<compile_context>
chip_gen: v6e
topology: v6e:2x2x1
jax: 0.10.0
libtpu: 0.0.40
codegen_flags: <defaults>
</compile_context>

<pallas_src>
import functools
from math import sqrt

import jax
import jax.numpy as jnp
from jax import lax
from jax.experimental import pallas as pl
from jax.experimental.pallas import tpu as pltpu

C_HIDDEN = 64                       # hidden channels (fixed by the PyTorch module)
KSZ = 3                             # 3x3 kernels
C_IN_PAD = 8                        # single input channel zero-padded to 8
COUT_PAD = 128                      # output-conv cout padded to a full MXU tile
N_RES_BLOCKS = 18
N_LAYERS = N_RES_BLOCKS + 2         # input conv + 18 blocks + output conv
VMEM_LIMIT = 48 * 1024 * 1024       # safe on 64 MiB (v7x) and 128 MiB (v5e/v6e) parts


# ---------------------------------------------------------------------------
# In-kernel helpers
# ---------------------------------------------------------------------------
def _conv3x3(src_ref, slot, w, height, width, cin):
    """One fused 3x3 conv as a single MXU matmul.

    src_ref[slot] is a zero-bordered (height+2, width+2, cin) activation.
    w is the folded (9*cin, cout) weight.  Returns (height*width, cout) f32.
    """
    parts = [src_ref[slot, kh:kh + height, kw:kw + width, :]
             for kh in range(KSZ) for kw in range(KSZ)]
    lhs = jnp.concatenate(parts, axis=-1).reshape(height * width, KSZ * KSZ * cin)
    return jnp.dot(lhs, w, preferred_element_type=jnp.float32)


# ---------------------------------------------------------------------------
# Fused kernel: grid = (batch, layer)
# ---------------------------------------------------------------------------
def _vdsr_kernel(x_ref, res_ref, w0_ref, wb_ref, wout_ref, o_ref, act_ref, *,
                 height, width):
    l = pl.program_id(1)

    # ---- layer 0: input conv (C_IN_PAD -> 64) + ReLU  ->  ping-pong slot 0.
    @pl.when(l == 0)
    def _():
        act_ref[...] = jnp.zeros_like(act_ref)        # zero halo borders once per image
        y = _conv3x3(x_ref, 0, w0_ref[...], height, width, C_IN_PAD)
        y = jnp.maximum(y, 0.0).astype(jnp.bfloat16).reshape(height, width, C_HIDDEN)
        act_ref[0, 1:height + 1, 1:width + 1, :] = y

    # ---- layers 1..18: Conv_ReLU_Block (64 -> 64), ping-pong between slots.
    @pl.when(jnp.logical_and(l >= 1, l <= N_RES_BLOCKS))
    def _():
        w = wb_ref[l - 1]                             # (576, 64) dynamic slice in VMEM

        @pl.when((l & 1) == 1)                        # odd layer: slot 0 -> slot 1
        def _():
            y = _conv3x3(act_ref, 0, w, height, width, C_HIDDEN)
            y = jnp.maximum(y, 0.0).astype(jnp.bfloat16).reshape(height, width, C_HIDDEN)
            act_ref[1, 1:height + 1, 1:width + 1, :] = y

        @pl.when((l & 1) == 0)                        # even layer: slot 1 -> slot 0
        def _():
            y = _conv3x3(act_ref, 1, w, height, width, C_HIDDEN)
            y = jnp.maximum(y, 0.0).astype(jnp.bfloat16).reshape(height, width, C_HIDDEN)
            act_ref[0, 1:height + 1, 1:width + 1, :] = y

    # ---- layer 19: output conv (64 -> 1) on the MXU + residual add.
    @pl.when(l == N_LAYERS - 1)
    def _():
        # After block 18 the activation sits in slot 0 (18 & 1 == 0).
        y = _conv3x3(act_ref, 0, wout_ref[...], height, width, C_HIDDEN)
        # Weight columns 1..COUT_PAD-1 are exactly zero, so a lane reduction
        # recovers channel 0 exactly (avoids a lane-0 gather/relayout).
        y = jnp.sum(y.reshape(height, width, COUT_PAD), axis=-1)
        o_ref[0] = y + res_ref[0]


# ---------------------------------------------------------------------------
# Host-side weight folding & forward pass
# ---------------------------------------------------------------------------
def _fold_weight(w_oihw, cin_pad=None):
    """OIHW (cout, cin, 3, 3) -> (9*cin[_pad], cout) bf16, rows ordered (kh, kw, cin)."""
    w = jnp.transpose(w_oihw, (2, 3, 1, 0))           # (kh, kw, cin, cout)
    if cin_pad is not None and cin_pad > w.shape[2]:
        w = jnp.pad(w, ((0, 0), (0, 0), (0, cin_pad - w.shape[2]), (0, 0)))
    kh, kw, cin, cout = w.shape
    return w.reshape(kh * kw * cin, cout).astype(jnp.bfloat16)


def vdsr_forward(x, params):
    """x: (N, 1, H, W) f32; params: {'input', 'blocks'(18), 'output'} OIHW f32."""
    n_b, c, height, width = x.shape
    assert c == 1
    hp, wp = height + 2, width + 2

    residual = x[:, 0]                                             # (N, H, W) f32

    # Single boundary transform: NHWC, zero-pad H/W halo, pad channel 1->8, bf16.
    img = jnp.transpose(x, (0, 2, 3, 1))                           # (N, H, W, 1)
    img = jnp.pad(img, ((0, 0), (1, 1), (1, 1), (0, C_IN_PAD - 1)))
    act_in = img.astype(jnp.bfloat16)                              # (N, H+2, W+2, 8)

    w0 = _fold_weight(params["input"], cin_pad=C_IN_PAD)           # (72, 64)
    wb = jnp.stack([_fold_weight(w) for w in params["blocks"]])    # (18, 576, 64)
    w_out = _fold_weight(params["output"])                         # (576, 1)
    w_out = jnp.pad(w_out, ((0, 0), (0, COUT_PAD - 1)))            # (576, 128)

    kernel = functools.partial(_vdsr_kernel, height=height, width=width)
    out = pl.pallas_call(
        kernel,
        out_shape=jax.ShapeDtypeStruct((n_b, height, width), jnp.float32),
        grid=(n_b, N_LAYERS),
        in_specs=[
            pl.BlockSpec((1, hp, wp, C_IN_PAD), lambda n, l: (n, 0, 0, 0)),
            pl.BlockSpec((1, height, width), lambda n, l: (n, 0, 0)),
            pl.BlockSpec((KSZ * KSZ * C_IN_PAD, C_HIDDEN), lambda n, l: (0, 0)),
            pl.BlockSpec((N_RES_BLOCKS, KSZ * KSZ * C_HIDDEN, C_HIDDEN),
                         lambda n, l: (0, 0, 0)),
            pl.BlockSpec((KSZ * KSZ * C_HIDDEN, COUT_PAD), lambda n, l: (0, 0)),
        ],
        out_specs=pl.BlockSpec((1, height, width), lambda n, l: (n, 0, 0)),
        scratch_shapes=[
            pltpu.VMEM((2, hp, wp, C_HIDDEN), jnp.bfloat16),   # resident ping-pong act
        ],
        compiler_params=pltpu.CompilerParams(
            dimension_semantics=("parallel", "arbitrary"),
            vmem_limit_bytes=VMEM_LIMIT),
    )(act_in, residual, w0, wb, w_out)

    return out[:, None]                                            # (N, 1, H, W)


def vdsr_reference(x, params):
    def conv(h, w):
        return lax.conv_general_dilated(h, w, (1, 1), ((1, 1), (1, 1)),
                                        dimension_numbers=("NCHW", "OIHW", "NCHW"))
    out = jnp.maximum(conv(x, params["input"]), 0.0)
    for w_blk in params["blocks"]:
        out = jnp.maximum(conv(out, w_blk), 0.0)
    return conv(out, params["output"]) + x


# ---------------------------------------------------------------------------
if __name__ == "__main__":
    key = jax.random.PRNGKey(0)
    n_b, height, width = 2, 16, 16

    key, kx = jax.random.split(key)
    x = jax.random.normal(kx, (n_b, 1, height, width), dtype=jnp.float32)

    def he(k, shape):
        cout = shape[0]
        return sqrt(2.0 / (KSZ * KSZ * cout)) * jax.random.normal(k, shape, dtype=jnp.float32)

    key, k_in, k_out = jax.random.split(key, 3)
    params = {
        "input": he(k_in, (C_HIDDEN, 1, KSZ, KSZ)),
        "blocks": [],
        "output": he(k_out, (1, C_HIDDEN, KSZ, KSZ)),
    }
    for _ in range(N_RES_BLOCKS):
        key, kb = jax.random.split(key)
        params["blocks"].append(he(kb, (C_HIDDEN, C_HIDDEN, KSZ, KSZ)))

    fwd = jax.jit(vdsr_forward)
    out = jax.block_until_ready(fwd(x, params))

    ref = vdsr_reference(x, params)
    assert out.shape == ref.shape == (n_b, 1, height, width)
    rel_err = float(jnp.max(jnp.abs(out - ref)) / (jnp.max(jnp.abs(ref)) + 1e-6))
    # bf16 activations / MXU bf16xbf16->f32 matmuls across 20 layers: loose bound.
    assert rel_err < 5e-2, f"relative error too large: {rel_err}"

    print("KERNEL_OK")
</pallas_src>

<mosaic_0001>
module attributes {stable_mosaic.version = 11 : i64} {
  func.func @_vdsr_kernel(%arg0: i32, %arg1: i32, %arg2: memref<1x18x18x8xbf16, #tpu.memory_space<vmem>>, %arg3: memref<1x16x16xf32, #tpu.memory_space<vmem>>, %arg4: memref<72x64xbf16, #tpu.memory_space<vmem>>, %arg5: memref<18x576x64xbf16, #tpu.memory_space<vmem>>, %arg6: memref<576x128xbf16, #tpu.memory_space<vmem>>, %arg7: memref<1x16x16xf32, #tpu.memory_space<vmem>>, %arg8: memref<2x18x18x64xbf16, #tpu.memory_space<vmem>>) attributes {dimension_semantics = [#tpu.dimension_semantics<parallel>, #tpu.dimension_semantics<arbitrary>], iteration_bounds = array<i64: 2, 20>, scalar_prefetch = 0 : i64, scratch_operands = 1 : i64, tpu.core_type = #tpu.core_type<tc>, window_params = [{transform_indices = @transform_0, window_bounds = array<i64: 1, 18, 18, 8>}, {transform_indices = @transform_1, window_bounds = array<i64: 1, 16, 16>}, {pipeline_mode = #tpu.pipeline_mode<synchronous>, transform_indices = @transform_2, window_bounds = array<i64: 72, 64>}, {pipeline_mode = #tpu.pipeline_mode<synchronous>, transform_indices = @transform_3, window_bounds = array<i64: 18, 576, 64>}, {pipeline_mode = #tpu.pipeline_mode<synchronous>, transform_indices = @transform_4, window_bounds = array<i64: 576, 128>}, {transform_indices = @transform_5, window_bounds = array<i64: 1, 16, 16>}]} {
    %c0_i32 = arith.constant 0 : i32
    %0 = arith.cmpi eq, %arg1, %c0_i32 : i32
    %1 = arith.extui %0 : i1 to i32
    %c0_i32_0 = arith.constant 0 : i32
    %2 = arith.cmpi ne, %1, %c0_i32_0 : i32
    scf.if %2 {
      %cst = arith.constant 0.000000e+00 : bf16
      %11 = vector.broadcast %cst : bf16 to vector<2x18x18x64xbf16>
      %c0 = arith.constant 0 : index
      %c0_3 = arith.constant 0 : index
      %c0_4 = arith.constant 0 : index
      %c0_5 = arith.constant 0 : index
      %12 = vector.load %arg8[%c0, %c0_3, %c0_4, %c0_5] : memref<2x18x18x64xbf16, #tpu.memory_space<vmem>>, vector<2x18x18x64xbf16>
      tpu.vector_store %arg8[%c0, %c0_3, %c0_4, %c0_5], %11 {strides = array<i32>} : memref<2x18x18x64xbf16, #tpu.memory_space<vmem>>, vector<2x18x18x64xbf16>,
      %c0_6 = arith.constant 0 : index
      %c0_7 = arith.constant 0 : index
      %13 = vector.load %arg4[%c0_6, %c0_7] : memref<72x64xbf16, #tpu.memory_space<vmem>>, vector<72x64xbf16>
      %c0_8 = arith.constant 0 : index
      %c0_9 = arith.constant 0 : index
      %c0_10 = arith.constant 0 : index
      %c0_11 = arith.constant 0 : index
      %14 = vector.load %arg2[%c0_8, %c0_9, %c0_10, %c0_11] : memref<1x18x18x8xbf16, #tpu.memory_space<vmem>>, vector<1x16x16x8xbf16>
      %15 = vector.shape_cast %14 : vector<1x16x16x8xbf16> to vector<16x16x8xbf16>
      %c0_12 = arith.constant 0 : index
      %c0_13 = arith.constant 0 : index
      %c1 = arith.constant 1 : index
      %c0_14 = arith.constant 0 : index
      %16 = vector.load %arg2[%c0_12, %c0_13, %c1, %c0_14] : memref<1x18x18x8xbf16, #tpu.memory_space<vmem>>, vector<1x16x16x8xbf16>
      %17 = vector.shape_cast %16 : vector<1x16x16x8xbf16> to vector<16x16x8xbf16>
      %c0_15 = arith.constant 0 : index
      %c0_16 = arith.constant 0 : index
      %c2 = arith.constant 2 : index
      %c0_17 = arith.constant 0 : index
      %18 = vector.load %arg2[%c0_15, %c0_16, %c2, %c0_17] : memref<1x18x18x8xbf16, #tpu.memory_space<vmem>>, vector<1x16x16x8xbf16>
      %19 = vector.shape_cast %18 : vector<1x16x16x8xbf16> to vector<16x16x8xbf16>
      %c0_18 = arith.constant 0 : index
      %c1_19 = arith.constant 1 : index
      %c0_20 = arith.constant 0 : index
      %c0_21 = arith.constant 0 : index
      %20 = vector.load %arg2[%c0_18, %c1_19, %c0_20, %c0_21] : memref<1x18x18x8xbf16, #tpu.memory_space<vmem>>, vector<1x16x16x8xbf16>
      %21 = vector.shape_cast %20 : vector<1x16x16x8xbf16> to vector<16x16x8xbf16>
      %c0_22 = arith.constant 0 : index
      %c1_23 = arith.constant 1 : index
      %c1_24 = arith.constant 1 : index
      %c0_25 = arith.constant 0 : index
      %22 = vector.load %arg2[%c0_22, %c1_23, %c1_24, %c0_25] : memref<1x18x18x8xbf16, #tpu.memory_space<vmem>>, vector<1x16x16x8xbf16>
      %23 = vector.shape_cast %22 : vector<1x16x16x8xbf16> to vector<16x16x8xbf16>
      %c0_26 = arith.constant 0 : index
      %c1_27 = arith.constant 1 : index
      %c2_28 = arith.constant 2 : index
      %c0_29 = arith.constant 0 : index
      %24 = vector.load %arg2[%c0_26, %c1_27, %c2_28, %c0_29] : memref<1x18x18x8xbf16, #tpu.memory_space<vmem>>, vector<1x16x16x8xbf16>
      %25 = vector.shape_cast %24 : vector<1x16x16x8xbf16> to vector<16x16x8xbf16>
      %c0_30 = arith.constant 0 : index
      %c2_31 = arith.constant 2 : index
      %c0_32 = arith.constant 0 : index
      %c0_33 = arith.constant 0 : index
      %26 = vector.load %arg2[%c0_30, %c2_31, %c0_32, %c0_33] : memref<1x18x18x8xbf16, #tpu.memory_space<vmem>>, vector<1x16x16x8xbf16>
      %27 = vector.shape_cast %26 : vector<1x16x16x8xbf16> to vector<16x16x8xbf16>
      %c0_34 = arith.constant 0 : index
      %c2_35 = arith.constant 2 : index
      %c1_36 = arith.constant 1 : index
      %c0_37 = arith.constant 0 : index
      %28 = vector.load %arg2[%c0_34, %c2_35, %c1_36, %c0_37] : memref<1x18x18x8xbf16, #tpu.memory_space<vmem>>, vector<1x16x16x8xbf16>
      %29 = vector.shape_cast %28 : vector<1x16x16x8xbf16> to vector<16x16x8xbf16>
      %c0_38 = arith.constant 0 : index
      %c2_39 = arith.constant 2 : index
      %c2_40 = arith.constant 2 : index
      %c0_41 = arith.constant 0 : index
      %30 = vector.load %arg2[%c0_38, %c2_39, %c2_40, %c0_41] : memref<1x18x18x8xbf16, #tpu.memory_space<vmem>>, vector<1x16x16x8xbf16>
      %31 = vector.shape_cast %30 : vector<1x16x16x8xbf16> to vector<16x16x8xbf16>
      %32 = tpu.concatenate %15, %17, %19, %21, %23, %25, %27, %29, %31 in 2 : vector<16x16x8xbf16>, vector<16x16x8xbf16>, vector<16x16x8xbf16>, vector<16x16x8xbf16>, vector<16x16x8xbf16>, vector<16x16x8xbf16>, vector<16x16x8xbf16>, vector<16x16x8xbf16>, vector<16x16x8xbf16> -> vector<16x16x72xbf16>
      %33 = vector.shape_cast %32 : vector<16x16x72xbf16> to vector<256x72xbf16>
      %cst_42 = arith.constant dense<0.000000e+00> : vector<256x64xf32>
      %34 = tpu.matmul %33, %13, %cst_42 {dimension_numbers = #tpu.dot_dimension_numbers<[1], [0], [0], [1], [0, 0, 1, 1], [], []>} : vector<256x72xbf16>, vector<72x64xbf16>, vector<256x64xf32> -> vector<256x64xf32>
      %cst_43 = arith.constant 0.000000e+00 : f32
      %35 = vector.broadcast %cst_43 : f32 to vector<256x64xf32>
      %36 = arith.maximumf %34, %35 : vector<256x64xf32>
      %37 = arith.truncf %36 : vector<256x64xf32> to vector<256x64xbf16>
      %38 = vector.shape_cast %37 : vector<256x64xbf16> to vector<16x16x64xbf16>
      %c0_44 = arith.constant 0 : index
      %c1_45 = arith.constant 1 : index
      %c1_46 = arith.constant 1 : index
      %c0_47 = arith.constant 0 : index
      %39 = vector.load %arg8[%c0_44, %c1_45, %c1_46, %c0_47] : memref<2x18x18x64xbf16, #tpu.memory_space<vmem>>, vector<1x16x16x64xbf16>
      %40 = vector.shape_cast %39 : vector<1x16x16x64xbf16> to vector<16x16x64xbf16>
      %41 = vector.shape_cast %38 : vector<16x16x64xbf16> to vector<1x16x16x64xbf16>
      tpu.vector_store %arg8[%c0_44, %c1_45, %c1_46, %c0_47], %41 {strides = array<i32>} : memref<2x18x18x64xbf16, #tpu.memory_space<vmem>>, vector<1x16x16x64xbf16>,
    } else {
    }
    %c1_i32 = arith.constant 1 : i32
    %3 = arith.cmpi sge, %arg1, %c1_i32 : i32
    %c18_i32 = arith.constant 18 : i32
    %4 = arith.cmpi sle, %arg1, %c18_i32 : i32
    %5 = arith.andi %3, %4 : i1
    %6 = arith.extui %5 : i1 to i32
    %c0_i32_1 = arith.constant 0 : i32
    %7 = arith.cmpi ne, %6, %c0_i32_1 : i32
    scf.if %7 {
      %c1_i32_3 = arith.constant 1 : i32
      %11 = arith.subi %arg1, %c1_i32_3 : i32
      %12 = arith.index_cast %11 : i32 to index
      %c0 = arith.constant 0 : index
      %c0_4 = arith.constant 0 : index
      %13 = vector.load %arg5[%12, %c0, %c0_4] : memref<18x576x64xbf16, #tpu.memory_space<vmem>>, vector<1x576x64xbf16>
      %14 = vector.shape_cast %13 : vector<1x576x64xbf16> to vector<576x64xbf16>
      %c1_i32_5 = arith.constant 1 : i32
      %15 = arith.andi %arg1, %c1_i32_5 : i32
      %c1_i32_6 = arith.constant 1 : i32
      %16 = arith.cmpi eq, %15, %c1_i32_6 : i32
      %17 = arith.extui %16 : i1 to i32
      %c0_i32_7 = arith.constant 0 : i32
      %18 = arith.cmpi ne, %17, %c0_i32_7 : i32
      scf.if %18 {
        %c0_11 = arith.constant 0 : index
        %c0_12 = arith.constant 0 : index
        %c0_13 = arith.constant 0 : index
        %c0_14 = arith.constant 0 : index
        %23 = vector.load %arg8[%c0_11, %c0_12, %c0_13, %c0_14] : memref<2x18x18x64xbf16, #tpu.memory_space<vmem>>, vector<1x16x16x64xbf16>
        %24 = vector.shape_cast %23 : vector<1x16x16x64xbf16> to vector<16x16x64xbf16>
        %c0_15 = arith.constant 0 : index
        %c0_16 = arith.constant 0 : index
        %c1 = arith.constant 1 : index
        %c0_17 = arith.constant 0 : index
        %25 = vector.load %arg8[%c0_15, %c0_16, %c1, %c0_17] : memref<2x18x18x64xbf16, #tpu.memory_space<vmem>>, vector<1x16x16x64xbf16>
        %26 = vector.shape_cast %25 : vector<1x16x16x64xbf16> to vector<16x16x64xbf16>
        %c0_18 = arith.constant 0 : index
        %c0_19 = arith.constant 0 : index
        %c2 = arith.constant 2 : index
        %c0_20 = arith.constant 0 : index
        %27 = vector.load %arg8[%c0_18, %c0_19, %c2, %c0_20] : memref<2x18x18x64xbf16, #tpu.memory_space<vmem>>, vector<1x16x16x64xbf16>
        %28 = vector.shape_cast %27 : vector<1x16x16x64xbf16> to vector<16x16x64xbf16>
        %c0_21 = arith.constant 0 : index
        %c1_22 = arith.constant 1 : index
        %c0_23 = arith.constant 0 : index
        %c0_24 = arith.constant 0 : index
        %29 = vector.load %arg8[%c0_21, %c1_22, %c0_23, %c0_24] : memref<2x18x18x64xbf16, #tpu.memory_space<vmem>>, vector<1x16x16x64xbf16>
        %30 = vector.shape_cast %29 : vector<1x16x16x64xbf16> to vector<16x16x64xbf16>
        %c0_25 = arith.constant 0 : index
        %c1_26 = arith.constant 1 : index
        %c1_27 = arith.constant 1 : index
        %c0_28 = arith.constant 0 : index
        %31 = vector.load %arg8[%c0_25, %c1_26, %c1_27, %c0_28] : memref<2x18x18x64xbf16, #tpu.memory_space<vmem>>, vector<1x16x16x64xbf16>
        %32 = vector.shape_cast %31 : vector<1x16x16x64xbf16> to vector<16x16x64xbf16>
        %c0_29 = arith.constant 0 : index
        %c1_30 = arith.constant 1 : index
        %c2_31 = arith.constant 2 : index
        %c0_32 = arith.constant 0 : index
        %33 = vector.load %arg8[%c0_29, %c1_30, %c2_31, %c0_32] : memref<2x18x18x64xbf16, #tpu.memory_space<vmem>>, vector<1x16x16x64xbf16>
        %34 = vector.shape_cast %33 : vector<1x16x16x64xbf16> to vector<16x16x64xbf16>
        %c0_33 = arith.constant 0 : index
        %c2_34 = arith.constant 2 : index
        %c0_35 = arith.constant 0 : index
        %c0_36 = arith.constant 0 : index
        %35 = vector.load %arg8[%c0_33, %c2_34, %c0_35, %c0_36] : memref<2x18x18x64xbf16, #tpu.memory_space<vmem>>, vector<1x16x16x64xbf16>
        %36 = vector.shape_cast %35 : vector<1x16x16x64xbf16> to vector<16x16x64xbf16>
        %c0_37 = arith.constant 0 : index
        %c2_38 = arith.constant 2 : index
        %c1_39 = arith.constant 1 : index
        %c0_40 = arith.constant 0 : index
        %37 = vector.load %arg8[%c0_37, %c2_38, %c1_39, %c0_40] : memref<2x18x18x64xbf16, #tpu.memory_space<vmem>>, vector<1x16x16x64xbf16>
        %38 = vector.shape_cast %37 : vector<1x16x16x64xbf16> to vector<16x16x64xbf16>
        %c0_41 = arith.constant 0 : index
        %c2_42 = arith.constant 2 : index
        %c2_43 = arith.constant 2 : index
        %c0_44 = arith.constant 0 : index
        %39 = vector.load %arg8[%c0_41, %c2_42, %c2_43, %c0_44] : memref<2x18x18x64xbf16, #tpu.memory_space<vmem>>, vector<1x16x16x64xbf16>
        %40 = vector.shape_cast %39 : vector<1x16x16x64xbf16> to vector<16x16x64xbf16>
        %41 = tpu.concatenate %24, %26, %28, %30, %32, %34, %36, %38, %40 in 2 : vector<16x16x64xbf16>, vector<16x16x64xbf16>, vector<16x16x64xbf16>, vector<16x16x64xbf16>, vector<16x16x64xbf16>, vector<16x16x64xbf16>, vector<16x16x64xbf16>, vector<16x16x64xbf16>, vector<16x16x64xbf16> -> vector<16x16x576xbf16>
        %42 = vector.shape_cast %41 : vector<16x16x576xbf16> to vector<256x576xbf16>
        %cst = arith.constant dense<0.000000e+00> : vector<256x64xf32>
        %43 = tpu.matmul %42, %14, %cst {dimension_numbers = #tpu.dot_dimension_numbers<[1], [0], [0], [1], [0, 0, 1, 1], [], []>} : vector<256x576xbf16>, vector<576x64xbf16>, vector<256x64xf32> -> vector<256x64xf32>
        %cst_45 = arith.constant 0.000000e+00 : f32
        %44 = vector.broadcast %cst_45 : f32 to vector<256x64xf32>
        %45 = arith.maximumf %43, %44 : vector<256x64xf32>
        %46 = arith.truncf %45 : vector<256x64xf32> to vector<256x64xbf16>
        %47 = vector.shape_cast %46 : vector<256x64xbf16> to vector<16x16x64xbf16>
        %c1_46 = arith.constant 1 : index
        %c1_47 = arith.constant 1 : index
        %c1_48 = arith.constant 1 : index
        %c0_49 = arith.constant 0 : index
        %48 = vector.load %arg8[%c1_46, %c1_47, %c1_48, %c0_49] : memref<2x18x18x64xbf16, #tpu.memory_space<vmem>>, vector<1x16x16x64xbf16>
        %49 = vector.shape_cast %48 : vector<1x16x16x64xbf16> to vector<16x16x64xbf16>
        %50 = vector.shape_cast %47 : vector<16x16x64xbf16> to vector<1x16x16x64xbf16>
        tpu.vector_store %arg8[%c1_46, %c1_47, %c1_48, %c0_49], %50 {strides = array<i32>} : memref<2x18x18x64xbf16, #tpu.memory_space<vmem>>, vector<1x16x16x64xbf16>,
      } else {
      }
      %c1_i32_8 = arith.constant 1 : i32
      %19 = arith.andi %arg1, %c1_i32_8 : i32
      %c0_i32_9 = arith.constant 0 : i32
      %20 = arith.cmpi eq, %19, %c0_i32_9 : i32
      %21 = arith.extui %20 : i1 to i32
      %c0_i32_10 = arith.constant 0 : i32
      %22 = arith.cmpi ne, %21, %c0_i32_10 : i32
      scf.if %22 {
        %c1 = arith.constant 1 : index
        %c0_11 = arith.constant 0 : index
        %c0_12 = arith.constant 0 : index
        %c0_13 = arith.constant 0 : index
        %23 = vector.load %arg8[%c1, %c0_11, %c0_12, %c0_13] : memref<2x18x18x64xbf16, #tpu.memory_space<vmem>>, vector<1x16x16x64xbf16>
        %24 = vector.shape_cast %23 : vector<1x16x16x64xbf16> to vector<16x16x64xbf16>
        %c1_14 = arith.constant 1 : index
        %c0_15 = arith.constant 0 : index
        %c1_16 = arith.constant 1 : index
        %c0_17 = arith.constant 0 : index
        %25 = vector.load %arg8[%c1_14, %c0_15, %c1_16, %c0_17] : memref<2x18x18x64xbf16, #tpu.memory_space<vmem>>, vector<1x16x16x64xbf16>
        %26 = vector.shape_cast %25 : vector<1x16x16x64xbf16> to vector<16x16x64xbf16>
        %c1_18 = arith.constant 1 : index
        %c0_19 = arith.constant 0 : index
        %c2 = arith.constant 2 : index
        %c0_20 = arith.constant 0 : index
        %27 = vector.load %arg8[%c1_18, %c0_19, %c2, %c0_20] : memref<2x18x18x64xbf16, #tpu.memory_space<vmem>>, vector<1x16x16x64xbf16>
        %28 = vector.shape_cast %27 : vector<1x16x16x64xbf16> to vector<16x16x64xbf16>
        %c1_21 = arith.constant 1 : index
        %c1_22 = arith.constant 1 : index
        %c0_23 = arith.constant 0 : index
        %c0_24 = arith.constant 0 : index
        %29 = vector.load %arg8[%c1_21, %c1_22, %c0_23, %c0_24] : memref<2x18x18x64xbf16, #tpu.memory_space<vmem>>, vector<1x16x16x64xbf16>
        %30 = vector.shape_cast %29 : vector<1x16x16x64xbf16> to vector<16x16x64xbf16>
        %c1_25 = arith.constant 1 : index
        %c1_26 = arith.constant 1 : index
        %c1_27 = arith.constant 1 : index
        %c0_28 = arith.constant 0 : index
        %31 = vector.load %arg8[%c1_25, %c1_26, %c1_27, %c0_28] : memref<2x18x18x64xbf16, #tpu.memory_space<vmem>>, vector<1x16x16x64xbf16>
        %32 = vector.shape_cast %31 : vector<1x16x16x64xbf16> to vector<16x16x64xbf16>
        %c1_29 = arith.constant 1 : index
        %c1_30 = arith.constant 1 : index
        %c2_31 = arith.constant 2 : index
        %c0_32 = arith.constant 0 : index
        %33 = vector.load %arg8[%c1_29, %c1_30, %c2_31, %c0_32] : memref<2x18x18x64xbf16, #tpu.memory_space<vmem>>, vector<1x16x16x64xbf16>
        %34 = vector.shape_cast %33 : vector<1x16x16x64xbf16> to vector<16x16x64xbf16>
        %c1_33 = arith.constant 1 : index
        %c2_34 = arith.constant 2 : index
        %c0_35 = arith.constant 0 : index
        %c0_36 = arith.constant 0 : index
        %35 = vector.load %arg8[%c1_33, %c2_34, %c0_35, %c0_36] : memref<2x18x18x64xbf16, #tpu.memory_space<vmem>>, vector<1x16x16x64xbf16>
        %36 = vector.shape_cast %35 : vector<1x16x16x64xbf16> to vector<16x16x64xbf16>
        %c1_37 = arith.constant 1 : index
        %c2_38 = arith.constant 2 : index
        %c1_39 = arith.constant 1 : index
        %c0_40 = arith.constant 0 : index
        %37 = vector.load %arg8[%c1_37, %c2_38, %c1_39, %c0_40] : memref<2x18x18x64xbf16, #tpu.memory_space<vmem>>, vector<1x16x16x64xbf16>
        %38 = vector.shape_cast %37 : vector<1x16x16x64xbf16> to vector<16x16x64xbf16>
        %c1_41 = arith.constant 1 : index
        %c2_42 = arith.constant 2 : index
        %c2_43 = arith.constant 2 : index
        %c0_44 = arith.constant 0 : index
        %39 = vector.load %arg8[%c1_41, %c2_42, %c2_43, %c0_44] : memref<2x18x18x64xbf16, #tpu.memory_space<vmem>>, vector<1x16x16x64xbf16>
        %40 = vector.shape_cast %39 : vector<1x16x16x64xbf16> to vector<16x16x64xbf16>
        %41 = tpu.concatenate %24, %26, %28, %30, %32, %34, %36, %38, %40 in 2 : vector<16x16x64xbf16>, vector<16x16x64xbf16>, vector<16x16x64xbf16>, vector<16x16x64xbf16>, vector<16x16x64xbf16>, vector<16x16x64xbf16>, vector<16x16x64xbf16>, vector<16x16x64xbf16>, vector<16x16x64xbf16> -> vector<16x16x576xbf16>
        %42 = vector.shape_cast %41 : vector<16x16x576xbf16> to vector<256x576xbf16>
        %cst = arith.constant dense<0.000000e+00> : vector<256x64xf32>
        %43 = tpu.matmul %42, %14, %cst {dimension_numbers = #tpu.dot_dimension_numbers<[1], [0], [0], [1], [0, 0, 1, 1], [], []>} : vector<256x576xbf16>, vector<576x64xbf16>, vector<256x64xf32> -> vector<256x64xf32>
        %cst_45 = arith.constant 0.000000e+00 : f32
        %44 = vector.broadcast %cst_45 : f32 to vector<256x64xf32>
        %45 = arith.maximumf %43, %44 : vector<256x64xf32>
        %46 = arith.truncf %45 : vector<256x64xf32> to vector<256x64xbf16>
        %47 = vector.shape_cast %46 : vector<256x64xbf16> to vector<16x16x64xbf16>
        %c0_46 = arith.constant 0 : index
        %c1_47 = arith.constant 1 : index
        %c1_48 = arith.constant 1 : index
        %c0_49 = arith.constant 0 : index
        %48 = vector.load %arg8[%c0_46, %c1_47, %c1_48, %c0_49] : memref<2x18x18x64xbf16, #tpu.memory_space<vmem>>, vector<1x16x16x64xbf16>
        %49 = vector.shape_cast %48 : vector<1x16x16x64xbf16> to vector<16x16x64xbf16>
        %50 = vector.shape_cast %47 : vector<16x16x64xbf16> to vector<1x16x16x64xbf16>
        tpu.vector_store %arg8[%c0_46, %c1_47, %c1_48, %c0_49], %50 {strides = array<i32>} : memref<2x18x18x64xbf16, #tpu.memory_space<vmem>>, vector<1x16x16x64xbf16>,
      } else {
      }
    } else {
    }
    %c19_i32 = arith.constant 19 : i32
    %8 = arith.cmpi eq, %arg1, %c19_i32 : i32
    %9 = arith.extui %8 : i1 to i32
    %c0_i32_2 = arith.constant 0 : i32
    %10 = arith.cmpi ne, %9, %c0_i32_2 : i32
    scf.if %10 {
      %c0 = arith.constant 0 : index
      %c0_3 = arith.constant 0 : index
      %11 = vector.load %arg6[%c0, %c0_3] : memref<576x128xbf16, #tpu.memory_space<vmem>>, vector<576x128xbf16>
      %c0_4 = arith.constant 0 : index
      %c0_5 = arith.constant 0 : index
      %c0_6 = arith.constant 0 : index
      %c0_7 = arith.constant 0 : index
      %12 = vector.load %arg8[%c0_4, %c0_5, %c0_6, %c0_7] : memref<2x18x18x64xbf16, #tpu.memory_space<vmem>>, vector<1x16x16x64xbf16>
      %13 = vector.shape_cast %12 : vector<1x16x16x64xbf16> to vector<16x16x64xbf16>
      %c0_8 = arith.constant 0 : index
      %c0_9 = arith.constant 0 : index
      %c1 = arith.constant 1 : index
      %c0_10 = arith.constant 0 : index
      %14 = vector.load %arg8[%c0_8, %c0_9, %c1, %c0_10] : memref<2x18x18x64xbf16, #tpu.memory_space<vmem>>, vector<1x16x16x64xbf16>
      %15 = vector.shape_cast %14 : vector<1x16x16x64xbf16> to vector<16x16x64xbf16>
      %c0_11 = arith.constant 0 : index
      %c0_12 = arith.constant 0 : index
      %c2 = arith.constant 2 : index
      %c0_13 = arith.constant 0 : index
      %16 = vector.load %arg8[%c0_11, %c0_12, %c2, %c0_13] : memref<2x18x18x64xbf16, #tpu.memory_space<vmem>>, vector<1x16x16x64xbf16>
      %17 = vector.shape_cast %16 : vector<1x16x16x64xbf16> to vector<16x16x64xbf16>
      %c0_14 = arith.constant 0 : index
      %c1_15 = arith.constant 1 : index
      %c0_16 = arith.constant 0 : index
      %c0_17 = arith.constant 0 : index
      %18 = vector.load %arg8[%c0_14, %c1_15, %c0_16, %c0_17] : memref<2x18x18x64xbf16, #tpu.memory_space<vmem>>, vector<1x16x16x64xbf16>
      %19 = vector.shape_cast %18 : vector<1x16x16x64xbf16> to vector<16x16x64xbf16>
      %c0_18 = arith.constant 0 : index
      %c1_19 = arith.constant 1 : index
      %c1_20 = arith.constant 1 : index
      %c0_21 = arith.constant 0 : index
      %20 = vector.load %arg8[%c0_18, %c1_19, %c1_20, %c0_21] : memref<2x18x18x64xbf16, #tpu.memory_space<vmem>>, vector<1x16x16x64xbf16>
      %21 = vector.shape_cast %20 : vector<1x16x16x64xbf16> to vector<16x16x64xbf16>
      %c0_22 = arith.constant 0 : index
      %c1_23 = arith.constant 1 : index
      %c2_24 = arith.constant 2 : index
      %c0_25 = arith.constant 0 : index
      %22 = vector.load %arg8[%c0_22, %c1_23, %c2_24, %c0_25] : memref<2x18x18x64xbf16, #tpu.memory_space<vmem>>, vector<1x16x16x64xbf16>
      %23 = vector.shape_cast %22 : vector<1x16x16x64xbf16> to vector<16x16x64xbf16>
      %c0_26 = arith.constant 0 : index
      %c2_27 = arith.constant 2 : index
      %c0_28 = arith.constant 0 : index
      %c0_29 = arith.constant 0 : index
      %24 = vector.load %arg8[%c0_26, %c2_27, %c0_28, %c0_29] : memref<2x18x18x64xbf16, #tpu.memory_space<vmem>>, vector<1x16x16x64xbf16>
      %25 = vector.shape_cast %24 : vector<1x16x16x64xbf16> to vector<16x16x64xbf16>
      %c0_30 = arith.constant 0 : index
      %c2_31 = arith.constant 2 : index
      %c1_32 = arith.constant 1 : index
      %c0_33 = arith.constant 0 : index
      %26 = vector.load %arg8[%c0_30, %c2_31, %c1_32, %c0_33] : memref<2x18x18x64xbf16, #tpu.memory_space<vmem>>, vector<1x16x16x64xbf16>
      %27 = vector.shape_cast %26 : vector<1x16x16x64xbf16> to vector<16x16x64xbf16>
      %c0_34 = arith.constant 0 : index
      %c2_35 = arith.constant 2 : index
      %c2_36 = arith.constant 2 : index
      %c0_37 = arith.constant 0 : index
      %28 = vector.load %arg8[%c0_34, %c2_35, %c2_36, %c0_37] : memref<2x18x18x64xbf16, #tpu.memory_space<vmem>>, vector<1x16x16x64xbf16>
      %29 = vector.shape_cast %28 : vector<1x16x16x64xbf16> to vector<16x16x64xbf16>
      %30 = tpu.concatenate %13, %15, %17, %19, %21, %23, %25, %27, %29 in 2 : vector<16x16x64xbf16>, vector<16x16x64xbf16>, vector<16x16x64xbf16>, vector<16x16x64xbf16>, vector<16x16x64xbf16>, vector<16x16x64xbf16>, vector<16x16x64xbf16>, vector<16x16x64xbf16>, vector<16x16x64xbf16> -> vector<16x16x576xbf16>
      %31 = vector.shape_cast %30 : vector<16x16x576xbf16> to vector<256x576xbf16>
      %cst = arith.constant dense<0.000000e+00> : vector<256x128xf32>
      %32 = tpu.matmul %31, %11, %cst {dimension_numbers = #tpu.dot_dimension_numbers<[1], [0], [0], [1], [0, 0, 1, 1], [], []>} : vector<256x576xbf16>, vector<576x128xbf16>, vector<256x128xf32> -> vector<256x128xf32>
      %33 = vector.shape_cast %32 : vector<256x128xf32> to vector<16x16x128xf32>
      %cst_38 = arith.constant dense<0.000000e+00> : vector<16x16xf32>
      %34 = vector.multi_reduction <add>, %33, %cst_38 [2] : vector<16x16x128xf32> to vector<16x16xf32>
      %c0_39 = arith.constant 0 : index
      %c0_40 = arith.constant 0 : index
      %c0_41 = arith.constant 0 : index
      %35 = vector.load %arg3[%c0_39, %c0_40, %c0_41] : memref<1x16x16xf32, #tpu.memory_space<vmem>>, vector<1x16x16xf32>
      %36 = vector.shape_cast %35 : vector<1x16x16xf32> to vector<16x16xf32>
      %37 = arith.addf %34, %36 : vector<16x16xf32>
      %c0_42 = arith.constant 0 : index
      %c0_43 = arith.constant 0 : index
      %c0_44 = arith.constant 0 : index
      %38 = vector.load %arg7[%c0_42, %c0_43, %c0_44] : memref<1x16x16xf32, #tpu.memory_space<vmem>>, vector<1x16x16xf32>
      %39 = vector.shape_cast %38 : vector<1x16x16xf32> to vector<16x16xf32>
      %40 = vector.shape_cast %37 : vector<16x16xf32> to vector<1x16x16xf32>
      tpu.vector_store %arg7[%c0_42, %c0_43, %c0_44], %40 {strides = array<i32>} : memref<1x16x16xf32, #tpu.memory_space<vmem>>, vector<1x16x16xf32>,
    } else {
    }
    return
  }
  func.func @transform_0(%arg0: i32, %arg1: i32) -> (i32, i32, i32, i32) {
    %c0_i32 = arith.constant 0 : i32
    %c0_i32_0 = arith.constant 0 : i32
    %c0_i32_1 = arith.constant 0 : i32
    %c0_i32_2 = arith.constant 0 : i32
    return %arg0, %c0_i32, %c0_i32_0, %c0_i32_1 : i32, i32, i32, i32
  }
  func.func @transform_1(%arg0: i32, %arg1: i32) -> (i32, i32, i32) {
    %c0_i32 = arith.constant 0 : i32
    %c0_i32_0 = arith.constant 0 : i32
    %c0_i32_1 = arith.constant 0 : i32
    return %arg0, %c0_i32, %c0_i32_0 : i32, i32, i32
  }
  func.func @transform_2(%arg0: i32, %arg1: i32) -> (i32, i32) {
    %c0_i32 = arith.constant 0 : i32
    %c0_i32_0 = arith.constant 0 : i32
    %c0_i32_1 = arith.constant 0 : i32
    return %c0_i32, %c0_i32_0 : i32, i32
  }
  func.func @transform_3(%arg0: i32, %arg1: i32) -> (i32, i32, i32) {
    %c0_i32 = arith.constant 0 : i32
    %c0_i32_0 = arith.constant 0 : i32
    %c0_i32_1 = arith.constant 0 : i32
    %c0_i32_2 = arith.constant 0 : i32
    return %c0_i32, %c0_i32_0, %c0_i32_1 : i32, i32, i32
  }
  func.func @transform_4(%arg0: i32, %arg1: i32) -> (i32, i32) {
    %c0_i32 = arith.constant 0 : i32
    %c0_i32_0 = arith.constant 0 : i32
    %c0_i32_1 = arith.constant 0 : i32
    return %c0_i32, %c0_i32_0 : i32, i32
  }
  func.func @transform_5(%arg0: i32, %arg1: i32) -> (i32, i32, i32) {
    %c0_i32 = arith.constant 0 : i32
    %c0_i32_0 = arith.constant 0 : i32
    %c0_i32_1 = arith.constant 0 : i32
    return %arg0, %c0_i32, %c0_i32_0 : i32, i32, i32
  }
}

</mosaic_0001>

<llo_original>
// kernel: vdsr_forward.1
$region0: #{vdsr_forward.1}
  #allocation0 [shape = 'u32[]', space=smem, size = 0x4, offset = 0x4, fixed_abs, tag = 'smem constant byte address 0x4 - core index']
  #allocation1 [shape = 'u32[144,128]{1,0:T(1,128)}', space=vmem, size = 0x12000, scoped, tag = 'internal scratch']
  #allocation2 [shape = 'bf16[2,18,18,64]{3,2,1,0:T(8,128)(2,1)}', space=vmem, size = 0x36000, scoped, tag = 'scratch operand']
  %s0 = inlined_call_operand.vmem [shape: bf16[2,18,18,8], index: 0, kind: input, shape index: {}]
  %s1 = inlined_call_operand.vmem [shape: f32[2,16,16], index: 1, kind: input, shape index: {}]
  %s2 = inlined_call_operand.vmem [shape: bf16[72,64], index: 2, kind: input, shape index: {}]
  %s3 = inlined_call_operand.vmem [shape: bf16[18,576,64], index: 3, kind: input, shape index: {}]
  %s4 = inlined_call_operand.vmem [shape: bf16[576,128], index: 4, kind: input, shape index: {}]
  %s5 = inlined_call_operand.hbm [shape: f32[2,16,16], index: 5, kind: output, shape index: {}]
  %s6 = sld [smem:[#allocation0]]
  $region73: #{vdsr_forward.1} parent=0
    _
  %s8 = ssub.s32 1, %s6
  %s9 = scalar_select 0, %s8, %s6
  $region1: #{vdsr_forward.1} parent=0
    #allocation3 [shape = 'u8[16384]{0}', space=vmem, size = 0x4000, scoped, tag = 'output window, operand 0']
    #allocation4 [shape = 's32[2]{0}', space=sflag, size = 0x8, scoped, tag = 'scoped memory for vdsr_forward.1']
    %10 = vsyncpa [#allocation4], 0
    %s11 = scalar_lea.sflag [#allocation4], 1
    %12 = vsyncpa %s11, 0
    loop: start=0, step=1, limit=42
    $region2: #{vdsr_forward.1} parent=1 // loop_pre_header
      _
    $region3: #{vdsr_forward.1} parent=1 // loop_header
      %s14 = sphi 0, %s18
      %p15 = scmp.ge.s32.totalorder %s14, 42
      %s21 = sphi 0, %s33
      %s22 = sphi 0, %s29
      %s23 = sphi 0, %s21
      %s24 = sphi 0, %s22
      %s25 = sphi 0, %s23
      %s26 = sphi 0, %s24
      %s36 = sphi 0, %s38
      %s39 = sphi 0, %s36
      %s40 = sphi 0, %s39
      %s56 = sphi 0, %s40
      %s62 = sphi 0, %s64
      %s65 = sphi 0, %s62
      %s66 = sphi 0, %s65
      %s82 = sphi 0, %s66
      %s86 = sphi 0, %s86
      %s88 = sphi 0, %s86
      %s89 = sphi 0, %s88
      %s103 = sphi 0, %s89
      %s107 = sphi 0, %s107
      %s109 = sphi 0, %s107
      %s110 = sphi 0, %s109
      %s124 = sphi 0, %s110
      %s128 = sphi 0, %s128
      %s130 = sphi 0, %s128
      %s131 = sphi 0, %s130
      %s145 = sphi 0, %s131
      %s151 = sphi 0, %s153
      %s154 = sphi 0, %s151
      %s155 = sphi 0, %s154
      %s171 = sphi 0, %s155
    $region4: #{vdsr_forward.1} parent=1 // loop_header_branch
      %17 = sbr.rel (%p15) target = $region8
    $region5: #{vdsr_forward.1} parent=1 // loop_body
      %s19 = ssub.s32 %s14, 1
      %s20 = ssub.s32 %s14, 2
      %s27 = sadd.s32 1, %s22
      %p28 = scmp.ge.s32.totalorder %s27, 20
      %s29 = scalar_select %p28, 0, %s27
      %s30 = sadd.s32 1, %s21
      %s31 = scalar_select %p28, %s30, %s21
      %p32 = scmp.ge.s32.totalorder %s31, 2
      %s33 = scalar_select %p32, 0, %s31
      %s34 = ssub.s32 %s21, %s33
      %p35 = scmp.eq.s32.totalorder %s34, 0
      %s37 = sadd.s32 %s36, 1
      %s38 = scalar_select %p35, %s36, %s37
      %p41 = pneg %p35
      %p42 = scmp.eq.s32.totalorder %s14, 39
      %p43 = por %p41, %p42
      %p44 = scmp.ne.s32.totalorder %s36, %s39
      %p45 = scmp.eq.s32.totalorder %s14, 0
      %p46 = por %p44, %p45
      %p47 = scmp.ne.s32.totalorder %s36, %s39
      %p48 = scmp.eq.s32.totalorder %s19, 39
      %p49 = por %p47, %p48
      %p50 = scmp.ne.s32.totalorder %s39, %s40
      %p51 = scmp.eq.s32.totalorder %s19, 0
      %p52 = por %p50, %p51
      %p53 = scmp.ne.s32.totalorder %s39, %s40
      %p54 = scmp.eq.s32.totalorder %s20, 39
      %p55 = por %p53, %p54
      %p57 = scmp.ne.s32.totalorder %s40, %s56
      %p58 = scmp.eq.s32.totalorder %s20, 0
      %p59 = por %p57, %p58
      %s60 = ssub.s32 %s21, %s33
      %p61 = scmp.eq.s32.totalorder %s60, 0
      %s63 = sadd.s32 %s62, 1
      %s64 = scalar_select %p61, %s62, %s63
      %p67 = pneg %p61
      %p68 = scmp.eq.s32.totalorder %s14, 39
      %p69 = por %p67, %p68
      %p70 = scmp.ne.s32.totalorder %s62, %s65
      %p71 = scmp.eq.s32.totalorder %s14, 0
      %p72 = por %p70, %p71
      %p73 = scmp.ne.s32.totalorder %s62, %s65
      %p74 = scmp.eq.s32.totalorder %s19, 39
      %p75 = por %p73, %p74
      %p76 = scmp.ne.s32.totalorder %s65, %s66
      %p77 = scmp.eq.s32.totalorder %s19, 0
      %p78 = por %p76, %p77
      %p79 = scmp.ne.s32.totalorder %s65, %s66
      %p80 = scmp.eq.s32.totalorder %s20, 39
      %p81 = por %p79, %p80
      %p83 = scmp.ne.s32.totalorder %s66, %s82
      %p84 = scmp.eq.s32.totalorder %s20, 0
      %p85 = por %p83, %p84
      %s87 = sadd.s32 %s86, 1
      %p90 = scmp.eq.s32.totalorder %s14, 39
      %p91 = scmp.ne.s32.totalorder %s86, %s88
      %p92 = scmp.eq.s32.totalorder %s14, 0
      %p93 = por %p91, %p92
      %p94 = scmp.ne.s32.totalorder %s86, %s88
      %p95 = scmp.eq.s32.totalorder %s19, 39
      %p96 = por %p94, %p95
      %p97 = scmp.ne.s32.totalorder %s88, %s89
      %p98 = scmp.eq.s32.totalorder %s19, 0
      %p99 = por %p97, %p98
      %p100 = scmp.ne.s32.totalorder %s88, %s89
      %p101 = scmp.eq.s32.totalorder %s20, 39
      %p102 = por %p100, %p101
      %p104 = scmp.ne.s32.totalorder %s89, %s103
      %p105 = scmp.eq.s32.totalorder %s20, 0
      %p106 = por %p104, %p105
      %s108 = sadd.s32 %s107, 1
      %p111 = scmp.eq.s32.totalorder %s14, 39
      %p112 = scmp.ne.s32.totalorder %s107, %s109
      %p113 = scmp.eq.s32.totalorder %s14, 0
      %p114 = por %p112, %p113
      %p115 = scmp.ne.s32.totalorder %s107, %s109
      %p116 = scmp.eq.s32.totalorder %s19, 39
      %p117 = por %p115, %p116
      %p118 = scmp.ne.s32.totalorder %s109, %s110
      %p119 = scmp.eq.s32.totalorder %s19, 0
      %p120 = por %p118, %p119
      %p121 = scmp.ne.s32.totalorder %s109, %s110
      %p122 = scmp.eq.s32.totalorder %s20, 39
      %p123 = por %p121, %p122
      %p125 = scmp.ne.s32.totalorder %s110, %s124
      %p126 = scmp.eq.s32.totalorder %s20, 0
      %p127 = por %p125, %p126
      %s129 = sadd.s32 %s128, 1
      %p132 = scmp.eq.s32.totalorder %s14, 39
      %p133 = scmp.ne.s32.totalorder %s128, %s130
      %p134 = scmp.eq.s32.totalorder %s14, 0
      %p135 = por %p133, %p134
      %p136 = scmp.ne.s32.totalorder %s128, %s130
      %p137 = scmp.eq.s32.totalorder %s19, 39
      %p138 = por %p136, %p137
      %p139 = scmp.ne.s32.totalorder %s130, %s131
      %p140 = scmp.eq.s32.totalorder %s19, 0
      %p141 = por %p139, %p140
      %p142 = scmp.ne.s32.totalorder %s130, %s131
      %p143 = scmp.eq.s32.totalorder %s20, 39
      %p144 = por %p142, %p143
      %p146 = scmp.ne.s32.totalorder %s131, %s145
      %p147 = scmp.eq.s32.totalorder %s20, 0
      %p148 = por %p146, %p147
      %s149 = ssub.s32 %s21, %s33
      %p150 = scmp.eq.s32.totalorder %s149, 0
      %s152 = sadd.s32 %s151, 1
      %s153 = scalar_select %p150, %s151, %s152
      %p156 = pneg %p150
      %p157 = scmp.eq.s32.totalorder %s14, 39
      %p158 = por %p156, %p157
      %p159 = scmp.ne.s32.totalorder %s151, %s154
      %p160 = scmp.eq.s32.totalorder %s14, 0
      %p161 = por %p159, %p160
      %p162 = scmp.ne.s32.totalorder %s151, %s154
      %p163 = scmp.eq.s32.totalorder %s19, 39
      %p164 = por %p162, %p163
      %p165 = scmp.ne.s32.totalorder %s154, %s155
      %p166 = scmp.eq.s32.totalorder %s19, 0
      %p167 = por %p165, %p166
      %p168 = scmp.ne.s32.totalorder %s154, %s155
      %p169 = scmp.eq.s32.totalorder %s20, 39
      %p170 = por %p168, %p169
      %p172 = scmp.ne.s32.totalorder %s155, %s171
      %p173 = scmp.eq.s32.totalorder %s20, 0
      %p174 = por %p172, %p173
      %p175 = scmp.le.s32.totalorder 1, %s14
      %p176 = scmp.lt.s32.totalorder %s14, 41
      %p177 = pnand %p175, %p176
      %p178 = pneg %p177
      // Predicated region
      $region9: #{vdsr_forward.1} parent=5 // pred_check
        _
      $region10: #{vdsr_forward.1} parent=5 // pred_check_branch
        %180 = sbr.rel (%p177) target = $region12
      $region11: #{vdsr_forward.1} parent=5 // pred_region
        %s181 = ssub.s32 %s14, 1
        // Predicated region
        $region13: #{vdsr_forward.1} parent=11 // pred_check
          %p182 = pneg %p99
        $region14: #{vdsr_forward.1} parent=11 // pred_check_branch
          %184 = sbr.rel (%p182) target = $region16
        $region15: #{vdsr_forward.1} parent=11 // pred_region
          _
        $region16: #{vdsr_forward.1} parent=11 // pred_fallthru
          _
        // Predicated region
        $region17: #{vdsr_forward.1} parent=11 // pred_check
          %p185 = pneg %p120
        $region18: #{vdsr_forward.1} parent=11 // pred_check_branch
          %187 = sbr.rel (%p185) target = $region20
        $region19: #{vdsr_forward.1} parent=11 // pred_region
          _
        $region20: #{vdsr_forward.1} parent=11 // pred_fallthru
          _
        // Predicated region
        $region21: #{vdsr_forward.1} parent=11 // pred_check
          %p188 = pneg %p141
        $region22: #{vdsr_forward.1} parent=11 // pred_check_branch
          %190 = sbr.rel (%p188) target = $region24
        $region23: #{vdsr_forward.1} parent=11 // pred_region
          _
        $region24: #{vdsr_forward.1} parent=11 // pred_fallthru
          _
      $region12: #{vdsr_forward.1} parent=5 // pred_fallthru
        _
      %p191 = scmp.lt.s32.totalorder %s14, 40
      // Predicated region
      $region25: #{vdsr_forward.1} parent=5 // pred_check
        %p192 = pneg %p191
      $region26: #{vdsr_forward.1} parent=5 // pred_check_branch
        %194 = sbr.rel (%p192) target = $region28
      $region27: #{vdsr_forward.1} parent=5 // pred_region
        // Predicated region
        $region29: #{vdsr_forward.1} parent=27 // pred_check
          %p195 = pneg %p46
        $region30: #{vdsr_forward.1} parent=27 // pred_check_branch
          %197 = sbr.rel (%p195) target = $region32
        $region31: #{vdsr_forward.1} parent=27 // pred_region
          %p198 = scmp.lt.s32.totalorder %s21, 1
          %s199 = scalar_select %p198, %s21, 1
          %s200 = smul.addr %s199, 54
          %s201 = smul.addr %s200, 4
          %s202 = scalar_lea.vmem %s0, %s201
        $region32: #{vdsr_forward.1} parent=27 // pred_fallthru
          _
        // Predicated region
        $region33: #{vdsr_forward.1} parent=27 // pred_check
          %p203 = pneg %p72
        $region34: #{vdsr_forward.1} parent=27 // pred_check_branch
          %205 = sbr.rel (%p203) target = $region36
        $region35: #{vdsr_forward.1} parent=27 // pred_region
          %p206 = scmp.lt.s32.totalorder %s21, 1
          %s207 = scalar_select %p206, %s21, 1
          %s208 = smul.addr %s207, 2
          %s209 = smul.addr %s208, 8
          %s210 = scalar_lea.vmem %s1, %s209
        $region36: #{vdsr_forward.1} parent=27 // pred_fallthru
          _
      $region28: #{vdsr_forward.1} parent=5 // pred_fallthru
        _
      %p211 = scmp.le.s32.totalorder 1, %s14
      %p212 = scmp.lt.s32.totalorder %s14, 41
      %p213 = pnand %p211, %p212
      %p214 = pneg %p213
      // Predicated region
      $region37: #{vdsr_forward.1} parent=5 // pred_check
        _
      $region38: #{vdsr_forward.1} parent=5 // pred_check_branch
        %216 = sbr.rel (%p213) target = $region40
      $region39: #{vdsr_forward.1} parent=5 // pred_region
        %s217 = ssub.s32 %s14, 1
        %p218 = scmp.lt.s32.totalorder %s23, 1
        %s219 = scalar_select %p218, %s23, 1
        %s220 = smul.addr %s219, 54
        %s221 = smul.addr %s220, 4
        %s222 = scalar_lea.vmem %s0, %s221
        %p223 = pneg %p52
        %p224 = pneg %p49
        %p225 = scmp.lt.s32.totalorder %s23, 1
        %s226 = scalar_select %p225, %s23, 1
        %s227 = smul.addr %s226, 2
        %s228 = smul.addr %s227, 8
        %s229 = scalar_lea.vmem %s1, %s228
        %p230 = pneg %p78
        %p231 = pneg %p75
        %p232 = pneg %p99
        %p233 = pneg %p96
        %p234 = pneg %p120
        %p235 = pneg %p117
        %p236 = pneg %p141
        %p237 = pneg %p138
        %p238 = pneg %p167
        %p239 = pneg %p164
        %s240 = sand.u32 %s154, 1
        %s241 = scalar_lea.sflag [#allocation4], %s240
        %s242 = sand.u32 %s154, 1
        %s243 = smul.addr %s242, 16
        %s244 = scalar_lea.vmem [#allocation3], %s243
        %p245 = scmp.lt.s32.totalorder %s23, 1
        %s246 = scalar_select %p245, %s23, 1
        %s247 = smul.addr %s246, 54
        %s248 = smul.addr %s247, 4
        %s249 = scalar_lea.vmem %s0, %s248
        %p250 = scmp.lt.s32.totalorder %s23, 1
        %s251 = scalar_select %p250, %s23, 1
        %s252 = smul.addr %s251, 2
        %s253 = smul.addr %s252, 8
        %s254 = scalar_lea.vmem %s1, %s253
        %p256 = scmp.eq.s32.totalorder %s24, 0
        // Predicated region
        $region41: #{vdsr_forward.1} parent=39 // pred_check
          %p257 = pneg %p256
        $region42: #{vdsr_forward.1} parent=39 // pred_check_branch
          %259 = sbr.rel (%p257) target = $region44
        $region43: #{vdsr_forward.1} parent=39 // pred_region
          %vm260 = vcmask 519168
          %261 = vst.msk [vmem:[#allocation2] sm:$0xf] %vm260, 0
          %262 = vst.msk [vmem:[#allocation2 + $0x4] sm:$0xf] %vm260, 0
          %vm263 = vcmask 516096
          %264 = vst.msk [vmem:[#allocation2 + $0x8] sm:$0x1] %vm263, 0
          %265 = vst.msk [vmem:[#allocation2 + $0xc] sm:$0xf] %vm260, 0
          %266 = vst.msk [vmem:[#allocation2 + $0x10] sm:$0xf] %vm260, 0
          %267 = vst.msk [vmem:[#allocation2 + $0x14] sm:$0x1] %vm263, 0
          %268 = vst.msk [vmem:[#allocation2 + $0x18] sm:$0xf] %vm260, 0
          %269 = vst.msk [vmem:[#allocation2 + $0x1c] sm:$0xf] %vm260, 0
          %270 = vst.msk [vmem:[#allocation2 + $0x20] sm:$0x1] %vm263, 0
          %271 = vst.msk [vmem:[#allocation2 + $0x24] sm:$0xf] %vm260, 0
          %272 = vst.msk [vmem:[#allocation2 + $0x28] sm:$0xf] %vm260, 0
          %273 = vst.msk [vmem:[#allocation2 + $0x2c] sm:$0x1] %vm263, 0
          %274 = vst.msk [vmem:[#allocation2 + $0x30] sm:$0xf] %vm260, 0
          %275 = vst.msk [vmem:[#allocation2 + $0x34] sm:$0xf] %vm260, 0
          %276 = vst.msk [vmem:[#allocation2 + $0x38] sm:$0x1] %vm263, 0
          %277 = vst.msk [vmem:[#allocation2 + $0x3c] sm:$0xf] %vm260, 0
          %278 = vst.msk [vmem:[#allocation2 + $0x40] sm:$0xf] %vm260, 0
          %279 = vst.msk [vmem:[#allocation2 + $0x44] sm:$0x1] %vm263, 0
          %280 = vst.msk [vmem:[#allocation2 + $0x48] sm:$0xf] %vm260, 0
          %281 = vst.msk [vmem:[#allocation2 + $0x4c] sm:$0xf] %vm260, 0
          %282 = vst.msk [vmem:[#allocation2 + $0x50] sm:$0x1] %vm263, 0
          %283 = vst.msk [vmem:[#allocation2 + $0x54] sm:$0xf] %vm260, 0
          %284 = vst.msk [vmem:[#allocation2 + $0x58] sm:$0xf] %vm260, 0
          %285 = vst.msk [vmem:[#allocation2 + $0x5c] sm:$0x1] %vm263, 0
          %286 = vst.msk [vmem:[#allocation2 + $0x60] sm:$0xf] %vm260, 0
          %287 = vst.msk [vmem:[#allocation2 + $0x64] sm:$0xf] %vm260, 0
          %288 = vst.msk [vmem:[#allocation2 + $0x68] sm:$0x1] %vm263, 0
          %289 = vst.msk [vmem:[#allocation2 + $0x6c] sm:$0xf] %vm260, 0
          %290 = vst.msk [vmem:[#allocation2 + $0x70] sm:$0xf] %vm260, 0
          %291 = vst.msk [vmem:[#allocation2 + $0x74] sm:$0x1] %vm263, 0
          %292 = vst.msk [vmem:[#allocation2 + $0x78] sm:$0xf] %vm260, 0
          %293 = vst.msk [vmem:[#allocation2 + $0x7c] sm:$0xf] %vm260, 0
          %294 = vst.msk [vmem:[#allocation2 + $0x80] sm:$0x1] %vm263, 0
          %295 = vst.msk [vmem:[#allocation2 + $0x84] sm:$0xf] %vm260, 0
          %296 = vst.msk [vmem:[#allocation2 + $0x88] sm:$0xf] %vm260, 0
          %297 = vst.msk [vmem:[#allocation2 + $0x8c] sm:$0x1] %vm263, 0
          %298 = vst.msk [vmem:[#allocation2 + $0x90] sm:$0xf] %vm260, 0
          %299 = vst.msk [vmem:[#allocation2 + $0x94] sm:$0xf] %vm260, 0
          %300 = vst.msk [vmem:[#allocation2 + $0x98] sm:$0x1] %vm263, 0
          %301 = vst.msk [vmem:[#allocation2 + $0x9c] sm:$0xf] %vm260, 0
          %302 = vst.msk [vmem:[#allocation2 + $0xa0] sm:$0xf] %vm260, 0
          %303 = vst.msk [vmem:[#allocation2 + $0xa4] sm:$0x1] %vm263, 0
          %304 = vst.msk [vmem:[#allocation2 + $0xa8] sm:$0xf] %vm260, 0
          %305 = vst.msk [vmem:[#allocation2 + $0xac] sm:$0xf] %vm260, 0
          %306 = vst.msk [vmem:[#allocation2 + $0xb0] sm:$0x1] %vm263, 0
          %307 = vst.msk [vmem:[#allocation2 + $0xb4] sm:$0xf] %vm260, 0
          %308 = vst.msk [vmem:[#allocation2 + $0xb8] sm:$0xf] %vm260, 0
          %309 = vst.msk [vmem:[#allocation2 + $0xbc] sm:$0x1] %vm263, 0
          %310 = vst.msk [vmem:[#allocation2 + $0xc0] sm:$0xf] %vm260, 0
          %311 = vst.msk [vmem:[#allocation2 + $0xc4] sm:$0xf] %vm260, 0
          %312 = vst.msk [vmem:[#allocation2 + $0xc8] sm:$0x1] %vm263, 0
          %313 = vst.msk [vmem:[#allocation2 + $0xcc] sm:$0xf] %vm260, 0
          %314 = vst.msk [vmem:[#allocation2 + $0xd0] sm:$0xf] %vm260, 0
          %315 = vst.msk [vmem:[#allocation2 + $0xd4] sm:$0x1] %vm263, 0
          %316 = vst.msk [vmem:[#allocation2 + $0xd8] sm:$0xf] %vm260, 0
          %317 = vst.msk [vmem:[#allocation2 + $0xdc] sm:$0xf] %vm260, 0
          %318 = vst.msk [vmem:[#allocation2 + $0xe0] sm:$0x1] %vm263, 0
          %319 = vst.msk [vmem:[#allocation2 + $0xe4] sm:$0xf] %vm260, 0
          %320 = vst.msk [vmem:[#allocation2 + $0xe8] sm:$0xf] %vm260, 0
          %321 = vst.msk [vmem:[#allocation2 + $0xec] sm:$0x1] %vm263, 0
          %322 = vst.msk [vmem:[#allocation2 + $0xf0] sm:$0xf] %vm260, 0
          %323 = vst.msk [vmem:[#allocation2 + $0xf4] sm:$0xf] %vm260, 0
          %324 = vst.msk [vmem:[#allocation2 + $0xf8] sm:$0x1] %vm263, 0
          %325 = vst.msk [vmem:[#allocation2 + $0xfc] sm:$0xf] %vm260, 0
          %326 = vst.msk [vmem:[#allocation2 + $0x100] sm:$0xf] %vm260, 0
          %327 = vst.msk [vmem:[#allocation2 + $0x104] sm:$0x1] %vm263, 0
          %328 = vst.msk [vmem:[#allocation2 + $0x108] sm:$0xf] %vm260, 0
          %329 = vst.msk [vmem:[#allocation2 + $0x10c] sm:$0xf] %vm260, 0
          %330 = vst.msk [vmem:[#allocation2 + $0x110] sm:$0x1] %vm263, 0
          %331 = vst.msk [vmem:[#allocation2 + $0x114] sm:$0xf] %vm260, 0
          %332 = vst.msk [vmem:[#allocation2 + $0x118] sm:$0xf] %vm260, 0
          %333 = vst.msk [vmem:[#allocation2 + $0x11c] sm:$0x1] %vm263, 0
          %334 = vst.msk [vmem:[#allocation2 + $0x120] sm:$0xf] %vm260, 0
          %335 = vst.msk [vmem:[#allocation2 + $0x124] sm:$0xf] %vm260, 0
          %336 = vst.msk [vmem:[#allocation2 + $0x128] sm:$0x1] %vm263, 0
          %337 = vst.msk [vmem:[#allocation2 + $0x12c] sm:$0xf] %vm260, 0
          %338 = vst.msk [vmem:[#allocation2 + $0x130] sm:$0xf] %vm260, 0
          %339 = vst.msk [vmem:[#allocation2 + $0x134] sm:$0x1] %vm263, 0
          %340 = vst.msk [vmem:[#allocation2 + $0x138] sm:$0xf] %vm260, 0
          %341 = vst.msk [vmem:[#allocation2 + $0x13c] sm:$0xf] %vm260, 0
          %342 = vst.msk [vmem:[#allocation2 + $0x140] sm:$0x1] %vm263, 0
          %343 = vst.msk [vmem:[#allocation2 + $0x144] sm:$0xf] %vm260, 0
          %344 = vst.msk [vmem:[#allocation2 + $0x148] sm:$0xf] %vm260, 0
          %345 = vst.msk [vmem:[#allocation2 + $0x14c] sm:$0x1] %vm263, 0
          %346 = vst.msk [vmem:[#allocation2 + $0x150] sm:$0xf] %vm260, 0
          %347 = vst.msk [vmem:[#allocation2 + $0x154] sm:$0xf] %vm260, 0
          %348 = vst.msk [vmem:[#allocation2 + $0x158] sm:$0x1] %vm263, 0
          %349 = vst.msk [vmem:[#allocation2 + $0x15c] sm:$0xf] %vm260, 0
          %350 = vst.msk [vmem:[#allocation2 + $0x160] sm:$0xf] %vm260, 0
          %351 = vst.msk [vmem:[#allocation2 + $0x164] sm:$0x1] %vm263, 0
          %352 = vst.msk [vmem:[#allocation2 + $0x168] sm:$0xf] %vm260, 0
          %353 = vst.msk [vmem:[#allocation2 + $0x16c] sm:$0xf] %vm260, 0
          %354 = vst.msk [vmem:[#allocation2 + $0x170] sm:$0x1] %vm263, 0
          %355 = vst.msk [vmem:[#allocation2 + $0x174] sm:$0xf] %vm260, 0
          %356 = vst.msk [vmem:[#allocation2 + $0x178] sm:$0xf] %vm260, 0
          %357 = vst.msk [vmem:[#allocation2 + $0x17c] sm:$0x1] %vm263, 0
          %358 = vst.msk [vmem:[#allocation2 + $0x180] sm:$0xf] %vm260, 0
          %359 = vst.msk [vmem:[#allocation2 + $0x184] sm:$0xf] %vm260, 0
          %360 = vst.msk [vmem:[#allocation2 + $0x188] sm:$0x1] %vm263, 0
          %361 = vst.msk [vmem:[#allocation2 + $0x18c] sm:$0xf] %vm260, 0
          %362 = vst.msk [vmem:[#allocation2 + $0x190] sm:$0xf] %vm260, 0
          %363 = vst.msk [vmem:[#allocation2 + $0x194] sm:$0x1] %vm263, 0
          %364 = vst.msk [vmem:[#allocation2 + $0x198] sm:$0xf] %vm260, 0
          %365 = vst.msk [vmem:[#allocation2 + $0x19c] sm:$0xf] %vm260, 0
          %366 = vst.msk [vmem:[#allocation2 + $0x1a0] sm:$0x1] %vm263, 0
          %367 = vst.msk [vmem:[#allocation2 + $0x1a4] sm:$0xf] %vm260, 0
          %368 = vst.msk [vmem:[#allocation2 + $0x1a8] sm:$0xf] %vm260, 0
          %369 = vst.msk [vmem:[#allocation2 + $0x1ac] sm:$0x1] %vm263, 0
          %v370 = vld [vmem:[%s2] sm:$0xf]
          %v371 = vld [vmem:[%s2 + $0x4] sm:$0xf]
          %v372 = vld [vmem:[%s2 + $0x8] sm:$0xf]
          %v373 = vld [vmem:[%s2 + $0xc] sm:$0xf]
          %v374 = vld [vmem:[%s2 + $0x10] sm:$0xf]
          %v375 = vld [vmem:[%s2 + $0x14] sm:$0xf]
          %v376 = vld [vmem:[%s2 + $0x18] sm:$0xf]
          %v377 = vld [vmem:[%s2 + $0x1c] sm:$0xf]
          %v378 = vld [vmem:[%s2 + $0x20] sm:$0xf]
          %v379 = vld [vmem:[%s249] sm:$0xf]
          %v380 = vld [vmem:[%s249 + $0x4] sm:$0xf]
          %v381 = vld [vmem:[%s249 + $0xc] sm:$0xf]
          %v382 = vld [vmem:[%s249 + $0x10] sm:$0xf]
          %v383 = vld [vmem:[%s249 + $0x18] sm:$0xf]
          %v384 = vld [vmem:[%s249 + $0x1c] sm:$0xf]
          %v385 = vld [vmem:[%s249 + $0x24] sm:$0xf]
          %v386 = vld [vmem:[%s249 + $0x28] sm:$0xf]
          %v387 = vld [vmem:[%s249 + $0x30] sm:$0xf]
          %v388 = vld [vmem:[%s249 + $0x34] sm:$0xf]
          %v389 = vld [vmem:[%s249 + $0x3c] sm:$0xf]
          %v390 = vld [vmem:[%s249 + $0x40] sm:$0xf]
          %v391 = vld [vmem:[%s249 + $0x48] sm:$0xf]
          %v392 = vld [vmem:[%s249 + $0x4c] sm:$0xf]
          %v393 = vld [vmem:[%s249 + $0x54] sm:$0xf]
          %v394 = vld [vmem:[%s249 + $0x58] sm:$0xf]
          %v395 = vld [vmem:[%s249 + $0x60] sm:$0xf]
          %v396 = vld [vmem:[%s249 + $0x64] sm:$0xf]
          %v397 = vld [vmem:[%s249 + $0x6c] sm:$0xf]
          %v398 = vld [vmem:[%s249 + $0x70] sm:$0xf]
          %v399 = vld [vmem:[%s249 + $0x78] sm:$0xf]
          %v400 = vld [vmem:[%s249 + $0x7c] sm:$0xf]
          %v401 = vld [vmem:[%s249 + $0x84] sm:$0xf]
          %v402 = vld [vmem:[%s249 + $0x88] sm:$0xf]
          %v403 = vld [vmem:[%s249 + $0x90] sm:$0xf]
          %v404 = vld [vmem:[%s249 + $0x94] sm:$0xf]
          %v405 = vld [vmem:[%s249 + $0x9c] sm:$0xf]
          %v406 = vld [vmem:[%s249 + $0xa0] sm:$0xf]
          %v407 = vld [vmem:[%s249 + $0xa8] sm:$0xf]
          %v408 = vld [vmem:[%s249 + $0xac] sm:$0xf]
          %v409 = vld [vmem:[%s249 + $0xb4] sm:$0xf]
          %v410 = vld [vmem:[%s249 + $0xb8] sm:$0xf]
          %v411 = vld [vmem:[%s249 + $0x8] sm:$0x1]
          %v412 = vld [vmem:[%s249 + $0x14] sm:$0x1]
          %v413 = vld [vmem:[%s249 + $0x20] sm:$0x1]
          %v414 = vld [vmem:[%s249 + $0x2c] sm:$0x1]
          %v415 = vld [vmem:[%s249 + $0x38] sm:$0x1]
          %v416 = vld [vmem:[%s249 + $0x44] sm:$0x1]
          %v417 = vld [vmem:[%s249 + $0x50] sm:$0x1]
          %v418 = vld [vmem:[%s249 + $0x5c] sm:$0x1]
          %v419 = vld [vmem:[%s249 + $0x68] sm:$0x1]
          %v420 = vld [vmem:[%s249 + $0x74] sm:$0x1]
          %v421 = vld [vmem:[%s249 + $0x80] sm:$0x1]
          %v422 = vld [vmem:[%s249 + $0x8c] sm:$0x1]
          %v423 = vld [vmem:[%s249 + $0x98] sm:$0x1]
          %v424 = vld [vmem:[%s249 + $0xa4] sm:$0x1]
          %v425 = vld [vmem:[%s249 + $0xb0] sm:$0x1]
          %v426 = vld [vmem:[%s249 + $0xbc] sm:$0x1]
          %v427 = vld [vmem:[%s249] sm:$0xe]
          %v428 = vld [vmem:[%s249 + $0xc] sm:$0xe]
          %v429 = vld [vmem:[%s249 + $0x18] sm:$0xe]
          %v430 = vld [vmem:[%s249 + $0x24] sm:$0xe]
          %v431 = vld [vmem:[%s249 + $0x30] sm:$0xe]
          %v432 = vld [vmem:[%s249 + $0x3c] sm:$0xe]
          %v433 = vld [vmem:[%s249 + $0x48] sm:$0xe]
          %v434 = vld [vmem:[%s249 + $0x54] sm:$0xe]
          %v435 = vld [vmem:[%s249 + $0x60] sm:$0xe]
          %v436 = vld [vmem:[%s249 + $0x6c] sm:$0xe]
          %v437 = vld [vmem:[%s249 + $0x78] sm:$0xe]
          %v438 = vld [vmem:[%s249 + $0x84] sm:$0xe]
          %v439 = vld [vmem:[%s249 + $0x90] sm:$0xe]
          %v440 = vld [vmem:[%s249 + $0x9c] sm:$0xe]
          %v441 = vld [vmem:[%s249 + $0xa8] sm:$0xe]
          %v442 = vld [vmem:[%s249 + $0xb4] sm:$0xe]
          %s443 = scalar_lea.vmem %s249, 12
          %v444 = vld [vmem:[%s443] sm:$0xf]
          %v445 = vld [vmem:[%s443 + $0x4] sm:$0xf]
          %v446 = vld [vmem:[%s443 + $0xc] sm:$0xf]
          %v447 = vld [vmem:[%s443 + $0x10] sm:$0xf]
          %v448 = vld [vmem:[%s443 + $0x18] sm:$0xf]
          %v449 = vld [vmem:[%s443 + $0x1c] sm:$0xf]
          %v450 = vld [vmem:[%s443 + $0x24] sm:$0xf]
          %v451 = vld [vmem:[%s443 + $0x28] sm:$0xf]
          %v452 = vld [vmem:[%s443 + $0x30] sm:$0xf]
          %v453 = vld [vmem:[%s443 + $0x34] sm:$0xf]
          %v454 = vld [vmem:[%s443 + $0x3c] sm:$0xf]
          %v455 = vld [vmem:[%s443 + $0x40] sm:$0xf]
          %v456 = vld [vmem:[%s443 + $0x48] sm:$0xf]
          %v457 = vld [vmem:[%s443 + $0x4c] sm:$0xf]
          %v458 = vld [vmem:[%s443 + $0x54] sm:$0xf]
          %v459 = vld [vmem:[%s443 + $0x58] sm:$0xf]
          %v460 = vld [vmem:[%s443 + $0x60] sm:$0xf]
          %v461 = vld [vmem:[%s443 + $0x64] sm:$0xf]
          %v462 = vld [vmem:[%s443 + $0x6c] sm:$0xf]
          %v463 = vld [vmem:[%s443 + $0x70] sm:$0xf]
          %v464 = vld [vmem:[%s443 + $0x78] sm:$0xf]
          %v465 = vld [vmem:[%s443 + $0x7c] sm:$0xf]
          %v466 = vld [vmem:[%s443 + $0x84] sm:$0xf]
          %v467 = vld [vmem:[%s443 + $0x88] sm:$0xf]
          %v468 = vld [vmem:[%s443 + $0x90] sm:$0xf]
          %v469 = vld [vmem:[%s443 + $0x94] sm:$0xf]
          %v470 = vld [vmem:[%s443 + $0x9c] sm:$0xf]
          %v471 = vld [vmem:[%s443 + $0xa0] sm:$0xf]
          %v472 = vld [vmem:[%s443 + $0xa8] sm:$0xf]
          %v473 = vld [vmem:[%s443 + $0xac] sm:$0xf]
          %v474 = vld [vmem:[%s443 + $0xb4] sm:$0xf]
          %v475 = vld [vmem:[%s443 + $0xb8] sm:$0xf]
          %v476 = vld [vmem:[%s443 + $0x8] sm:$0x1]
          %v477 = vld [vmem:[%s443 + $0x14] sm:$0x1]
          %v478 = vld [vmem:[%s443 + $0x20] sm:$0x1]
          %v479 = vld [vmem:[%s443 + $0x2c] sm:$0x1]
          %v480 = vld [vmem:[%s443 + $0x38] sm:$0x1]
          %v481 = vld [vmem:[%s443 + $0x44] sm:$0x1]
          %v482 = vld [vmem:[%s443 + $0x50] sm:$0x1]
          %v483 = vld [vmem:[%s443 + $0x5c] sm:$0x1]
          %v484 = vld [vmem:[%s443 + $0x68] sm:$0x1]
          %v485 = vld [vmem:[%s443 + $0x74] sm:$0x1]
          %v486 = vld [vmem:[%s443 + $0x80] sm:$0x1]
          %v487 = vld [vmem:[%s443 + $0x8c] sm:$0x1]
          %v488 = vld [vmem:[%s443 + $0x98] sm:$0x1]
          %v489 = vld [vmem:[%s443 + $0xa4] sm:$0x1]
          %v490 = vld [vmem:[%s443 + $0xb0] sm:$0x1]
          %v491 = vld [vmem:[%s443 + $0xbc] sm:$0x1]
          %v492 = vld [vmem:[%s443] sm:$0xe]
          %v493 = vld [vmem:[%s443 + $0xc] sm:$0xe]
          %v494 = vld [vmem:[%s443 + $0x18] sm:$0xe]
          %v495 = vld [vmem:[%s443 + $0x24] sm:$0xe]
          %v496 = vld [vmem:[%s443 + $0x30] sm:$0xe]
          %v497 = vld [vmem:[%s443 + $0x3c] sm:$0xe]
          %v498 = vld [vmem:[%s443 + $0x48] sm:$0xe]
          %v499 = vld [vmem:[%s443 + $0x54] sm:$0xe]
          %v500 = vld [vmem:[%s443 + $0x60] sm:$0xe]
          %v501 = vld [vmem:[%s443 + $0x6c] sm:$0xe]
          %v502 = vld [vmem:[%s443 + $0x78] sm:$0xe]
          %v503 = vld [vmem:[%s443 + $0x84] sm:$0xe]
          %v504 = vld [vmem:[%s443 + $0x90] sm:$0xe]
          %v505 = vld [vmem:[%s443 + $0x9c] sm:$0xe]
          %v506 = vld [vmem:[%s443 + $0xa8] sm:$0xe]
          %v507 = vld [vmem:[%s443 + $0xb4] sm:$0xe]
          %s508 = scalar_lea.vmem %s249, 24
          %v509 = vld [vmem:[%s508] sm:$0xf]
          %v510 = vld [vmem:[%s508 + $0x4] sm:$0xf]
          %v511 = vld [vmem:[%s508 + $0xc] sm:$0xf]
          %v512 = vld [vmem:[%s508 + $0x10] sm:$0xf]
          %v513 = vld [vmem:[%s508 + $0x18] sm:$0xf]
          %v514 = vld [vmem:[%s508 + $0x1c] sm:$0xf]
          %v515 = vld [vmem:[%s508 + $0x24] sm:$0xf]
          %v516 = vld [vmem:[%s508 + $0x28] sm:$0xf]
          %v517 = vld [vmem:[%s508 + $0x30] sm:$0xf]
          %v518 = vld [vmem:[%s508 + $0x34] sm:$0xf]
          %v519 = vld [vmem:[%s508 + $0x3c] sm:$0xf]
          %v520 = vld [vmem:[%s508 + $0x40] sm:$0xf]
          %v521 = vld [vmem:[%s508 + $0x48] sm:$0xf]
          %v522 = vld [vmem:[%s508 + $0x4c] sm:$0xf]
          %v523 = vld [vmem:[%s508 + $0x54] sm:$0xf]
          %v524 = vld [vmem:[%s508 + $0x58] sm:$0xf]
          %v525 = vld [vmem:[%s508 + $0x60] sm:$0xf]
          %v526 = vld [vmem:[%s508 + $0x64] sm:$0xf]
          %v527 = vld [vmem:[%s508 + $0x6c] sm:$0xf]
          %v528 = vld [vmem:[%s508 + $0x70] sm:$0xf]
          %v529 = vld [vmem:[%s508 + $0x78] sm:$0xf]
          %v530 = vld [vmem:[%s508 + $0x7c] sm:$0xf]
          %v531 = vld [vmem:[%s508 + $0x84] sm:$0xf]
          %v532 = vld [vmem:[%s508 + $0x88] sm:$0xf]
          %v533 = vld [vmem:[%s508 + $0x90] sm:$0xf]
          %v534 = vld [vmem:[%s508 + $0x94] sm:$0xf]
          %v535 = vld [vmem:[%s508 + $0x9c] sm:$0xf]
          %v536 = vld [vmem:[%s508 + $0xa0] sm:$0xf]
          %v537 = vld [vmem:[%s508 + $0xa8] sm:$0xf]
          %v538 = vld [vmem:[%s508 + $0xac] sm:$0xf]
          %v539 = vld [vmem:[%s508 + $0xb4] sm:$0xf]
          %v540 = vld [vmem:[%s508 + $0xb8] sm:$0xf]
          %v541 = vld [vmem:[%s508 + $0x8] sm:$0x1]
          %v542 = vld [vmem:[%s508 + $0x14] sm:$0x1]
          %v543 = vld [vmem:[%s508 + $0x20] sm:$0x1]
          %v544 = vld [vmem:[%s508 + $0x2c] sm:$0x1]
          %v545 = vld [vmem:[%s508 + $0x38] sm:$0x1]
          %v546 = vld [vmem:[%s508 + $0x44] sm:$0x1]
          %v547 = vld [vmem:[%s508 + $0x50] sm:$0x1]
          %v548 = vld [vmem:[%s508 + $0x5c] sm:$0x1]
          %v549 = vld [vmem:[%s508 + $0x68] sm:$0x1]
          %v550 = vld [vmem:[%s508 + $0x74] sm:$0x1]
          %v551 = vld [vmem:[%s508 + $0x80] sm:$0x1]
          %v552 = vld [vmem:[%s508 + $0x8c] sm:$0x1]
          %v553 = vld [vmem:[%s508 + $0x98] sm:$0x1]
          %v554 = vld [vmem:[%s508 + $0xa4] sm:$0x1]
          %v555 = vld [vmem:[%s508 + $0xb0] sm:$0x1]
          %v556 = vld [vmem:[%s508 + $0xbc] sm:$0x1]
          %v557 = vld [vmem:[%s508] sm:$0xe]
          %v558 = vld [vmem:[%s508 + $0xc] sm:$0xe]
          %v559 = vld [vmem:[%s508 + $0x18] sm:$0xe]
          %v560 = vld [vmem:[%s508 + $0x24] sm:$0xe]
          %v561 = vld [vmem:[%s508 + $0x30] sm:$0xe]
          %v562 = vld [vmem:[%s508 + $0x3c] sm:$0xe]
          %v563 = vld [vmem:[%s508 + $0x48] sm:$0xe]
          %v564 = vld [vmem:[%s508 + $0x54] sm:$0xe]
          %v565 = vld [vmem:[%s508 + $0x60] sm:$0xe]
          %v566 = vld [vmem:[%s508 + $0x6c] sm:$0xe]
          %v567 = vld [vmem:[%s508 + $0x78] sm:$0xe]
          %v568 = vld [vmem:[%s508 + $0x84] sm:$0xe]
          %v569 = vld [vmem:[%s508 + $0x90] sm:$0xe]
          %v570 = vld [vmem:[%s508 + $0x9c] sm:$0xe]
          %v571 = vld [vmem:[%s508 + $0xa8] sm:$0xe]
          %v572 = vld [vmem:[%s508 + $0xb4] sm:$0xe]
          %v605 = vunpack.c.l.b16 %v379
          %v606 = vunpack.c.l.b16 %v380
          %v607 = vunpack.c.l.b16 %v381
          %v608 = vunpack.c.l.b16 %v382
          %v609 = vunpack.c.l.b16 %v383
          %v610 = vunpack.c.l.b16 %v384
          %v611 = vunpack.c.l.b16 %v385
          %v612 = vunpack.c.l.b16 %v386
          %v613 = vunpack.c.l.b16 %v387
          %v614 = vunpack.c.l.b16 %v388
          %v615 = vunpack.c.l.b16 %v389
          %v616 = vunpack.c.l.b16 %v390
          %v617 = vunpack.c.l.b16 %v391
          %v618 = vunpack.c.l.b16 %v392
          %v619 = vunpack.c.l.b16 %v393
          %v620 = vunpack.c.l.b16 %v394
          %v621 = vunpack.c.l.b16 %v395
          %v622 = vunpack.c.l.b16 %v396
          %v623 = vunpack.c.l.b16 %v397
          %v624 = vunpack.c.l.b16 %v398
          %v625 = vunpack.c.l.b16 %v399
          %v626 = vunpack.c.l.b16 %v400
          %v627 = vunpack.c.l.b16 %v401
          %v628 = vunpack.c.l.b16 %v402
          %v629 = vunpack.c.l.b16 %v403
          %v630 = vunpack.c.l.b16 %v404
          %v631 = vunpack.c.l.b16 %v405
          %v632 = vunpack.c.l.b16 %v406
          %v633 = vunpack.c.l.b16 %v407
          %v634 = vunpack.c.l.b16 %v408
          %v635 = vunpack.c.l.b16 %v409
          %v636 = vunpack.c.l.b16 %v410
          %v637 = vpack.c.b16 %v606, %v605
          %v638 = vpack.c.b16 %v608, %v607
          %v639 = vpack.c.b16 %v610, %v609
          %v640 = vpack.c.b16 %v612, %v611
          %v641 = vpack.c.b16 %v614, %v613
          %v642 = vpack.c.b16 %v616, %v615
          %v643 = vpack.c.b16 %v618, %v617
          %v644 = vpack.c.b16 %v620, %v619
          %v645 = vpack.c.b16 %v622, %v621
          %v646 = vpack.c.b16 %v624, %v623
          %v647 = vpack.c.b16 %v626, %v625
          %v648 = vpack.c.b16 %v628, %v627
          %v649 = vpack.c.b16 %v630, %v629
          %v650 = vpack.c.b16 %v632, %v631
          %v651 = vpack.c.b16 %v634, %v633
          %v652 = vpack.c.b16 %v636, %v635
          %v669 = vunpack.c.l.b16 %v411
          %v670 = vunpack.c.l.b16 %v412
          %v671 = vunpack.c.l.b16 %v413
          %v672 = vunpack.c.l.b16 %v414
          %v673 = vunpack.c.l.b16 %v415
          %v674 = vunpack.c.l.b16 %v416
          %v675 = vunpack.c.l.b16 %v417
          %v676 = vunpack.c.l.b16 %v418
          %v677 = vunpack.c.l.b16 %v419
          %v678 = vunpack.c.l.b16 %v420
          %v679 = vunpack.c.l.b16 %v421
          %v680 = vunpack.c.l.b16 %v422
          %v681 = vunpack.c.l.b16 %v423
          %v682 = vunpack.c.l.b16 %v424
          %v683 = vunpack.c.l.b16 %v425
          %v684 = vunpack.c.l.b16 %v426
          %v685 = vpack.c.b16 %v669, %v669
          %v686 = vpack.c.b16 %v670, %v670
          %v687 = vpack.c.b16 %v671, %v671
          %v688 = vpack.c.b16 %v672, %v672
          %v689 = vpack.c.b16 %v673, %v673
          %v690 = vpack.c.b16 %v674, %v674
          %v691 = vpack.c.b16 %v675, %v675
          %v692 = vpack.c.b16 %v676, %v676
          %v693 = vpack.c.b16 %v677, %v677
          %v694 = vpack.c.b16 %v678, %v678
          %v695 = vpack.c.b16 %v679, %v679
          %v696 = vpack.c.b16 %v680, %v680
          %v697 = vpack.c.b16 %v681, %v681
          %v698 = vpack.c.b16 %v682, %v682
          %v699 = vpack.c.b16 %v683, %v683
          %v700 = vpack.c.b16 %v684, %v684
          %vm701 = vsmask.f32 7424
          %v703 = vshrl.u32 %v637, 16
          %v705 = vshll.u32 %v637, 16
          %v707 = vrot.slane %v705, 1
          %v708 = vor.u32 %v703, %v707
          %v710 = vshll.u32 %v685, 16
          %v712 = vrot.slane %v710, 1
          %v713 = vsel %vm701, %v708, %v712
          %v715 = vshrl.u32 %v638, 16
          %v717 = vshll.u32 %v638, 16
          %v719 = vrot.slane %v717, 1
          %v720 = vor.u32 %v715, %v719
          %v722 = vshll.u32 %v686, 16
          %v724 = vrot.slane %v722, 1
          %v725 = vsel %vm701, %v720, %v724
          %v727 = vshrl.u32 %v639, 16
          %v729 = vshll.u32 %v639, 16
          %v731 = vrot.slane %v729, 1
          %v732 = vor.u32 %v727, %v731
          %v734 = vshll.u32 %v687, 16
          %v736 = vrot.slane %v734, 1
          %v737 = vsel %vm701, %v732, %v736
          %v739 = vshrl.u32 %v640, 16
          %v741 = vshll.u32 %v640, 16
          %v743 = vrot.slane %v741, 1
          %v744 = vor.u32 %v739, %v743
          %v746 = vshll.u32 %v688, 16
          %v748 = vrot.slane %v746, 1
          %v749 = vsel %vm701, %v744, %v748
          %v751 = vshrl.u32 %v641, 16
          %v753 = vshll.u32 %v641, 16
          %v755 = vrot.slane %v753, 1
          %v756 = vor.u32 %v751, %v755
          %v758 = vshll.u32 %v689, 16
          %v760 = vrot.slane %v758, 1
          %v761 = vsel %vm701, %v756, %v760
          %v763 = vshrl.u32 %v642, 16
          %v765 = vshll.u32 %v642, 16
          %v767 = vrot.slane %v765, 1
          %v768 = vor.u32 %v763, %v767
          %v770 = vshll.u32 %v690, 16
          %v772 = vrot.slane %v770, 1
          %v773 = vsel %vm701, %v768, %v772
          %v775 = vshrl.u32 %v643, 16
          %v777 = vshll.u32 %v643, 16
          %v779 = vrot.slane %v777, 1
          %v780 = vor.u32 %v775, %v779
          %v782 = vshll.u32 %v691, 16
          %v784 = vrot.slane %v782, 1
          %v785 = vsel %vm701, %v780, %v784
          %v787 = vshrl.u32 %v644, 16
          %v789 = vshll.u32 %v644, 16
          %v791 = vrot.slane %v789, 1
          %v792 = vor.u32 %v787, %v791
          %v794 = vshll.u32 %v692, 16
          %v796 = vrot.slane %v794, 1
          %v797 = vsel %vm701, %v792, %v796
          %v799 = vshrl.u32 %v645, 16
          %v801 = vshll.u32 %v645, 16
          %v803 = vrot.slane %v801, 1
          %v804 = vor.u32 %v799, %v803
          %v806 = vshll.u32 %v693, 16
          %v808 = vrot.slane %v806, 1
          %v809 = vsel %vm701, %v804, %v808
          %v811 = vshrl.u32 %v646, 16
          %v813 = vshll.u32 %v646, 16
          %v815 = vrot.slane %v813, 1
          %v816 = vor.u32 %v811, %v815
          %v818 = vshll.u32 %v694, 16
          %v820 = vrot.slane %v818, 1
          %v821 = vsel %vm701, %v816, %v820
          %v823 = vshrl.u32 %v647, 16
          %v825 = vshll.u32 %v647, 16
          %v827 = vrot.slane %v825, 1
          %v828 = vor.u32 %v823, %v827
          %v830 = vshll.u32 %v695, 16
          %v832 = vrot.slane %v830, 1
          %v833 = vsel %vm701, %v828, %v832
          %v835 = vshrl.u32 %v648, 16
          %v837 = vshll.u32 %v648, 16
          %v839 = vrot.slane %v837, 1
          %v840 = vor.u32 %v835, %v839
          %v842 = vshll.u32 %v696, 16
          %v844 = vrot.slane %v842, 1
          %v845 = vsel %vm701, %v840, %v844
          %v847 = vshrl.u32 %v649, 16
          %v849 = vshll.u32 %v649, 16
          %v851 = vrot.slane %v849, 1
          %v852 = vor.u32 %v847, %v851
          %v854 = vshll.u32 %v697, 16
          %v856 = vrot.slane %v854, 1
          %v857 = vsel %vm701, %v852, %v856
          %v859 = vshrl.u32 %v650, 16
          %v861 = vshll.u32 %v650, 16
          %v863 = vrot.slane %v861, 1
          %v864 = vor.u32 %v859, %v863
          %v866 = vshll.u32 %v698, 16
          %v868 = vrot.slane %v866, 1
          %v869 = vsel %vm701, %v864, %v868
          %v871 = vshrl.u32 %v651, 16
          %v873 = vshll.u32 %v651, 16
          %v875 = vrot.slane %v873, 1
          %v876 = vor.u32 %v871, %v875
          %v878 = vshll.u32 %v699, 16
          %v880 = vrot.slane %v878, 1
          %v881 = vsel %vm701, %v876, %v880
          %v883 = vshrl.u32 %v652, 16
          %v885 = vshll.u32 %v652, 16
          %v887 = vrot.slane %v885, 1
          %v888 = vor.u32 %v883, %v887
          %v890 = vshll.u32 %v700, 16
          %v892 = vrot.slane %v890, 1
          %v893 = vsel %vm701, %v888, %v892
          %894 = vrot.lane.b32.xlu0 %v713, 8
          %v895 = vpop.permute.xlu0 %894
          %896 = vrot.lane.b32.xlu0 %v725, 8
          %v897 = vpop.permute.xlu0 %896
          %898 = vrot.lane.b32.xlu0 %v737, 8
          %v899 = vpop.permute.xlu0 %898
          %900 = vrot.lane.b32.xlu0 %v749, 8
          %v901 = vpop.permute.xlu0 %900
          %902 = vrot.lane.b32.xlu0 %v761, 8
          %v903 = vpop.permute.xlu0 %902
          %904 = vrot.lane.b32.xlu0 %v773, 8
          %v905 = vpop.permute.xlu0 %904
          %906 = vrot.lane.b32.xlu0 %v785, 8
          %v907 = vpop.permute.xlu0 %906
          %908 = vrot.lane.b32.xlu0 %v797, 8
          %v909 = vpop.permute.xlu0 %908
          %910 = vrot.lane.b32.xlu0 %v809, 8
          %v911 = vpop.permute.xlu0 %910
          %912 = vrot.lane.b32.xlu0 %v821, 8
          %v913 = vpop.permute.xlu0 %912
          %914 = vrot.lane.b32.xlu0 %v833, 8
          %v915 = vpop.permute.xlu0 %914
          %916 = vrot.lane.b32.xlu0 %v845, 8
          %v917 = vpop.permute.xlu0 %916
          %918 = vrot.lane.b32.xlu0 %v857, 8
          %v919 = vpop.permute.xlu0 %918
          %920 = vrot.lane.b32.xlu0 %v869, 8
          %v921 = vpop.permute.xlu0 %920
          %922 = vrot.lane.b32.xlu0 %v881, 8
          %v923 = vpop.permute.xlu0 %922
          %924 = vrot.lane.b32.xlu0 %v893, 8
          %v925 = vpop.permute.xlu0 %924
          %v942 = vunpack.c.l.b16 %v427
          %v943 = vunpack.c.l.b16 %v428
          %v944 = vunpack.c.l.b16 %v429
          %v945 = vunpack.c.l.b16 %v430
          %v946 = vunpack.c.l.b16 %v431
          %v947 = vunpack.c.l.b16 %v432
          %v948 = vunpack.c.l.b16 %v433
          %v949 = vunpack.c.l.b16 %v434
          %v950 = vunpack.c.l.b16 %v435
          %v951 = vunpack.c.l.b16 %v436
          %v952 = vunpack.c.l.b16 %v437
          %v953 = vunpack.c.l.b16 %v438
          %v954 = vunpack.c.l.b16 %v439
          %v955 = vunpack.c.l.b16 %v440
          %v956 = vunpack.c.l.b16 %v441
          %v957 = vunpack.c.l.b16 %v442
          %v958 = vpack.c.b16 %v606, %v942
          %v959 = vpack.c.b16 %v608, %v943
          %v960 = vpack.c.b16 %v610, %v944
          %v961 = vpack.c.b16 %v612, %v945
          %v962 = vpack.c.b16 %v614, %v946
          %v963 = vpack.c.b16 %v616, %v947
          %v964 = vpack.c.b16 %v618, %v948
          %v965 = vpack.c.b16 %v620, %v949
          %v966 = vpack.c.b16 %v622, %v950
          %v967 = vpack.c.b16 %v624, %v951
          %v968 = vpack.c.b16 %v626, %v952
          %v969 = vpack.c.b16 %v628, %v953
          %v970 = vpack.c.b16 %v630, %v954
          %v971 = vpack.c.b16 %v632, %v955
          %v972 = vpack.c.b16 %v634, %v956
          %v973 = vpack.c.b16 %v636, %v957
          %vm974 = vcmask 1046528
          %v975 = vrot.slane %v958, 1
          %v976 = vrot.slane %v685, 1
          %v977 = vsel %vm974, %v975, %v976
          %v978 = vrot.slane %v959, 1
          %v979 = vrot.slane %v686, 1
          %v980 = vsel %vm974, %v978, %v979
          %v981 = vrot.slane %v960, 1
          %v982 = vrot.slane %v687, 1
          %v983 = vsel %vm974, %v981, %v982
          %v984 = vrot.slane %v961, 1
          %v985 = vrot.slane %v688, 1
          %v986 = vsel %vm974, %v984, %v985
          %v987 = vrot.slane %v962, 1
          %v988 = vrot.slane %v689, 1
          %v989 = vsel %vm974, %v987, %v988
          %v990 = vrot.slane %v963, 1
          %v991 = vrot.slane %v690, 1
          %v992 = vsel %vm974, %v990, %v991
          %v993 = vrot.slane %v964, 1
          %v994 = vrot.slane %v691, 1
          %v995 = vsel %vm974, %v993, %v994
          %v996 = vrot.slane %v965, 1
          %v997 = vrot.slane %v692, 1
          %v998 = vsel %vm974, %v996, %v997
          %v999 = vrot.slane %v966, 1
          %v1000 = vrot.slane %v693, 1
          %v1001 = vsel %vm974, %v999, %v1000
          %v1002 = vrot.slane %v967, 1
          %v1003 = vrot.slane %v694, 1
          %v1004 = vsel %vm974, %v1002, %v1003
          %v1005 = vrot.slane %v968, 1
          %v1006 = vrot.slane %v695, 1
          %v1007 = vsel %vm974, %v1005, %v1006
          %v1008 = vrot.slane %v969, 1
          %v1009 = vrot.slane %v696, 1
          %v1010 = vsel %vm974, %v1008, %v1009
          %v1011 = vrot.slane %v970, 1
          %v1012 = vrot.slane %v697, 1
          %v1013 = vsel %vm974, %v1011, %v1012
          %v1014 = vrot.slane %v971, 1
          %v1015 = vrot.slane %v698, 1
          %v1016 = vsel %vm974, %v1014, %v1015
          %v1017 = vrot.slane %v972, 1
          %v1018 = vrot.slane %v699, 1
          %v1019 = vsel %vm974, %v1017, %v1018
          %v1020 = vrot.slane %v973, 1
          %v1021 = vrot.slane %v700, 1
          %v1022 = vsel %vm974, %v1020, %v1021
          %1023 = vrot.lane.b32.xlu0 %v977, 16
          %v1024 = vpop.permute.xlu0 %1023
          %1025 = vrot.lane.b32.xlu0 %v980, 16
          %v1026 = vpop.permute.xlu0 %1025
          %1027 = vrot.lane.b32.xlu0 %v983, 16
          %v1028 = vpop.permute.xlu0 %1027
          %1029 = vrot.lane.b32.xlu0 %v986, 16
          %v1030 = vpop.permute.xlu0 %1029
          %1031 = vrot.lane.b32.xlu0 %v989, 16
          %v1032 = vpop.permute.xlu0 %1031
          %1033 = vrot.lane.b32.xlu0 %v992, 16
          %v1034 = vpop.permute.xlu0 %1033
          %1035 = vrot.lane.b32.xlu0 %v995, 16
          %v1036 = vpop.permute.xlu0 %1035
          %1037 = vrot.lane.b32.xlu0 %v998, 16
          %v1038 = vpop.permute.xlu0 %1037
          %1039 = vrot.lane.b32.xlu0 %v1001, 16
          %v1040 = vpop.permute.xlu0 %1039
          %1041 = vrot.lane.b32.xlu0 %v1004, 16
          %v1042 = vpop.permute.xlu0 %1041
          %1043 = vrot.lane.b32.xlu0 %v1007, 16
          %v1044 = vpop.permute.xlu0 %1043
          %1045 = vrot.lane.b32.xlu0 %v1010, 16
          %v1046 = vpop.permute.xlu0 %1045
          %1047 = vrot.lane.b32.xlu0 %v1013, 16
          %v1048 = vpop.permute.xlu0 %1047
          %1049 = vrot.lane.b32.xlu0 %v1016, 16
          %v1050 = vpop.permute.xlu0 %1049
          %1051 = vrot.lane.b32.xlu0 %v1019, 16
          %v1052 = vpop.permute.xlu0 %1051
          %1053 = vrot.lane.b32.xlu0 %v1022, 16
          %v1054 = vpop.permute.xlu0 %1053
          %v1087 = vunpack.c.l.b16 %v444
          %v1088 = vunpack.c.l.b16 %v445
          %v1089 = vunpack.c.l.b16 %v446
          %v1090 = vunpack.c.l.b16 %v447
          %v1091 = vunpack.c.l.b16 %v448
          %v1092 = vunpack.c.l.b16 %v449
          %v1093 = vunpack.c.l.b16 %v450
          %v1094 = vunpack.c.l.b16 %v451
          %v1095 = vunpack.c.l.b16 %v452
          %v1096 = vunpack.c.l.b16 %v453
          %v1097 = vunpack.c.l.b16 %v454
          %v1098 = vunpack.c.l.b16 %v455
          %v1099 = vunpack.c.l.b16 %v456
          %v1100 = vunpack.c.l.b16 %v457
          %v1101 = vunpack.c.l.b16 %v458
          %v1102 = vunpack.c.l.b16 %v459
          %v1103 = vunpack.c.l.b16 %v460
          %v1104 = vunpack.c.l.b16 %v461
          %v1105 = vunpack.c.l.b16 %v462
          %v1106 = vunpack.c.l.b16 %v463
          %v1107 = vunpack.c.l.b16 %v464
          %v1108 = vunpack.c.l.b16 %v465
          %v1109 = vunpack.c.l.b16 %v466
          %v1110 = vunpack.c.l.b16 %v467
          %v1111 = vunpack.c.l.b16 %v468
          %v1112 = vunpack.c.l.b16 %v469
          %v1113 = vunpack.c.l.b16 %v470
          %v1114 = vunpack.c.l.b16 %v471
          %v1115 = vunpack.c.l.b16 %v472
          %v1116 = vunpack.c.l.b16 %v473
          %v1117 = vunpack.c.l.b16 %v474
          %v1118 = vunpack.c.l.b16 %v475
          %v1119 = vpack.c.b16 %v1088, %v1087
          %v1120 = vpack.c.b16 %v1090, %v1089
          %v1121 = vpack.c.b16 %v1092, %v1091
          %v1122 = vpack.c.b16 %v1094, %v1093
          %v1123 = vpack.c.b16 %v1096, %v1095
          %v1124 = vpack.c.b16 %v1098, %v1097
          %v1125 = vpack.c.b16 %v1100, %v1099
          %v1126 = vpack.c.b16 %v1102, %v1101
          %v1127 = vpack.c.b16 %v1104, %v1103
          %v1128 = vpack.c.b16 %v1106, %v1105
          %v1129 = vpack.c.b16 %v1108, %v1107
          %v1130 = vpack.c.b16 %v1110, %v1109
          %v1131 = vpack.c.b16 %v1112, %v1111
          %v1132 = vpack.c.b16 %v1114, %v1113
          %v1133 = vpack.c.b16 %v1116, %v1115
          %v1134 = vpack.c.b16 %v1118, %v1117
          %1135 = vrot.lane.b32.xlu0 %v1119, 24
          %v1136 = vpop.permute.xlu0 %1135
          %1137 = vrot.lane.b32.xlu0 %v1120, 24
          %v1138 = vpop.permute.xlu0 %1137
          %1139 = vrot.lane.b32.xlu0 %v1121, 24
          %v1140 = vpop.permute.xlu0 %1139
          %1141 = vrot.lane.b32.xlu0 %v1122, 24
          %v1142 = vpop.permute.xlu0 %1141
          %1143 = vrot.lane.b32.xlu0 %v1123, 24
          %v1144 = vpop.permute.xlu0 %1143
          %1145 = vrot.lane.b32.xlu0 %v1124, 24
          %v1146 = vpop.permute.xlu0 %1145
          %1147 = vrot.lane.b32.xlu0 %v1125, 24
          %v1148 = vpop.permute.xlu0 %1147
          %1149 = vrot.lane.b32.xlu0 %v1126, 24
          %v1150 = vpop.permute.xlu0 %1149
          %1151 = vrot.lane.b32.xlu0 %v1127, 24
          %v1152 = vpop.permute.xlu0 %1151
          %1153 = vrot.lane.b32.xlu0 %v1128, 24
          %v1154 = vpop.permute.xlu0 %1153
          %1155 = vrot.lane.b32.xlu0 %v1129, 24
          %v1156 = vpop.permute.xlu0 %1155
          %1157 = vrot.lane.b32.xlu0 %v1130, 24
          %v1158 = vpop.permute.xlu0 %1157
          %1159 = vrot.lane.b32.xlu0 %v1131, 24
          %v1160 = vpop.permute.xlu0 %1159
          %1161 = vrot.lane.b32.xlu0 %v1132, 24
          %v1162 = vpop.permute.xlu0 %1161
          %1163 = vrot.lane.b32.xlu0 %v1133, 24
          %v1164 = vpop.permute.xlu0 %1163
          %1165 = vrot.lane.b32.xlu0 %v1134, 24
          %v1166 = vpop.permute.xlu0 %1165
          %v1183 = vunpack.c.l.b16 %v476
          %v1184 = vunpack.c.l.b16 %v477
          %v1185 = vunpack.c.l.b16 %v478
          %v1186 = vunpack.c.l.b16 %v479
          %v1187 = vunpack.c.l.b16 %v480
          %v1188 = vunpack.c.l.b16 %v481
          %v1189 = vunpack.c.l.b16 %v482
          %v1190 = vunpack.c.l.b16 %v483
          %v1191 = vunpack.c.l.b16 %v484
          %v1192 = vunpack.c.l.b16 %v485
          %v1193 = vunpack.c.l.b16 %v486
          %v1194 = vunpack.c.l.b16 %v487
          %v1195 = vunpack.c.l.b16 %v488
          %v1196 = vunpack.c.l.b16 %v489
          %v1197 = vunpack.c.l.b16 %v490
          %v1198 = vunpack.c.l.b16 %v491
          %v1199 = vpack.c.b16 %v1183, %v1183
          %v1200 = vpack.c.b16 %v1184, %v1184
          %v1201 = vpack.c.b16 %v1185, %v1185
          %v1202 = vpack.c.b16 %v1186, %v1186
          %v1203 = vpack.c.b16 %v1187, %v1187
          %v1204 = vpack.c.b16 %v1188, %v1188
          %v1205 = vpack.c.b16 %v1189, %v1189
          %v1206 = vpack.c.b16 %v1190, %v1190
          %v1207 = vpack.c.b16 %v1191, %v1191
          %v1208 = vpack.c.b16 %v1192, %v1192
          %v1209 = vpack.c.b16 %v1193, %v1193
          %v1210 = vpack.c.b16 %v1194, %v1194
          %v1211 = vpack.c.b16 %v1195, %v1195
          %v1212 = vpack.c.b16 %v1196, %v1196
          %v1213 = vpack.c.b16 %v1197, %v1197
          %v1214 = vpack.c.b16 %v1198, %v1198
          %v1216 = vshrl.u32 %v1119, 16
          %v1218 = vshll.u32 %v1119, 16
          %v1220 = vrot.slane %v1218, 1
          %v1221 = vor.u32 %v1216, %v1220
          %v1223 = vshll.u32 %v1199, 16
          %v1225 = vrot.slane %v1223, 1
          %v1226 = vsel %vm701, %v1221, %v1225
          %v1228 = vshrl.u32 %v1120, 16
          %v1230 = vshll.u32 %v1120, 16
          %v1232 = vrot.slane %v1230, 1
          %v1233 = vor.u32 %v1228, %v1232
          %v1235 = vshll.u32 %v1200, 16
          %v1237 = vrot.slane %v1235, 1
          %v1238 = vsel %vm701, %v1233, %v1237
          %v1240 = vshrl.u32 %v1121, 16
          %v1242 = vshll.u32 %v1121, 16
          %v1244 = vrot.slane %v1242, 1
          %v1245 = vor.u32 %v1240, %v1244
          %v1247 = vshll.u32 %v1201, 16
          %v1249 = vrot.slane %v1247, 1
          %v1250 = vsel %vm701, %v1245, %v1249
          %v1252 = vshrl.u32 %v1122, 16
          %v1254 = vshll.u32 %v1122, 16
          %v1256 = vrot.slane %v1254, 1
          %v1257 = vor.u32 %v1252, %v1256
          %v1259 = vshll.u32 %v1202, 16
          %v1261 = vrot.slane %v1259, 1
          %v1262 = vsel %vm701, %v1257, %v1261
          %v1264 = vshrl.u32 %v1123, 16
          %v1266 = vshll.u32 %v1123, 16
          %v1268 = vrot.slane %v1266, 1
          %v1269 = vor.u32 %v1264, %v1268
          %v1271 = vshll.u32 %v1203, 16
          %v1273 = vrot.slane %v1271, 1
          %v1274 = vsel %vm701, %v1269, %v1273
          %v1276 = vshrl.u32 %v1124, 16
          %v1278 = vshll.u32 %v1124, 16
          %v1280 = vrot.slane %v1278, 1
          %v1281 = vor.u32 %v1276, %v1280
          %v1283 = vshll.u32 %v1204, 16
          %v1285 = vrot.slane %v1283, 1
          %v1286 = vsel %vm701, %v1281, %v1285
          %v1288 = vshrl.u32 %v1125, 16
          %v1290 = vshll.u32 %v1125, 16
          %v1292 = vrot.slane %v1290, 1
          %v1293 = vor.u32 %v1288, %v1292
          %v1295 = vshll.u32 %v1205, 16
          %v1297 = vrot.slane %v1295, 1
          %v1298 = vsel %vm701, %v1293, %v1297
          %v1300 = vshrl.u32 %v1126, 16
          %v1302 = vshll.u32 %v1126, 16
          %v1304 = vrot.slane %v1302, 1
          %v1305 = vor.u32 %v1300, %v1304
          %v1307 = vshll.u32 %v1206, 16
          %v1309 = vrot.slane %v1307, 1
          %v1310 = vsel %vm701, %v1305, %v1309
          %v1312 = vshrl.u32 %v1127, 16
          %v1314 = vshll.u32 %v1127, 16
          %v1316 = vrot.slane %v1314, 1
          %v1317 = vor.u32 %v1312, %v1316
          %v1319 = vshll.u32 %v1207, 16
          %v1321 = vrot.slane %v1319, 1
          %v1322 = vsel %vm701, %v1317, %v1321
          %v1324 = vshrl.u32 %v1128, 16
          %v1326 = vshll.u32 %v1128, 16
          %v1328 = vrot.slane %v1326, 1
          %v1329 = vor.u32 %v1324, %v1328
          %v1331 = vshll.u32 %v1208, 16
          %v1333 = vrot.slane %v1331, 1
          %v1334 = vsel %vm701, %v1329, %v1333
          %v1336 = vshrl.u32 %v1129, 16
          %v1338 = vshll.u32 %v1129, 16
          %v1340 = vrot.slane %v1338, 1
          %v1341 = vor.u32 %v1336, %v1340
          %v1343 = vshll.u32 %v1209, 16
          %v1345 = vrot.slane %v1343, 1
          %v1346 = vsel %vm701, %v1341, %v1345
          %v1348 = vshrl.u32 %v1130, 16
          %v1350 = vshll.u32 %v1130, 16
          %v1352 = vrot.slane %v1350, 1
          %v1353 = vor.u32 %v1348, %v1352
          %v1355 = vshll.u32 %v1210, 16
          %v1357 = vrot.slane %v1355, 1
          %v1358 = vsel %vm701, %v1353, %v1357
          %v1360 = vshrl.u32 %v1131, 16
          %v1362 = vshll.u32 %v1131, 16
          %v1364 = vrot.slane %v1362, 1
          %v1365 = vor.u32 %v1360, %v1364
          %v1367 = vshll.u32 %v1211, 16
          %v1369 = vrot.slane %v1367, 1
          %v1370 = vsel %vm701, %v1365, %v1369
          %v1372 = vshrl.u32 %v1132, 16
          %v1374 = vshll.u32 %v1132, 16
          %v1376 = vrot.slane %v1374, 1
          %v1377 = vor.u32 %v1372, %v1376
          %v1379 = vshll.u32 %v1212, 16
          %v1381 = vrot.slane %v1379, 1
          %v1382 = vsel %vm701, %v1377, %v1381
          %v1384 = vshrl.u32 %v1133, 16
          %v1386 = vshll.u32 %v1133, 16
          %v1388 = vrot.slane %v1386, 1
          %v1389 = vor.u32 %v1384, %v1388
          %v1391 = vshll.u32 %v1213, 16
          %v1393 = vrot.slane %v1391, 1
          %v1394 = vsel %vm701, %v1389, %v1393
          %v1396 = vshrl.u32 %v1134, 16
          %v1398 = vshll.u32 %v1134, 16
          %v1400 = vrot.slane %v1398, 1
          %v1401 = vor.u32 %v1396, %v1400
          %v1403 = vshll.u32 %v1214, 16
          %v1405 = vrot.slane %v1403, 1
          %v1406 = vsel %vm701, %v1401, %v1405
          %1407 = vrot.lane.b32.xlu0 %v1226, 32
          %v1408 = vpop.permute.xlu0 %1407
          %1409 = vrot.lane.b32.xlu0 %v1238, 32
          %v1410 = vpop.permute.xlu0 %1409
          %1411 = vrot.lane.b32.xlu0 %v1250, 32
          %v1412 = vpop.permute.xlu0 %1411
          %1413 = vrot.lane.b32.xlu0 %v1262, 32
          %v1414 = vpop.permute.xlu0 %1413
          %1415 = vrot.lane.b32.xlu0 %v1274, 32
          %v1416 = vpop.permute.xlu0 %1415
          %1417 = vrot.lane.b32.xlu0 %v1286, 32
          %v1418 = vpop.permute.xlu0 %1417
          %1419 = vrot.lane.b32.xlu0 %v1298, 32
          %v1420 = vpop.permute.xlu0 %1419
          %1421 = vrot.lane.b32.xlu0 %v1310, 32
          %v1422 = vpop.permute.xlu0 %1421
          %1423 = vrot.lane.b32.xlu0 %v1322, 32
          %v1424 = vpop.permute.xlu0 %1423
          %1425 = vrot.lane.b32.xlu0 %v1334, 32
          %v1426 = vpop.permute.xlu0 %1425
          %1427 = vrot.lane.b32.xlu0 %v1346, 32
          %v1428 = vpop.permute.xlu0 %1427
          %1429 = vrot.lane.b32.xlu0 %v1358, 32
          %v1430 = vpop.permute.xlu0 %1429
          %1431 = vrot.lane.b32.xlu0 %v1370, 32
          %v1432 = vpop.permute.xlu0 %1431
          %1433 = vrot.lane.b32.xlu0 %v1382, 32
          %v1434 = vpop.permute.xlu0 %1433
          %1435 = vrot.lane.b32.xlu0 %v1394, 32
          %v1436 = vpop.permute.xlu0 %1435
          %1437 = vrot.lane.b32.xlu0 %v1406, 32
          %v1438 = vpop.permute.xlu0 %1437
          %v1455 = vunpack.c.l.b16 %v492
          %v1456 = vunpack.c.l.b16 %v493
          %v1457 = vunpack.c.l.b16 %v494
          %v1458 = vunpack.c.l.b16 %v495
          %v1459 = vunpack.c.l.b16 %v496
          %v1460 = vunpack.c.l.b16 %v497
          %v1461 = vunpack.c.l.b16 %v498
          %v1462 = vunpack.c.l.b16 %v499
          %v1463 = vunpack.c.l.b16 %v500
          %v1464 = vunpack.c.l.b16 %v501
          %v1465 = vunpack.c.l.b16 %v502
          %v1466 = vunpack.c.l.b16 %v503
          %v1467 = vunpack.c.l.b16 %v504
          %v1468 = vunpack.c.l.b16 %v505
          %v1469 = vunpack.c.l.b16 %v506
          %v1470 = vunpack.c.l.b16 %v507
          %v1471 = vpack.c.b16 %v1088, %v1455
          %v1472 = vpack.c.b16 %v1090, %v1456
          %v1473 = vpack.c.b16 %v1092, %v1457
          %v1474 = vpack.c.b16 %v1094, %v1458
          %v1475 = vpack.c.b16 %v1096, %v1459
          %v1476 = vpack.c.b16 %v1098, %v1460
          %v1477 = vpack.c.b16 %v1100, %v1461
          %v1478 = vpack.c.b16 %v1102, %v1462
          %v1479 = vpack.c.b16 %v1104, %v1463
          %v1480 = vpack.c.b16 %v1106, %v1464
          %v1481 = vpack.c.b16 %v1108, %v1465
          %v1482 = vpack.c.b16 %v1110, %v1466
          %v1483 = vpack.c.b16 %v1112, %v1467
          %v1484 = vpack.c.b16 %v1114, %v1468
          %v1485 = vpack.c.b16 %v1116, %v1469
          %v1486 = vpack.c.b16 %v1118, %v1470
          %v1487 = vrot.slane %v1471, 1
          %v1488 = vrot.slane %v1199, 1
          %v1489 = vsel %vm974, %v1487, %v1488
          %v1490 = vrot.slane %v1472, 1
          %v1491 = vrot.slane %v1200, 1
          %v1492 = vsel %vm974, %v1490, %v1491
          %v1493 = vrot.slane %v1473, 1
          %v1494 = vrot.slane %v1201, 1
          %v1495 = vsel %vm974, %v1493, %v1494
          %v1496 = vrot.slane %v1474, 1
          %v1497 = vrot.slane %v1202, 1
          %v1498 = vsel %vm974, %v1496, %v1497
          %v1499 = vrot.slane %v1475, 1
          %v1500 = vrot.slane %v1203, 1
          %v1501 = vsel %vm974, %v1499, %v1500
          %v1502 = vrot.slane %v1476, 1
          %v1503 = vrot.slane %v1204, 1
          %v1504 = vsel %vm974, %v1502, %v1503
          %v1505 = vrot.slane %v1477, 1
          %v1506 = vrot.slane %v1205, 1
          %v1507 = vsel %vm974, %v1505, %v1506
          %v1508 = vrot.slane %v1478, 1
          %v1509 = vrot.slane %v1206, 1
          %v1510 = vsel %vm974, %v1508, %v1509
          %v1511 = vrot.slane %v1479, 1
          %v1512 = vrot.slane %v1207, 1
          %v1513 = vsel %vm974, %v1511, %v1512
          %v1514 = vrot.slane %v1480, 1
          %v1515 = vrot.slane %v1208, 1
          %v1516 = vsel %vm974, %v1514, %v1515
          %v1517 = vrot.slane %v1481, 1
          %v1518 = vrot.slane %v1209, 1
          %v1519 = vsel %vm974, %v1517, %v1518
          %v1520 = vrot.slane %v1482, 1
          %v1521 = vrot.slane %v1210, 1
          %v1522 = vsel %vm974, %v1520, %v1521
          %v1523 = vrot.slane %v1483, 1
          %v1524 = vrot.slane %v1211, 1
          %v1525 = vsel %vm974, %v1523, %v1524
          %v1526 = vrot.slane %v1484, 1
          %v1527 = vrot.slane %v1212, 1
          %v1528 = vsel %vm974, %v1526, %v1527
          %v1529 = vrot.slane %v1485, 1
          %v1530 = vrot.slane %v1213, 1
          %v1531 = vsel %vm974, %v1529, %v1530
          %v1532 = vrot.slane %v1486, 1
          %v1533 = vrot.slane %v1214, 1
          %v1534 = vsel %vm974, %v1532, %v1533
          %1535 = vrot.lane.b32.xlu0 %v1489, 40
          %v1536 = vpop.permute.xlu0 %1535
          %1537 = vrot.lane.b32.xlu0 %v1492, 40
          %v1538 = vpop.permute.xlu0 %1537
          %1539 = vrot.lane.b32.xlu0 %v1495, 40
          %v1540 = vpop.permute.xlu0 %1539
          %1541 = vrot.lane.b32.xlu0 %v1498, 40
          %v1542 = vpop.permute.xlu0 %1541
          %1543 = vrot.lane.b32.xlu0 %v1501, 40
          %v1544 = vpop.permute.xlu0 %1543
          %1545 = vrot.lane.b32.xlu0 %v1504, 40
          %v1546 = vpop.permute.xlu0 %1545
          %1547 = vrot.lane.b32.xlu0 %v1507, 40
          %v1548 = vpop.permute.xlu0 %1547
          %1549 = vrot.lane.b32.xlu0 %v1510, 40
          %v1550 = vpop.permute.xlu0 %1549
          %1551 = vrot.lane.b32.xlu0 %v1513, 40
          %v1552 = vpop.permute.xlu0 %1551
          %1553 = vrot.lane.b32.xlu0 %v1516, 40
          %v1554 = vpop.permute.xlu0 %1553
          %1555 = vrot.lane.b32.xlu0 %v1519, 40
          %v1556 = vpop.permute.xlu0 %1555
          %1557 = vrot.lane.b32.xlu0 %v1522, 40
          %v1558 = vpop.permute.xlu0 %1557
          %1559 = vrot.lane.b32.xlu0 %v1525, 40
          %v1560 = vpop.permute.xlu0 %1559
          %1561 = vrot.lane.b32.xlu0 %v1528, 40
          %v1562 = vpop.permute.xlu0 %1561
          %1563 = vrot.lane.b32.xlu0 %v1531, 40
          %v1564 = vpop.permute.xlu0 %1563
          %1565 = vrot.lane.b32.xlu0 %v1534, 40
          %v1566 = vpop.permute.xlu0 %1565
          %v1599 = vunpack.c.l.b16 %v509
          %v1600 = vunpack.c.l.b16 %v510
          %v1601 = vunpack.c.l.b16 %v511
          %v1602 = vunpack.c.l.b16 %v512
          %v1603 = vunpack.c.l.b16 %v513
          %v1604 = vunpack.c.l.b16 %v514
          %v1605 = vunpack.c.l.b16 %v515
          %v1606 = vunpack.c.l.b16 %v516
          %v1607 = vunpack.c.l.b16 %v517
          %v1608 = vunpack.c.l.b16 %v518
          %v1609 = vunpack.c.l.b16 %v519
          %v1610 = vunpack.c.l.b16 %v520
          %v1611 = vunpack.c.l.b16 %v521
          %v1612 = vunpack.c.l.b16 %v522
          %v1613 = vunpack.c.l.b16 %v523
          %v1614 = vunpack.c.l.b16 %v524
          %v1615 = vunpack.c.l.b16 %v525
          %v1616 = vunpack.c.l.b16 %v526
          %v1617 = vunpack.c.l.b16 %v527
          %v1618 = vunpack.c.l.b16 %v528
          %v1619 = vunpack.c.l.b16 %v529
          %v1620 = vunpack.c.l.b16 %v530
          %v1621 = vunpack.c.l.b16 %v531
          %v1622 = vunpack.c.l.b16 %v532
          %v1623 = vunpack.c.l.b16 %v533
          %v1624 = vunpack.c.l.b16 %v534
          %v1625 = vunpack.c.l.b16 %v535
          %v1626 = vunpack.c.l.b16 %v536
          %v1627 = vunpack.c.l.b16 %v537
          %v1628 = vunpack.c.l.b16 %v538
          %v1629 = vunpack.c.l.b16 %v539
          %v1630 = vunpack.c.l.b16 %v540
          %v1631 = vpack.c.b16 %v1600, %v1599
          %v1632 = vpack.c.b16 %v1602, %v1601
          %v1633 = vpack.c.b16 %v1604, %v1603
          %v1634 = vpack.c.b16 %v1606, %v1605
          %v1635 = vpack.c.b16 %v1608, %v1607
          %v1636 = vpack.c.b16 %v1610, %v1609
          %v1637 = vpack.c.b16 %v1612, %v1611
          %v1638 = vpack.c.b16 %v1614, %v1613
          %v1639 = vpack.c.b16 %v1616, %v1615
          %v1640 = vpack.c.b16 %v1618, %v1617
          %v1641 = vpack.c.b16 %v1620, %v1619
          %v1642 = vpack.c.b16 %v1622, %v1621
          %v1643 = vpack.c.b16 %v1624, %v1623
          %v1644 = vpack.c.b16 %v1626, %v1625
          %v1645 = vpack.c.b16 %v1628, %v1627
          %v1646 = vpack.c.b16 %v1630, %v1629
          %1647 = vrot.lane.b32.xlu0 %v1631, 48
          %v1648 = vpop.permute.xlu0 %1647
          %1649 = vrot.lane.b32.xlu0 %v1632, 48
          %v1650 = vpop.permute.xlu0 %1649
          %1651 = vrot.lane.b32.xlu0 %v1633, 48
          %v1652 = vpop.permute.xlu0 %1651
          %1653 = vrot.lane.b32.xlu0 %v1634, 48
          %v1654 = vpop.permute.xlu0 %1653
          %1655 = vrot.lane.b32.xlu0 %v1635, 48
          %v1656 = vpop.permute.xlu0 %1655
          %1657 = vrot.lane.b32.xlu0 %v1636, 48
          %v1658 = vpop.permute.xlu0 %1657
          %1659 = vrot.lane.b32.xlu0 %v1637, 48
          %v1660 = vpop.permute.xlu0 %1659
          %1661 = vrot.lane.b32.xlu0 %v1638, 48
          %v1662 = vpop.permute.xlu0 %1661
          %1663 = vrot.lane.b32.xlu0 %v1639, 48
          %v1664 = vpop.permute.xlu0 %1663
          %1665 = vrot.lane.b32.xlu0 %v1640, 48
          %v1666 = vpop.permute.xlu0 %1665
          %1667 = vrot.lane.b32.xlu0 %v1641, 48
          %v1668 = vpop.permute.xlu0 %1667
          %1669 = vrot.lane.b32.xlu0 %v1642, 48
          %v1670 = vpop.permute.xlu0 %1669
          %1671 = vrot.lane.b32.xlu0 %v1643, 48
          %v1672 = vpop.permute.xlu0 %1671
          %1673 = vrot.lane.b32.xlu0 %v1644, 48
          %v1674 = vpop.permute.xlu0 %1673
          %1675 = vrot.lane.b32.xlu0 %v1645, 48
          %v1676 = vpop.permute.xlu0 %1675
          %1677 = vrot.lane.b32.xlu0 %v1646, 48
          %v1678 = vpop.permute.xlu0 %1677
          %v1695 = vunpack.c.l.b16 %v541
          %v1696 = vunpack.c.l.b16 %v542
          %v1697 = vunpack.c.l.b16 %v543
          %v1698 = vunpack.c.l.b16 %v544
          %v1699 = vunpack.c.l.b16 %v545
          %v1700 = vunpack.c.l.b16 %v546
          %v1701 = vunpack.c.l.b16 %v547
          %v1702 = vunpack.c.l.b16 %v548
          %v1703 = vunpack.c.l.b16 %v549
          %v1704 = vunpack.c.l.b16 %v550
          %v1705 = vunpack.c.l.b16 %v551
          %v1706 = vunpack.c.l.b16 %v552
          %v1707 = vunpack.c.l.b16 %v553
          %v1708 = vunpack.c.l.b16 %v554
          %v1709 = vunpack.c.l.b16 %v555
          %v1710 = vunpack.c.l.b16 %v556
          %v1711 = vpack.c.b16 %v1695, %v1695
          %v1712 = vpack.c.b16 %v1696, %v1696
          %v1713 = vpack.c.b16 %v1697, %v1697
          %v1714 = vpack.c.b16 %v1698, %v1698
          %v1715 = vpack.c.b16 %v1699, %v1699
          %v1716 = vpack.c.b16 %v1700, %v1700
          %v1717 = vpack.c.b16 %v1701, %v1701
          %v1718 = vpack.c.b16 %v1702, %v1702
          %v1719 = vpack.c.b16 %v1703, %v1703
          %v1720 = vpack.c.b16 %v1704, %v1704
          %v1721 = vpack.c.b16 %v1705, %v1705
          %v1722 = vpack.c.b16 %v1706, %v1706
          %v1723 = vpack.c.b16 %v1707, %v1707
          %v1724 = vpack.c.b16 %v1708, %v1708
          %v1725 = vpack.c.b16 %v1709, %v1709
          %v1726 = vpack.c.b16 %v1710, %v1710
          %v1728 = vshrl.u32 %v1631, 16
          %v1730 = vshll.u32 %v1631, 16
          %v1732 = vrot.slane %v1730, 1
          %v1733 = vor.u32 %v1728, %v1732
          %v1735 = vshll.u32 %v1711, 16
          %v1737 = vrot.slane %v1735, 1
          %v1738 = vsel %vm701, %v1733, %v1737
          %v1740 = vshrl.u32 %v1632, 16
          %v1742 = vshll.u32 %v1632, 16
          %v1744 = vrot.slane %v1742, 1
          %v1745 = vor.u32 %v1740, %v1744
          %v1747 = vshll.u32 %v1712, 16
          %v1749 = vrot.slane %v1747, 1
          %v1750 = vsel %vm701, %v1745, %v1749
          %v1752 = vshrl.u32 %v1633, 16
          %v1754 = vshll.u32 %v1633, 16
          %v1756 = vrot.slane %v1754, 1
          %v1757 = vor.u32 %v1752, %v1756
          %v1759 = vshll.u32 %v1713, 16
          %v1761 = vrot.slane %v1759, 1
          %v1762 = vsel %vm701, %v1757, %v1761
          %v1764 = vshrl.u32 %v1634, 16
          %v1766 = vshll.u32 %v1634, 16
          %v1768 = vrot.slane %v1766, 1
          %v1769 = vor.u32 %v1764, %v1768
          %v1771 = vshll.u32 %v1714, 16
          %v1773 = vrot.slane %v1771, 1
          %v1774 = vsel %vm701, %v1769, %v1773
          %v1776 = vshrl.u32 %v1635, 16
          %v1778 = vshll.u32 %v1635, 16
          %v1780 = vrot.slane %v1778, 1
          %v1781 = vor.u32 %v1776, %v1780
          %v1783 = vshll.u32 %v1715, 16
          %v1785 = vrot.slane %v1783, 1
          %v1786 = vsel %vm701, %v1781, %v1785
          %v1788 = vshrl.u32 %v1636, 16
          %v1790 = vshll.u32 %v1636, 16
          %v1792 = vrot.slane %v1790, 1
          %v1793 = vor.u32 %v1788, %v1792
          %v1795 = vshll.u32 %v1716, 16
          %v1797 = vrot.slane %v1795, 1
          %v1798 = vsel %vm701, %v1793, %v1797
          %v1800 = vshrl.u32 %v1637, 16
          %v1802 = vshll.u32 %v1637, 16
          %v1804 = vrot.slane %v1802, 1
          %v1805 = vor.u32 %v1800, %v1804
          %v1807 = vshll.u32 %v1717, 16
          %v1809 = vrot.slane %v1807, 1
          %v1810 = vsel %vm701, %v1805, %v1809
          %v1812 = vshrl.u32 %v1638, 16
          %v1814 = vshll.u32 %v1638, 16
          %v1816 = vrot.slane %v1814, 1
          %v1817 = vor.u32 %v1812, %v1816
          %v1819 = vshll.u32 %v1718, 16
          %v1821 = vrot.slane %v1819, 1
          %v1822 = vsel %vm701, %v1817, %v1821
          %v1824 = vshrl.u32 %v1639, 16
          %v1826 = vshll.u32 %v1639, 16
          %v1828 = vrot.slane %v1826, 1
          %v1829 = vor.u32 %v1824, %v1828
          %v1831 = vshll.u32 %v1719, 16
          %v1833 = vrot.slane %v1831, 1
          %v1834 = vsel %vm701, %v1829, %v1833
          %v1836 = vshrl.u32 %v1640, 16
          %v1838 = vshll.u32 %v1640, 16
          %v1840 = vrot.slane %v1838, 1
          %v1841 = vor.u32 %v1836, %v1840
          %v1843 = vshll.u32 %v1720, 16
          %v1845 = vrot.slane %v1843, 1
          %v1846 = vsel %vm701, %v1841, %v1845
          %v1848 = vshrl.u32 %v1641, 16
          %v1850 = vshll.u32 %v1641, 16
          %v1852 = vrot.slane %v1850, 1
          %v1853 = vor.u32 %v1848, %v1852
          %v1855 = vshll.u32 %v1721, 16
          %v1857 = vrot.slane %v1855, 1
          %v1858 = vsel %vm701, %v1853, %v1857
          %v1860 = vshrl.u32 %v1642, 16
          %v1862 = vshll.u32 %v1642, 16
          %v1864 = vrot.slane %v1862, 1
          %v1865 = vor.u32 %v1860, %v1864
          %v1867 = vshll.u32 %v1722, 16
          %v1869 = vrot.slane %v1867, 1
          %v1870 = vsel %vm701, %v1865, %v1869
          %v1872 = vshrl.u32 %v1643, 16
          %v1874 = vshll.u32 %v1643, 16
          %v1876 = vrot.slane %v1874, 1
          %v1877 = vor.u32 %v1872, %v1876
          %v1879 = vshll.u32 %v1723, 16
          %v1881 = vrot.slane %v1879, 1
          %v1882 = vsel %vm701, %v1877, %v1881
          %v1884 = vshrl.u32 %v1644, 16
          %v1886 = vshll.u32 %v1644, 16
          %v1888 = vrot.slane %v1886, 1
          %v1889 = vor.u32 %v1884, %v1888
          %v1891 = vshll.u32 %v1724, 16
          %v1893 = vrot.slane %v1891, 1
          %v1894 = vsel %vm701, %v1889, %v1893
          %v1896 = vshrl.u32 %v1645, 16
          %v1898 = vshll.u32 %v1645, 16
          %v1900 = vrot.slane %v1898, 1
          %v1901 = vor.u32 %v1896, %v1900
          %v1903 = vshll.u32 %v1725, 16
          %v1905 = vrot.slane %v1903, 1
          %v1906 = vsel %vm701, %v1901, %v1905
          %v1908 = vshrl.u32 %v1646, 16
          %v1910 = vshll.u32 %v1646, 16
          %v1912 = vrot.slane %v1910, 1
          %v1913 = vor.u32 %v1908, %v1912
          %v1915 = vshll.u32 %v1726, 16
          %v1917 = vrot.slane %v1915, 1
          %v1918 = vsel %vm701, %v1913, %v1917
          %1919 = vrot.lane.b32.xlu0 %v1738, 56
          %v1920 = vpop.permute.xlu0 %1919
          %1921 = vrot.lane.b32.xlu0 %v1750, 56
          %v1922 = vpop.permute.xlu0 %1921
          %1923 = vrot.lane.b32.xlu0 %v1762, 56
          %v1924 = vpop.permute.xlu0 %1923
          %1925 = vrot.lane.b32.xlu0 %v1774, 56
          %v1926 = vpop.permute.xlu0 %1925
          %1927 = vrot.lane.b32.xlu0 %v1786, 56
          %v1928 = vpop.permute.xlu0 %1927
          %1929 = vrot.lane.b32.xlu0 %v1798, 56
          %v1930 = vpop.permute.xlu0 %1929
          %1931 = vrot.lane.b32.xlu0 %v1810, 56
          %v1932 = vpop.permute.xlu0 %1931
          %1933 = vrot.lane.b32.xlu0 %v1822, 56
          %v1934 = vpop.permute.xlu0 %1933
          %1935 = vrot.lane.b32.xlu0 %v1834, 56
          %v1936 = vpop.permute.xlu0 %1935
          %1937 = vrot.lane.b32.xlu0 %v1846, 56
          %v1938 = vpop.permute.xlu0 %1937
          %1939 = vrot.lane.b32.xlu0 %v1858, 56
          %v1940 = vpop.permute.xlu0 %1939
          %1941 = vrot.lane.b32.xlu0 %v1870, 56
          %v1942 = vpop.permute.xlu0 %1941
          %1943 = vrot.lane.b32.xlu0 %v1882, 56
          %v1944 = vpop.permute.xlu0 %1943
          %1945 = vrot.lane.b32.xlu0 %v1894, 56
          %v1946 = vpop.permute.xlu0 %1945
          %1947 = vrot.lane.b32.xlu0 %v1906, 56
          %v1948 = vpop.permute.xlu0 %1947
          %1949 = vrot.lane.b32.xlu0 %v1918, 56
          %v1950 = vpop.permute.xlu0 %1949
          %v1967 = vunpack.c.l.b16 %v557
          %v1968 = vunpack.c.l.b16 %v558
          %v1969 = vunpack.c.l.b16 %v559
          %v1970 = vunpack.c.l.b16 %v560
          %v1971 = vunpack.c.l.b16 %v561
          %v1972 = vunpack.c.l.b16 %v562
          %v1973 = vunpack.c.l.b16 %v563
          %v1974 = vunpack.c.l.b16 %v564
          %v1975 = vunpack.c.l.b16 %v565
          %v1976 = vunpack.c.l.b16 %v566
          %v1977 = vunpack.c.l.b16 %v567
          %v1978 = vunpack.c.l.b16 %v568
          %v1979 = vunpack.c.l.b16 %v569
          %v1980 = vunpack.c.l.b16 %v570
          %v1981 = vunpack.c.l.b16 %v571
          %v1982 = vunpack.c.l.b16 %v572
          %v1983 = vpack.c.b16 %v1600, %v1967
          %v1984 = vpack.c.b16 %v1602, %v1968
          %v1985 = vpack.c.b16 %v1604, %v1969
          %v1986 = vpack.c.b16 %v1606, %v1970
          %v1987 = vpack.c.b16 %v1608, %v1971
          %v1988 = vpack.c.b16 %v1610, %v1972
          %v1989 = vpack.c.b16 %v1612, %v1973
          %v1990 = vpack.c.b16 %v1614, %v1974
          %v1991 = vpack.c.b16 %v1616, %v1975
          %v1992 = vpack.c.b16 %v1618, %v1976
          %v1993 = vpack.c.b16 %v1620, %v1977
          %v1994 = vpack.c.b16 %v1622, %v1978
          %v1995 = vpack.c.b16 %v1624, %v1979
          %v1996 = vpack.c.b16 %v1626, %v1980
          %v1997 = vpack.c.b16 %v1628, %v1981
          %v1998 = vpack.c.b16 %v1630, %v1982
          %v1999 = vrot.slane %v1983, 1
          %v2000 = vrot.slane %v1711, 1
          %v2001 = vsel %vm974, %v1999, %v2000
          %v2002 = vrot.slane %v1984, 1
          %v2003 = vrot.slane %v1712, 1
          %v2004 = vsel %vm974, %v2002, %v2003
          %v2005 = vrot.slane %v1985, 1
          %v2006 = vrot.slane %v1713, 1
          %v2007 = vsel %vm974, %v2005, %v2006
          %v2008 = vrot.slane %v1986, 1
          %v2009 = vrot.slane %v1714, 1
          %v2010 = vsel %vm974, %v2008, %v2009
          %v2011 = vrot.slane %v1987, 1
          %v2012 = vrot.slane %v1715, 1
          %v2013 = vsel %vm974, %v2011, %v2012
          %v2014 = vrot.slane %v1988, 1
          %v2015 = vrot.slane %v1716, 1
          %v2016 = vsel %vm974, %v2014, %v2015
          %v2017 = vrot.slane %v1989, 1
          %v2018 = vrot.slane %v1717, 1
          %v2019 = vsel %vm974, %v2017, %v2018
          %v2020 = vrot.slane %v1990, 1
          %v2021 = vrot.slane %v1718, 1
          %v2022 = vsel %vm974, %v2020, %v2021
          %v2023 = vrot.slane %v1991, 1
          %v2024 = vrot.slane %v1719, 1
          %v2025 = vsel %vm974, %v2023, %v2024
          %v2026 = vrot.slane %v1992, 1
          %v2027 = vrot.slane %v1720, 1
          %v2028 = vsel %vm974, %v2026, %v2027
          %v2029 = vrot.slane %v1993, 1
          %v2030 = vrot.slane %v1721, 1
          %v2031 = vsel %vm974, %v2029, %v2030
          %v2032 = vrot.slane %v1994, 1
          %v2033 = vrot.slane %v1722, 1
          %v2034 = vsel %vm974, %v2032, %v2033
          %v2035 = vrot.slane %v1995, 1
          %v2036 = vrot.slane %v1723, 1
          %v2037 = vsel %vm974, %v2035, %v2036
          %v2038 = vrot.slane %v1996, 1
          %v2039 = vrot.slane %v1724, 1
          %v2040 = vsel %vm974, %v2038, %v2039
          %v2041 = vrot.slane %v1997, 1
          %v2042 = vrot.slane %v1725, 1
          %v2043 = vsel %vm974, %v2041, %v2042
          %v2044 = vrot.slane %v1998, 1
          %v2045 = vrot.slane %v1726, 1
          %v2046 = vsel %vm974, %v2044, %v2045
          %2047 = vrot.lane.b32.xlu0 %v2001, 64
          %v2048 = vpop.permute.xlu0 %2047
          %2049 = vrot.lane.b32.xlu0 %v2004, 64
          %v2050 = vpop.permute.xlu0 %2049
          %2051 = vrot.lane.b32.xlu0 %v2007, 64
          %v2052 = vpop.permute.xlu0 %2051
          %2053 = vrot.lane.b32.xlu0 %v2010, 64
          %v2054 = vpop.permute.xlu0 %2053
          %2055 = vrot.lane.b32.xlu0 %v2013, 64
          %v2056 = vpop.permute.xlu0 %2055
          %2057 = vrot.lane.b32.xlu0 %v2016, 64
          %v2058 = vpop.permute.xlu0 %2057
          %2059 = vrot.lane.b32.xlu0 %v2019, 64
          %v2060 = vpop.permute.xlu0 %2059
          %2061 = vrot.lane.b32.xlu0 %v2022, 64
          %v2062 = vpop.permute.xlu0 %2061
          %2063 = vrot.lane.b32.xlu0 %v2025, 64
          %v2064 = vpop.permute.xlu0 %2063
          %2065 = vrot.lane.b32.xlu0 %v2028, 64
          %v2066 = vpop.permute.xlu0 %2065
          %2067 = vrot.lane.b32.xlu0 %v2031, 64
          %v2068 = vpop.permute.xlu0 %2067
          %2069 = vrot.lane.b32.xlu0 %v2034, 64
          %v2070 = vpop.permute.xlu0 %2069
          %2071 = vrot.lane.b32.xlu0 %v2037, 64
          %v2072 = vpop.permute.xlu0 %2071
          %2073 = vrot.lane.b32.xlu0 %v2040, 64
          %v2074 = vpop.permute.xlu0 %2073
          %2075 = vrot.lane.b32.xlu0 %v2043, 64
          %v2076 = vpop.permute.xlu0 %2075
          %2077 = vrot.lane.b32.xlu0 %v2046, 64
          %v2078 = vpop.permute.xlu0 %2077
          %vm2079 = vcmask 64512
          %v2081 = vsel %vm2079, %v637, %v895
          %v2083 = vsel %vm2079, %v638, %v897
          %v2085 = vsel %vm2079, %v639, %v899
          %v2087 = vsel %vm2079, %v640, %v901
          %v2089 = vsel %vm2079, %v641, %v903
          %v2091 = vsel %vm2079, %v642, %v905
          %v2093 = vsel %vm2079, %v643, %v907
          %v2095 = vsel %vm2079, %v644, %v909
          %v2097 = vsel %vm2079, %v645, %v911
          %v2099 = vsel %vm2079, %v646, %v913
          %v2101 = vsel %vm2079, %v647, %v915
          %v2103 = vsel %vm2079, %v648, %v917
          %v2105 = vsel %vm2079, %v649, %v919
          %v2107 = vsel %vm2079, %v650, %v921
          %v2109 = vsel %vm2079, %v651, %v923
          %v2111 = vsel %vm2079, %v652, %v925
          %vm2112 = vcmask 130048
          %v2114 = vsel %vm2112, %v2081, %v1024
          %v2116 = vsel %vm2112, %v2083, %v1026
          %v2118 = vsel %vm2112, %v2085, %v1028
          %v2120 = vsel %vm2112, %v2087, %v1030
          %v2122 = vsel %vm2112, %v2089, %v1032
          %v2124 = vsel %vm2112, %v2091, %v1034
          %v2126 = vsel %vm2112, %v2093, %v1036
          %v2128 = vsel %vm2112, %v2095, %v1038
          %v2130 = vsel %vm2112, %v2097, %v1040
          %v2132 = vsel %vm2112, %v2099, %v1042
          %v2134 = vsel %vm2112, %v2101, %v1044
          %v2136 = vsel %vm2112, %v2103, %v1046
          %v2138 = vsel %vm2112, %v2105, %v1048
          %v2140 = vsel %vm2112, %v2107, %v1050
          %v2142 = vsel %vm2112, %v2109, %v1052
          %v2144 = vsel %vm2112, %v2111, %v1054
          %vm2145 = vcmask 195584
          %v2147 = vsel %vm2145, %v2114, %v1136
          %v2149 = vsel %vm2145, %v2116, %v1138
          %v2151 = vsel %vm2145, %v2118, %v1140
          %v2153 = vsel %vm2145, %v2120, %v1142
          %v2155 = vsel %vm2145, %v2122, %v1144
          %v2157 = vsel %vm2145, %v2124, %v1146
          %v2159 = vsel %vm2145, %v2126, %v1148
          %v2161 = vsel %vm2145, %v2128, %v1150
          %v2163 = vsel %vm2145, %v2130, %v1152
          %v2165 = vsel %vm2145, %v2132, %v1154
          %v2167 = vsel %vm2145, %v2134, %v1156
          %v2169 = vsel %vm2145, %v2136, %v1158
          %v2171 = vsel %vm2145, %v2138, %v1160
          %v2173 = vsel %vm2145, %v2140, %v1162
          %v2175 = vsel %vm2145, %v2142, %v1164
          %v2177 = vsel %vm2145, %v2144, %v1166
          %vm2178 = vcmask 261120
          %v2180 = vsel %vm2178, %v2147, %v1408
          %v2182 = vsel %vm2178, %v2149, %v1410
          %v2184 = vsel %vm2178, %v2151, %v1412
          %v2186 = vsel %vm2178, %v2153, %v1414
          %v2188 = vsel %vm2178, %v2155, %v1416
          %v2190 = vsel %vm2178, %v2157, %v1418
          %v2192 = vsel %vm2178, %v2159, %v1420
          %v2194 = vsel %vm2178, %v2161, %v1422
          %v2196 = vsel %vm2178, %v2163, %v1424
          %v2198 = vsel %vm2178, %v2165, %v1426
          %v2200 = vsel %vm2178, %v2167, %v1428
          %v2202 = vsel %vm2178, %v2169, %v1430
          %v2204 = vsel %vm2178, %v2171, %v1432
          %v2206 = vsel %vm2178, %v2173, %v1434
          %v2208 = vsel %vm2178, %v2175, %v1436
          %v2210 = vsel %vm2178, %v2177, %v1438
          %vm2211 = vcmask 326656
          %v2213 = vsel %vm2211, %v2180, %v1536
          %v2215 = vsel %vm2211, %v2182, %v1538
          %v2217 = vsel %vm2211, %v2184, %v1540
          %v2219 = vsel %vm2211, %v2186, %v1542
          %v2221 = vsel %vm2211, %v2188, %v1544
          %v2223 = vsel %vm2211, %v2190, %v1546
          %v2225 = vsel %vm2211, %v2192, %v1548
          %v2227 = vsel %vm2211, %v2194, %v1550
          %v2229 = vsel %vm2211, %v2196, %v1552
          %v2231 = vsel %vm2211, %v2198, %v1554
          %v2233 = vsel %vm2211, %v2200, %v1556
          %v2235 = vsel %vm2211, %v2202, %v1558
          %v2237 = vsel %vm2211, %v2204, %v1560
          %v2239 = vsel %vm2211, %v2206, %v1562
          %v2241 = vsel %vm2211, %v2208, %v1564
          %v2243 = vsel %vm2211, %v2210, %v1566
          %vm2244 = vcmask 392192
          %v2246 = vsel %vm2244, %v2213, %v1648
          %v2248 = vsel %vm2244, %v2215, %v1650
          %v2250 = vsel %vm2244, %v2217, %v1652
          %v2252 = vsel %vm2244, %v2219, %v1654
          %v2254 = vsel %vm2244, %v2221, %v1656
          %v2256 = vsel %vm2244, %v2223, %v1658
          %v2258 = vsel %vm2244, %v2225, %v1660
          %v2260 = vsel %vm2244, %v2227, %v1662
          %v2262 = vsel %vm2244, %v2229, %v1664
          %v2264 = vsel %vm2244, %v2231, %v1666
          %v2266 = vsel %vm2244, %v2233, %v1668
          %v2268 = vsel %vm2244, %v2235, %v1670
          %v2270 = vsel %vm2244, %v2237, %v1672
          %v2272 = vsel %vm2244, %v2239, %v1674
          %v2274 = vsel %vm2244, %v2241, %v1676
          %v2276 = vsel %vm2244, %v2243, %v1678
          %vm2277 = vcmask 457728
          %v2279 = vsel %vm2277, %v2246, %v1920
          %v2281 = vsel %vm2277, %v2248, %v1922
          %v2283 = vsel %vm2277, %v2250, %v1924
          %v2285 = vsel %vm2277, %v2252, %v1926
          %v2287 = vsel %vm2277, %v2254, %v1928
          %v2289 = vsel %vm2277, %v2256, %v1930
          %v2291 = vsel %vm2277, %v2258, %v1932
          %v2293 = vsel %vm2277, %v2260, %v1934
          %v2295 = vsel %vm2277, %v2262, %v1936
          %v2297 = vsel %vm2277, %v2264, %v1938
          %v2299 = vsel %vm2277, %v2266, %v1940
          %v2301 = vsel %vm2277, %v2268, %v1942
          %v2303 = vsel %vm2277, %v2270, %v1944
          %v2305 = vsel %vm2277, %v2272, %v1946
          %v2307 = vsel %vm2277, %v2274, %v1948
          %v2309 = vsel %vm2277, %v2276, %v1950
          %vm2310 = vcmask 523264
          %v2312 = vsel %vm2310, %v2279, %v2048
          %v2314 = vsel %vm2310, %v2281, %v2050
          %v2316 = vsel %vm2310, %v2283, %v2052
          %v2318 = vsel %vm2310, %v2285, %v2054
          %v2320 = vsel %vm2310, %v2287, %v2056
          %v2322 = vsel %vm2310, %v2289, %v2058
          %v2324 = vsel %vm2310, %v2291, %v2060
          %v2326 = vsel %vm2310, %v2293, %v2062
          %v2328 = vsel %vm2310, %v2295, %v2064
          %v2330 = vsel %vm2310, %v2297, %v2066
          %v2332 = vsel %vm2310, %v2299, %v2068
          %v2334 = vsel %vm2310, %v2301, %v2070
          %v2336 = vsel %vm2310, %v2303, %v2072
          %v2338 = vsel %vm2310, %v2305, %v2074
          %v2340 = vsel %vm2310, %v2307, %v2076
          %v2342 = vsel %vm2310, %v2309, %v2078
          %v2352 = vunpack.c.l.b16 %v370
          %v2353 = vunpack.c.l.b16 %v371
          %v2354 = vunpack.c.l.b16 %v372
          %v2355 = vunpack.c.l.b16 %v373
          %v2356 = vunpack.c.l.b16 %v374
          %v2357 = vunpack.c.l.b16 %v375
          %v2358 = vunpack.c.l.b16 %v376
          %v2359 = vunpack.c.l.b16 %v377
          %v2360 = vunpack.c.l.b16 %v378
          %v2361 = vpack.c.b16 %v2353, %v2352
          %v2362 = vpack.c.b16 %v2355, %v2354
          %v2363 = vpack.c.b16 %v2357, %v2356
          %v2364 = vpack.c.b16 %v2359, %v2358
          %v2365 = vpack.c.b16 %v2360, %v2360
          %vm2370 = vcmask 588800
          %v2371 = vsel %vm2370, %v2312, 0
          %v2373 = vsel %vm2370, %v2314, 0
          %v2375 = vsel %vm2370, %v2316, 0
          %v2377 = vsel %vm2370, %v2318, 0
          %v2379 = vsel %vm2370, %v2320, 0
          %v2381 = vsel %vm2370, %v2322, 0
          %v2383 = vsel %vm2370, %v2324, 0
          %v2385 = vsel %vm2370, %v2326, 0
          %v2387 = vsel %vm2370, %v2328, 0
          %v2389 = vsel %vm2370, %v2330, 0
          %v2391 = vsel %vm2370, %v2332, 0
          %v2393 = vsel %vm2370, %v2334, 0
          %v2395 = vsel %vm2370, %v2336, 0
          %v2397 = vsel %vm2370, %v2338, 0
          %v2399 = vsel %vm2370, %v2340, 0
          %v2401 = vsel %vm2370, %v2342, 0
          %vm2403 = vcmask 1043456
          %v2405 = vsel %vm2403, %v2365, 0
          %2407 = vmatprep.subr.bf16.mxu0 0
          %2408 = vmatpush1.bf16.msra.mxu0 0
          %2409 = vmatprep.subr.bf16.mxu0 0
          %2410 = vmatpush1.bf16.msra.mxu0 0
          %2411 = vmatprep.subr.bf16.mxu0 0
          %2412 = vmatpush1.bf16.msra.mxu0 0
          %2413 = vmatprep.subr.bf16.mxu0 0
          %2414 = vmatpush1.bf16.msra.mxu0 %v2405
          %2415 = vmatprep.subr.bf16.mxu0 0
          %2416 = vmatpush1.bf16.msra.mxu0 %v2364
          %2417 = vmatprep.subr.bf16.mxu0 0
          %2418 = vmatpush1.bf16.msra.mxu0 %v2363
          %2419 = vmatprep.subr.bf16.mxu0 0
          %2420 = vmatpush1.bf16.msra.mxu0 %v2362
          %2421 = vmatprep.subr.bf16.mxu0 0
          %2422 = vmatpush1.bf16.msra.mxu0 %v2361
          %2423 = vmatprep.subr.bf16.mxu0 0
          %2424 = vmatpush2.bf16.msra.mxu0 0
          %2425 = vmatprep.subr.bf16.mxu0 0
          %2426 = vmatpush2.bf16.msra.mxu0 0
          %2427 = vmatprep.subr.bf16.mxu0 0
          %2428 = vmatpush2.bf16.msra.mxu0 0
          %2429 = vmatprep.subr.bf16.mxu0 0
          %2430 = vmatpush2.bf16.msra.mxu0 0
          %2431 = vmatprep.subr.bf16.mxu0 0
          %2432 = vmatpush2.bf16.msra.mxu0 0
          %2433 = vmatprep.subr.bf16.mxu0 0
          %2434 = vmatpush2.bf16.msra.mxu0 0
          %2435 = vmatprep.subr.bf16.mxu0 0
          %2436 = vmatpush2.bf16.msra.mxu0 0
          %2437 = vmatprep.subr.bf16.mxu0 0
          %2438 = vmatpush2.bf16.msra.mxu0 0
          %2439 = vmatprep.mubr.bf16.mxu0 0
          %2440 = vmatmul.mubr.bf16.gmra.mxu0 %v2371
          %v2441 = vpop.f32.mrf.mxu0
          %v2442 = vadd.f32 0.0, %v2441
          %v2443 = vpop.f32.mrf.mxu0
          %v2444 = vpop.f32.mrf.mxu0
          %v2445 = vadd.f32 0.0, %v2444
          %v2446 = vpop.f32.mrf.mxu0
          %2447 = vmatprep.mubr.bf16.mxu0 0
          %2448 = vmatmul.mubr.bf16.gmra.mxu0 %v2373
          %v2449 = vpop.f32.mrf.mxu0
          %v2450 = vadd.f32 0.0, %v2449
          %v2451 = vpop.f32.mrf.mxu0
          %v2452 = vpop.f32.mrf.mxu0
          %v2453 = vadd.f32 0.0, %v2452
          %v2454 = vpop.f32.mrf.mxu0
          %2455 = vmatprep.mubr.bf16.mxu0 0
          %2456 = vmatmul.mubr.bf16.gmra.mxu0 %v2375
          %v2457 = vpop.f32.mrf.mxu0
          %v2458 = vadd.f32 0.0, %v2457
          %v2459 = vpop.f32.mrf.mxu0
          %v2460 = vpop.f32.mrf.mxu0
          %v2461 = vadd.f32 0.0, %v2460
          %v2462 = vpop.f32.mrf.mxu0
          %2463 = vmatprep.mubr.bf16.mxu0 0
          %2464 = vmatmul.mubr.bf16.gmra.mxu0 %v2377
          %v2465 = vpop.f32.mrf.mxu0
          %v2466 = vadd.f32 0.0, %v2465
          %v2467 = vpop.f32.mrf.mxu0
          %v2468 = vpop.f32.mrf.mxu0
          %v2469 = vadd.f32 0.0, %v2468
          %v2470 = vpop.f32.mrf.mxu0
          %2471 = vmatprep.mubr.bf16.mxu0 0
          %2472 = vmatmul.mubr.bf16.gmra.mxu0 %v2379
          %v2473 = vpop.f32.mrf.mxu0
          %v2474 = vadd.f32 0.0, %v2473
          %v2475 = vpop.f32.mrf.mxu0
          %v2476 = vpop.f32.mrf.mxu0
          %v2477 = vadd.f32 0.0, %v2476
          %v2478 = vpop.f32.mrf.mxu0
          %2479 = vmatprep.mubr.bf16.mxu0 0
          %2480 = vmatmul.mubr.bf16.gmra.mxu0 %v2381
          %v2481 = vpop.f32.mrf.mxu0
          %v2482 = vadd.f32 0.0, %v2481
          %v2483 = vpop.f32.mrf.mxu0
          %v2484 = vpop.f32.mrf.mxu0
          %v2485 = vadd.f32 0.0, %v2484
          %v2486 = vpop.f32.mrf.mxu0
          %2487 = vmatprep.mubr.bf16.mxu0 0
          %2488 = vmatmul.mubr.bf16.gmra.mxu0 %v2383
          %v2489 = vpop.f32.mrf.mxu0
          %v2490 = vadd.f32 0.0, %v2489
          %v2491 = vpop.f32.mrf.mxu0
          %v2492 = vpop.f32.mrf.mxu0
          %v2493 = vadd.f32 0.0, %v2492
          %v2494 = vpop.f32.mrf.mxu0
          %2495 = vmatprep.mubr.bf16.mxu0 0
          %2496 = vmatmul.mubr.bf16.gmra.mxu0 %v2385
          %v2497 = vpop.f32.mrf.mxu0
          %v2498 = vadd.f32 0.0, %v2497
          %v2499 = vpop.f32.mrf.mxu0
          %v2500 = vpop.f32.mrf.mxu0
          %v2501 = vadd.f32 0.0, %v2500
          %v2502 = vpop.f32.mrf.mxu0
          %2503 = vmatprep.mubr.bf16.mxu0 0
          %2504 = vmatmul.mubr.bf16.gmra.mxu0 %v2387
          %v2505 = vpop.f32.mrf.mxu0
          %v2506 = vadd.f32 0.0, %v2505
          %v2507 = vpop.f32.mrf.mxu0
          %v2508 = vpop.f32.mrf.mxu0
          %v2509 = vadd.f32 0.0, %v2508
          %v2510 = vpop.f32.mrf.mxu0
          %2511 = vmatprep.mubr.bf16.mxu0 0
          %2512 = vmatmul.mubr.bf16.gmra.mxu0 %v2389
          %v2513 = vpop.f32.mrf.mxu0
          %v2514 = vadd.f32 0.0, %v2513
          %v2515 = vpop.f32.mrf.mxu0
          %v2516 = vpop.f32.mrf.mxu0
          %v2517 = vadd.f32 0.0, %v2516
          %v2518 = vpop.f32.mrf.mxu0
          %2519 = vmatprep.mubr.bf16.mxu0 0
          %2520 = vmatmul.mubr.bf16.gmra.mxu0 %v2391
          %v2521 = vpop.f32.mrf.mxu0
          %v2522 = vadd.f32 0.0, %v2521
          %v2523 = vpop.f32.mrf.mxu0
          %v2524 = vpop.f32.mrf.mxu0
          %v2525 = vadd.f32 0.0, %v2524
          %v2526 = vpop.f32.mrf.mxu0
          %2527 = vmatprep.mubr.bf16.mxu0 0
          %2528 = vmatmul.mubr.bf16.gmra.mxu0 %v2393
          %v2529 = vpop.f32.mrf.mxu0
          %v2530 = vadd.f32 0.0, %v2529
          %v2531 = vpop.f32.mrf.mxu0
          %v2532 = vpop.f32.mrf.mxu0
          %v2533 = vadd.f32 0.0, %v2532
          %v2534 = vpop.f32.mrf.mxu0
          %2535 = vmatprep.mubr.bf16.mxu0 0
          %2536 = vmatmul.mubr.bf16.gmra.mxu0 %v2395
          %v2537 = vpop.f32.mrf.mxu0
          %v2538 = vadd.f32 0.0, %v2537
          %v2539 = vpop.f32.mrf.mxu0
          %v2540 = vpop.f32.mrf.mxu0
          %v2541 = vadd.f32 0.0, %v2540
          %v2542 = vpop.f32.mrf.mxu0
          %2543 = vmatprep.mubr.bf16.mxu0 0
          %2544 = vmatmul.mubr.bf16.gmra.mxu0 %v2397
          %v2545 = vpop.f32.mrf.mxu0
          %v2546 = vadd.f32 0.0, %v2545
          %v2547 = vpop.f32.mrf.mxu0
          %v2548 = vpop.f32.mrf.mxu0
          %v2549 = vadd.f32 0.0, %v2548
          %v2550 = vpop.f32.mrf.mxu0
          %2551 = vmatprep.mubr.bf16.mxu0 0
          %2552 = vmatmul.mubr.bf16.gmra.mxu0 %v2399
          %v2553 = vpop.f32.mrf.mxu0
          %v2554 = vadd.f32 0.0, %v2553
          %v2555 = vpop.f32.mrf.mxu0
          %v2556 = vpop.f32.mrf.mxu0
          %v2557 = vadd.f32 0.0, %v2556
          %v2558 = vpop.f32.mrf.mxu0
          %2559 = vmatprep.mubr.bf16.mxu0 0
          %2560 = vmatmul.mubr.bf16.gmra.mxu0 %v2401
          %v2561 = vpop.f32.mrf.mxu0
          %v2562 = vadd.f32 0.0, %v2561
          %v2563 = vpop.f32.mrf.mxu0
          %v2564 = vpop.f32.mrf.mxu0
          %v2565 = vadd.f32 0.0, %v2564
          %v2566 = vpop.f32.mrf.mxu0
          %2567 = vdwg.mxu0
          %v2568 = vmax.f32 %v2442, 0.0
          %v2569 = vmax.f32 %v2445, 0.0
          %v2570 = vmax.f32 %v2450, 0.0
          %v2571 = vmax.f32 %v2453, 0.0
          %v2572 = vmax.f32 %v2458, 0.0
          %v2573 = vmax.f32 %v2461, 0.0
          %v2574 = vmax.f32 %v2466, 0.0
          %v2575 = vmax.f32 %v2469, 0.0
          %v2576 = vmax.f32 %v2474, 0.0
          %v2577 = vmax.f32 %v2477, 0.0
          %v2578 = vmax.f32 %v2482, 0.0
          %v2579 = vmax.f32 %v2485, 0.0
          %v2580 = vmax.f32 %v2490, 0.0
          %v2581 = vmax.f32 %v2493, 0.0
          %v2582 = vmax.f32 %v2498, 0.0
          %v2583 = vmax.f32 %v2501, 0.0
          %v2584 = vmax.f32 %v2506, 0.0
          %v2585 = vmax.f32 %v2509, 0.0
          %v2586 = vmax.f32 %v2514, 0.0
          %v2587 = vmax.f32 %v2517, 0.0
          %v2588 = vmax.f32 %v2522, 0.0
          %v2589 = vmax.f32 %v2525, 0.0
          %v2590 = vmax.f32 %v2530, 0.0
          %v2591 = vmax.f32 %v2533, 0.0
          %v2592 = vmax.f32 %v2538, 0.0
          %v2593 = vmax.f32 %v2541, 0.0
          %v2594 = vmax.f32 %v2546, 0.0
          %v2595 = vmax.f32 %v2549, 0.0
          %v2596 = vmax.f32 %v2554, 0.0
          %v2597 = vmax.f32 %v2557, 0.0
          %v2598 = vmax.f32 %v2562, 0.0
          %v2599 = vmax.f32 %v2565, 0.0
          %v2600 = vpack.c.bf16 %v2569, %v2568
          %v2601 = vpack.c.bf16 %v2571, %v2570
          %v2602 = vpack.c.bf16 %v2573, %v2572
          %v2603 = vpack.c.bf16 %v2575, %v2574
          %v2604 = vpack.c.bf16 %v2577, %v2576
          %v2605 = vpack.c.bf16 %v2579, %v2578
          %v2606 = vpack.c.bf16 %v2581, %v2580
          %v2607 = vpack.c.bf16 %v2583, %v2582
          %v2608 = vpack.c.bf16 %v2585, %v2584
          %v2609 = vpack.c.bf16 %v2587, %v2586
          %v2610 = vpack.c.bf16 %v2589, %v2588
          %v2611 = vpack.c.bf16 %v2591, %v2590
          %v2612 = vpack.c.bf16 %v2593, %v2592
          %v2613 = vpack.c.bf16 %v2595, %v2594
          %v2614 = vpack.c.bf16 %v2597, %v2596
          %v2615 = vpack.c.bf16 %v2599, %v2598
          %v2632 = vunpack.c.l.b16 %v2600
          %v2633 = vunpack.c.h.b16 %v2600
          %v2634 = vunpack.c.l.b16 %v2601
          %v2635 = vunpack.c.h.b16 %v2601
          %v2636 = vunpack.c.l.b16 %v2602
          %v2637 = vunpack.c.h.b16 %v2602
          %v2638 = vunpack.c.l.b16 %v2603
          %v2639 = vunpack.c.h.b16 %v2603
          %v2640 = vunpack.c.l.b16 %v2604
          %v2641 = vunpack.c.h.b16 %v2604
          %v2642 = vunpack.c.l.b16 %v2605
          %v2643 = vunpack.c.h.b16 %v2605
          %v2644 = vunpack.c.l.b16 %v2606
          %v2645 = vunpack.c.h.b16 %v2606
          %v2646 = vunpack.c.l.b16 %v2607
          %v2647 = vunpack.c.h.b16 %v2607
          %v2648 = vunpack.c.l.b16 %v2608
          %v2649 = vunpack.c.h.b16 %v2608
          %v2650 = vunpack.c.l.b16 %v2609
          %v2651 = vunpack.c.h.b16 %v2609
          %v2652 = vunpack.c.l.b16 %v2610
          %v2653 = vunpack.c.h.b16 %v2610
          %v2654 = vunpack.c.l.b16 %v2611
          %v2655 = vunpack.c.h.b16 %v2611
          %v2656 = vunpack.c.l.b16 %v2612
          %v2657 = vunpack.c.h.b16 %v2612
          %v2658 = vunpack.c.l.b16 %v2613
          %v2659 = vunpack.c.h.b16 %v2613
          %v2660 = vunpack.c.l.b16 %v2614
          %v2661 = vunpack.c.h.b16 %v2614
          %v2662 = vunpack.c.l.b16 %v2615
          %v2663 = vunpack.c.h.b16 %v2615
          %v2664 = vpack.c.b16 %v2632, %v2632
          %v2665 = vpack.c.b16 %v2633, %v2633
          %v2666 = vpack.c.b16 %v2634, %v2634
          %v2667 = vpack.c.b16 %v2635, %v2635
          %v2668 = vpack.c.b16 %v2636, %v2636
          %v2669 = vpack.c.b16 %v2637, %v2637
          %v2670 = vpack.c.b16 %v2638, %v2638
          %v2671 = vpack.c.b16 %v2639, %v2639
          %v2672 = vpack.c.b16 %v2640, %v2640
          %v2673 = vpack.c.b16 %v2641, %v2641
          %v2674 = vpack.c.b16 %v2642, %v2642
          %v2675 = vpack.c.b16 %v2643, %v2643
          %v2676 = vpack.c.b16 %v2644, %v2644
          %v2677 = vpack.c.b16 %v2645, %v2645
          %v2678 = vpack.c.b16 %v2646, %v2646
          %v2679 = vpack.c.b16 %v2647, %v2647
          %v2680 = vpack.c.b16 %v2648, %v2648
          %v2681 = vpack.c.b16 %v2649, %v2649
          %v2682 = vpack.c.b16 %v2650, %v2650
          %v2683 = vpack.c.b16 %v2651, %v2651
          %v2684 = vpack.c.b16 %v2652, %v2652
          %v2685 = vpack.c.b16 %v2653, %v2653
          %v2686 = vpack.c.b16 %v2654, %v2654
          %v2687 = vpack.c.b16 %v2655, %v2655
          %v2688 = vpack.c.b16 %v2656, %v2656
          %v2689 = vpack.c.b16 %v2657, %v2657
          %v2690 = vpack.c.b16 %v2658, %v2658
          %v2691 = vpack.c.b16 %v2659, %v2659
          %v2692 = vpack.c.b16 %v2660, %v2660
          %v2693 = vpack.c.b16 %v2661, %v2661
          %v2694 = vpack.c.b16 %v2662, %v2662
          %v2695 = vpack.c.b16 %v2663, %v2663
          %vm2696 = vsmask.f32 256
          %vm2697 = vsmask.f32 4368
          %vm2698 = vmor %vm2696, %vm2697
          %v2700 = vshrl.u32 %v2664, 16
          %v2702 = vrot.slane %v2700, 7
          %v2703 = vshll.u32 %v2664, 16
          %v2705 = vor.u32 %v2702, %v2703
          %v2706 = vrot.slane %v2702, 4
          %v2708 = vshrl.u32 %v2665, 16
          %v2710 = vrot.slane %v2708, 7
          %v2711 = vshll.u32 %v2665, 16
          %v2713 = vor.u32 %v2710, %v2711
          %v2714 = vsel %vm2698, %v2706, %v2713
          %v2715 = vrot.slane %v2710, 4
          %v2717 = vshrl.u32 %v2666, 16
          %v2719 = vrot.slane %v2717, 7
          %v2720 = vshll.u32 %v2666, 16
          %v2722 = vor.u32 %v2719, %v2720
          %v2723 = vrot.slane %v2719, 4
          %v2725 = vshrl.u32 %v2667, 16
          %v2727 = vrot.slane %v2725, 7
          %v2728 = vshll.u32 %v2667, 16
          %v2730 = vor.u32 %v2727, %v2728
          %v2731 = vsel %vm2698, %v2723, %v2730
          %v2732 = vrot.slane %v2727, 4
          %v2734 = vshrl.u32 %v2668, 16
          %v2736 = vrot.slane %v2734, 7
          %v2737 = vshll.u32 %v2668, 16
          %v2739 = vor.u32 %v2736, %v2737
          %v2740 = vrot.slane %v2736, 4
          %v2742 = vshrl.u32 %v2669, 16
          %v2744 = vrot.slane %v2742, 7
          %v2745 = vshll.u32 %v2669, 16
          %v2747 = vor.u32 %v2744, %v2745
          %v2748 = vsel %vm2698, %v2740, %v2747
          %v2749 = vrot.slane %v2744, 4
          %v2751 = vshrl.u32 %v2670, 16
          %v2753 = vrot.slane %v2751, 7
          %v2754 = vshll.u32 %v2670, 16
          %v2756 = vor.u32 %v2753, %v2754
          %v2757 = vrot.slane %v2753, 4
          %v2759 = vshrl.u32 %v2671, 16
          %v2761 = vrot.slane %v2759, 7
          %v2762 = vshll.u32 %v2671, 16
          %v2764 = vor.u32 %v2761, %v2762
          %v2765 = vsel %vm2698, %v2757, %v2764
          %v2766 = vrot.slane %v2761, 4
          %v2768 = vshrl.u32 %v2672, 16
          %v2770 = vrot.slane %v2768, 7
          %v2771 = vshll.u32 %v2672, 16
          %v2773 = vor.u32 %v2770, %v2771
          %v2774 = vrot.slane %v2770, 4
          %v2776 = vshrl.u32 %v2673, 16
          %v2778 = vrot.slane %v2776, 7
          %v2779 = vshll.u32 %v2673, 16
          %v2781 = vor.u32 %v2778, %v2779
          %v2782 = vsel %vm2698, %v2774, %v2781
          %v2783 = vrot.slane %v2778, 4
          %v2785 = vshrl.u32 %v2674, 16
          %v2787 = vrot.slane %v2785, 7
          %v2788 = vshll.u32 %v2674, 16
          %v2790 = vor.u32 %v2787, %v2788
          %v2791 = vrot.slane %v2787, 4
          %v2793 = vshrl.u32 %v2675, 16
          %v2795 = vrot.slane %v2793, 7
          %v2796 = vshll.u32 %v2675, 16
          %v2798 = vor.u32 %v2795, %v2796
          %v2799 = vsel %vm2698, %v2791, %v2798
          %v2800 = vrot.slane %v2795, 4
          %v2802 = vshrl.u32 %v2676, 16
          %v2804 = vrot.slane %v2802, 7
          %v2805 = vshll.u32 %v2676, 16
          %v2807 = vor.u32 %v2804, %v2805
          %v2808 = vrot.slane %v2804, 4
          %v2810 = vshrl.u32 %v2677, 16
          %v2812 = vrot.slane %v2810, 7
          %v2813 = vshll.u32 %v2677, 16
          %v2815 = vor.u32 %v2812, %v2813
          %v2816 = vsel %vm2698, %v2808, %v2815
          %v2817 = vrot.slane %v2812, 4
          %v2819 = vshrl.u32 %v2678, 16
          %v2821 = vrot.slane %v2819, 7
          %v2822 = vshll.u32 %v2678, 16
          %v2824 = vor.u32 %v2821, %v2822
          %v2825 = vrot.slane %v2821, 4
          %v2827 = vshrl.u32 %v2679, 16
          %v2829 = vrot.slane %v2827, 7
          %v2830 = vshll.u32 %v2679, 16
          %v2832 = vor.u32 %v2829, %v2830
          %v2833 = vsel %vm2698, %v2825, %v2832
          %v2834 = vrot.slane %v2829, 4
          %v2836 = vshrl.u32 %v2680, 16
          %v2838 = vrot.slane %v2836, 7
          %v2839 = vshll.u32 %v2680, 16
          %v2841 = vor.u32 %v2838, %v2839
          %v2842 = vrot.slane %v2838, 4
          %v2844 = vshrl.u32 %v2681, 16
          %v2846 = vrot.slane %v2844, 7
          %v2847 = vshll.u32 %v2681, 16
          %v2849 = vor.u32 %v2846, %v2847
          %v2850 = vsel %vm2698, %v2842, %v2849
          %v2851 = vrot.slane %v2846, 4
          %v2853 = vshrl.u32 %v2682, 16
          %v2855 = vrot.slane %v2853, 7
          %v2856 = vshll.u32 %v2682, 16
          %v2858 = vor.u32 %v2855, %v2856
          %v2859 = vrot.slane %v2855, 4
          %v2861 = vshrl.u32 %v2683, 16
          %v2863 = vrot.slane %v2861, 7
          %v2864 = vshll.u32 %v2683, 16
          %v2866 = vor.u32 %v2863, %v2864
          %v2867 = vsel %vm2698, %v2859, %v2866
          %v2868 = vrot.slane %v2863, 4
          %v2870 = vshrl.u32 %v2684, 16
          %v2872 = vrot.slane %v2870, 7
          %v2873 = vshll.u32 %v2684, 16
          %v2875 = vor.u32 %v2872, %v2873
          %v2876 = vrot.slane %v2872, 4
          %v2878 = vshrl.u32 %v2685, 16
          %v2880 = vrot.slane %v2878, 7
          %v2881 = vshll.u32 %v2685, 16
          %v2883 = vor.u32 %v2880, %v2881
          %v2884 = vsel %vm2698, %v2876, %v2883
          %v2885 = vrot.slane %v2880, 4
          %v2887 = vshrl.u32 %v2686, 16
          %v2889 = vrot.slane %v2887, 7
          %v2890 = vshll.u32 %v2686, 16
          %v2892 = vor.u32 %v2889, %v2890
          %v2893 = vrot.slane %v2889, 4
          %v2895 = vshrl.u32 %v2687, 16
          %v2897 = vrot.slane %v2895, 7
          %v2898 = vshll.u32 %v2687, 16
          %v2900 = vor.u32 %v2897, %v2898
          %v2901 = vsel %vm2698, %v2893, %v2900
          %v2902 = vrot.slane %v2897, 4
          %v2904 = vshrl.u32 %v2688, 16
          %v2906 = vrot.slane %v2904, 7
          %v2907 = vshll.u32 %v2688, 16
          %v2909 = vor.u32 %v2906, %v2907
          %v2910 = vrot.slane %v2906, 4
          %v2912 = vshrl.u32 %v2689, 16
          %v2914 = vrot.slane %v2912, 7
          %v2915 = vshll.u32 %v2689, 16
          %v2917 = vor.u32 %v2914, %v2915
          %v2918 = vsel %vm2698, %v2910, %v2917
          %v2919 = vrot.slane %v2914, 4
          %v2921 = vshrl.u32 %v2690, 16
          %v2923 = vrot.slane %v2921, 7
          %v2924 = vshll.u32 %v2690, 16
          %v2926 = vor.u32 %v2923, %v2924
          %v2927 = vrot.slane %v2923, 4
          %v2929 = vshrl.u32 %v2691, 16
          %v2931 = vrot.slane %v2929, 7
          %v2932 = vshll.u32 %v2691, 16
          %v2934 = vor.u32 %v2931, %v2932
          %v2935 = vsel %vm2698, %v2927, %v2934
          %v2936 = vrot.slane %v2931, 4
          %v2938 = vshrl.u32 %v2692, 16
          %v2940 = vrot.slane %v2938, 7
          %v2941 = vshll.u32 %v2692, 16
          %v2943 = vor.u32 %v2940, %v2941
          %v2944 = vrot.slane %v2940, 4
          %v2946 = vshrl.u32 %v2693, 16
          %v2948 = vrot.slane %v2946, 7
          %v2949 = vshll.u32 %v2693, 16
          %v2951 = vor.u32 %v2948, %v2949
          %v2952 = vsel %vm2698, %v2944, %v2951
          %v2953 = vrot.slane %v2948, 4
          %v2955 = vshrl.u32 %v2694, 16
          %v2957 = vrot.slane %v2955, 7
          %v2958 = vshll.u32 %v2694, 16
          %v2960 = vor.u32 %v2957, %v2958
          %v2961 = vrot.slane %v2957, 4
          %v2963 = vshrl.u32 %v2695, 16
          %v2965 = vrot.slane %v2963, 7
          %v2966 = vshll.u32 %v2695, 16
          %v2968 = vor.u32 %v2965, %v2966
          %v2969 = vsel %vm2698, %v2961, %v2968
          %v2970 = vrot.slane %v2965, 4
          %s3019 = scalar_lea.vmem [#allocation2], 12
          %vm3020 = vcmask 519168
          %vm3021 = vsmask.f32 7938
          %vm3022 = vmand %vm3020, %vm3021
          %v3023 = vld [vmem:[%s3019] sm:$0xf]
          %v3024 = vsel %vm3022, %v2705, %v3023
          %3025 = vst [vmem:[%s3019] sm:$0xf] %v3024
          %3026 = vst.msk [vmem:[%s3019 + $0x4] sm:$0xf] %vm260, %v2714
          %vm3027 = vcmask 516096
          %vm3028 = vmand %vm3027, %vm2696
          %v3029 = vld [vmem:[%s3019 + $0x8] sm:$0x1]
          %v3030 = vsel %vm3028, %v2715, %v3029
          %3031 = vst [vmem:[%s3019 + $0x8] sm:$0x1] %v3030
          %v3032 = vld [vmem:[%s3019 + $0xc] sm:$0xf]
          %v3033 = vsel %vm3022, %v2722, %v3032
          %3034 = vst [vmem:[%s3019 + $0xc] sm:$0xf] %v3033
          %3035 = vst.msk [vmem:[%s3019 + $0x10] sm:$0xf] %vm260, %v2731
          %v3036 = vld [vmem:[%s3019 + $0x14] sm:$0x1]
          %v3037 = vsel %vm3028, %v2732, %v3036
          %3038 = vst [vmem:[%s3019 + $0x14] sm:$0x1] %v3037
          %v3039 = vld [vmem:[%s3019 + $0x18] sm:$0xf]
          %v3040 = vsel %vm3022, %v2739, %v3039
          %3041 = vst [vmem:[%s3019 + $0x18] sm:$0xf] %v3040
          %3042 = vst.msk [vmem:[%s3019 + $0x1c] sm:$0xf] %vm260, %v2748
          %v3043 = vld [vmem:[%s3019 + $0x20] sm:$0x1]
          %v3044 = vsel %vm3028, %v2749, %v3043
          %3045 = vst [vmem:[%s3019 + $0x20] sm:$0x1] %v3044
          %v3046 = vld [vmem:[%s3019 + $0x24] sm:$0xf]
          %v3047 = vsel %vm3022, %v2756, %v3046
          %3048 = vst [vmem:[%s3019 + $0x24] sm:$0xf] %v3047
          %3049 = vst.msk [vmem:[%s3019 + $0x28] sm:$0xf] %vm260, %v2765
          %v3050 = vld [vmem:[%s3019 + $0x2c] sm:$0x1]
          %v3051 = vsel %vm3028, %v2766, %v3050
          %3052 = vst [vmem:[%s3019 + $0x2c] sm:$0x1] %v3051
          %v3053 = vld [vmem:[%s3019 + $0x30] sm:$0xf]
          %v3054 = vsel %vm3022, %v2773, %v3053
          %3055 = vst [vmem:[%s3019 + $0x30] sm:$0xf] %v3054
          %3056 = vst.msk [vmem:[%s3019 + $0x34] sm:$0xf] %vm260, %v2782
          %v3057 = vld [vmem:[%s3019 + $0x38] sm:$0x1]
          %v3058 = vsel %vm3028, %v2783, %v3057
          %3059 = vst [vmem:[%s3019 + $0x38] sm:$0x1] %v3058
          %v3060 = vld [vmem:[%s3019 + $0x3c] sm:$0xf]
          %v3061 = vsel %vm3022, %v2790, %v3060
          %3062 = vst [vmem:[%s3019 + $0x3c] sm:$0xf] %v3061
          %3063 = vst.msk [vmem:[%s3019 + $0x40] sm:$0xf] %vm260, %v2799
          %v3064 = vld [vmem:[%s3019 + $0x44] sm:$0x1]
          %v3065 = vsel %vm3028, %v2800, %v3064
          %3066 = vst [vmem:[%s3019 + $0x44] sm:$0x1] %v3065
          %v3067 = vld [vmem:[%s3019 + $0x48] sm:$0xf]
          %v3068 = vsel %vm3022, %v2807, %v3067
          %3069 = vst [vmem:[%s3019 + $0x48] sm:$0xf] %v3068
          %3070 = vst.msk [vmem:[%s3019 + $0x4c] sm:$0xf] %vm260, %v2816
          %v3071 = vld [vmem:[%s3019 + $0x50] sm:$0x1]
          %v3072 = vsel %vm3028, %v2817, %v3071
          %3073 = vst [vmem:[%s3019 + $0x50] sm:$0x1] %v3072
          %v3074 = vld [vmem:[%s3019 + $0x54] sm:$0xf]
          %v3075 = vsel %vm3022, %v2824, %v3074
          %3076 = vst [vmem:[%s3019 + $0x54] sm:$0xf] %v3075
          %3077 = vst.msk [vmem:[%s3019 + $0x58] sm:$0xf] %vm260, %v2833
          %v3078 = vld [vmem:[%s3019 + $0x5c] sm:$0x1]
          %v3079 = vsel %vm3028, %v2834, %v3078
          %3080 = vst [vmem:[%s3019 + $0x5c] sm:$0x1] %v3079
          %v3081 = vld [vmem:[%s3019 + $0x60] sm:$0xf]
          %v3082 = vsel %vm3022, %v2841, %v3081
          %3083 = vst [vmem:[%s3019 + $0x60] sm:$0xf] %v3082
          %3084 = vst.msk [vmem:[%s3019 + $0x64] sm:$0xf] %vm260, %v2850
          %v3085 = vld [vmem:[%s3019 + $0x68] sm:$0x1]
          %v3086 = vsel %vm3028, %v2851, %v3085
          %3087 = vst [vmem:[%s3019 + $0x68] sm:$0x1] %v3086
          %v3088 = vld [vmem:[%s3019 + $0x6c] sm:$0xf]
          %v3089 = vsel %vm3022, %v2858, %v3088
          %3090 = vst [vmem:[%s3019 + $0x6c] sm:$0xf] %v3089
          %3091 = vst.msk [vmem:[%s3019 + $0x70] sm:$0xf] %vm260, %v2867
          %v3092 = vld [vmem:[%s3019 + $0x74] sm:$0x1]
          %v3093 = vsel %vm3028, %v2868, %v3092
          %3094 = vst [vmem:[%s3019 + $0x74] sm:$0x1] %v3093
          %v3095 = vld [vmem:[%s3019 + $0x78] sm:$0xf]
          %v3096 = vsel %vm3022, %v2875, %v3095
          %3097 = vst [vmem:[%s3019 + $0x78] sm:$0xf] %v3096
          %3098 = vst.msk [vmem:[%s3019 + $0x7c] sm:$0xf] %vm260, %v2884
          %v3099 = vld [vmem:[%s3019 + $0x80] sm:$0x1]
          %v3100 = vsel %vm3028, %v2885, %v3099
          %3101 = vst [vmem:[%s3019 + $0x80] sm:$0x1] %v3100
          %v3102 = vld [vmem:[%s3019 + $0x84] sm:$0xf]
          %v3103 = vsel %vm3022, %v2892, %v3102
          %3104 = vst [vmem:[%s3019 + $0x84] sm:$0xf] %v3103
          %3105 = vst.msk [vmem:[%s3019 + $0x88] sm:$0xf] %vm260, %v2901
          %v3106 = vld [vmem:[%s3019 + $0x8c] sm:$0x1]
          %v3107 = vsel %vm3028, %v2902, %v3106
          %3108 = vst [vmem:[%s3019 + $0x8c] sm:$0x1] %v3107
          %v3109 = vld [vmem:[%s3019 + $0x90] sm:$0xf]
          %v3110 = vsel %vm3022, %v2909, %v3109
          %3111 = vst [vmem:[%s3019 + $0x90] sm:$0xf] %v3110
          %3112 = vst.msk [vmem:[%s3019 + $0x94] sm:$0xf] %vm260, %v2918
          %v3113 = vld [vmem:[%s3019 + $0x98] sm:$0x1]
          %v3114 = vsel %vm3028, %v2919, %v3113
          %3115 = vst [vmem:[%s3019 + $0x98] sm:$0x1] %v3114
          %v3116 = vld [vmem:[%s3019 + $0x9c] sm:$0xf]
          %v3117 = vsel %vm3022, %v2926, %v3116
          %3118 = vst [vmem:[%s3019 + $0x9c] sm:$0xf] %v3117
          %3119 = vst.msk [vmem:[%s3019 + $0xa0] sm:$0xf] %vm260, %v2935
          %v3120 = vld [vmem:[%s3019 + $0xa4] sm:$0x1]
          %v3121 = vsel %vm3028, %v2936, %v3120
          %3122 = vst [vmem:[%s3019 + $0xa4] sm:$0x1] %v3121
          %v3123 = vld [vmem:[%s3019 + $0xa8] sm:$0xf]
          %v3124 = vsel %vm3022, %v2943, %v3123
          %3125 = vst [vmem:[%s3019 + $0xa8] sm:$0xf] %v3124
          %3126 = vst.msk [vmem:[%s3019 + $0xac] sm:$0xf] %vm260, %v2952
          %v3127 = vld [vmem:[%s3019 + $0xb0] sm:$0x1]
          %v3128 = vsel %vm3028, %v2953, %v3127
          %3129 = vst [vmem:[%s3019 + $0xb0] sm:$0x1] %v3128
          %v3130 = vld [vmem:[%s3019 + $0xb4] sm:$0xf]
          %v3131 = vsel %vm3022, %v2960, %v3130
          %3132 = vst [vmem:[%s3019 + $0xb4] sm:$0xf] %v3131
          %3133 = vst.msk [vmem:[%s3019 + $0xb8] sm:$0xf] %vm260, %v2969
          %v3134 = vld [vmem:[%s3019 + $0xbc] sm:$0x1]
          %v3135 = vsel %vm3028, %v2970, %v3134
          %3136 = vst [vmem:[%s3019 + $0xbc] sm:$0x1] %v3135
        $region44: #{vdsr_forward.1} parent=39 // pred_fallthru
          _
        %p3137 = scmp.ge.s32.totalorder %s24, 1
        %p3138 = scmp.le.s32.totalorder %s24, 18
        %p3139 = pnand %p3137, %p3138
        %p3140 = pneg %p3139
        // Predicated region
        $region45: #{vdsr_forward.1} parent=39 // pred_check
          _
        $region46: #{vdsr_forward.1} parent=39 // pred_check_branch
          %3142 = sbr.rel (%p3139) target = $region48
        $region47: #{vdsr_forward.1} parent=39 // pred_region
          %s3143 = ssub.s32 %s24, 1
          %s3144 = smul.u32 %s3143, 72
          %s3145 = smul.addr %s3144, 4
          %s3146 = scalar_lea.vmem %s3, %s3145
          %v3147 = vld [vmem:[%s3146] sm:$0xf]
          %v3148 = vld [vmem:[%s3146 + $0x4] sm:$0xf]
          %v3149 = vld [vmem:[%s3146 + $0x8] sm:$0xf]
          %v3150 = vld [vmem:[%s3146 + $0xc] sm:$0xf]
          %v3151 = vld [vmem:[%s3146 + $0x10] sm:$0xf]
          %v3152 = vld [vmem:[%s3146 + $0x14] sm:$0xf]
          %v3153 = vld [vmem:[%s3146 + $0x18] sm:$0xf]
          %v3154 = vld [vmem:[%s3146 + $0x1c] sm:$0xf]
          %v3155 = vld [vmem:[%s3146 + $0x20] sm:$0xf]
          %v3156 = vld [vmem:[%s3146 + $0x24] sm:$0xf]
          %v3157 = vld [vmem:[%s3146 + $0x28] sm:$0xf]
          %v3158 = vld [vmem:[%s3146 + $0x2c] sm:$0xf]
          %v3159 = vld [vmem:[%s3146 + $0x30] sm:$0xf]
          %v3160 = vld [vmem:[%s3146 + $0x34] sm:$0xf]
          %v3161 = vld [vmem:[%s3146 + $0x38] sm:$0xf]
          %v3162 = vld [vmem:[%s3146 + $0x3c] sm:$0xf]
          %v3163 = vld [vmem:[%s3146 + $0x40] sm:$0xf]
          %v3164 = vld [vmem:[%s3146 + $0x44] sm:$0xf]
          %v3165 = vld [vmem:[%s3146 + $0x48] sm:$0xf]
          %v3166 = vld [vmem:[%s3146 + $0x4c] sm:$0xf]
          %v3167 = vld [vmem:[%s3146 + $0x50] sm:$0xf]
          %v3168 = vld [vmem:[%s3146 + $0x54] sm:$0xf]
          %v3169 = vld [vmem:[%s3146 + $0x58] sm:$0xf]
          %v3170 = vld [vmem:[%s3146 + $0x5c] sm:$0xf]
          %v3171 = vld [vmem:[%s3146 + $0x60] sm:$0xf]
          %v3172 = vld [vmem:[%s3146 + $0x64] sm:$0xf]
          %v3173 = vld [vmem:[%s3146 + $0x68] sm:$0xf]
          %v3174 = vld [vmem:[%s3146 + $0x6c] sm:$0xf]
          %v3175 = vld [vmem:[%s3146 + $0x70] sm:$0xf]
          %v3176 = vld [vmem:[%s3146 + $0x74] sm:$0xf]
          %v3177 = vld [vmem:[%s3146 + $0x78] sm:$0xf]
          %v3178 = vld [vmem:[%s3146 + $0x7c] sm:$0xf]
          %v3179 = vld [vmem:[%s3146 + $0x80] sm:$0xf]
          %v3180 = vld [vmem:[%s3146 + $0x84] sm:$0xf]
          %v3181 = vld [vmem:[%s3146 + $0x88] sm:$0xf]
          %v3182 = vld [vmem:[%s3146 + $0x8c] sm:$0xf]
          %v3183 = vld [vmem:[%s3146 + $0x90] sm:$0xf]
          %v3184 = vld [vmem:[%s3146 + $0x94] sm:$0xf]
          %v3185 = vld [vmem:[%s3146 + $0x98] sm:$0xf]
          %v3186 = vld [vmem:[%s3146 + $0x9c] sm:$0xf]
          %v3187 = vld [vmem:[%s3146 + $0xa0] sm:$0xf]
          %v3188 = vld [vmem:[%s3146 + $0xa4] sm:$0xf]
          %v3189 = vld [vmem:[%s3146 + $0xa8] sm:$0xf]
          %v3190 = vld [vmem:[%s3146 + $0xac] sm:$0xf]
          %v3191 = vld [vmem:[%s3146 + $0xb0] sm:$0xf]
          %v3192 = vld [vmem:[%s3146 + $0xb4] sm:$0xf]
          %v3193 = vld [vmem:[%s3146 + $0xb8] sm:$0xf]
          %v3194 = vld [vmem:[%s3146 + $0xbc] sm:$0xf]
          %v3195 = vld [vmem:[%s3146 + $0xc0] sm:$0xf]
          %v3196 = vld [vmem:[%s3146 + $0xc4] sm:$0xf]
          %v3197 = vld [vmem:[%s3146 + $0xc8] sm:$0xf]
          %v3198 = vld [vmem:[%s3146 + $0xcc] sm:$0xf]
          %v3199 = vld [vmem:[%s3146 + $0xd0] sm:$0xf]
          %v3200 = vld [vmem:[%s3146 + $0xd4] sm:$0xf]
          %v3201 = vld [vmem:[%s3146 + $0xd8] sm:$0xf]
          %v3202 = vld [vmem:[%s3146 + $0xdc] sm:$0xf]
          %v3203 = vld [vmem:[%s3146 + $0xe0] sm:$0xf]
          %v3204 = vld [vmem:[%s3146 + $0xe4] sm:$0xf]
          %v3205 = vld [vmem:[%s3146 + $0xe8] sm:$0xf]
          %v3206 = vld [vmem:[%s3146 + $0xec] sm:$0xf]
          %v3207 = vld [vmem:[%s3146 + $0xf0] sm:$0xf]
          %v3208 = vld [vmem:[%s3146 + $0xf4] sm:$0xf]
          %v3209 = vld [vmem:[%s3146 + $0xf8] sm:$0xf]
          %v3210 = vld [vmem:[%s3146 + $0xfc] sm:$0xf]
          %v3211 = vld [vmem:[%s3146 + $0x100] sm:$0xf]
          %v3212 = vld [vmem:[%s3146 + $0x104] sm:$0xf]
          %v3213 = vld [vmem:[%s3146 + $0x108] sm:$0xf]
          %v3214 = vld [vmem:[%s3146 + $0x10c] sm:$0xf]
          %v3215 = vld [vmem:[%s3146 + $0x110] sm:$0xf]
          %v3216 = vld [vmem:[%s3146 + $0x114] sm:$0xf]
          %v3217 = vld [vmem:[%s3146 + $0x118] sm:$0xf]
          %v3218 = vld [vmem:[%s3146 + $0x11c] sm:$0xf]
          %s3219 = sand.u32 %s24, 1
          %p3220 = scmp.eq.s32.totalorder %s3219, 1
          // Predicated region
          $region49: #{vdsr_forward.1} parent=47 // pred_check
            %p3221 = pneg %p3220
          $region50: #{vdsr_forward.1} parent=47 // pred_check_branch
            %3223 = sbr.rel (%p3221) target = $region52
          $region51: #{vdsr_forward.1} parent=47 // pred_region
            %v3224 = vld [vmem:[#allocation2] sm:$0xf]
            %v3225 = vld [vmem:[#allocation2 + $0x4] sm:$0xf]
            %v3226 = vld [vmem:[#allocation2 + $0xc] sm:$0xf]
            %v3227 = vld [vmem:[#allocation2 + $0x10] sm:$0xf]
            %v3228 = vld [vmem:[#allocation2 + $0x18] sm:$0xf]
            %v3229 = vld [vmem:[#allocation2 + $0x1c] sm:$0xf]
            %v3230 = vld [vmem:[#allocation2 + $0x24] sm:$0xf]
            %v3231 = vld [vmem:[#allocation2 + $0x28] sm:$0xf]
            %v3232 = vld [vmem:[#allocation2 + $0x30] sm:$0xf]
            %v3233 = vld [vmem:[#allocation2 + $0x34] sm:$0xf]
            %v3234 = vld [vmem:[#allocation2 + $0x3c] sm:$0xf]
            %v3235 = vld [vmem:[#allocation2 + $0x40] sm:$0xf]
            %v3236 = vld [vmem:[#allocation2 + $0x48] sm:$0xf]
            %v3237 = vld [vmem:[#allocation2 + $0x4c] sm:$0xf]
            %v3238 = vld [vmem:[#allocation2 + $0x54] sm:$0xf]
            %v3239 = vld [vmem:[#allocation2 + $0x58] sm:$0xf]
            %v3240 = vld [vmem:[#allocation2 + $0x60] sm:$0xf]
            %v3241 = vld [vmem:[#allocation2 + $0x64] sm:$0xf]
            %v3242 = vld [vmem:[#allocation2 + $0x6c] sm:$0xf]
            %v3243 = vld [vmem:[#allocation2 + $0x70] sm:$0xf]
            %v3244 = vld [vmem:[#allocation2 + $0x78] sm:$0xf]
            %v3245 = vld [vmem:[#allocation2 + $0x7c] sm:$0xf]
            %v3246 = vld [vmem:[#allocation2 + $0x84] sm:$0xf]
            %v3247 = vld [vmem:[#allocation2 + $0x88] sm:$0xf]
            %v3248 = vld [vmem:[#allocation2 + $0x90] sm:$0xf]
            %v3249 = vld [vmem:[#allocation2 + $0x94] sm:$0xf]
            %v3250 = vld [vmem:[#allocation2 + $0x9c] sm:$0xf]
            %v3251 = vld [vmem:[#allocation2 + $0xa0] sm:$0xf]
            %v3252 = vld [vmem:[#allocation2 + $0xa8] sm:$0xf]
            %v3253 = vld [vmem:[#allocation2 + $0xac] sm:$0xf]
            %v3254 = vld [vmem:[#allocation2 + $0xb4] sm:$0xf]
            %v3255 = vld [vmem:[#allocation2 + $0xb8] sm:$0xf]
            %v3256 = vld [vmem:[#allocation2 + $0x8] sm:$0x1]
            %v3257 = vld [vmem:[#allocation2 + $0x14] sm:$0x1]
            %v3258 = vld [vmem:[#allocation2 + $0x20] sm:$0x1]
            %v3259 = vld [vmem:[#allocation2 + $0x2c] sm:$0x1]
            %v3260 = vld [vmem:[#allocation2 + $0x38] sm:$0x1]
            %v3261 = vld [vmem:[#allocation2 + $0x44] sm:$0x1]
            %v3262 = vld [vmem:[#allocation2 + $0x50] sm:$0x1]
            %v3263 = vld [vmem:[#allocation2 + $0x5c] sm:$0x1]
            %v3264 = vld [vmem:[#allocation2 + $0x68] sm:$0x1]
            %v3265 = vld [vmem:[#allocation2 + $0x74] sm:$0x1]
            %v3266 = vld [vmem:[#allocation2 + $0x80] sm:$0x1]
            %v3267 = vld [vmem:[#allocation2 + $0x8c] sm:$0x1]
            %v3268 = vld [vmem:[#allocation2 + $0x98] sm:$0x1]
            %v3269 = vld [vmem:[#allocation2 + $0xa4] sm:$0x1]
            %v3270 = vld [vmem:[#allocation2 + $0xb0] sm:$0x1]
            %v3271 = vld [vmem:[#allocation2 + $0xbc] sm:$0x1]
            %v3272 = vld [vmem:[#allocation2] sm:$0xe]
            %v3273 = vld [vmem:[#allocation2 + $0xc] sm:$0xe]
            %v3274 = vld [vmem:[#allocation2 + $0x18] sm:$0xe]
            %v3275 = vld [vmem:[#allocation2 + $0x24] sm:$0xe]
            %v3276 = vld [vmem:[#allocation2 + $0x30] sm:$0xe]
            %v3277 = vld [vmem:[#allocation2 + $0x3c] sm:$0xe]
            %v3278 = vld [vmem:[#allocation2 + $0x48] sm:$0xe]
            %v3279 = vld [vmem:[#allocation2 + $0x54] sm:$0xe]
            %v3280 = vld [vmem:[#allocation2 + $0x60] sm:$0xe]
            %v3281 = vld [vmem:[#allocation2 + $0x6c] sm:$0xe]
            %v3282 = vld [vmem:[#allocation2 + $0x78] sm:$0xe]
            %v3283 = vld [vmem:[#allocation2 + $0x84] sm:$0xe]
            %v3284 = vld [vmem:[#allocation2 + $0x90] sm:$0xe]
            %v3285 = vld [vmem:[#allocation2 + $0x9c] sm:$0xe]
            %v3286 = vld [vmem:[#allocation2 + $0xa8] sm:$0xe]
            %v3287 = vld [vmem:[#allocation2 + $0xb4] sm:$0xe]
            %s3288 = scalar_lea.vmem [#allocation2], 12
            %v3289 = vld [vmem:[%s3288] sm:$0xf]
            %v3290 = vld [vmem:[%s3288 + $0x4] sm:$0xf]
            %v3291 = vld [vmem:[%s3288 + $0xc] sm:$0xf]
            %v3292 = vld [vmem:[%s3288 + $0x10] sm:$0xf]
            %v3293 = vld [vmem:[%s3288 + $0x18] sm:$0xf]
            %v3294 = vld [vmem:[%s3288 + $0x1c] sm:$0xf]
            %v3295 = vld [vmem:[%s3288 + $0x24] sm:$0xf]
            %v3296 = vld [vmem:[%s3288 + $0x28] sm:$0xf]
            %v3297 = vld [vmem:[%s3288 + $0x30] sm:$0xf]
            %v3298 = vld [vmem:[%s3288 + $0x34] sm:$0xf]
            %v3299 = vld [vmem:[%s3288 + $0x3c] sm:$0xf]
            %v3300 = vld [vmem:[%s3288 + $0x40] sm:$0xf]
            %v3301 = vld [vmem:[%s3288 + $0x48] sm:$0xf]
            %v3302 = vld [vmem:[%s3288 + $0x4c] sm:$0xf]
            %v3303 = vld [vmem:[%s3288 + $0x54] sm:$0xf]
            %v3304 = vld [vmem:[%s3288 + $0x58] sm:$0xf]
            %v3305 = vld [vmem:[%s3288 + $0x60] sm:$0xf]
            %v3306 = vld [vmem:[%s3288 + $0x64] sm:$0xf]
            %v3307 = vld [vmem:[%s3288 + $0x6c] sm:$0xf]
            %v3308 = vld [vmem:[%s3288 + $0x70] sm:$0xf]
            %v3309 = vld [vmem:[%s3288 + $0x78] sm:$0xf]
            %v3310 = vld [vmem:[%s3288 + $0x7c] sm:$0xf]
            %v3311 = vld [vmem:[%s3288 + $0x84] sm:$0xf]
            %v3312 = vld [vmem:[%s3288 + $0x88] sm:$0xf]
            %v3313 = vld [vmem:[%s3288 + $0x90] sm:$0xf]
            %v3314 = vld [vmem:[%s3288 + $0x94] sm:$0xf]
            %v3315 = vld [vmem:[%s3288 + $0x9c] sm:$0xf]
            %v3316 = vld [vmem:[%s3288 + $0xa0] sm:$0xf]
            %v3317 = vld [vmem:[%s3288 + $0xa8] sm:$0xf]
            %v3318 = vld [vmem:[%s3288 + $0xac] sm:$0xf]
            %v3319 = vld [vmem:[%s3288 + $0xb4] sm:$0xf]
            %v3320 = vld [vmem:[%s3288 + $0xb8] sm:$0xf]
            %v3321 = vld [vmem:[%s3288 + $0x8] sm:$0x1]
            %v3322 = vld [vmem:[%s3288 + $0x14] sm:$0x1]
            %v3323 = vld [vmem:[%s3288 + $0x20] sm:$0x1]
            %v3324 = vld [vmem:[%s3288 + $0x2c] sm:$0x1]
            %v3325 = vld [vmem:[%s3288 + $0x38] sm:$0x1]
            %v3326 = vld [vmem:[%s3288 + $0x44] sm:$0x1]
            %v3327 = vld [vmem:[%s3288 + $0x50] sm:$0x1]
            %v3328 = vld [vmem:[%s3288 + $0x5c] sm:$0x1]
            %v3329 = vld [vmem:[%s3288 + $0x68] sm:$0x1]
            %v3330 = vld [vmem:[%s3288 + $0x74] sm:$0x1]
            %v3331 = vld [vmem:[%s3288 + $0x80] sm:$0x1]
            %v3332 = vld [vmem:[%s3288 + $0x8c] sm:$0x1]
            %v3333 = vld [vmem:[%s3288 + $0x98] sm:$0x1]
            %v3334 = vld [vmem:[%s3288 + $0xa4] sm:$0x1]
            %v3335 = vld [vmem:[%s3288 + $0xb0] sm:$0x1]
            %v3336 = vld [vmem:[%s3288 + $0xbc] sm:$0x1]
            %v3337 = vld [vmem:[%s3288] sm:$0xe]
            %v3338 = vld [vmem:[%s3288 + $0xc] sm:$0xe]
            %v3339 = vld [vmem:[%s3288 + $0x18] sm:$0xe]
            %v3340 = vld [vmem:[%s3288 + $0x24] sm:$0xe]
            %v3341 = vld [vmem:[%s3288 + $0x30] sm:$0xe]
            %v3342 = vld [vmem:[%s3288 + $0x3c] sm:$0xe]
            %v3343 = vld [vmem:[%s3288 + $0x48] sm:$0xe]
            %v3344 = vld [vmem:[%s3288 + $0x54] sm:$0xe]
            %v3345 = vld [vmem:[%s3288 + $0x60] sm:$0xe]
            %v3346 = vld [vmem:[%s3288 + $0x6c] sm:$0xe]
            %v3347 = vld [vmem:[%s3288 + $0x78] sm:$0xe]
            %v3348 = vld [vmem:[%s3288 + $0x84] sm:$0xe]
            %v3349 = vld [vmem:[%s3288 + $0x90] sm:$0xe]
            %v3350 = vld [vmem:[%s3288 + $0x9c] sm:$0xe]
            %v3351 = vld [vmem:[%s3288 + $0xa8] sm:$0xe]
            %v3352 = vld [vmem:[%s3288 + $0xb4] sm:$0xe]
            %s3353 = scalar_lea.vmem [#allocation2], 24
            %v3354 = vld [vmem:[%s3353] sm:$0xf]
            %v3355 = vld [vmem:[%s3353 + $0x4] sm:$0xf]
            %v3356 = vld [vmem:[%s3353 + $0xc] sm:$0xf]
            %v3357 = vld [vmem:[%s3353 + $0x10] sm:$0xf]
            %v3358 = vld [vmem:[%s3353 + $0x18] sm:$0xf]
            %v3359 = vld [vmem:[%s3353 + $0x1c] sm:$0xf]
            %v3360 = vld [vmem:[%s3353 + $0x24] sm:$0xf]
            %v3361 = vld [vmem:[%s3353 + $0x28] sm:$0xf]
            %v3362 = vld [vmem:[%s3353 + $0x30] sm:$0xf]
            %v3363 = vld [vmem:[%s3353 + $0x34] sm:$0xf]
            %v3364 = vld [vmem:[%s3353 + $0x3c] sm:$0xf]
            %v3365 = vld [vmem:[%s3353 + $0x40] sm:$0xf]
            %v3366 = vld [vmem:[%s3353 + $0x48] sm:$0xf]
            %v3367 = vld [vmem:[%s3353 + $0x4c] sm:$0xf]
            %v3368 = vld [vmem:[%s3353 + $0x54] sm:$0xf]
            %v3369 = vld [vmem:[%s3353 + $0x58] sm:$0xf]
            %v3370 = vld [vmem:[%s3353 + $0x60] sm:$0xf]
            %v3371 = vld [vmem:[%s3353 + $0x64] sm:$0xf]
            %v3372 = vld [vmem:[%s3353 + $0x6c] sm:$0xf]
            %v3373 = vld [vmem:[%s3353 + $0x70] sm:$0xf]
            %v3374 = vld [vmem:[%s3353 + $0x78] sm:$0xf]
            %v3375 = vld [vmem:[%s3353 + $0x7c] sm:$0xf]
            %v3376 = vld [vmem:[%s3353 + $0x84] sm:$0xf]
            %v3377 = vld [vmem:[%s3353 + $0x88] sm:$0xf]
            %v3378 = vld [vmem:[%s3353 + $0x90] sm:$0xf]
            %v3379 = vld [vmem:[%s3353 + $0x94] sm:$0xf]
            %v3380 = vld [vmem:[%s3353 + $0x9c] sm:$0xf]
            %v3381 = vld [vmem:[%s3353 + $0xa0] sm:$0xf]
            %v3382 = vld [vmem:[%s3353 + $0xa8] sm:$0xf]
            %v3383 = vld [vmem:[%s3353 + $0xac] sm:$0xf]
            %v3384 = vld [vmem:[%s3353 + $0xb4] sm:$0xf]
            %v3385 = vld [vmem:[%s3353 + $0xb8] sm:$0xf]
            %v3386 = vld [vmem:[%s3353 + $0x8] sm:$0x1]
            %v3387 = vld [vmem:[%s3353 + $0x14] sm:$0x1]
            %v3388 = vld [vmem:[%s3353 + $0x20] sm:$0x1]
            %v3389 = vld [vmem:[%s3353 + $0x2c] sm:$0x1]
            %v3390 = vld [vmem:[%s3353 + $0x38] sm:$0x1]
            %v3391 = vld [vmem:[%s3353 + $0x44] sm:$0x1]
            %v3392 = vld [vmem:[%s3353 + $0x50] sm:$0x1]
            %v3393 = vld [vmem:[%s3353 + $0x5c] sm:$0x1]
            %v3394 = vld [vmem:[%s3353 + $0x68] sm:$0x1]
            %v3395 = vld [vmem:[%s3353 + $0x74] sm:$0x1]
            %v3396 = vld [vmem:[%s3353 + $0x80] sm:$0x1]
            %v3397 = vld [vmem:[%s3353 + $0x8c] sm:$0x1]
            %v3398 = vld [vmem:[%s3353 + $0x98] sm:$0x1]
            %v3399 = vld [vmem:[%s3353 + $0xa4] sm:$0x1]
            %v3400 = vld [vmem:[%s3353 + $0xb0] sm:$0x1]
            %v3401 = vld [vmem:[%s3353 + $0xbc] sm:$0x1]
            %v3402 = vld [vmem:[%s3353] sm:$0xe]
            %v3403 = vld [vmem:[%s3353 + $0xc] sm:$0xe]
            %v3404 = vld [vmem:[%s3353 + $0x18] sm:$0xe]
            %v3405 = vld [vmem:[%s3353 + $0x24] sm:$0xe]
            %v3406 = vld [vmem:[%s3353 + $0x30] sm:$0xe]
            %v3407 = vld [vmem:[%s3353 + $0x3c] sm:$0xe]
            %v3408 = vld [vmem:[%s3353 + $0x48] sm:$0xe]
            %v3409 = vld [vmem:[%s3353 + $0x54] sm:$0xe]
            %v3410 = vld [vmem:[%s3353 + $0x60] sm:$0xe]
            %v3411 = vld [vmem:[%s3353 + $0x6c] sm:$0xe]
            %v3412 = vld [vmem:[%s3353 + $0x78] sm:$0xe]
            %v3413 = vld [vmem:[%s3353 + $0x84] sm:$0xe]
            %v3414 = vld [vmem:[%s3353 + $0x90] sm:$0xe]
            %v3415 = vld [vmem:[%s3353 + $0x9c] sm:$0xe]
            %v3416 = vld [vmem:[%s3353 + $0xa8] sm:$0xe]
            %v3417 = vld [vmem:[%s3353 + $0xb4] sm:$0xe]
            %v3450 = vunpack.c.l.b16 %v3224
            %v3451 = vunpack.c.l.b16 %v3225
            %v3452 = vunpack.c.l.b16 %v3226
            %v3453 = vunpack.c.l.b16 %v3227
            %v3454 = vunpack.c.l.b16 %v3228
            %v3455 = vunpack.c.l.b16 %v3229
            %v3456 = vunpack.c.l.b16 %v3230
            %v3457 = vunpack.c.l.b16 %v3231
            %v3458 = vunpack.c.l.b16 %v3232
            %v3459 = vunpack.c.l.b16 %v3233
            %v3460 = vunpack.c.l.b16 %v3234
            %v3461 = vunpack.c.l.b16 %v3235
            %v3462 = vunpack.c.l.b16 %v3236
            %v3463 = vunpack.c.l.b16 %v3237
            %v3464 = vunpack.c.l.b16 %v3238
            %v3465 = vunpack.c.l.b16 %v3239
            %v3466 = vunpack.c.l.b16 %v3240
            %v3467 = vunpack.c.l.b16 %v3241
            %v3468 = vunpack.c.l.b16 %v3242
            %v3469 = vunpack.c.l.b16 %v3243
            %v3470 = vunpack.c.l.b16 %v3244
            %v3471 = vunpack.c.l.b16 %v3245
            %v3472 = vunpack.c.l.b16 %v3246
            %v3473 = vunpack.c.l.b16 %v3247
            %v3474 = vunpack.c.l.b16 %v3248
            %v3475 = vunpack.c.l.b16 %v3249
            %v3476 = vunpack.c.l.b16 %v3250
            %v3477 = vunpack.c.l.b16 %v3251
            %v3478 = vunpack.c.l.b16 %v3252
            %v3479 = vunpack.c.l.b16 %v3253
            %v3480 = vunpack.c.l.b16 %v3254
            %v3481 = vunpack.c.l.b16 %v3255
            %v3482 = vpack.c.b16 %v3451, %v3450
            %v3483 = vpack.c.b16 %v3453, %v3452
            %v3484 = vpack.c.b16 %v3455, %v3454
            %v3485 = vpack.c.b16 %v3457, %v3456
            %v3486 = vpack.c.b16 %v3459, %v3458
            %v3487 = vpack.c.b16 %v3461, %v3460
            %v3488 = vpack.c.b16 %v3463, %v3462
            %v3489 = vpack.c.b16 %v3465, %v3464
            %v3490 = vpack.c.b16 %v3467, %v3466
            %v3491 = vpack.c.b16 %v3469, %v3468
            %v3492 = vpack.c.b16 %v3471, %v3470
            %v3493 = vpack.c.b16 %v3473, %v3472
            %v3494 = vpack.c.b16 %v3475, %v3474
            %v3495 = vpack.c.b16 %v3477, %v3476
            %v3496 = vpack.c.b16 %v3479, %v3478
            %v3497 = vpack.c.b16 %v3481, %v3480
            %v3514 = vunpack.c.l.b16 %v3256
            %v3515 = vunpack.c.l.b16 %v3257
            %v3516 = vunpack.c.l.b16 %v3258
            %v3517 = vunpack.c.l.b16 %v3259
            %v3518 = vunpack.c.l.b16 %v3260
            %v3519 = vunpack.c.l.b16 %v3261
            %v3520 = vunpack.c.l.b16 %v3262
            %v3521 = vunpack.c.l.b16 %v3263
            %v3522 = vunpack.c.l.b16 %v3264
            %v3523 = vunpack.c.l.b16 %v3265
            %v3524 = vunpack.c.l.b16 %v3266
            %v3525 = vunpack.c.l.b16 %v3267
            %v3526 = vunpack.c.l.b16 %v3268
            %v3527 = vunpack.c.l.b16 %v3269
            %v3528 = vunpack.c.l.b16 %v3270
            %v3529 = vunpack.c.l.b16 %v3271
            %v3530 = vpack.c.b16 %v3514, %v3514
            %v3531 = vpack.c.b16 %v3515, %v3515
            %v3532 = vpack.c.b16 %v3516, %v3516
            %v3533 = vpack.c.b16 %v3517, %v3517
            %v3534 = vpack.c.b16 %v3518, %v3518
            %v3535 = vpack.c.b16 %v3519, %v3519
            %v3536 = vpack.c.b16 %v3520, %v3520
            %v3537 = vpack.c.b16 %v3521, %v3521
            %v3538 = vpack.c.b16 %v3522, %v3522
            %v3539 = vpack.c.b16 %v3523, %v3523
            %v3540 = vpack.c.b16 %v3524, %v3524
            %v3541 = vpack.c.b16 %v3525, %v3525
            %v3542 = vpack.c.b16 %v3526, %v3526
            %v3543 = vpack.c.b16 %v3527, %v3527
            %v3544 = vpack.c.b16 %v3528, %v3528
            %v3545 = vpack.c.b16 %v3529, %v3529
            %vm3546 = vsmask.f32 7424
            %v3548 = vshrl.u32 %v3482, 16
            %v3550 = vshll.u32 %v3482, 16
            %v3552 = vrot.slane %v3550, 1
            %v3553 = vor.u32 %v3548, %v3552
            %v3555 = vshll.u32 %v3530, 16
            %v3557 = vrot.slane %v3555, 1
            %v3558 = vsel %vm3546, %v3553, %v3557
            %v3560 = vshrl.u32 %v3483, 16
            %v3562 = vshll.u32 %v3483, 16
            %v3564 = vrot.slane %v3562, 1
            %v3565 = vor.u32 %v3560, %v3564
            %v3567 = vshll.u32 %v3531, 16
            %v3569 = vrot.slane %v3567, 1
            %v3570 = vsel %vm3546, %v3565, %v3569
            %v3572 = vshrl.u32 %v3484, 16
            %v3574 = vshll.u32 %v3484, 16
            %v3576 = vrot.slane %v3574, 1
            %v3577 = vor.u32 %v3572, %v3576
            %v3579 = vshll.u32 %v3532, 16
            %v3581 = vrot.slane %v3579, 1
            %v3582 = vsel %vm3546, %v3577, %v3581
            %v3584 = vshrl.u32 %v3485, 16
            %v3586 = vshll.u32 %v3485, 16
            %v3588 = vrot.slane %v3586, 1
            %v3589 = vor.u32 %v3584, %v3588
            %v3591 = vshll.u32 %v3533, 16
            %v3593 = vrot.slane %v3591, 1
            %v3594 = vsel %vm3546, %v3589, %v3593
            %v3596 = vshrl.u32 %v3486, 16
            %v3598 = vshll.u32 %v3486, 16
            %v3600 = vrot.slane %v3598, 1
            %v3601 = vor.u32 %v3596, %v3600
            %v3603 = vshll.u32 %v3534, 16
            %v3605 = vrot.slane %v3603, 1
            %v3606 = vsel %vm3546, %v3601, %v3605
            %v3608 = vshrl.u32 %v3487, 16
            %v3610 = vshll.u32 %v3487, 16
            %v3612 = vrot.slane %v3610, 1
            %v3613 = vor.u32 %v3608, %v3612
            %v3615 = vshll.u32 %v3535, 16
            %v3617 = vrot.slane %v3615, 1
            %v3618 = vsel %vm3546, %v3613, %v3617
            %v3620 = vshrl.u32 %v3488, 16
            %v3622 = vshll.u32 %v3488, 16
            %v3624 = vrot.slane %v3622, 1
            %v3625 = vor.u32 %v3620, %v3624
            %v3627 = vshll.u32 %v3536, 16
            %v3629 = vrot.slane %v3627, 1
            %v3630 = vsel %vm3546, %v3625, %v3629
            %v3632 = vshrl.u32 %v3489, 16
            %v3634 = vshll.u32 %v3489, 16
            %v3636 = vrot.slane %v3634, 1
            %v3637 = vor.u32 %v3632, %v3636
            %v3639 = vshll.u32 %v3537, 16
            %v3641 = vrot.slane %v3639, 1
            %v3642 = vsel %vm3546, %v3637, %v3641
            %v3644 = vshrl.u32 %v3490, 16
            %v3646 = vshll.u32 %v3490, 16
            %v3648 = vrot.slane %v3646, 1
            %v3649 = vor.u32 %v3644, %v3648
            %v3651 = vshll.u32 %v3538, 16
            %v3653 = vrot.slane %v3651, 1
            %v3654 = vsel %vm3546, %v3649, %v3653
            %v3656 = vshrl.u32 %v3491, 16
            %v3658 = vshll.u32 %v3491, 16
            %v3660 = vrot.slane %v3658, 1
            %v3661 = vor.u32 %v3656, %v3660
            %v3663 = vshll.u32 %v3539, 16
            %v3665 = vrot.slane %v3663, 1
            %v3666 = vsel %vm3546, %v3661, %v3665
            %v3668 = vshrl.u32 %v3492, 16
            %v3670 = vshll.u32 %v3492, 16
            %v3672 = vrot.slane %v3670, 1
            %v3673 = vor.u32 %v3668, %v3672
            %v3675 = vshll.u32 %v3540, 16
            %v3677 = vrot.slane %v3675, 1
            %v3678 = vsel %vm3546, %v3673, %v3677
            %v3680 = vshrl.u32 %v3493, 16
            %v3682 = vshll.u32 %v3493, 16
            %v3684 = vrot.slane %v3682, 1
            %v3685 = vor.u32 %v3680, %v3684
            %v3687 = vshll.u32 %v3541, 16
            %v3689 = vrot.slane %v3687, 1
            %v3690 = vsel %vm3546, %v3685, %v3689
            %v3692 = vshrl.u32 %v3494, 16
            %v3694 = vshll.u32 %v3494, 16
            %v3696 = vrot.slane %v3694, 1
            %v3697 = vor.u32 %v3692, %v3696
            %v3699 = vshll.u32 %v3542, 16
            %v3701 = vrot.slane %v3699, 1
            %v3702 = vsel %vm3546, %v3697, %v3701
            %v3704 = vshrl.u32 %v3495, 16
            %v3706 = vshll.u32 %v3495, 16
            %v3708 = vrot.slane %v3706, 1
            %v3709 = vor.u32 %v3704, %v3708
            %v3711 = vshll.u32 %v3543, 16
            %v3713 = vrot.slane %v3711, 1
            %v3714 = vsel %vm3546, %v3709, %v3713
            %v3716 = vshrl.u32 %v3496, 16
            %v3718 = vshll.u32 %v3496, 16
            %v3720 = vrot.slane %v3718, 1
            %v3721 = vor.u32 %v3716, %v3720
            %v3723 = vshll.u32 %v3544, 16
            %v3725 = vrot.slane %v3723, 1
            %v3726 = vsel %vm3546, %v3721, %v3725
            %v3728 = vshrl.u32 %v3497, 16
            %v3730 = vshll.u32 %v3497, 16
            %v3732 = vrot.slane %v3730, 1
            %v3733 = vor.u32 %v3728, %v3732
            %v3735 = vshll.u32 %v3545, 16
            %v3737 = vrot.slane %v3735, 1
            %v3738 = vsel %vm3546, %v3733, %v3737
            %3739 = vrot.lane.b32.xlu0 %v3558, 64
            %v3740 = vpop.permute.xlu0 %3739
            %3741 = vrot.lane.b32.xlu0 %v3570, 64
            %v3742 = vpop.permute.xlu0 %3741
            %3743 = vrot.lane.b32.xlu0 %v3582, 64
            %v3744 = vpop.permute.xlu0 %3743
            %3745 = vrot.lane.b32.xlu0 %v3594, 64
            %v3746 = vpop.permute.xlu0 %3745
            %3747 = vrot.lane.b32.xlu0 %v3606, 64
            %v3748 = vpop.permute.xlu0 %3747
            %3749 = vrot.lane.b32.xlu0 %v3618, 64
            %v3750 = vpop.permute.xlu0 %3749
            %3751 = vrot.lane.b32.xlu0 %v3630, 64
            %v3752 = vpop.permute.xlu0 %3751
            %3753 = vrot.lane.b32.xlu0 %v3642, 64
            %v3754 = vpop.permute.xlu0 %3753
            %3755 = vrot.lane.b32.xlu0 %v3654, 64
            %v3756 = vpop.permute.xlu0 %3755
            %3757 = vrot.lane.b32.xlu0 %v3666, 64
            %v3758 = vpop.permute.xlu0 %3757
            %3759 = vrot.lane.b32.xlu0 %v3678, 64
            %v3760 = vpop.permute.xlu0 %3759
            %3761 = vrot.lane.b32.xlu0 %v3690, 64
            %v3762 = vpop.permute.xlu0 %3761
            %3763 = vrot.lane.b32.xlu0 %v3702, 64
            %v3764 = vpop.permute.xlu0 %3763
            %3765 = vrot.lane.b32.xlu0 %v3714, 64
            %v3766 = vpop.permute.xlu0 %3765
            %3767 = vrot.lane.b32.xlu0 %v3726, 64
            %v3768 = vpop.permute.xlu0 %3767
            %3769 = vrot.lane.b32.xlu0 %v3738, 64
            %v3770 = vpop.permute.xlu0 %3769
            %v3787 = vunpack.c.l.b16 %v3272
            %v3788 = vunpack.c.l.b16 %v3273
            %v3789 = vunpack.c.l.b16 %v3274
            %v3790 = vunpack.c.l.b16 %v3275
            %v3791 = vunpack.c.l.b16 %v3276
            %v3792 = vunpack.c.l.b16 %v3277
            %v3793 = vunpack.c.l.b16 %v3278
            %v3794 = vunpack.c.l.b16 %v3279
            %v3795 = vunpack.c.l.b16 %v3280
            %v3796 = vunpack.c.l.b16 %v3281
            %v3797 = vunpack.c.l.b16 %v3282
            %v3798 = vunpack.c.l.b16 %v3283
            %v3799 = vunpack.c.l.b16 %v3284
            %v3800 = vunpack.c.l.b16 %v3285
            %v3801 = vunpack.c.l.b16 %v3286
            %v3802 = vunpack.c.l.b16 %v3287
            %v3803 = vpack.c.b16 %v3451, %v3787
            %v3804 = vpack.c.b16 %v3453, %v3788
            %v3805 = vpack.c.b16 %v3455, %v3789
            %v3806 = vpack.c.b16 %v3457, %v3790
            %v3807 = vpack.c.b16 %v3459, %v3791
            %v3808 = vpack.c.b16 %v3461, %v3792
            %v3809 = vpack.c.b16 %v3463, %v3793
            %v3810 = vpack.c.b16 %v3465, %v3794
            %v3811 = vpack.c.b16 %v3467, %v3795
            %v3812 = vpack.c.b16 %v3469, %v3796
            %v3813 = vpack.c.b16 %v3471, %v3797
            %v3814 = vpack.c.b16 %v3473, %v3798
            %v3815 = vpack.c.b16 %v3475, %v3799
            %v3816 = vpack.c.b16 %v3477, %v3800
            %v3817 = vpack.c.b16 %v3479, %v3801
            %v3818 = vpack.c.b16 %v3481, %v3802
            %vm3819 = vcmask 1046528
            %v3820 = vrot.slane %v3803, 1
            %v3821 = vrot.slane %v3530, 1
            %v3822 = vsel %vm3819, %v3820, %v3821
            %v3823 = vrot.slane %v3804, 1
            %v3824 = vrot.slane %v3531, 1
            %v3825 = vsel %vm3819, %v3823, %v3824
            %v3826 = vrot.slane %v3805, 1
            %v3827 = vrot.slane %v3532, 1
            %v3828 = vsel %vm3819, %v3826, %v3827
            %v3829 = vrot.slane %v3806, 1
            %v3830 = vrot.slane %v3533, 1
            %v3831 = vsel %vm3819, %v3829, %v3830
            %v3832 = vrot.slane %v3807, 1
            %v3833 = vrot.slane %v3534, 1
            %v3834 = vsel %vm3819, %v3832, %v3833
            %v3835 = vrot.slane %v3808, 1
            %v3836 = vrot.slane %v3535, 1
            %v3837 = vsel %vm3819, %v3835, %v3836
            %v3838 = vrot.slane %v3809, 1
            %v3839 = vrot.slane %v3536, 1
            %v3840 = vsel %vm3819, %v3838, %v3839
            %v3841 = vrot.slane %v3810, 1
            %v3842 = vrot.slane %v3537, 1
            %v3843 = vsel %vm3819, %v3841, %v3842
            %v3844 = vrot.slane %v3811, 1
            %v3845 = vrot.slane %v3538, 1
            %v3846 = vsel %vm3819, %v3844, %v3845
            %v3847 = vrot.slane %v3812, 1
            %v3848 = vrot.slane %v3539, 1
            %v3849 = vsel %vm3819, %v3847, %v3848
            %v3850 = vrot.slane %v3813, 1
            %v3851 = vrot.slane %v3540, 1
            %v3852 = vsel %vm3819, %v3850, %v3851
            %v3853 = vrot.slane %v3814, 1
            %v3854 = vrot.slane %v3541, 1
            %v3855 = vsel %vm3819, %v3853, %v3854
            %v3856 = vrot.slane %v3815, 1
            %v3857 = vrot.slane %v3542, 1
            %v3858 = vsel %vm3819, %v3856, %v3857
            %v3859 = vrot.slane %v3816, 1
            %v3860 = vrot.slane %v3543, 1
            %v3861 = vsel %vm3819, %v3859, %v3860
            %v3862 = vrot.slane %v3817, 1
            %v3863 = vrot.slane %v3544, 1
            %v3864 = vsel %vm3819, %v3862, %v3863
            %v3865 = vrot.slane %v3818, 1
            %v3866 = vrot.slane %v3545, 1
            %v3867 = vsel %vm3819, %v3865, %v3866
            %v3900 = vunpack.c.l.b16 %v3289
            %v3901 = vunpack.c.l.b16 %v3290
            %v3902 = vunpack.c.l.b16 %v3291
            %v3903 = vunpack.c.l.b16 %v3292
            %v3904 = vunpack.c.l.b16 %v3293
            %v3905 = vunpack.c.l.b16 %v3294
            %v3906 = vunpack.c.l.b16 %v3295
            %v3907 = vunpack.c.l.b16 %v3296
            %v3908 = vunpack.c.l.b16 %v3297
            %v3909 = vunpack.c.l.b16 %v3298
            %v3910 = vunpack.c.l.b16 %v3299
            %v3911 = vunpack.c.l.b16 %v3300
            %v3912 = vunpack.c.l.b16 %v3301
            %v3913 = vunpack.c.l.b16 %v3302
            %v3914 = vunpack.c.l.b16 %v3303
            %v3915 = vunpack.c.l.b16 %v3304
            %v3916 = vunpack.c.l.b16 %v3305
            %v3917 = vunpack.c.l.b16 %v3306
            %v3918 = vunpack.c.l.b16 %v3307
            %v3919 = vunpack.c.l.b16 %v3308
            %v3920 = vunpack.c.l.b16 %v3309
            %v3921 = vunpack.c.l.b16 %v3310
            %v3922 = vunpack.c.l.b16 %v3311
            %v3923 = vunpack.c.l.b16 %v3312
            %v3924 = vunpack.c.l.b16 %v3313
            %v3925 = vunpack.c.l.b16 %v3314
            %v3926 = vunpack.c.l.b16 %v3315
            %v3927 = vunpack.c.l.b16 %v3316
            %v3928 = vunpack.c.l.b16 %v3317
            %v3929 = vunpack.c.l.b16 %v3318
            %v3930 = vunpack.c.l.b16 %v3319
            %v3931 = vunpack.c.l.b16 %v3320
            %v3932 = vpack.c.b16 %v3901, %v3900
            %v3933 = vpack.c.b16 %v3903, %v3902
            %v3934 = vpack.c.b16 %v3905, %v3904
            %v3935 = vpack.c.b16 %v3907, %v3906
            %v3936 = vpack.c.b16 %v3909, %v3908
            %v3937 = vpack.c.b16 %v3911, %v3910
            %v3938 = vpack.c.b16 %v3913, %v3912
            %v3939 = vpack.c.b16 %v3915, %v3914
            %v3940 = vpack.c.b16 %v3917, %v3916
            %v3941 = vpack.c.b16 %v3919, %v3918
            %v3942 = vpack.c.b16 %v3921, %v3920
            %v3943 = vpack.c.b16 %v3923, %v3922
            %v3944 = vpack.c.b16 %v3925, %v3924
            %v3945 = vpack.c.b16 %v3927, %v3926
            %v3946 = vpack.c.b16 %v3929, %v3928
            %v3947 = vpack.c.b16 %v3931, %v3930
            %3948 = vrot.lane.b32.xlu0 %v3932, 64
            %v3949 = vpop.permute.xlu0 %3948
            %3950 = vrot.lane.b32.xlu0 %v3933, 64
            %v3951 = vpop.permute.xlu0 %3950
            %3952 = vrot.lane.b32.xlu0 %v3934, 64
            %v3953 = vpop.permute.xlu0 %3952
            %3954 = vrot.lane.b32.xlu0 %v3935, 64
            %v3955 = vpop.permute.xlu0 %3954
            %3956 = vrot.lane.b32.xlu0 %v3936, 64
            %v3957 = vpop.permute.xlu0 %3956
            %3958 = vrot.lane.b32.xlu0 %v3937, 64
            %v3959 = vpop.permute.xlu0 %3958
            %3960 = vrot.lane.b32.xlu0 %v3938, 64
            %v3961 = vpop.permute.xlu0 %3960
            %3962 = vrot.lane.b32.xlu0 %v3939, 64
            %v3963 = vpop.permute.xlu0 %3962
            %3964 = vrot.lane.b32.xlu0 %v3940, 64
            %v3965 = vpop.permute.xlu0 %3964
            %3966 = vrot.lane.b32.xlu0 %v3941, 64
            %v3967 = vpop.permute.xlu0 %3966
            %3968 = vrot.lane.b32.xlu0 %v3942, 64
            %v3969 = vpop.permute.xlu0 %3968
            %3970 = vrot.lane.b32.xlu0 %v3943, 64
            %v3971 = vpop.permute.xlu0 %3970
            %3972 = vrot.lane.b32.xlu0 %v3944, 64
            %v3973 = vpop.permute.xlu0 %3972
            %3974 = vrot.lane.b32.xlu0 %v3945, 64
            %v3975 = vpop.permute.xlu0 %3974
            %3976 = vrot.lane.b32.xlu0 %v3946, 64
            %v3977 = vpop.permute.xlu0 %3976
            %3978 = vrot.lane.b32.xlu0 %v3947, 64
            %v3979 = vpop.permute.xlu0 %3978
            %v3996 = vunpack.c.l.b16 %v3321
            %v3997 = vunpack.c.l.b16 %v3322
            %v3998 = vunpack.c.l.b16 %v3323
            %v3999 = vunpack.c.l.b16 %v3324
            %v4000 = vunpack.c.l.b16 %v3325
            %v4001 = vunpack.c.l.b16 %v3326
            %v4002 = vunpack.c.l.b16 %v3327
            %v4003 = vunpack.c.l.b16 %v3328
            %v4004 = vunpack.c.l.b16 %v3329
            %v4005 = vunpack.c.l.b16 %v3330
            %v4006 = vunpack.c.l.b16 %v3331
            %v4007 = vunpack.c.l.b16 %v3332
            %v4008 = vunpack.c.l.b16 %v3333
            %v4009 = vunpack.c.l.b16 %v3334
            %v4010 = vunpack.c.l.b16 %v3335
            %v4011 = vunpack.c.l.b16 %v3336
            %v4012 = vpack.c.b16 %v3996, %v3996
            %v4013 = vpack.c.b16 %v3997, %v3997
            %v4014 = vpack.c.b16 %v3998, %v3998
            %v4015 = vpack.c.b16 %v3999, %v3999
            %v4016 = vpack.c.b16 %v4000, %v4000
            %v4017 = vpack.c.b16 %v4001, %v4001
            %v4018 = vpack.c.b16 %v4002, %v4002
            %v4019 = vpack.c.b16 %v4003, %v4003
            %v4020 = vpack.c.b16 %v4004, %v4004
            %v4021 = vpack.c.b16 %v4005, %v4005
            %v4022 = vpack.c.b16 %v4006, %v4006
            %v4023 = vpack.c.b16 %v4007, %v4007
            %v4024 = vpack.c.b16 %v4008, %v4008
            %v4025 = vpack.c.b16 %v4009, %v4009
            %v4026 = vpack.c.b16 %v4010, %v4010
            %v4027 = vpack.c.b16 %v4011, %v4011
            %v4029 = vshrl.u32 %v3932, 16
            %v4031 = vshll.u32 %v3932, 16
            %v4033 = vrot.slane %v4031, 1
            %v4034 = vor.u32 %v4029, %v4033
            %v4036 = vshll.u32 %v4012, 16
            %v4038 = vrot.slane %v4036, 1
            %v4039 = vsel %vm3546, %v4034, %v4038
            %v4041 = vshrl.u32 %v3933, 16
            %v4043 = vshll.u32 %v3933, 16
            %v4045 = vrot.slane %v4043, 1
            %v4046 = vor.u32 %v4041, %v4045
            %v4048 = vshll.u32 %v4013, 16
            %v4050 = vrot.slane %v4048, 1
            %v4051 = vsel %vm3546, %v4046, %v4050
            %v4053 = vshrl.u32 %v3934, 16
            %v4055 = vshll.u32 %v3934, 16
            %v4057 = vrot.slane %v4055, 1
            %v4058 = vor.u32 %v4053, %v4057
            %v4060 = vshll.u32 %v4014, 16
            %v4062 = vrot.slane %v4060, 1
            %v4063 = vsel %vm3546, %v4058, %v4062
            %v4065 = vshrl.u32 %v3935, 16
            %v4067 = vshll.u32 %v3935, 16
            %v4069 = vrot.slane %v4067, 1
            %v4070 = vor.u32 %v4065, %v4069
            %v4072 = vshll.u32 %v4015, 16
            %v4074 = vrot.slane %v4072, 1
            %v4075 = vsel %vm3546, %v4070, %v4074
            %v4077 = vshrl.u32 %v3936, 16
            %v4079 = vshll.u32 %v3936, 16
            %v4081 = vrot.slane %v4079, 1
            %v4082 = vor.u32 %v4077, %v4081
            %v4084 = vshll.u32 %v4016, 16
            %v4086 = vrot.slane %v4084, 1
            %v4087 = vsel %vm3546, %v4082, %v4086
            %v4089 = vshrl.u32 %v3937, 16
            %v4091 = vshll.u32 %v3937, 16
            %v4093 = vrot.slane %v4091, 1
            %v4094 = vor.u32 %v4089, %v4093
            %v4096 = vshll.u32 %v4017, 16
            %v4098 = vrot.slane %v4096, 1
            %v4099 = vsel %vm3546, %v4094, %v4098
            %v4101 = vshrl.u32 %v3938, 16
            %v4103 = vshll.u32 %v3938, 16
            %v4105 = vrot.slane %v4103, 1
            %v4106 = vor.u32 %v4101, %v4105
            %v4108 = vshll.u32 %v4018, 16
            %v4110 = vrot.slane %v4108, 1
            %v4111 = vsel %vm3546, %v4106, %v4110
            %v4113 = vshrl.u32 %v3939, 16
            %v4115 = vshll.u32 %v3939, 16
            %v4117 = vrot.slane %v4115, 1
            %v4118 = vor.u32 %v4113, %v4117
            %v4120 = vshll.u32 %v4019, 16
            %v4122 = vrot.slane %v4120, 1
            %v4123 = vsel %vm3546, %v4118, %v4122
            %v4125 = vshrl.u32 %v3940, 16
            %v4127 = vshll.u32 %v3940, 16
            %v4129 = vrot.slane %v4127, 1
            %v4130 = vor.u32 %v4125, %v4129
            %v4132 = vshll.u32 %v4020, 16
            %v4134 = vrot.slane %v4132, 1
            %v4135 = vsel %vm3546, %v4130, %v4134
            %v4137 = vshrl.u32 %v3941, 16
            %v4139 = vshll.u32 %v3941, 16
            %v4141 = vrot.slane %v4139, 1
            %v4142 = vor.u32 %v4137, %v4141
            %v4144 = vshll.u32 %v4021, 16
            %v4146 = vrot.slane %v4144, 1
            %v4147 = vsel %vm3546, %v4142, %v4146
            %v4149 = vshrl.u32 %v3942, 16
            %v4151 = vshll.u32 %v3942, 16
            %v4153 = vrot.slane %v4151, 1
            %v4154 = vor.u32 %v4149, %v4153
            %v4156 = vshll.u32 %v4022, 16
            %v4158 = vrot.slane %v4156, 1
            %v4159 = vsel %vm3546, %v4154, %v4158
            %v4161 = vshrl.u32 %v3943, 16
            %v4163 = vshll.u32 %v3943, 16
            %v4165 = vrot.slane %v4163, 1
            %v4166 = vor.u32 %v4161, %v4165
            %v4168 = vshll.u32 %v4023, 16
            %v4170 = vrot.slane %v4168, 1
            %v4171 = vsel %vm3546, %v4166, %v4170
            %v4173 = vshrl.u32 %v3944, 16
            %v4175 = vshll.u32 %v3944, 16
            %v4177 = vrot.slane %v4175, 1
            %v4178 = vor.u32 %v4173, %v4177
            %v4180 = vshll.u32 %v4024, 16
            %v4182 = vrot.slane %v4180, 1
            %v4183 = vsel %vm3546, %v4178, %v4182
            %v4185 = vshrl.u32 %v3945, 16
            %v4187 = vshll.u32 %v3945, 16
            %v4189 = vrot.slane %v4187, 1
            %v4190 = vor.u32 %v4185, %v4189
            %v4192 = vshll.u32 %v4025, 16
            %v4194 = vrot.slane %v4192, 1
            %v4195 = vsel %vm3546, %v4190, %v4194
            %v4197 = vshrl.u32 %v3946, 16
            %v4199 = vshll.u32 %v3946, 16
            %v4201 = vrot.slane %v4199, 1
            %v4202 = vor.u32 %v4197, %v4201
            %v4204 = vshll.u32 %v4026, 16
            %v4206 = vrot.slane %v4204, 1
            %v4207 = vsel %vm3546, %v4202, %v4206
            %v4209 = vshrl.u32 %v3947, 16
            %v4211 = vshll.u32 %v3947, 16
            %v4213 = vrot.slane %v4211, 1
            %v4214 = vor.u32 %v4209, %v4213
            %v4216 = vshll.u32 %v4027, 16
            %v4218 = vrot.slane %v4216, 1
            %v4219 = vsel %vm3546, %v4214, %v4218
            %v4236 = vunpack.c.l.b16 %v3337
            %v4237 = vunpack.c.l.b16 %v3338
            %v4238 = vunpack.c.l.b16 %v3339
            %v4239 = vunpack.c.l.b16 %v3340
            %v4240 = vunpack.c.l.b16 %v3341
            %v4241 = vunpack.c.l.b16 %v3342
            %v4242 = vunpack.c.l.b16 %v3343
            %v4243 = vunpack.c.l.b16 %v3344
            %v4244 = vunpack.c.l.b16 %v3345
            %v4245 = vunpack.c.l.b16 %v3346
            %v4246 = vunpack.c.l.b16 %v3347
            %v4247 = vunpack.c.l.b16 %v3348
            %v4248 = vunpack.c.l.b16 %v3349
            %v4249 = vunpack.c.l.b16 %v3350
            %v4250 = vunpack.c.l.b16 %v3351
            %v4251 = vunpack.c.l.b16 %v3352
            %v4252 = vpack.c.b16 %v3901, %v4236
            %v4253 = vpack.c.b16 %v3903, %v4237
            %v4254 = vpack.c.b16 %v3905, %v4238
            %v4255 = vpack.c.b16 %v3907, %v4239
            %v4256 = vpack.c.b16 %v3909, %v4240
            %v4257 = vpack.c.b16 %v3911, %v4241
            %v4258 = vpack.c.b16 %v3913, %v4242
            %v4259 = vpack.c.b16 %v3915, %v4243
            %v4260 = vpack.c.b16 %v3917, %v4244
            %v4261 = vpack.c.b16 %v3919, %v4245
            %v4262 = vpack.c.b16 %v3921, %v4246
            %v4263 = vpack.c.b16 %v3923, %v4247
            %v4264 = vpack.c.b16 %v3925, %v4248
            %v4265 = vpack.c.b16 %v3927, %v4249
            %v4266 = vpack.c.b16 %v3929, %v4250
            %v4267 = vpack.c.b16 %v3931, %v4251
            %v4268 = vrot.slane %v4252, 1
            %v4269 = vrot.slane %v4012, 1
            %v4270 = vsel %vm3819, %v4268, %v4269
            %v4271 = vrot.slane %v4253, 1
            %v4272 = vrot.slane %v4013, 1
            %v4273 = vsel %vm3819, %v4271, %v4272
            %v4274 = vrot.slane %v4254, 1
            %v4275 = vrot.slane %v4014, 1
            %v4276 = vsel %vm3819, %v4274, %v4275
            %v4277 = vrot.slane %v4255, 1
            %v4278 = vrot.slane %v4015, 1
            %v4279 = vsel %vm3819, %v4277, %v4278
            %v4280 = vrot.slane %v4256, 1
            %v4281 = vrot.slane %v4016, 1
            %v4282 = vsel %vm3819, %v4280, %v4281
            %v4283 = vrot.slane %v4257, 1
            %v4284 = vrot.slane %v4017, 1
            %v4285 = vsel %vm3819, %v4283, %v4284
            %v4286 = vrot.slane %v4258, 1
            %v4287 = vrot.slane %v4018, 1
            %v4288 = vsel %vm3819, %v4286, %v4287
            %v4289 = vrot.slane %v4259, 1
            %v4290 = vrot.slane %v4019, 1
            %v4291 = vsel %vm3819, %v4289, %v4290
            %v4292 = vrot.slane %v4260, 1
            %v4293 = vrot.slane %v4020, 1
            %v4294 = vsel %vm3819, %v4292, %v4293
            %v4295 = vrot.slane %v4261, 1
            %v4296 = vrot.slane %v4021, 1
            %v4297 = vsel %vm3819, %v4295, %v4296
            %v4298 = vrot.slane %v4262, 1
            %v4299 = vrot.slane %v4022, 1
            %v4300 = vsel %vm3819, %v4298, %v4299
            %v4301 = vrot.slane %v4263, 1
            %v4302 = vrot.slane %v4023, 1
            %v4303 = vsel %vm3819, %v4301, %v4302
            %v4304 = vrot.slane %v4264, 1
            %v4305 = vrot.slane %v4024, 1
            %v4306 = vsel %vm3819, %v4304, %v4305
            %v4307 = vrot.slane %v4265, 1
            %v4308 = vrot.slane %v4025, 1
            %v4309 = vsel %vm3819, %v4307, %v4308
            %v4310 = vrot.slane %v4266, 1
            %v4311 = vrot.slane %v4026, 1
            %v4312 = vsel %vm3819, %v4310, %v4311
            %v4313 = vrot.slane %v4267, 1
            %v4314 = vrot.slane %v4027, 1
            %v4315 = vsel %vm3819, %v4313, %v4314
            %4316 = vrot.lane.b32.xlu0 %v4270, 64
            %v4317 = vpop.permute.xlu0 %4316
            %4318 = vrot.lane.b32.xlu0 %v4273, 64
            %v4319 = vpop.permute.xlu0 %4318
            %4320 = vrot.lane.b32.xlu0 %v4276, 64
            %v4321 = vpop.permute.xlu0 %4320
            %4322 = vrot.lane.b32.xlu0 %v4279, 64
            %v4323 = vpop.permute.xlu0 %4322
            %4324 = vrot.lane.b32.xlu0 %v4282, 64
            %v4325 = vpop.permute.xlu0 %4324
            %4326 = vrot.lane.b32.xlu0 %v4285, 64
            %v4327 = vpop.permute.xlu0 %4326
            %4328 = vrot.lane.b32.xlu0 %v4288, 64
            %v4329 = vpop.permute.xlu0 %4328
            %4330 = vrot.lane.b32.xlu0 %v4291, 64
            %v4331 = vpop.permute.xlu0 %4330
            %4332 = vrot.lane.b32.xlu0 %v4294, 64
            %v4333 = vpop.permute.xlu0 %4332
            %4334 = vrot.lane.b32.xlu0 %v4297, 64
            %v4335 = vpop.permute.xlu0 %4334
            %4336 = vrot.lane.b32.xlu0 %v4300, 64
            %v4337 = vpop.permute.xlu0 %4336
            %4338 = vrot.lane.b32.xlu0 %v4303, 64
            %v4339 = vpop.permute.xlu0 %4338
            %4340 = vrot.lane.b32.xlu0 %v4306, 64
            %v4341 = vpop.permute.xlu0 %4340
            %4342 = vrot.lane.b32.xlu0 %v4309, 64
            %v4343 = vpop.permute.xlu0 %4342
            %4344 = vrot.lane.b32.xlu0 %v4312, 64
            %v4345 = vpop.permute.xlu0 %4344
            %4346 = vrot.lane.b32.xlu0 %v4315, 64
            %v4347 = vpop.permute.xlu0 %4346
            %v4380 = vunpack.c.l.b16 %v3354
            %v4381 = vunpack.c.l.b16 %v3355
            %v4382 = vunpack.c.l.b16 %v3356
            %v4383 = vunpack.c.l.b16 %v3357
            %v4384 = vunpack.c.l.b16 %v3358
            %v4385 = vunpack.c.l.b16 %v3359
            %v4386 = vunpack.c.l.b16 %v3360
            %v4387 = vunpack.c.l.b16 %v3361
            %v4388 = vunpack.c.l.b16 %v3362
            %v4389 = vunpack.c.l.b16 %v3363
            %v4390 = vunpack.c.l.b16 %v3364
            %v4391 = vunpack.c.l.b16 %v3365
            %v4392 = vunpack.c.l.b16 %v3366
            %v4393 = vunpack.c.l.b16 %v3367
            %v4394 = vunpack.c.l.b16 %v3368
            %v4395 = vunpack.c.l.b16 %v3369
            %v4396 = vunpack.c.l.b16 %v3370
            %v4397 = vunpack.c.l.b16 %v3371
            %v4398 = vunpack.c.l.b16 %v3372
            %v4399 = vunpack.c.l.b16 %v3373
            %v4400 = vunpack.c.l.b16 %v3374
            %v4401 = vunpack.c.l.b16 %v3375
            %v4402 = vunpack.c.l.b16 %v3376
            %v4403 = vunpack.c.l.b16 %v3377
            %v4404 = vunpack.c.l.b16 %v3378
            %v4405 = vunpack.c.l.b16 %v3379
            %v4406 = vunpack.c.l.b16 %v3380
            %v4407 = vunpack.c.l.b16 %v3381
            %v4408 = vunpack.c.l.b16 %v3382
            %v4409 = vunpack.c.l.b16 %v3383
            %v4410 = vunpack.c.l.b16 %v3384
            %v4411 = vunpack.c.l.b16 %v3385
            %v4412 = vpack.c.b16 %v4381, %v4380
            %v4413 = vpack.c.b16 %v4383, %v4382
            %v4414 = vpack.c.b16 %v4385, %v4384
            %v4415 = vpack.c.b16 %v4387, %v4386
            %v4416 = vpack.c.b16 %v4389, %v4388
            %v4417 = vpack.c.b16 %v4391, %v4390
            %v4418 = vpack.c.b16 %v4393, %v4392
            %v4419 = vpack.c.b16 %v4395, %v4394
            %v4420 = vpack.c.b16 %v4397, %v4396
            %v4421 = vpack.c.b16 %v4399, %v4398
            %v4422 = vpack.c.b16 %v4401, %v4400
            %v4423 = vpack.c.b16 %v4403, %v4402
            %v4424 = vpack.c.b16 %v4405, %v4404
            %v4425 = vpack.c.b16 %v4407, %v4406
            %v4426 = vpack.c.b16 %v4409, %v4408
            %v4427 = vpack.c.b16 %v4411, %v4410
            %v4444 = vunpack.c.l.b16 %v3386
            %v4445 = vunpack.c.l.b16 %v3387
            %v4446 = vunpack.c.l.b16 %v3388
            %v4447 = vunpack.c.l.b16 %v3389
            %v4448 = vunpack.c.l.b16 %v3390
            %v4449 = vunpack.c.l.b16 %v3391
            %v4450 = vunpack.c.l.b16 %v3392
            %v4451 = vunpack.c.l.b16 %v3393
            %v4452 = vunpack.c.l.b16 %v3394
            %v4453 = vunpack.c.l.b16 %v3395
            %v4454 = vunpack.c.l.b16 %v3396
            %v4455 = vunpack.c.l.b16 %v3397
            %v4456 = vunpack.c.l.b16 %v3398
            %v4457 = vunpack.c.l.b16 %v3399
            %v4458 = vunpack.c.l.b16 %v3400
            %v4459 = vunpack.c.l.b16 %v3401
            %v4460 = vpack.c.b16 %v4444, %v4444
            %v4461 = vpack.c.b16 %v4445, %v4445
            %v4462 = vpack.c.b16 %v4446, %v4446
            %v4463 = vpack.c.b16 %v4447, %v4447
            %v4464 = vpack.c.b16 %v4448, %v4448
            %v4465 = vpack.c.b16 %v4449, %v4449
            %v4466 = vpack.c.b16 %v4450, %v4450
            %v4467 = vpack.c.b16 %v4451, %v4451
            %v4468 = vpack.c.b16 %v4452, %v4452
            %v4469 = vpack.c.b16 %v4453, %v4453
            %v4470 = vpack.c.b16 %v4454, %v4454
            %v4471 = vpack.c.b16 %v4455, %v4455
            %v4472 = vpack.c.b16 %v4456, %v4456
            %v4473 = vpack.c.b16 %v4457, %v4457
            %v4474 = vpack.c.b16 %v4458, %v4458
            %v4475 = vpack.c.b16 %v4459, %v4459
            %v4477 = vshrl.u32 %v4412, 16
            %v4479 = vshll.u32 %v4412, 16
            %v4481 = vrot.slane %v4479, 1
            %v4482 = vor.u32 %v4477, %v4481
            %v4484 = vshll.u32 %v4460, 16
            %v4486 = vrot.slane %v4484, 1
            %v4487 = vsel %vm3546, %v4482, %v4486
            %v4489 = vshrl.u32 %v4413, 16
            %v4491 = vshll.u32 %v4413, 16
            %v4493 = vrot.slane %v4491, 1
            %v4494 = vor.u32 %v4489, %v4493
            %v4496 = vshll.u32 %v4461, 16
            %v4498 = vrot.slane %v4496, 1
            %v4499 = vsel %vm3546, %v4494, %v4498
            %v4501 = vshrl.u32 %v4414, 16
            %v4503 = vshll.u32 %v4414, 16
            %v4505 = vrot.slane %v4503, 1
            %v4506 = vor.u32 %v4501, %v4505
            %v4508 = vshll.u32 %v4462, 16
            %v4510 = vrot.slane %v4508, 1
            %v4511 = vsel %vm3546, %v4506, %v4510
            %v4513 = vshrl.u32 %v4415, 16
            %v4515 = vshll.u32 %v4415, 16
            %v4517 = vrot.slane %v4515, 1
            %v4518 = vor.u32 %v4513, %v4517
            %v4520 = vshll.u32 %v4463, 16
            %v4522 = vrot.slane %v4520, 1
            %v4523 = vsel %vm3546, %v4518, %v4522
            %v4525 = vshrl.u32 %v4416, 16
            %v4527 = vshll.u32 %v4416, 16
            %v4529 = vrot.slane %v4527, 1
            %v4530 = vor.u32 %v4525, %v4529
            %v4532 = vshll.u32 %v4464, 16
            %v4534 = vrot.slane %v4532, 1
            %v4535 = vsel %vm3546, %v4530, %v4534
            %v4537 = vshrl.u32 %v4417, 16
            %v4539 = vshll.u32 %v4417, 16
            %v4541 = vrot.slane %v4539, 1
            %v4542 = vor.u32 %v4537, %v4541
            %v4544 = vshll.u32 %v4465, 16
            %v4546 = vrot.slane %v4544, 1
            %v4547 = vsel %vm3546, %v4542, %v4546
            %v4549 = vshrl.u32 %v4418, 16
            %v4551 = vshll.u32 %v4418, 16
            %v4553 = vrot.slane %v4551, 1
            %v4554 = vor.u32 %v4549, %v4553
            %v4556 = vshll.u32 %v4466, 16
            %v4558 = vrot.slane %v4556, 1
            %v4559 = vsel %vm3546, %v4554, %v4558
            %v4561 = vshrl.u32 %v4419, 16
            %v4563 = vshll.u32 %v4419, 16
            %v4565 = vrot.slane %v4563, 1
            %v4566 = vor.u32 %v4561, %v4565
            %v4568 = vshll.u32 %v4467, 16
            %v4570 = vrot.slane %v4568, 1
            %v4571 = vsel %vm3546, %v4566, %v4570
            %v4573 = vshrl.u32 %v4420, 16
            %v4575 = vshll.u32 %v4420, 16
            %v4577 = vrot.slane %v4575, 1
            %v4578 = vor.u32 %v4573, %v4577
            %v4580 = vshll.u32 %v4468, 16
            %v4582 = vrot.slane %v4580, 1
            %v4583 = vsel %vm3546, %v4578, %v4582
            %v4585 = vshrl.u32 %v4421, 16
            %v4587 = vshll.u32 %v4421, 16
            %v4589 = vrot.slane %v4587, 1
            %v4590 = vor.u32 %v4585, %v4589
            %v4592 = vshll.u32 %v4469, 16
            %v4594 = vrot.slane %v4592, 1
            %v4595 = vsel %vm3546, %v4590, %v4594
            %v4597 = vshrl.u32 %v4422, 16
            %v4599 = vshll.u32 %v4422, 16
            %v4601 = vrot.slane %v4599, 1
            %v4602 = vor.u32 %v4597, %v4601
            %v4604 = vshll.u32 %v4470, 16
            %v4606 = vrot.slane %v4604, 1
            %v4607 = vsel %vm3546, %v4602, %v4606
            %v4609 = vshrl.u32 %v4423, 16
            %v4611 = vshll.u32 %v4423, 16
            %v4613 = vrot.slane %v4611, 1
            %v4614 = vor.u32 %v4609, %v4613
            %v4616 = vshll.u32 %v4471, 16
            %v4618 = vrot.slane %v4616, 1
            %v4619 = vsel %vm3546, %v4614, %v4618
            %v4621 = vshrl.u32 %v4424, 16
            %v4623 = vshll.u32 %v4424, 16
            %v4625 = vrot.slane %v4623, 1
            %v4626 = vor.u32 %v4621, %v4625
            %v4628 = vshll.u32 %v4472, 16
            %v4630 = vrot.slane %v4628, 1
            %v4631 = vsel %vm3546, %v4626, %v4630
            %v4633 = vshrl.u32 %v4425, 16
            %v4635 = vshll.u32 %v4425, 16
            %v4637 = vrot.slane %v4635, 1
            %v4638 = vor.u32 %v4633, %v4637
            %v4640 = vshll.u32 %v4473, 16
            %v4642 = vrot.slane %v4640, 1
            %v4643 = vsel %vm3546, %v4638, %v4642
            %v4645 = vshrl.u32 %v4426, 16
            %v4647 = vshll.u32 %v4426, 16
            %v4649 = vrot.slane %v4647, 1
            %v4650 = vor.u32 %v4645, %v4649
            %v4652 = vshll.u32 %v4474, 16
            %v4654 = vrot.slane %v4652, 1
            %v4655 = vsel %vm3546, %v4650, %v4654
            %v4657 = vshrl.u32 %v4427, 16
            %v4659 = vshll.u32 %v4427, 16
            %v4661 = vrot.slane %v4659, 1
            %v4662 = vor.u32 %v4657, %v4661
            %v4664 = vshll.u32 %v4475, 16
            %v4666 = vrot.slane %v4664, 1
            %v4667 = vsel %vm3546, %v4662, %v4666
            %4668 = vrot.lane.b32.xlu0 %v4487, 64
            %v4669 = vpop.permute.xlu0 %4668
            %4670 = vrot.lane.b32.xlu0 %v4499, 64
            %v4671 = vpop.permute.xlu0 %4670
            %4672 = vrot.lane.b32.xlu0 %v4511, 64
            %v4673 = vpop.permute.xlu0 %4672
            %4674 = vrot.lane.b32.xlu0 %v4523, 64
            %v4675 = vpop.permute.xlu0 %4674
            %4676 = vrot.lane.b32.xlu0 %v4535, 64
            %v4677 = vpop.permute.xlu0 %4676
            %4678 = vrot.lane.b32.xlu0 %v4547, 64
            %v4679 = vpop.permute.xlu0 %4678
            %4680 = vrot.lane.b32.xlu0 %v4559, 64
            %v4681 = vpop.permute.xlu0 %4680
            %4682 = vrot.lane.b32.xlu0 %v4571, 64
            %v4683 = vpop.permute.xlu0 %4682
            %4684 = vrot.lane.b32.xlu0 %v4583, 64
            %v4685 = vpop.permute.xlu0 %4684
            %4686 = vrot.lane.b32.xlu0 %v4595, 64
            %v4687 = vpop.permute.xlu0 %4686
            %4688 = vrot.lane.b32.xlu0 %v4607, 64
            %v4689 = vpop.permute.xlu0 %4688
            %4690 = vrot.lane.b32.xlu0 %v4619, 64
            %v4691 = vpop.permute.xlu0 %4690
            %4692 = vrot.lane.b32.xlu0 %v4631, 64
            %v4693 = vpop.permute.xlu0 %4692
            %4694 = vrot.lane.b32.xlu0 %v4643, 64
            %v4695 = vpop.permute.xlu0 %4694
            %4696 = vrot.lane.b32.xlu0 %v4655, 64
            %v4697 = vpop.permute.xlu0 %4696
            %4698 = vrot.lane.b32.xlu0 %v4667, 64
            %v4699 = vpop.permute.xlu0 %4698
            %v4716 = vunpack.c.l.b16 %v3402
            %v4717 = vunpack.c.l.b16 %v3403
            %v4718 = vunpack.c.l.b16 %v3404
            %v4719 = vunpack.c.l.b16 %v3405
            %v4720 = vunpack.c.l.b16 %v3406
            %v4721 = vunpack.c.l.b16 %v3407
            %v4722 = vunpack.c.l.b16 %v3408
            %v4723 = vunpack.c.l.b16 %v3409
            %v4724 = vunpack.c.l.b16 %v3410
            %v4725 = vunpack.c.l.b16 %v3411
            %v4726 = vunpack.c.l.b16 %v3412
            %v4727 = vunpack.c.l.b16 %v3413
            %v4728 = vunpack.c.l.b16 %v3414
            %v4729 = vunpack.c.l.b16 %v3415
            %v4730 = vunpack.c.l.b16 %v3416
            %v4731 = vunpack.c.l.b16 %v3417
            %v4732 = vpack.c.b16 %v4381, %v4716
            %v4733 = vpack.c.b16 %v4383, %v4717
            %v4734 = vpack.c.b16 %v4385, %v4718
            %v4735 = vpack.c.b16 %v4387, %v4719
            %v4736 = vpack.c.b16 %v4389, %v4720
            %v4737 = vpack.c.b16 %v4391, %v4721
            %v4738 = vpack.c.b16 %v4393, %v4722
            %v4739 = vpack.c.b16 %v4395, %v4723
            %v4740 = vpack.c.b16 %v4397, %v4724
            %v4741 = vpack.c.b16 %v4399, %v4725
            %v4742 = vpack.c.b16 %v4401, %v4726
            %v4743 = vpack.c.b16 %v4403, %v4727
            %v4744 = vpack.c.b16 %v4405, %v4728
            %v4745 = vpack.c.b16 %v4407, %v4729
            %v4746 = vpack.c.b16 %v4409, %v4730
            %v4747 = vpack.c.b16 %v4411, %v4731
            %v4748 = vrot.slane %v4732, 1
            %v4749 = vrot.slane %v4460, 1
            %v4750 = vsel %vm3819, %v4748, %v4749
            %v4751 = vrot.slane %v4733, 1
            %v4752 = vrot.slane %v4461, 1
            %v4753 = vsel %vm3819, %v4751, %v4752
            %v4754 = vrot.slane %v4734, 1
            %v4755 = vrot.slane %v4462, 1
            %v4756 = vsel %vm3819, %v4754, %v4755
            %v4757 = vrot.slane %v4735, 1
            %v4758 = vrot.slane %v4463, 1
            %v4759 = vsel %vm3819, %v4757, %v4758
            %v4760 = vrot.slane %v4736, 1
            %v4761 = vrot.slane %v4464, 1
            %v4762 = vsel %vm3819, %v4760, %v4761
            %v4763 = vrot.slane %v4737, 1
            %v4764 = vrot.slane %v4465, 1
            %v4765 = vsel %vm3819, %v4763, %v4764
            %v4766 = vrot.slane %v4738, 1
            %v4767 = vrot.slane %v4466, 1
            %v4768 = vsel %vm3819, %v4766, %v4767
            %v4769 = vrot.slane %v4739, 1
            %v4770 = vrot.slane %v4467, 1
            %v4771 = vsel %vm3819, %v4769, %v4770
            %v4772 = vrot.slane %v4740, 1
            %v4773 = vrot.slane %v4468, 1
            %v4774 = vsel %vm3819, %v4772, %v4773
            %v4775 = vrot.slane %v4741, 1
            %v4776 = vrot.slane %v4469, 1
            %v4777 = vsel %vm3819, %v4775, %v4776
            %v4778 = vrot.slane %v4742, 1
            %v4779 = vrot.slane %v4470, 1
            %v4780 = vsel %vm3819, %v4778, %v4779
            %v4781 = vrot.slane %v4743, 1
            %v4782 = vrot.slane %v4471, 1
            %v4783 = vsel %vm3819, %v4781, %v4782
            %v4784 = vrot.slane %v4744, 1
            %v4785 = vrot.slane %v4472, 1
            %v4786 = vsel %vm3819, %v4784, %v4785
            %v4787 = vrot.slane %v4745, 1
            %v4788 = vrot.slane %v4473, 1
            %v4789 = vsel %vm3819, %v4787, %v4788
            %v4790 = vrot.slane %v4746, 1
            %v4791 = vrot.slane %v4474, 1
            %v4792 = vsel %vm3819, %v4790, %v4791
            %v4793 = vrot.slane %v4747, 1
            %v4794 = vrot.slane %v4475, 1
            %v4795 = vsel %vm3819, %v4793, %v4794
            %vm4796 = vcmask 523264
            %v4798 = vsel %vm4796, %v3482, %v3740
            %v4801 = vsel %vm4796, %v3483, %v3742
            %v4804 = vsel %vm4796, %v3484, %v3744
            %v4807 = vsel %vm4796, %v3485, %v3746
            %v4810 = vsel %vm4796, %v3486, %v3748
            %v4813 = vsel %vm4796, %v3487, %v3750
            %v4816 = vsel %vm4796, %v3488, %v3752
            %v4819 = vsel %vm4796, %v3489, %v3754
            %v4822 = vsel %vm4796, %v3490, %v3756
            %v4825 = vsel %vm4796, %v3491, %v3758
            %v4828 = vsel %vm4796, %v3492, %v3760
            %v4831 = vsel %vm4796, %v3493, %v3762
            %v4834 = vsel %vm4796, %v3494, %v3764
            %v4837 = vsel %vm4796, %v3495, %v3766
            %v4840 = vsel %vm4796, %v3496, %v3768
            %v4843 = vsel %vm4796, %v3497, %v3770
            %v4847 = vsel %vm4796, %v3822, %v3949
            %v4851 = vsel %vm4796, %v3825, %v3951
            %v4855 = vsel %vm4796, %v3828, %v3953
            %v4859 = vsel %vm4796, %v3831, %v3955
            %v4863 = vsel %vm4796, %v3834, %v3957
            %v4867 = vsel %vm4796, %v3837, %v3959
            %v4871 = vsel %vm4796, %v3840, %v3961
            %v4875 = vsel %vm4796, %v3843, %v3963
            %v4879 = vsel %vm4796, %v3846, %v3965
            %v4883 = vsel %vm4796, %v3849, %v3967
            %v4887 = vsel %vm4796, %v3852, %v3969
            %v4891 = vsel %vm4796, %v3855, %v3971
            %v4895 = vsel %vm4796, %v3858, %v3973
            %v4899 = vsel %vm4796, %v3861, %v3975
            %v4903 = vsel %vm4796, %v3864, %v3977
            %v4907 = vsel %vm4796, %v3867, %v3979
            %v4911 = vsel %vm4796, %v4039, %v4317
            %v4915 = vsel %vm4796, %v4051, %v4319
            %v4919 = vsel %vm4796, %v4063, %v4321
            %v4923 = vsel %vm4796, %v4075, %v4323
            %v4927 = vsel %vm4796, %v4087, %v4325
            %v4931 = vsel %vm4796, %v4099, %v4327
            %v4935 = vsel %vm4796, %v4111, %v4329
            %v4939 = vsel %vm4796, %v4123, %v4331
            %v4943 = vsel %vm4796, %v4135, %v4333
            %v4947 = vsel %vm4796, %v4147, %v4335
            %v4951 = vsel %vm4796, %v4159, %v4337
            %v4955 = vsel %vm4796, %v4171, %v4339
            %v4959 = vsel %vm4796, %v4183, %v4341
            %v4963 = vsel %vm4796, %v4195, %v4343
            %v4967 = vsel %vm4796, %v4207, %v4345
            %v4971 = vsel %vm4796, %v4219, %v4347
            %v4974 = vsel %vm4796, %v4412, %v4669
            %v4977 = vsel %vm4796, %v4413, %v4671
            %v4980 = vsel %vm4796, %v4414, %v4673
            %v4983 = vsel %vm4796, %v4415, %v4675
            %v4986 = vsel %vm4796, %v4416, %v4677
            %v4989 = vsel %vm4796, %v4417, %v4679
            %v4992 = vsel %vm4796, %v4418, %v4681
            %v4995 = vsel %vm4796, %v4419, %v4683
            %v4998 = vsel %vm4796, %v4420, %v4685
            %v5001 = vsel %vm4796, %v4421, %v4687
            %v5004 = vsel %vm4796, %v4422, %v4689
            %v5007 = vsel %vm4796, %v4423, %v4691
            %v5010 = vsel %vm4796, %v4424, %v4693
            %v5013 = vsel %vm4796, %v4425, %v4695
            %v5016 = vsel %vm4796, %v4426, %v4697
            %v5019 = vsel %vm4796, %v4427, %v4699
            %v5093 = vunpack.c.l.b16 %v3147
            %v5094 = vunpack.c.l.b16 %v3148
            %v5095 = vunpack.c.l.b16 %v3149
            %v5096 = vunpack.c.l.b16 %v3150
            %v5097 = vunpack.c.l.b16 %v3151
            %v5098 = vunpack.c.l.b16 %v3152
            %v5099 = vunpack.c.l.b16 %v3153
            %v5100 = vunpack.c.l.b16 %v3154
            %v5101 = vunpack.c.l.b16 %v3155
            %v5102 = vunpack.c.l.b16 %v3156
            %v5103 = vunpack.c.l.b16 %v3157
            %v5104 = vunpack.c.l.b16 %v3158
            %v5105 = vunpack.c.l.b16 %v3159
            %v5106 = vunpack.c.l.b16 %v3160
            %v5107 = vunpack.c.l.b16 %v3161
            %v5108 = vunpack.c.l.b16 %v3162
            %v5109 = vunpack.c.l.b16 %v3163
            %v5110 = vunpack.c.l.b16 %v3164
            %v5111 = vunpack.c.l.b16 %v3165
            %v5112 = vunpack.c.l.b16 %v3166
            %v5113 = vunpack.c.l.b16 %v3167
            %v5114 = vunpack.c.l.b16 %v3168
            %v5115 = vunpack.c.l.b16 %v3169
            %v5116 = vunpack.c.l.b16 %v3170
            %v5117 = vunpack.c.l.b16 %v3171
            %v5118 = vunpack.c.l.b16 %v3172
            %v5119 = vunpack.c.l.b16 %v3173
            %v5120 = vunpack.c.l.b16 %v3174
            %v5121 = vunpack.c.l.b16 %v3175
            %v5122 = vunpack.c.l.b16 %v3176
            %v5123 = vunpack.c.l.b16 %v3177
            %v5124 = vunpack.c.l.b16 %v3178
            %v5125 = vunpack.c.l.b16 %v3179
            %v5126 = vunpack.c.l.b16 %v3180
            %v5127 = vunpack.c.l.b16 %v3181
            %v5128 = vunpack.c.l.b16 %v3182
            %v5129 = vunpack.c.l.b16 %v3183
            %v5130 = vunpack.c.l.b16 %v3184
            %v5131 = vunpack.c.l.b16 %v3185
            %v5132 = vunpack.c.l.b16 %v3186
            %v5133 = vunpack.c.l.b16 %v3187
            %v5134 = vunpack.c.l.b16 %v3188
            %v5135 = vunpack.c.l.b16 %v3189
            %v5136 = vunpack.c.l.b16 %v3190
            %v5137 = vunpack.c.l.b16 %v3191
            %v5138 = vunpack.c.l.b16 %v3192
            %v5139 = vunpack.c.l.b16 %v3193
            %v5140 = vunpack.c.l.b16 %v3194
            %v5141 = vunpack.c.l.b16 %v3195
            %v5142 = vunpack.c.l.b16 %v3196
            %v5143 = vunpack.c.l.b16 %v3197
            %v5144 = vunpack.c.l.b16 %v3198
            %v5145 = vunpack.c.l.b16 %v3199
            %v5146 = vunpack.c.l.b16 %v3200
            %v5147 = vunpack.c.l.b16 %v3201
            %v5148 = vunpack.c.l.b16 %v3202
            %v5149 = vunpack.c.l.b16 %v3203
            %v5150 = vunpack.c.l.b16 %v3204
            %v5151 = vunpack.c.l.b16 %v3205
            %v5152 = vunpack.c.l.b16 %v3206
            %v5153 = vunpack.c.l.b16 %v3207
            %v5154 = vunpack.c.l.b16 %v3208
            %v5155 = vunpack.c.l.b16 %v3209
            %v5156 = vunpack.c.l.b16 %v3210
            %v5157 = vunpack.c.l.b16 %v3211
            %v5158 = vunpack.c.l.b16 %v3212
            %v5159 = vunpack.c.l.b16 %v3213
            %v5160 = vunpack.c.l.b16 %v3214
            %v5161 = vunpack.c.l.b16 %v3215
            %v5162 = vunpack.c.l.b16 %v3216
            %v5163 = vunpack.c.l.b16 %v3217
            %v5164 = vunpack.c.l.b16 %v3218
            %v5165 = vpack.c.b16 %v5094, %v5093
            %v5166 = vpack.c.b16 %v5096, %v5095
            %v5167 = vpack.c.b16 %v5098, %v5097
            %v5168 = vpack.c.b16 %v5100, %v5099
            %v5169 = vpack.c.b16 %v5102, %v5101
            %v5170 = vpack.c.b16 %v5104, %v5103
            %v5171 = vpack.c.b16 %v5106, %v5105
            %v5172 = vpack.c.b16 %v5108, %v5107
            %v5173 = vpack.c.b16 %v5110, %v5109
            %v5174 = vpack.c.b16 %v5112, %v5111
            %v5175 = vpack.c.b16 %v5114, %v5113
            %v5176 = vpack.c.b16 %v5116, %v5115
            %v5177 = vpack.c.b16 %v5118, %v5117
            %v5178 = vpack.c.b16 %v5120, %v5119
            %v5179 = vpack.c.b16 %v5122, %v5121
            %v5180 = vpack.c.b16 %v5124, %v5123
            %v5181 = vpack.c.b16 %v5126, %v5125
            %v5182 = vpack.c.b16 %v5128, %v5127
            %v5183 = vpack.c.b16 %v5130, %v5129
            %v5184 = vpack.c.b16 %v5132, %v5131
            %v5185 = vpack.c.b16 %v5134, %v5133
            %v5186 = vpack.c.b16 %v5136, %v5135
            %v5187 = vpack.c.b16 %v5138, %v5137
            %v5188 = vpack.c.b16 %v5140, %v5139
            %v5189 = vpack.c.b16 %v5142, %v5141
            %v5190 = vpack.c.b16 %v5144, %v5143
            %v5191 = vpack.c.b16 %v5146, %v5145
            %v5192 = vpack.c.b16 %v5148, %v5147
            %v5193 = vpack.c.b16 %v5150, %v5149
            %v5194 = vpack.c.b16 %v5152, %v5151
            %v5195 = vpack.c.b16 %v5154, %v5153
            %v5196 = vpack.c.b16 %v5156, %v5155
            %v5197 = vpack.c.b16 %v5158, %v5157
            %v5198 = vpack.c.b16 %v5160, %v5159
            %v5199 = vpack.c.b16 %v5162, %v5161
            %v5200 = vpack.c.b16 %v5164, %v5163
            %v5238 = vsel %vm4796, %v4750, 0
            %v5241 = vsel %vm4796, %v4753, 0
            %v5244 = vsel %vm4796, %v4756, 0
            %v5247 = vsel %vm4796, %v4759, 0
            %v5250 = vsel %vm4796, %v4762, 0
            %v5253 = vsel %vm4796, %v4765, 0
            %v5256 = vsel %vm4796, %v4768, 0
            %v5259 = vsel %vm4796, %v4771, 0
            %v5262 = vsel %vm4796, %v4774, 0
            %v5265 = vsel %vm4796, %v4777, 0
            %v5268 = vsel %vm4796, %v4780, 0
            %v5271 = vsel %vm4796, %v4783, 0
            %v5274 = vsel %vm4796, %v4786, 0
            %v5277 = vsel %vm4796, %v4789, 0
            %v5280 = vsel %vm4796, %v4792, 0
            %v5283 = vsel %vm4796, %v4795, 0
            %5285 = vmatprep.subr.bf16.mxu0 0
            %5286 = vmatpush1.bf16.msra.mxu0 %v5172
            %5287 = vmatprep.subr.bf16.mxu0 0
            %5288 = vmatpush1.bf16.msra.mxu0 %v5171
            %5289 = vmatprep.subr.bf16.mxu0 0
            %5290 = vmatpush1.bf16.msra.mxu0 %v5170
            %5291 = vmatprep.subr.bf16.mxu0 0
            %5292 = vmatpush1.bf16.msra.mxu0 %v5169
            %5293 = vmatprep.subr.bf16.mxu0 0
            %5294 = vmatpush1.bf16.msra.mxu0 %v5168
            %5295 = vmatprep.subr.bf16.mxu0 0
            %5296 = vmatpush1.bf16.msra.mxu0 %v5167
            %5297 = vmatprep.subr.bf16.mxu0 0
            %5298 = vmatpush1.bf16.msra.mxu0 %v5166
            %5299 = vmatprep.subr.bf16.mxu0 0
            %5300 = vmatpush1.bf16.msra.mxu0 %v5165
            %5301 = vmatprep.subr.bf16.mxu0 0
            %5302 = vmatpush2.bf16.msra.mxu0 %v5180
            %5303 = vmatprep.subr.bf16.mxu0 0
            %5304 = vmatpush2.bf16.msra.mxu0 %v5179
            %5305 = vmatprep.subr.bf16.mxu0 0
            %5306 = vmatpush2.bf16.msra.mxu0 %v5178
            %5307 = vmatprep.subr.bf16.mxu0 0
            %5308 = vmatpush2.bf16.msra.mxu0 %v5177
            %5309 = vmatprep.subr.bf16.mxu0 0
            %5310 = vmatpush2.bf16.msra.mxu0 %v5176
            %5311 = vmatprep.subr.bf16.mxu0 0
            %5312 = vmatpush2.bf16.msra.mxu0 %v5175
            %5313 = vmatprep.subr.bf16.mxu0 0
            %5314 = vmatpush2.bf16.msra.mxu0 %v5174
            %5315 = vmatprep.subr.bf16.mxu0 0
            %5316 = vmatpush2.bf16.msra.mxu0 %v5173
            %5317 = vmatprep.mubr.bf16.mxu0 %v4847
            %5318 = vmatmul.mubr.bf16.gmra.mxu0 %v4798
            %v5319 = vpop.f32.mrf.mxu0
            %v5320 = vadd.f32 0.0, %v5319
            %v5321 = vpop.f32.mrf.mxu0
            %v5322 = vpop.f32.mrf.mxu0
            %v5323 = vadd.f32 0.0, %v5322
            %v5324 = vpop.f32.mrf.mxu0
            %5325 = vmatprep.mubr.bf16.mxu0 %v4851
            %5326 = vmatmul.mubr.bf16.gmra.mxu0 %v4801
            %v5327 = vpop.f32.mrf.mxu0
            %v5328 = vadd.f32 0.0, %v5327
            %v5329 = vpop.f32.mrf.mxu0
            %v5330 = vpop.f32.mrf.mxu0
            %v5331 = vadd.f32 0.0, %v5330
            %v5332 = vpop.f32.mrf.mxu0
            %5333 = vmatprep.mubr.bf16.mxu0 %v4855
            %5334 = vmatmul.mubr.bf16.gmra.mxu0 %v4804
            %v5335 = vpop.f32.mrf.mxu0
            %v5336 = vadd.f32 0.0, %v5335
            %v5337 = vpop.f32.mrf.mxu0
            %v5338 = vpop.f32.mrf.mxu0
            %v5339 = vadd.f32 0.0, %v5338
            %v5340 = vpop.f32.mrf.mxu0
            %5341 = vmatprep.mubr.bf16.mxu0 %v4859
            %5342 = vmatmul.mubr.bf16.gmra.mxu0 %v4807
            %v5343 = vpop.f32.mrf.mxu0
            %v5344 = vadd.f32 0.0, %v5343
            %v5345 = vpop.f32.mrf.mxu0
            %v5346 = vpop.f32.mrf.mxu0
            %v5347 = vadd.f32 0.0, %v5346
            %v5348 = vpop.f32.mrf.mxu0
            %5349 = vmatprep.mubr.bf16.mxu0 %v4863
            %5350 = vmatmul.mubr.bf16.gmra.mxu0 %v4810
            %v5351 = vpop.f32.mrf.mxu0
            %v5352 = vadd.f32 0.0, %v5351
            %v5353 = vpop.f32.mrf.mxu0
            %v5354 = vpop.f32.mrf.mxu0
            %v5355 = vadd.f32 0.0, %v5354
            %v5356 = vpop.f32.mrf.mxu0
            %5357 = vmatprep.mubr.bf16.mxu0 %v4867
            %5358 = vmatmul.mubr.bf16.gmra.mxu0 %v4813
            %v5359 = vpop.f32.mrf.mxu0
            %v5360 = vadd.f32 0.0, %v5359
            %v5361 = vpop.f32.mrf.mxu0
            %v5362 = vpop.f32.mrf.mxu0
            %v5363 = vadd.f32 0.0, %v5362
            %v5364 = vpop.f32.mrf.mxu0
            %5365 = vmatprep.mubr.bf16.mxu0 %v4871
            %5366 = vmatmul.mubr.bf16.gmra.mxu0 %v4816
            %v5367 = vpop.f32.mrf.mxu0
            %v5368 = vadd.f32 0.0, %v5367
            %v5369 = vpop.f32.mrf.mxu0
            %v5370 = vpop.f32.mrf.mxu0
            %v5371 = vadd.f32 0.0, %v5370
            %v5372 = vpop.f32.mrf.mxu0
            %5373 = vmatprep.mubr.bf16.mxu0 %v4875
            %5374 = vmatmul.mubr.bf16.gmra.mxu0 %v4819
            %v5375 = vpop.f32.mrf.mxu0
            %v5376 = vadd.f32 0.0, %v5375
            %v5377 = vpop.f32.mrf.mxu0
            %v5378 = vpop.f32.mrf.mxu0
            %v5379 = vadd.f32 0.0, %v5378
            %v5380 = vpop.f32.mrf.mxu0
            %5381 = vmatprep.mubr.bf16.mxu0 %v4879
            %5382 = vmatmul.mubr.bf16.gmra.mxu0 %v4822
            %v5383 = vpop.f32.mrf.mxu0
            %v5384 = vadd.f32 0.0, %v5383
            %v5385 = vpop.f32.mrf.mxu0
            %v5386 = vpop.f32.mrf.mxu0
            %v5387 = vadd.f32 0.0, %v5386
            %v5388 = vpop.f32.mrf.mxu0
            %5389 = vmatprep.mubr.bf16.mxu0 %v4883
            %5390 = vmatmul.mubr.bf16.gmra.mxu0 %v4825
            %v5391 = vpop.f32.mrf.mxu0
            %v5392 = vadd.f32 0.0, %v5391
            %v5393 = vpop.f32.mrf.mxu0
            %v5394 = vpop.f32.mrf.mxu0
            %v5395 = vadd.f32 0.0, %v5394
            %v5396 = vpop.f32.mrf.mxu0
            %5397 = vmatprep.mubr.bf16.mxu0 %v4887
            %5398 = vmatmul.mubr.bf16.gmra.mxu0 %v4828
            %v5399 = vpop.f32.mrf.mxu0
            %v5400 = vadd.f32 0.0, %v5399
            %v5401 = vpop.f32.mrf.mxu0
            %v5402 = vpop.f32.mrf.mxu0
            %v5403 = vadd.f32 0.0, %v5402
            %v5404 = vpop.f32.mrf.mxu0
            %5405 = vmatprep.mubr.bf16.mxu0 %v4891
            %5406 = vmatmul.mubr.bf16.gmra.mxu0 %v4831
            %v5407 = vpop.f32.mrf.mxu0
            %v5408 = vadd.f32 0.0, %v5407
            %v5409 = vpop.f32.mrf.mxu0
            %v5410 = vpop.f32.mrf.mxu0
            %v5411 = vadd.f32 0.0, %v5410
            %v5412 = vpop.f32.mrf.mxu0
            %5413 = vmatprep.mubr.bf16.mxu0 %v4895
            %5414 = vmatmul.mubr.bf16.gmra.mxu0 %v4834
            %v5415 = vpop.f32.mrf.mxu0
            %v5416 = vadd.f32 0.0, %v5415
            %v5417 = vpop.f32.mrf.mxu0
            %v5418 = vpop.f32.mrf.mxu0
            %v5419 = vadd.f32 0.0, %v5418
            %v5420 = vpop.f32.mrf.mxu0
            %5421 = vmatprep.mubr.bf16.mxu0 %v4899
            %5422 = vmatmul.mubr.bf16.gmra.mxu0 %v4837
            %v5423 = vpop.f32.mrf.mxu0
            %v5424 = vadd.f32 0.0, %v5423
            %v5425 = vpop.f32.mrf.mxu0
            %v5426 = vpop.f32.mrf.mxu0
            %v5427 = vadd.f32 0.0, %v5426
            %v5428 = vpop.f32.mrf.mxu0
            %5429 = vmatprep.mubr.bf16.mxu0 %v4903
            %5430 = vmatmul.mubr.bf16.gmra.mxu0 %v4840
            %v5431 = vpop.f32.mrf.mxu0
            %v5432 = vadd.f32 0.0, %v5431
            %v5433 = vpop.f32.mrf.mxu0
            %v5434 = vpop.f32.mrf.mxu0
            %v5435 = vadd.f32 0.0, %v5434
            %v5436 = vpop.f32.mrf.mxu0
            %5437 = vmatprep.mubr.bf16.mxu0 %v4907
            %5438 = vmatmul.mubr.bf16.gmra.mxu0 %v4843
            %v5439 = vpop.f32.mrf.mxu0
            %v5440 = vadd.f32 0.0, %v5439
            %v5441 = vpop.f32.mrf.mxu0
            %v5442 = vpop.f32.mrf.mxu0
            %v5443 = vadd.f32 0.0, %v5442
            %v5444 = vpop.f32.mrf.mxu0
            %5445 = vdwg.mxu0
            %5446 = vmatprep.subr.bf16.mxu0 0
            %5447 = vmatpush1.bf16.msra.mxu0 %v5188
            %5448 = vmatprep.subr.bf16.mxu0 0
            %5449 = vmatpush1.bf16.msra.mxu0 %v5187
            %5450 = vmatprep.subr.bf16.mxu0 0
            %5451 = vmatpush1.bf16.msra.mxu0 %v5186
            %5452 = vmatprep.subr.bf16.mxu0 0
            %5453 = vmatpush1.bf16.msra.mxu0 %v5185
            %5454 = vmatprep.subr.bf16.mxu0 0
            %5455 = vmatpush1.bf16.msra.mxu0 %v5184
            %5456 = vmatprep.subr.bf16.mxu0 0
            %5457 = vmatpush1.bf16.msra.mxu0 %v5183
            %5458 = vmatprep.subr.bf16.mxu0 0
            %5459 = vmatpush1.bf16.msra.mxu0 %v5182
            %5460 = vmatprep.subr.bf16.mxu0 0
            %5461 = vmatpush1.bf16.msra.mxu0 %v5181
            %5462 = vmatprep.subr.bf16.mxu0 0
            %5463 = vmatpush2.bf16.msra.mxu0 %v5196
            %5464 = vmatprep.subr.bf16.mxu0 0
            %5465 = vmatpush2.bf16.msra.mxu0 %v5195
            %5466 = vmatprep.subr.bf16.mxu0 0
            %5467 = vmatpush2.bf16.msra.mxu0 %v5194
            %5468 = vmatprep.subr.bf16.mxu0 0
            %5469 = vmatpush2.bf16.msra.mxu0 %v5193
            %5470 = vmatprep.subr.bf16.mxu0 0
            %5471 = vmatpush2.bf16.msra.mxu0 %v5192
            %5472 = vmatprep.subr.bf16.mxu0 0
            %5473 = vmatpush2.bf16.msra.mxu0 %v5191
            %5474 = vmatprep.subr.bf16.mxu0 0
            %5475 = vmatpush2.bf16.msra.mxu0 %v5190
            %5476 = vmatprep.subr.bf16.mxu0 0
            %5477 = vmatpush2.bf16.msra.mxu0 %v5189
            %5478 = vmatprep.mubr.bf16.mxu0 %v4974
            %5479 = vmatmul.mubr.bf16.gmra.mxu0 %v4911
            %v5480 = vpop.f32.mrf.mxu0
            %v5481 = vadd.f32 %v5320, %v5480
            %v5482 = vpop.f32.mrf.mxu0
            %v5483 = vpop.f32.mrf.mxu0
            %v5484 = vadd.f32 %v5323, %v5483
            %v5485 = vpop.f32.mrf.mxu0
            %5486 = vmatprep.mubr.bf16.mxu0 %v4977
            %5487 = vmatmul.mubr.bf16.gmra.mxu0 %v4915
            %v5488 = vpop.f32.mrf.mxu0
            %v5489 = vadd.f32 %v5328, %v5488
            %v5490 = vpop.f32.mrf.mxu0
            %v5491 = vpop.f32.mrf.mxu0
            %v5492 = vadd.f32 %v5331, %v5491
            %v5493 = vpop.f32.mrf.mxu0
            %5494 = vmatprep.mubr.bf16.mxu0 %v4980
            %5495 = vmatmul.mubr.bf16.gmra.mxu0 %v4919
            %v5496 = vpop.f32.mrf.mxu0
            %v5497 = vadd.f32 %v5336, %v5496
            %v5498 = vpop.f32.mrf.mxu0
            %v5499 = vpop.f32.mrf.mxu0
            %v5500 = vadd.f32 %v5339, %v5499
            %v5501 = vpop.f32.mrf.mxu0
            %5502 = vmatprep.mubr.bf16.mxu0 %v4983
            %5503 = vmatmul.mubr.bf16.gmra.mxu0 %v4923
            %v5504 = vpop.f32.mrf.mxu0
            %v5505 = vadd.f32 %v5344, %v5504
            %v5506 = vpop.f32.mrf.mxu0
            %v5507 = vpop.f32.mrf.mxu0
            %v5508 = vadd.f32 %v5347, %v5507
            %v5509 = vpop.f32.mrf.mxu0
            %5510 = vmatprep.mubr.bf16.mxu0 %v4986
            %5511 = vmatmul.mubr.bf16.gmra.mxu0 %v4927
            %v5512 = vpop.f32.mrf.mxu0
            %v5513 = vadd.f32 %v5352, %v5512
            %v5514 = vpop.f32.mrf.mxu0
            %v5515 = vpop.f32.mrf.mxu0
            %v5516 = vadd.f32 %v5355, %v5515
            %v5517 = vpop.f32.mrf.mxu0
            %5518 = vmatprep.mubr.bf16.mxu0 %v4989
            %5519 = vmatmul.mubr.bf16.gmra.mxu0 %v4931
            %v5520 = vpop.f32.mrf.mxu0
            %v5521 = vadd.f32 %v5360, %v5520
            %v5522 = vpop.f32.mrf.mxu0
            %v5523 = vpop.f32.mrf.mxu0
            %v5524 = vadd.f32 %v5363, %v5523
            %v5525 = vpop.f32.mrf.mxu0
            %5526 = vmatprep.mubr.bf16.mxu0 %v4992
            %5527 = vmatmul.mubr.bf16.gmra.mxu0 %v4935
            %v5528 = vpop.f32.mrf.mxu0
            %v5529 = vadd.f32 %v5368, %v5528
            %v5530 = vpop.f32.mrf.mxu0
            %v5531 = vpop.f32.mrf.mxu0
            %v5532 = vadd.f32 %v5371, %v5531
            %v5533 = vpop.f32.mrf.mxu0
            %5534 = vmatprep.mubr.bf16.mxu0 %v4995
            %5535 = vmatmul.mubr.bf16.gmra.mxu0 %v4939
            %v5536 = vpop.f32.mrf.mxu0
            %v5537 = vadd.f32 %v5376, %v5536
            %v5538 = vpop.f32.mrf.mxu0
            %v5539 = vpop.f32.mrf.mxu0
            %v5540 = vadd.f32 %v5379, %v5539
            %v5541 = vpop.f32.mrf.mxu0
            %5542 = vmatprep.mubr.bf16.mxu0 %v4998
            %5543 = vmatmul.mubr.bf16.gmra.mxu0 %v4943
            %v5544 = vpop.f32.mrf.mxu0
            %v5545 = vadd.f32 %v5384, %v5544
            %v5546 = vpop.f32.mrf.mxu0
            %v5547 = vpop.f32.mrf.mxu0
            %v5548 = vadd.f32 %v5387, %v5547
            %v5549 = vpop.f32.mrf.mxu0
            %5550 = vmatprep.mubr.bf16.mxu0 %v5001
            %5551 = vmatmul.mubr.bf16.gmra.mxu0 %v4947
            %v5552 = vpop.f32.mrf.mxu0
            %v5553 = vadd.f32 %v5392, %v5552
            %v5554 = vpop.f32.mrf.mxu0
            %v5555 = vpop.f32.mrf.mxu0
            %v5556 = vadd.f32 %v5395, %v5555
            %v5557 = vpop.f32.mrf.mxu0
            %5558 = vmatprep.mubr.bf16.mxu0 %v5004
            %5559 = vmatmul.mubr.bf16.gmra.mxu0 %v4951
            %v5560 = vpop.f32.mrf.mxu0
            %v5561 = vadd.f32 %v5400, %v5560
            %v5562 = vpop.f32.mrf.mxu0
            %v5563 = vpop.f32.mrf.mxu0
            %v5564 = vadd.f32 %v5403, %v5563
            %v5565 = vpop.f32.mrf.mxu0
            %5566 = vmatprep.mubr.bf16.mxu0 %v5007
            %5567 = vmatmul.mubr.bf16.gmra.mxu0 %v4955
            %v5568 = vpop.f32.mrf.mxu0
            %v5569 = vadd.f32 %v5408, %v5568
            %v5570 = vpop.f32.mrf.mxu0
            %v5571 = vpop.f32.mrf.mxu0
            %v5572 = vadd.f32 %v5411, %v5571
            %v5573 = vpop.f32.mrf.mxu0
            %5574 = vmatprep.mubr.bf16.mxu0 %v5010
            %5575 = vmatmul.mubr.bf16.gmra.mxu0 %v4959
            %v5576 = vpop.f32.mrf.mxu0
            %v5577 = vadd.f32 %v5416, %v5576
            %v5578 = vpop.f32.mrf.mxu0
            %v5579 = vpop.f32.mrf.mxu0
            %v5580 = vadd.f32 %v5419, %v5579
            %v5581 = vpop.f32.mrf.mxu0
            %5582 = vmatprep.mubr.bf16.mxu0 %v5013
            %5583 = vmatmul.mubr.bf16.gmra.mxu0 %v4963
            %v5584 = vpop.f32.mrf.mxu0
            %v5585 = vadd.f32 %v5424, %v5584
            %v5586 = vpop.f32.mrf.mxu0
            %v5587 = vpop.f32.mrf.mxu0
            %v5588 = vadd.f32 %v5427, %v5587
            %v5589 = vpop.f32.mrf.mxu0
            %5590 = vmatprep.mubr.bf16.mxu0 %v5016
            %5591 = vmatmul.mubr.bf16.gmra.mxu0 %v4967
            %v5592 = vpop.f32.mrf.mxu0
            %v5593 = vadd.f32 %v5432, %v5592
            %v5594 = vpop.f32.mrf.mxu0
            %v5595 = vpop.f32.mrf.mxu0
            %v5596 = vadd.f32 %v5435, %v5595
            %v5597 = vpop.f32.mrf.mxu0
            %5598 = vmatprep.mubr.bf16.mxu0 %v5019
            %5599 = vmatmul.mubr.bf16.gmra.mxu0 %v4971
            %v5600 = vpop.f32.mrf.mxu0
            %v5601 = vadd.f32 %v5440, %v5600
            %v5602 = vpop.f32.mrf.mxu0
            %v5603 = vpop.f32.mrf.mxu0
            %v5604 = vadd.f32 %v5443, %v5603
            %v5605 = vpop.f32.mrf.mxu0
            %5606 = vdwg.mxu0
            %5607 = vmatprep.subr.bf16.mxu0 0
            %5608 = vmatpush1.bf16.msra.mxu0 0
            %5609 = vmatprep.subr.bf16.mxu0 0
            %5610 = vmatpush1.bf16.msra.mxu0 0
            %5611 = vmatprep.subr.bf16.mxu0 0
            %5612 = vmatpush1.bf16.msra.mxu0 0
            %5613 = vmatprep.subr.bf16.mxu0 0
            %5614 = vmatpush1.bf16.msra.mxu0 0
            %5615 = vmatprep.subr.bf16.mxu0 0
            %5616 = vmatpush1.bf16.msra.mxu0 %v5200
            %5617 = vmatprep.subr.bf16.mxu0 0
            %5618 = vmatpush1.bf16.msra.mxu0 %v5199
            %5619 = vmatprep.subr.bf16.mxu0 0
            %5620 = vmatpush1.bf16.msra.mxu0 %v5198
            %5621 = vmatprep.subr.bf16.mxu0 0
            %5622 = vmatpush1.bf16.msra.mxu0 %v5197
            %5623 = vmatprep.subr.bf16.mxu0 0
            %5624 = vmatpush2.bf16.msra.mxu0 0
            %5625 = vmatprep.subr.bf16.mxu0 0
            %5626 = vmatpush2.bf16.msra.mxu0 0
            %5627 = vmatprep.subr.bf16.mxu0 0
            %5628 = vmatpush2.bf16.msra.mxu0 0
            %5629 = vmatprep.subr.bf16.mxu0 0
            %5630 = vmatpush2.bf16.msra.mxu0 0
            %5631 = vmatprep.subr.bf16.mxu0 0
            %5632 = vmatpush2.bf16.msra.mxu0 0
            %5633 = vmatprep.subr.bf16.mxu0 0
            %5634 = vmatpush2.bf16.msra.mxu0 0
            %5635 = vmatprep.subr.bf16.mxu0 0
            %5636 = vmatpush2.bf16.msra.mxu0 0
            %5637 = vmatprep.subr.bf16.mxu0 0
            %5638 = vmatpush2.bf16.msra.mxu0 0
            %5639 = vmatprep.mubr.bf16.mxu0 0
            %5640 = vmatmul.mubr.bf16.gmra.mxu0 %v5238
            %v5641 = vpop.f32.mrf.mxu0
            %v5642 = vadd.f32 %v5481, %v5641
            %v5643 = vpop.f32.mrf.mxu0
            %v5644 = vpop.f32.mrf.mxu0
            %v5645 = vadd.f32 %v5484, %v5644
            %v5646 = vpop.f32.mrf.mxu0
            %5647 = vmatprep.mubr.bf16.mxu0 0
            %5648 = vmatmul.mubr.bf16.gmra.mxu0 %v5241
            %v5649 = vpop.f32.mrf.mxu0
            %v5650 = vadd.f32 %v5489, %v5649
            %v5651 = vpop.f32.mrf.mxu0
            %v5652 = vpop.f32.mrf.mxu0
            %v5653 = vadd.f32 %v5492, %v5652
            %v5654 = vpop.f32.mrf.mxu0
            %5655 = vmatprep.mubr.bf16.mxu0 0
            %5656 = vmatmul.mubr.bf16.gmra.mxu0 %v5244
            %v5657 = vpop.f32.mrf.mxu0
            %v5658 = vadd.f32 %v5497, %v5657
            %v5659 = vpop.f32.mrf.mxu0
            %v5660 = vpop.f32.mrf.mxu0
            %v5661 = vadd.f32 %v5500, %v5660
            %v5662 = vpop.f32.mrf.mxu0
            %5663 = vmatprep.mubr.bf16.mxu0 0
            %5664 = vmatmul.mubr.bf16.gmra.mxu0 %v5247
            %v5665 = vpop.f32.mrf.mxu0
            %v5666 = vadd.f32 %v5505, %v5665
            %v5667 = vpop.f32.mrf.mxu0
            %v5668 = vpop.f32.mrf.mxu0
            %v5669 = vadd.f32 %v5508, %v5668
            %v5670 = vpop.f32.mrf.mxu0
            %5671 = vmatprep.mubr.bf16.mxu0 0
            %5672 = vmatmul.mubr.bf16.gmra.mxu0 %v5250
            %v5673 = vpop.f32.mrf.mxu0
            %v5674 = vadd.f32 %v5513, %v5673
            %v5675 = vpop.f32.mrf.mxu0
            %v5676 = vpop.f32.mrf.mxu0
            %v5677 = vadd.f32 %v5516, %v5676
            %v5678 = vpop.f32.mrf.mxu0
            %5679 = vmatprep.mubr.bf16.mxu0 0
            %5680 = vmatmul.mubr.bf16.gmra.mxu0 %v5253
            %v5681 = vpop.f32.mrf.mxu0
            %v5682 = vadd.f32 %v5521, %v5681
            %v5683 = vpop.f32.mrf.mxu0
            %v5684 = vpop.f32.mrf.mxu0
            %v5685 = vadd.f32 %v5524, %v5684
            %v5686 = vpop.f32.mrf.mxu0
            %5687 = vmatprep.mubr.bf16.mxu0 0
            %5688 = vmatmul.mubr.bf16.gmra.mxu0 %v5256
            %v5689 = vpop.f32.mrf.mxu0
            %v5690 = vadd.f32 %v5529, %v5689
            %v5691 = vpop.f32.mrf.mxu0
            %v5692 = vpop.f32.mrf.mxu0
            %v5693 = vadd.f32 %v5532, %v5692
            %v5694 = vpop.f32.mrf.mxu0
            %5695 = vmatprep.mubr.bf16.mxu0 0
            %5696 = vmatmul.mubr.bf16.gmra.mxu0 %v5259
            %v5697 = vpop.f32.mrf.mxu0
            %v5698 = vadd.f32 %v5537, %v5697
            %v5699 = vpop.f32.mrf.mxu0
            %v5700 = vpop.f32.mrf.mxu0
            %v5701 = vadd.f32 %v5540, %v5700
            %v5702 = vpop.f32.mrf.mxu0
            %5703 = vmatprep.mubr.bf16.mxu0 0
            %5704 = vmatmul.mubr.bf16.gmra.mxu0 %v5262
            %v5705 = vpop.f32.mrf.mxu0
            %v5706 = vadd.f32 %v5545, %v5705
            %v5707 = vpop.f32.mrf.mxu0
            %v5708 = vpop.f32.mrf.mxu0
            %v5709 = vadd.f32 %v5548, %v5708
            %v5710 = vpop.f32.mrf.mxu0
            %5711 = vmatprep.mubr.bf16.mxu0 0
            %5712 = vmatmul.mubr.bf16.gmra.mxu0 %v5265
            %v5713 = vpop.f32.mrf.mxu0
            %v5714 = vadd.f32 %v5553, %v5713
            %v5715 = vpop.f32.mrf.mxu0
            %v5716 = vpop.f32.mrf.mxu0
            %v5717 = vadd.f32 %v5556, %v5716
            %v5718 = vpop.f32.mrf.mxu0
            %5719 = vmatprep.mubr.bf16.mxu0 0
            %5720 = vmatmul.mubr.bf16.gmra.mxu0 %v5268
            %v5721 = vpop.f32.mrf.mxu0
            %v5722 = vadd.f32 %v5561, %v5721
            %v5723 = vpop.f32.mrf.mxu0
            %v5724 = vpop.f32.mrf.mxu0
            %v5725 = vadd.f32 %v5564, %v5724
            %v5726 = vpop.f32.mrf.mxu0
            %5727 = vmatprep.mubr.bf16.mxu0 0
            %5728 = vmatmul.mubr.bf16.gmra.mxu0 %v5271
            %v5729 = vpop.f32.mrf.mxu0
            %v5730 = vadd.f32 %v5569, %v5729
            %v5731 = vpop.f32.mrf.mxu0
            %v5732 = vpop.f32.mrf.mxu0
            %v5733 = vadd.f32 %v5572, %v5732
            %v5734 = vpop.f32.mrf.mxu0
            %5735 = vmatprep.mubr.bf16.mxu0 0
            %5736 = vmatmul.mubr.bf16.gmra.mxu0 %v5274
            %v5737 = vpop.f32.mrf.mxu0
            %v5738 = vadd.f32 %v5577, %v5737
            %v5739 = vpop.f32.mrf.mxu0
            %v5740 = vpop.f32.mrf.mxu0
            %v5741 = vadd.f32 %v5580, %v5740
            %v5742 = vpop.f32.mrf.mxu0
            %5743 = vmatprep.mubr.bf16.mxu0 0
            %5744 = vmatmul.mubr.bf16.gmra.mxu0 %v5277
            %v5745 = vpop.f32.mrf.mxu0
            %v5746 = vadd.f32 %v5585, %v5745
            %v5747 = vpop.f32.mrf.mxu0
            %v5748 = vpop.f32.mrf.mxu0
            %v5749 = vadd.f32 %v5588, %v5748
            %v5750 = vpop.f32.mrf.mxu0
            %5751 = vmatprep.mubr.bf16.mxu0 0
            %5752 = vmatmul.mubr.bf16.gmra.mxu0 %v5280
            %v5753 = vpop.f32.mrf.mxu0
            %v5754 = vadd.f32 %v5593, %v5753
            %v5755 = vpop.f32.mrf.mxu0
            %v5756 = vpop.f32.mrf.mxu0
            %v5757 = vadd.f32 %v5596, %v5756
            %v5758 = vpop.f32.mrf.mxu0
            %5759 = vmatprep.mubr.bf16.mxu0 0
            %5760 = vmatmul.mubr.bf16.gmra.mxu0 %v5283
            %v5761 = vpop.f32.mrf.mxu0
            %v5762 = vadd.f32 %v5601, %v5761
            %v5763 = vpop.f32.mrf.mxu0
            %v5764 = vpop.f32.mrf.mxu0
            %v5765 = vadd.f32 %v5604, %v5764
            %v5766 = vpop.f32.mrf.mxu0
            %5767 = vdwg.mxu0
            %v5768 = vmax.f32 %v5642, 0.0
            %v5769 = vmax.f32 %v5645, 0.0
            %v5770 = vmax.f32 %v5650, 0.0
            %v5771 = vmax.f32 %v5653, 0.0
            %v5772 = vmax.f32 %v5658, 0.0
            %v5773 = vmax.f32 %v5661, 0.0
            %v5774 = vmax.f32 %v5666, 0.0
            %v5775 = vmax.f32 %v5669, 0.0
            %v5776 = vmax.f32 %v5674, 0.0
            %v5777 = vmax.f32 %v5677, 0.0
            %v5778 = vmax.f32 %v5682, 0.0
            %v5779 = vmax.f32 %v5685, 0.0
            %v5780 = vmax.f32 %v5690, 0.0
            %v5781 = vmax.f32 %v5693, 0.0
            %v5782 = vmax.f32 %v5698, 0.0
            %v5783 = vmax.f32 %v5701, 0.0
            %v5784 = vmax.f32 %v5706, 0.0
            %v5785 = vmax.f32 %v5709, 0.0
            %v5786 = vmax.f32 %v5714, 0.0
            %v5787 = vmax.f32 %v5717, 0.0
            %v5788 = vmax.f32 %v5722, 0.0
            %v5789 = vmax.f32 %v5725, 0.0
            %v5790 = vmax.f32 %v5730, 0.0
            %v5791 = vmax.f32 %v5733, 0.0
            %v5792 = vmax.f32 %v5738, 0.0
            %v5793 = vmax.f32 %v5741, 0.0
            %v5794 = vmax.f32 %v5746, 0.0
            %v5795 = vmax.f32 %v5749, 0.0
            %v5796 = vmax.f32 %v5754, 0.0
            %v5797 = vmax.f32 %v5757, 0.0
            %v5798 = vmax.f32 %v5762, 0.0
            %v5799 = vmax.f32 %v5765, 0.0
            %v5800 = vpack.c.bf16 %v5769, %v5768
            %v5801 = vpack.c.bf16 %v5771, %v5770
            %v5802 = vpack.c.bf16 %v5773, %v5772
            %v5803 = vpack.c.bf16 %v5775, %v5774
            %v5804 = vpack.c.bf16 %v5777, %v5776
            %v5805 = vpack.c.bf16 %v5779, %v5778
            %v5806 = vpack.c.bf16 %v5781, %v5780
            %v5807 = vpack.c.bf16 %v5783, %v5782
            %v5808 = vpack.c.bf16 %v5785, %v5784
            %v5809 = vpack.c.bf16 %v5787, %v5786
            %v5810 = vpack.c.bf16 %v5789, %v5788
            %v5811 = vpack.c.bf16 %v5791, %v5790
            %v5812 = vpack.c.bf16 %v5793, %v5792
            %v5813 = vpack.c.bf16 %v5795, %v5794
            %v5814 = vpack.c.bf16 %v5797, %v5796
            %v5815 = vpack.c.bf16 %v5799, %v5798
            %v5832 = vunpack.c.l.b16 %v5800
            %v5833 = vunpack.c.h.b16 %v5800
            %v5834 = vunpack.c.l.b16 %v5801
            %v5835 = vunpack.c.h.b16 %v5801
            %v5836 = vunpack.c.l.b16 %v5802
            %v5837 = vunpack.c.h.b16 %v5802
            %v5838 = vunpack.c.l.b16 %v5803
            %v5839 = vunpack.c.h.b16 %v5803
            %v5840 = vunpack.c.l.b16 %v5804
            %v5841 = vunpack.c.h.b16 %v5804
            %v5842 = vunpack.c.l.b16 %v5805
            %v5843 = vunpack.c.h.b16 %v5805
            %v5844 = vunpack.c.l.b16 %v5806
            %v5845 = vunpack.c.h.b16 %v5806
            %v5846 = vunpack.c.l.b16 %v5807
            %v5847 = vunpack.c.h.b16 %v5807
            %v5848 = vunpack.c.l.b16 %v5808
            %v5849 = vunpack.c.h.b16 %v5808
            %v5850 = vunpack.c.l.b16 %v5809
            %v5851 = vunpack.c.h.b16 %v5809
            %v5852 = vunpack.c.l.b16 %v5810
            %v5853 = vunpack.c.h.b16 %v5810
            %v5854 = vunpack.c.l.b16 %v5811
            %v5855 = vunpack.c.h.b16 %v5811
            %v5856 = vunpack.c.l.b16 %v5812
            %v5857 = vunpack.c.h.b16 %v5812
            %v5858 = vunpack.c.l.b16 %v5813
            %v5859 = vunpack.c.h.b16 %v5813
            %v5860 = vunpack.c.l.b16 %v5814
            %v5861 = vunpack.c.h.b16 %v5814
            %v5862 = vunpack.c.l.b16 %v5815
            %v5863 = vunpack.c.h.b16 %v5815
            %v5864 = vpack.c.b16 %v5832, %v5832
            %v5865 = vpack.c.b16 %v5833, %v5833
            %v5866 = vpack.c.b16 %v5834, %v5834
            %v5867 = vpack.c.b16 %v5835, %v5835
            %v5868 = vpack.c.b16 %v5836, %v5836
            %v5869 = vpack.c.b16 %v5837, %v5837
            %v5870 = vpack.c.b16 %v5838, %v5838
            %v5871 = vpack.c.b16 %v5839, %v5839
            %v5872 = vpack.c.b16 %v5840, %v5840
            %v5873 = vpack.c.b16 %v5841, %v5841
            %v5874 = vpack.c.b16 %v5842, %v5842
            %v5875 = vpack.c.b16 %v5843, %v5843
            %v5876 = vpack.c.b16 %v5844, %v5844
            %v5877 = vpack.c.b16 %v5845, %v5845
            %v5878 = vpack.c.b16 %v5846, %v5846
            %v5879 = vpack.c.b16 %v5847, %v5847
            %v5880 = vpack.c.b16 %v5848, %v5848
            %v5881 = vpack.c.b16 %v5849, %v5849
            %v5882 = vpack.c.b16 %v5850, %v5850
            %v5883 = vpack.c.b16 %v5851, %v5851
            %v5884 = vpack.c.b16 %v5852, %v5852
            %v5885 = vpack.c.b16 %v5853, %v5853
            %v5886 = vpack.c.b16 %v5854, %v5854
            %v5887 = vpack.c.b16 %v5855, %v5855
            %v5888 = vpack.c.b16 %v5856, %v5856
            %v5889 = vpack.c.b16 %v5857, %v5857
            %v5890 = vpack.c.b16 %v5858, %v5858
            %v5891 = vpack.c.b16 %v5859, %v5859
            %v5892 = vpack.c.b16 %v5860, %v5860
            %v5893 = vpack.c.b16 %v5861, %v5861
            %v5894 = vpack.c.b16 %v5862, %v5862
            %v5895 = vpack.c.b16 %v5863, %v5863
            %vm5896 = vsmask.f32 256
            %vm5897 = vsmask.f32 4368
            %vm5898 = vmor %vm5896, %vm5897
            %v5900 = vshrl.u32 %v5864, 16
            %v5902 = vrot.slane %v5900, 7
            %v5903 = vshll.u32 %v5864, 16
            %v5905 = vor.u32 %v5902, %v5903
            %v5906 = vrot.slane %v5902, 4
            %v5908 = vshrl.u32 %v5865, 16
            %v5910 = vrot.slane %v5908, 7
            %v5911 = vshll.u32 %v5865, 16
            %v5913 = vor.u32 %v5910, %v5911
            %v5914 = vsel %vm5898, %v5906, %v5913
            %v5915 = vrot.slane %v5910, 4
            %v5917 = vshrl.u32 %v5866, 16
            %v5919 = vrot.slane %v5917, 7
            %v5920 = vshll.u32 %v5866, 16
            %v5922 = vor.u32 %v5919, %v5920
            %v5923 = vrot.slane %v5919, 4
            %v5925 = vshrl.u32 %v5867, 16
            %v5927 = vrot.slane %v5925, 7
            %v5928 = vshll.u32 %v5867, 16
            %v5930 = vor.u32 %v5927, %v5928
            %v5931 = vsel %vm5898, %v5923, %v5930
            %v5932 = vrot.slane %v5927, 4
            %v5934 = vshrl.u32 %v5868, 16
            %v5936 = vrot.slane %v5934, 7
            %v5937 = vshll.u32 %v5868, 16
            %v5939 = vor.u32 %v5936, %v5937
            %v5940 = vrot.slane %v5936, 4
            %v5942 = vshrl.u32 %v5869, 16
            %v5944 = vrot.slane %v5942, 7
            %v5945 = vshll.u32 %v5869, 16
            %v5947 = vor.u32 %v5944, %v5945
            %v5948 = vsel %vm5898, %v5940, %v5947
            %v5949 = vrot.slane %v5944, 4
            %v5951 = vshrl.u32 %v5870, 16
            %v5953 = vrot.slane %v5951, 7
            %v5954 = vshll.u32 %v5870, 16
            %v5956 = vor.u32 %v5953, %v5954
            %v5957 = vrot.slane %v5953, 4
            %v5959 = vshrl.u32 %v5871, 16
            %v5961 = vrot.slane %v5959, 7
            %v5962 = vshll.u32 %v5871, 16
            %v5964 = vor.u32 %v5961, %v5962
            %v5965 = vsel %vm5898, %v5957, %v5964
            %v5966 = vrot.slane %v5961, 4
            %v5968 = vshrl.u32 %v5872, 16
            %v5970 = vrot.slane %v5968, 7
            %v5971 = vshll.u32 %v5872, 16
            %v5973 = vor.u32 %v5970, %v5971
            %v5974 = vrot.slane %v5970, 4
            %v5976 = vshrl.u32 %v5873, 16
            %v5978 = vrot.slane %v5976, 7
            %v5979 = vshll.u32 %v5873, 16
            %v5981 = vor.u32 %v5978, %v5979
            %v5982 = vsel %vm5898, %v5974, %v5981
            %v5983 = vrot.slane %v5978, 4
            %v5985 = vshrl.u32 %v5874, 16
            %v5987 = vrot.slane %v5985, 7
            %v5988 = vshll.u32 %v5874, 16
            %v5990 = vor.u32 %v5987, %v5988
            %v5991 = vrot.slane %v5987, 4
            %v5993 = vshrl.u32 %v5875, 16
            %v5995 = vrot.slane %v5993, 7
            %v5996 = vshll.u32 %v5875, 16
            %v5998 = vor.u32 %v5995, %v5996
            %v5999 = vsel %vm5898, %v5991, %v5998
            %v6000 = vrot.slane %v5995, 4
            %v6002 = vshrl.u32 %v5876, 16
            %v6004 = vrot.slane %v6002, 7
            %v6005 = vshll.u32 %v5876, 16
            %v6007 = vor.u32 %v6004, %v6005
            %v6008 = vrot.slane %v6004, 4
            %v6010 = vshrl.u32 %v5877, 16
            %v6012 = vrot.slane %v6010, 7
            %v6013 = vshll.u32 %v5877, 16
            %v6015 = vor.u32 %v6012, %v6013
            %v6016 = vsel %vm5898, %v6008, %v6015
            %v6017 = vrot.slane %v6012, 4
            %v6019 = vshrl.u32 %v5878, 16
            %v6021 = vrot.slane %v6019, 7
            %v6022 = vshll.u32 %v5878, 16
            %v6024 = vor.u32 %v6021, %v6022
            %v6025 = vrot.slane %v6021, 4
            %v6027 = vshrl.u32 %v5879, 16
            %v6029 = vrot.slane %v6027, 7
            %v6030 = vshll.u32 %v5879, 16
            %v6032 = vor.u32 %v6029, %v6030
            %v6033 = vsel %vm5898, %v6025, %v6032
            %v6034 = vrot.slane %v6029, 4
            %v6036 = vshrl.u32 %v5880, 16
            %v6038 = vrot.slane %v6036, 7
            %v6039 = vshll.u32 %v5880, 16
            %v6041 = vor.u32 %v6038, %v6039
            %v6042 = vrot.slane %v6038, 4
            %v6044 = vshrl.u32 %v5881, 16
            %v6046 = vrot.slane %v6044, 7
            %v6047 = vshll.u32 %v5881, 16
            %v6049 = vor.u32 %v6046, %v6047
            %v6050 = vsel %vm5898, %v6042, %v6049
            %v6051 = vrot.slane %v6046, 4
            %v6053 = vshrl.u32 %v5882, 16
            %v6055 = vrot.slane %v6053, 7
            %v6056 = vshll.u32 %v5882, 16
            %v6058 = vor.u32 %v6055, %v6056
            %v6059 = vrot.slane %v6055, 4
            %v6061 = vshrl.u32 %v5883, 16
            %v6063 = vrot.slane %v6061, 7
            %v6064 = vshll.u32 %v5883, 16
            %v6066 = vor.u32 %v6063, %v6064
            %v6067 = vsel %vm5898, %v6059, %v6066
            %v6068 = vrot.slane %v6063, 4
            %v6070 = vshrl.u32 %v5884, 16
            %v6072 = vrot.slane %v6070, 7
            %v6073 = vshll.u32 %v5884, 16
            %v6075 = vor.u32 %v6072, %v6073
            %v6076 = vrot.slane %v6072, 4
            %v6078 = vshrl.u32 %v5885, 16
            %v6080 = vrot.slane %v6078, 7
            %v6081 = vshll.u32 %v5885, 16
            %v6083 = vor.u32 %v6080, %v6081
            %v6084 = vsel %vm5898, %v6076, %v6083
            %v6085 = vrot.slane %v6080, 4
            %v6087 = vshrl.u32 %v5886, 16
            %v6089 = vrot.slane %v6087, 7
            %v6090 = vshll.u32 %v5886, 16
            %v6092 = vor.u32 %v6089, %v6090
            %v6093 = vrot.slane %v6089, 4
            %v6095 = vshrl.u32 %v5887, 16
            %v6097 = vrot.slane %v6095, 7
            %v6098 = vshll.u32 %v5887, 16
            %v6100 = vor.u32 %v6097, %v6098
            %v6101 = vsel %vm5898, %v6093, %v6100
            %v6102 = vrot.slane %v6097, 4
            %v6104 = vshrl.u32 %v5888, 16
            %v6106 = vrot.slane %v6104, 7
            %v6107 = vshll.u32 %v5888, 16
            %v6109 = vor.u32 %v6106, %v6107
            %v6110 = vrot.slane %v6106, 4
            %v6112 = vshrl.u32 %v5889, 16
            %v6114 = vrot.slane %v6112, 7
            %v6115 = vshll.u32 %v5889, 16
            %v6117 = vor.u32 %v6114, %v6115
            %v6118 = vsel %vm5898, %v6110, %v6117
            %v6119 = vrot.slane %v6114, 4
            %v6121 = vshrl.u32 %v5890, 16
            %v6123 = vrot.slane %v6121, 7
            %v6124 = vshll.u32 %v5890, 16
            %v6126 = vor.u32 %v6123, %v6124
            %v6127 = vrot.slane %v6123, 4
            %v6129 = vshrl.u32 %v5891, 16
            %v6131 = vrot.slane %v6129, 7
            %v6132 = vshll.u32 %v5891, 16
            %v6134 = vor.u32 %v6131, %v6132
            %v6135 = vsel %vm5898, %v6127, %v6134
            %v6136 = vrot.slane %v6131, 4
            %v6138 = vshrl.u32 %v5892, 16
            %v6140 = vrot.slane %v6138, 7
            %v6141 = vshll.u32 %v5892, 16
            %v6143 = vor.u32 %v6140, %v6141
            %v6144 = vrot.slane %v6140, 4
            %v6146 = vshrl.u32 %v5893, 16
            %v6148 = vrot.slane %v6146, 7
            %v6149 = vshll.u32 %v5893, 16
            %v6151 = vor.u32 %v6148, %v6149
            %v6152 = vsel %vm5898, %v6144, %v6151
            %v6153 = vrot.slane %v6148, 4
            %v6155 = vshrl.u32 %v5894, 16
            %v6157 = vrot.slane %v6155, 7
            %v6158 = vshll.u32 %v5894, 16
            %v6160 = vor.u32 %v6157, %v6158
            %v6161 = vrot.slane %v6157, 4
            %v6163 = vshrl.u32 %v5895, 16
            %v6165 = vrot.slane %v6163, 7
            %v6166 = vshll.u32 %v5895, 16
            %v6168 = vor.u32 %v6165, %v6166
            %v6169 = vsel %vm5898, %v6161, %v6168
            %v6170 = vrot.slane %v6165, 4
            %s6219 = scalar_lea.vmem [#allocation2], 228
            %vm6220 = vcmask 519168
            %vm6221 = vsmask.f32 7938
            %vm6222 = vmand %vm6220, %vm6221
            %v6223 = vld [vmem:[%s6219] sm:$0xf]
            %v6224 = vsel %vm6222, %v5905, %v6223
            %6225 = vst [vmem:[%s6219] sm:$0xf] %v6224
            %vm6226 = vcmask 519168
            %6227 = vst.msk [vmem:[%s6219 + $0x4] sm:$0xf] %vm6226, %v5914
            %vm6228 = vcmask 516096
            %vm6229 = vmand %vm6228, %vm5896
            %v6230 = vld [vmem:[%s6219 + $0x8] sm:$0x1]
            %v6231 = vsel %vm6229, %v5915, %v6230
            %6232 = vst [vmem:[%s6219 + $0x8] sm:$0x1] %v6231
            %v6233 = vld [vmem:[%s6219 + $0xc] sm:$0xf]
            %v6234 = vsel %vm6222, %v5922, %v6233
            %6235 = vst [vmem:[%s6219 + $0xc] sm:$0xf] %v6234
            %6236 = vst.msk [vmem:[%s6219 + $0x10] sm:$0xf] %vm6226, %v5931
            %v6237 = vld [vmem:[%s6219 + $0x14] sm:$0x1]
            %v6238 = vsel %vm6229, %v5932, %v6237
            %6239 = vst [vmem:[%s6219 + $0x14] sm:$0x1] %v6238
            %v6240 = vld [vmem:[%s6219 + $0x18] sm:$0xf]
            %v6241 = vsel %vm6222, %v5939, %v6240
            %6242 = vst [vmem:[%s6219 + $0x18] sm:$0xf] %v6241
            %6243 = vst.msk [vmem:[%s6219 + $0x1c] sm:$0xf] %vm6226, %v5948
            %v6244 = vld [vmem:[%s6219 + $0x20] sm:$0x1]
            %v6245 = vsel %vm6229, %v5949, %v6244
            %6246 = vst [vmem:[%s6219 + $0x20] sm:$0x1] %v6245
            %v6247 = vld [vmem:[%s6219 + $0x24] sm:$0xf]
            %v6248 = vsel %vm6222, %v5956, %v6247
            %6249 = vst [vmem:[%s6219 + $0x24] sm:$0xf] %v6248
            %6250 = vst.msk [vmem:[%s6219 + $0x28] sm:$0xf] %vm6226, %v5965
            %v6251 = vld [vmem:[%s6219 + $0x2c] sm:$0x1]
            %v6252 = vsel %vm6229, %v5966, %v6251
            %6253 = vst [vmem:[%s6219 + $0x2c] sm:$0x1] %v6252
            %v6254 = vld [vmem:[%s6219 + $0x30] sm:$0xf]
            %v6255 = vsel %vm6222, %v5973, %v6254
            %6256 = vst [vmem:[%s6219 + $0x30] sm:$0xf] %v6255
            %6257 = vst.msk [vmem:[%s6219 + $0x34] sm:$0xf] %vm6226, %v5982
            %v6258 = vld [vmem:[%s6219 + $0x38] sm:$0x1]
            %v6259 = vsel %vm6229, %v5983, %v6258
            %6260 = vst [vmem:[%s6219 + $0x38] sm:$0x1] %v6259
            %v6261 = vld [vmem:[%s6219 + $0x3c] sm:$0xf]
            %v6262 = vsel %vm6222, %v5990, %v6261
            %6263 = vst [vmem:[%s6219 + $0x3c] sm:$0xf] %v6262
            %6264 = vst.msk [vmem:[%s6219 + $0x40] sm:$0xf] %vm6226, %v5999
            %v6265 = vld [vmem:[%s6219 + $0x44] sm:$0x1]
            %v6266 = vsel %vm6229, %v6000, %v6265
            %6267 = vst [vmem:[%s6219 + $0x44] sm:$0x1] %v6266
            %v6268 = vld [vmem:[%s6219 + $0x48] sm:$0xf]
            %v6269 = vsel %vm6222, %v6007, %v6268
            %6270 = vst [vmem:[%s6219 + $0x48] sm:$0xf] %v6269
            %6271 = vst.msk [vmem:[%s6219 + $0x4c] sm:$0xf] %vm6226, %v6016
            %v6272 = vld [vmem:[%s6219 + $0x50] sm:$0x1]
            %v6273 = vsel %vm6229, %v6017, %v6272
            %6274 = vst [vmem:[%s6219 + $0x50] sm:$0x1] %v6273
            %v6275 = vld [vmem:[%s6219 + $0x54] sm:$0xf]
            %v6276 = vsel %vm6222, %v6024, %v6275
            %6277 = vst [vmem:[%s6219 + $0x54] sm:$0xf] %v6276
            %6278 = vst.msk [vmem:[%s6219 + $0x58] sm:$0xf] %vm6226, %v6033
            %v6279 = vld [vmem:[%s6219 + $0x5c] sm:$0x1]
            %v6280 = vsel %vm6229, %v6034, %v6279
            %6281 = vst [vmem:[%s6219 + $0x5c] sm:$0x1] %v6280
            %v6282 = vld [vmem:[%s6219 + $0x60] sm:$0xf]
            %v6283 = vsel %vm6222, %v6041, %v6282
            %6284 = vst [vmem:[%s6219 + $0x60] sm:$0xf] %v6283
            %6285 = vst.msk [vmem:[%s6219 + $0x64] sm:$0xf] %vm6226, %v6050
            %v6286 = vld [vmem:[%s6219 + $0x68] sm:$0x1]
            %v6287 = vsel %vm6229, %v6051, %v6286
            %6288 = vst [vmem:[%s6219 + $0x68] sm:$0x1] %v6287
            %v6289 = vld [vmem:[%s6219 + $0x6c] sm:$0xf]
            %v6290 = vsel %vm6222, %v6058, %v6289
            %6291 = vst [vmem:[%s6219 + $0x6c] sm:$0xf] %v6290
            %6292 = vst.msk [vmem:[%s6219 + $0x70] sm:$0xf] %vm6226, %v6067
            %v6293 = vld [vmem:[%s6219 + $0x74] sm:$0x1]
            %v6294 = vsel %vm6229, %v6068, %v6293
            %6295 = vst [vmem:[%s6219 + $0x74] sm:$0x1] %v6294
            %v6296 = vld [vmem:[%s6219 + $0x78] sm:$0xf]
            %v6297 = vsel %vm6222, %v6075, %v6296
            %6298 = vst [vmem:[%s6219 + $0x78] sm:$0xf] %v6297
            %6299 = vst.msk [vmem:[%s6219 + $0x7c] sm:$0xf] %vm6226, %v6084
            %v6300 = vld [vmem:[%s6219 + $0x80] sm:$0x1]
            %v6301 = vsel %vm6229, %v6085, %v6300
            %6302 = vst [vmem:[%s6219 + $0x80] sm:$0x1] %v6301
            %v6303 = vld [vmem:[%s6219 + $0x84] sm:$0xf]
            %v6304 = vsel %vm6222, %v6092, %v6303
            %6305 = vst [vmem:[%s6219 + $0x84] sm:$0xf] %v6304
            %6306 = vst.msk [vmem:[%s6219 + $0x88] sm:$0xf] %vm6226, %v6101
            %v6307 = vld [vmem:[%s6219 + $0x8c] sm:$0x1]
            %v6308 = vsel %vm6229, %v6102, %v6307
            %6309 = vst [vmem:[%s6219 + $0x8c] sm:$0x1] %v6308
            %v6310 = vld [vmem:[%s6219 + $0x90] sm:$0xf]
            %v6311 = vsel %vm6222, %v6109, %v6310
            %6312 = vst [vmem:[%s6219 + $0x90] sm:$0xf] %v6311
            %6313 = vst.msk [vmem:[%s6219 + $0x94] sm:$0xf] %vm6226, %v6118
            %v6314 = vld [vmem:[%s6219 + $0x98] sm:$0x1]
            %v6315 = vsel %vm6229, %v6119, %v6314
            %6316 = vst [vmem:[%s6219 + $0x98] sm:$0x1] %v6315
            %v6317 = vld [vmem:[%s6219 + $0x9c] sm:$0xf]
            %v6318 = vsel %vm6222, %v6126, %v6317
            %6319 = vst [vmem:[%s6219 + $0x9c] sm:$0xf] %v6318
            %6320 = vst.msk [vmem:[%s6219 + $0xa0] sm:$0xf] %vm6226, %v6135
            %v6321 = vld [vmem:[%s6219 + $0xa4] sm:$0x1]
            %v6322 = vsel %vm6229, %v6136, %v6321
            %6323 = vst [vmem:[%s6219 + $0xa4] sm:$0x1] %v6322
            %v6324 = vld [vmem:[%s6219 + $0xa8] sm:$0xf]
            %v6325 = vsel %vm6222, %v6143, %v6324
            %6326 = vst [vmem:[%s6219 + $0xa8] sm:$0xf] %v6325
            %6327 = vst.msk [vmem:[%s6219 + $0xac] sm:$0xf] %vm6226, %v6152
            %v6328 = vld [vmem:[%s6219 + $0xb0] sm:$0x1]
            %v6329 = vsel %vm6229, %v6153, %v6328
            %6330 = vst [vmem:[%s6219 + $0xb0] sm:$0x1] %v6329
            %v6331 = vld [vmem:[%s6219 + $0xb4] sm:$0xf]
            %v6332 = vsel %vm6222, %v6160, %v6331
            %6333 = vst [vmem:[%s6219 + $0xb4] sm:$0xf] %v6332
            %6334 = vst.msk [vmem:[%s6219 + $0xb8] sm:$0xf] %vm6226, %v6169
            %v6335 = vld [vmem:[%s6219 + $0xbc] sm:$0x1]
            %v6336 = vsel %vm6229, %v6170, %v6335
            %6337 = vst [vmem:[%s6219 + $0xbc] sm:$0x1] %v6336
          $region52: #{vdsr_forward.1} parent=47 // pred_fallthru
            _
          %p6338 = scmp.eq.s32.totalorder %s3219, 0
          // Predicated region
          $region53: #{vdsr_forward.1} parent=47 // pred_check
            %p6339 = pneg %p6338
          $region54: #{vdsr_forward.1} parent=47 // pred_check_branch
            %6341 = sbr.rel (%p6339) target = $region56
          $region55: #{vdsr_forward.1} parent=47 // pred_region
            %s6342 = scalar_lea.vmem [#allocation2], 216
            %v6343 = vld [vmem:[%s6342] sm:$0xf]
            %v6344 = vld [vmem:[%s6342 + $0x4] sm:$0xf]
            %v6345 = vld [vmem:[%s6342 + $0xc] sm:$0xf]
            %v6346 = vld [vmem:[%s6342 + $0x10] sm:$0xf]
            %v6347 = vld [vmem:[%s6342 + $0x18] sm:$0xf]
            %v6348 = vld [vmem:[%s6342 + $0x1c] sm:$0xf]
            %v6349 = vld [vmem:[%s6342 + $0x24] sm:$0xf]
            %v6350 = vld [vmem:[%s6342 + $0x28] sm:$0xf]
            %v6351 = vld [vmem:[%s6342 + $0x30] sm:$0xf]
            %v6352 = vld [vmem:[%s6342 + $0x34] sm:$0xf]
            %v6353 = vld [vmem:[%s6342 + $0x3c] sm:$0xf]
            %v6354 = vld [vmem:[%s6342 + $0x40] sm:$0xf]
            %v6355 = vld [vmem:[%s6342 + $0x48] sm:$0xf]
            %v6356 = vld [vmem:[%s6342 + $0x4c] sm:$0xf]
            %v6357 = vld [vmem:[%s6342 + $0x54] sm:$0xf]
            %v6358 = vld [vmem:[%s6342 + $0x58] sm:$0xf]
            %v6359 = vld [vmem:[%s6342 + $0x60] sm:$0xf]
            %v6360 = vld [vmem:[%s6342 + $0x64] sm:$0xf]
            %v6361 = vld [vmem:[%s6342 + $0x6c] sm:$0xf]
            %v6362 = vld [vmem:[%s6342 + $0x70] sm:$0xf]
            %v6363 = vld [vmem:[%s6342 + $0x78] sm:$0xf]
            %v6364 = vld [vmem:[%s6342 + $0x7c] sm:$0xf]
            %v6365 = vld [vmem:[%s6342 + $0x84] sm:$0xf]
            %v6366 = vld [vmem:[%s6342 + $0x88] sm:$0xf]
            %v6367 = vld [vmem:[%s6342 + $0x90] sm:$0xf]
            %v6368 = vld [vmem:[%s6342 + $0x94] sm:$0xf]
            %v6369 = vld [vmem:[%s6342 + $0x9c] sm:$0xf]
            %v6370 = vld [vmem:[%s6342 + $0xa0] sm:$0xf]
            %v6371 = vld [vmem:[%s6342 + $0xa8] sm:$0xf]
            %v6372 = vld [vmem:[%s6342 + $0xac] sm:$0xf]
            %v6373 = vld [vmem:[%s6342 + $0xb4] sm:$0xf]
            %v6374 = vld [vmem:[%s6342 + $0xb8] sm:$0xf]
            %v6375 = vld [vmem:[%s6342 + $0x8] sm:$0x1]
            %v6376 = vld [vmem:[%s6342 + $0x14] sm:$0x1]
            %v6377 = vld [vmem:[%s6342 + $0x20] sm:$0x1]
            %v6378 = vld [vmem:[%s6342 + $0x2c] sm:$0x1]
            %v6379 = vld [vmem:[%s6342 + $0x38] sm:$0x1]
            %v6380 = vld [vmem:[%s6342 + $0x44] sm:$0x1]
            %v6381 = vld [vmem:[%s6342 + $0x50] sm:$0x1]
            %v6382 = vld [vmem:[%s6342 + $0x5c] sm:$0x1]
            %v6383 = vld [vmem:[%s6342 + $0x68] sm:$0x1]
            %v6384 = vld [vmem:[%s6342 + $0x74] sm:$0x1]
            %v6385 = vld [vmem:[%s6342 + $0x80] sm:$0x1]
            %v6386 = vld [vmem:[%s6342 + $0x8c] sm:$0x1]
            %v6387 = vld [vmem:[%s6342 + $0x98] sm:$0x1]
            %v6388 = vld [vmem:[%s6342 + $0xa4] sm:$0x1]
            %v6389 = vld [vmem:[%s6342 + $0xb0] sm:$0x1]
            %v6390 = vld [vmem:[%s6342 + $0xbc] sm:$0x1]
            %v6391 = vld [vmem:[%s6342] sm:$0xe]
            %v6392 = vld [vmem:[%s6342 + $0xc] sm:$0xe]
            %v6393 = vld [vmem:[%s6342 + $0x18] sm:$0xe]
            %v6394 = vld [vmem:[%s6342 + $0x24] sm:$0xe]
            %v6395 = vld [vmem:[%s6342 + $0x30] sm:$0xe]
            %v6396 = vld [vmem:[%s6342 + $0x3c] sm:$0xe]
            %v6397 = vld [vmem:[%s6342 + $0x48] sm:$0xe]
            %v6398 = vld [vmem:[%s6342 + $0x54] sm:$0xe]
            %v6399 = vld [vmem:[%s6342 + $0x60] sm:$0xe]
            %v6400 = vld [vmem:[%s6342 + $0x6c] sm:$0xe]
            %v6401 = vld [vmem:[%s6342 + $0x78] sm:$0xe]
            %v6402 = vld [vmem:[%s6342 + $0x84] sm:$0xe]
            %v6403 = vld [vmem:[%s6342 + $0x90] sm:$0xe]
            %v6404 = vld [vmem:[%s6342 + $0x9c] sm:$0xe]
            %v6405 = vld [vmem:[%s6342 + $0xa8] sm:$0xe]
            %v6406 = vld [vmem:[%s6342 + $0xb4] sm:$0xe]
            %s6407 = scalar_lea.vmem [#allocation2], 228
            %v6408 = vld [vmem:[%s6407] sm:$0xf]
            %v6409 = vld [vmem:[%s6407 + $0x4] sm:$0xf]
            %v6410 = vld [vmem:[%s6407 + $0xc] sm:$0xf]
            %v6411 = vld [vmem:[%s6407 + $0x10] sm:$0xf]
            %v6412 = vld [vmem:[%s6407 + $0x18] sm:$0xf]
            %v6413 = vld [vmem:[%s6407 + $0x1c] sm:$0xf]
            %v6414 = vld [vmem:[%s6407 + $0x24] sm:$0xf]
            %v6415 = vld [vmem:[%s6407 + $0x28] sm:$0xf]
            %v6416 = vld [vmem:[%s6407 + $0x30] sm:$0xf]
            %v6417 = vld [vmem:[%s6407 + $0x34] sm:$0xf]
            %v6418 = vld [vmem:[%s6407 + $0x3c] sm:$0xf]
            %v6419 = vld [vmem:[%s6407 + $0x40] sm:$0xf]
            %v6420 = vld [vmem:[%s6407 + $0x48] sm:$0xf]
            %v6421 = vld [vmem:[%s6407 + $0x4c] sm:$0xf]
            %v6422 = vld [vmem:[%s6407 + $0x54] sm:$0xf]
            %v6423 = vld [vmem:[%s6407 + $0x58] sm:$0xf]
            %v6424 = vld [vmem:[%s6407 + $0x60] sm:$0xf]
            %v6425 = vld [vmem:[%s6407 + $0x64] sm:$0xf]
            %v6426 = vld [vmem:[%s6407 + $0x6c] sm:$0xf]
            %v6427 = vld [vmem:[%s6407 + $0x70] sm:$0xf]
            %v6428 = vld [vmem:[%s6407 + $0x78] sm:$0xf]
            %v6429 = vld [vmem:[%s6407 + $0x7c] sm:$0xf]
            %v6430 = vld [vmem:[%s6407 + $0x84] sm:$0xf]
            %v6431 = vld [vmem:[%s6407 + $0x88] sm:$0xf]
            %v6432 = vld [vmem:[%s6407 + $0x90] sm:$0xf]
            %v6433 = vld [vmem:[%s6407 + $0x94] sm:$0xf]
            %v6434 = vld [vmem:[%s6407 + $0x9c] sm:$0xf]
            %v6435 = vld [vmem:[%s6407 + $0xa0] sm:$0xf]
            %v6436 = vld [vmem:[%s6407 + $0xa8] sm:$0xf]
            %v6437 = vld [vmem:[%s6407 + $0xac] sm:$0xf]
            %v6438 = vld [vmem:[%s6407 + $0xb4] sm:$0xf]
            %v6439 = vld [vmem:[%s6407 + $0xb8] sm:$0xf]
            %v6440 = vld [vmem:[%s6407 + $0x8] sm:$0x1]
            %v6441 = vld [vmem:[%s6407 + $0x14] sm:$0x1]
            %v6442 = vld [vmem:[%s6407 + $0x20] sm:$0x1]
            %v6443 = vld [vmem:[%s6407 + $0x2c] sm:$0x1]
            %v6444 = vld [vmem:[%s6407 + $0x38] sm:$0x1]
            %v6445 = vld [vmem:[%s6407 + $0x44] sm:$0x1]
            %v6446 = vld [vmem:[%s6407 + $0x50] sm:$0x1]
            %v6447 = vld [vmem:[%s6407 + $0x5c] sm:$0x1]
            %v6448 = vld [vmem:[%s6407 + $0x68] sm:$0x1]
            %v6449 = vld [vmem:[%s6407 + $0x74] sm:$0x1]
            %v6450 = vld [vmem:[%s6407 + $0x80] sm:$0x1]
            %v6451 = vld [vmem:[%s6407 + $0x8c] sm:$0x1]
            %v6452 = vld [vmem:[%s6407 + $0x98] sm:$0x1]
            %v6453 = vld [vmem:[%s6407 + $0xa4] sm:$0x1]
            %v6454 = vld [vmem:[%s6407 + $0xb0] sm:$0x1]
            %v6455 = vld [vmem:[%s6407 + $0xbc] sm:$0x1]
            %v6456 = vld [vmem:[%s6407] sm:$0xe]
            %v6457 = vld [vmem:[%s6407 + $0xc] sm:$0xe]
            %v6458 = vld [vmem:[%s6407 + $0x18] sm:$0xe]
            %v6459 = vld [vmem:[%s6407 + $0x24] sm:$0xe]
            %v6460 = vld [vmem:[%s6407 + $0x30] sm:$0xe]
            %v6461 = vld [vmem:[%s6407 + $0x3c] sm:$0xe]
            %v6462 = vld [vmem:[%s6407 + $0x48] sm:$0xe]
            %v6463 = vld [vmem:[%s6407 + $0x54] sm:$0xe]
            %v6464 = vld [vmem:[%s6407 + $0x60] sm:$0xe]
            %v6465 = vld [vmem:[%s6407 + $0x6c] sm:$0xe]
            %v6466 = vld [vmem:[%s6407 + $0x78] sm:$0xe]
            %v6467 = vld [vmem:[%s6407 + $0x84] sm:$0xe]
            %v6468 = vld [vmem:[%s6407 + $0x90] sm:$0xe]
            %v6469 = vld [vmem:[%s6407 + $0x9c] sm:$0xe]
            %v6470 = vld [vmem:[%s6407 + $0xa8] sm:$0xe]
            %v6471 = vld [vmem:[%s6407 + $0xb4] sm:$0xe]
            %s6472 = scalar_lea.vmem [#allocation2], 240
            %v6473 = vld [vmem:[%s6472] sm:$0xf]
            %v6474 = vld [vmem:[%s6472 + $0x4] sm:$0xf]
            %v6475 = vld [vmem:[%s6472 + $0xc] sm:$0xf]
            %v6476 = vld [vmem:[%s6472 + $0x10] sm:$0xf]
            %v6477 = vld [vmem:[%s6472 + $0x18] sm:$0xf]
            %v6478 = vld [vmem:[%s6472 + $0x1c] sm:$0xf]
            %v6479 = vld [vmem:[%s6472 + $0x24] sm:$0xf]
            %v6480 = vld [vmem:[%s6472 + $0x28] sm:$0xf]
            %v6481 = vld [vmem:[%s6472 + $0x30] sm:$0xf]
            %v6482 = vld [vmem:[%s6472 + $0x34] sm:$0xf]
            %v6483 = vld [vmem:[%s6472 + $0x3c] sm:$0xf]
            %v6484 = vld [vmem:[%s6472 + $0x40] sm:$0xf]
            %v6485 = vld [vmem:[%s6472 + $0x48] sm:$0xf]
            %v6486 = vld [vmem:[%s6472 + $0x4c] sm:$0xf]
            %v6487 = vld [vmem:[%s6472 + $0x54] sm:$0xf]
            %v6488 = vld [vmem:[%s6472 + $0x58] sm:$0xf]
            %v6489 = vld [vmem:[%s6472 + $0x60] sm:$0xf]
            %v6490 = vld [vmem:[%s6472 + $0x64] sm:$0xf]
            %v6491 = vld [vmem:[%s6472 + $0x6c] sm:$0xf]
            %v6492 = vld [vmem:[%s6472 + $0x70] sm:$0xf]
            %v6493 = vld [vmem:[%s6472 + $0x78] sm:$0xf]
            %v6494 = vld [vmem:[%s6472 + $0x7c] sm:$0xf]
            %v6495 = vld [vmem:[%s6472 + $0x84] sm:$0xf]
            %v6496 = vld [vmem:[%s6472 + $0x88] sm:$0xf]
            %v6497 = vld [vmem:[%s6472 + $0x90] sm:$0xf]
            %v6498 = vld [vmem:[%s6472 + $0x94] sm:$0xf]
            %v6499 = vld [vmem:[%s6472 + $0x9c] sm:$0xf]
            %v6500 = vld [vmem:[%s6472 + $0xa0] sm:$0xf]
            %v6501 = vld [vmem:[%s6472 + $0xa8] sm:$0xf]
            %v6502 = vld [vmem:[%s6472 + $0xac] sm:$0xf]
            %v6503 = vld [vmem:[%s6472 + $0xb4] sm:$0xf]
            %v6504 = vld [vmem:[%s6472 + $0xb8] sm:$0xf]
            %v6505 = vld [vmem:[%s6472 + $0x8] sm:$0x1]
            %v6506 = vld [vmem:[%s6472 + $0x14] sm:$0x1]
            %v6507 = vld [vmem:[%s6472 + $0x20] sm:$0x1]
            %v6508 = vld [vmem:[%s6472 + $0x2c] sm:$0x1]
            %v6509 = vld [vmem:[%s6472 + $0x38] sm:$0x1]
            %v6510 = vld [vmem:[%s6472 + $0x44] sm:$0x1]
            %v6511 = vld [vmem:[%s6472 + $0x50] sm:$0x1]
            %v6512 = vld [vmem:[%s6472 + $0x5c] sm:$0x1]
            %v6513 = vld [vmem:[%s6472 + $0x68] sm:$0x1]
            %v6514 = vld [vmem:[%s6472 + $0x74] sm:$0x1]
            %v6515 = vld [vmem:[%s6472 + $0x80] sm:$0x1]
            %v6516 = vld [vmem:[%s6472 + $0x8c] sm:$0x1]
            %v6517 = vld [vmem:[%s6472 + $0x98] sm:$0x1]
            %v6518 = vld [vmem:[%s6472 + $0xa4] sm:$0x1]
            %v6519 = vld [vmem:[%s6472 + $0xb0] sm:$0x1]
            %v6520 = vld [vmem:[%s6472 + $0xbc] sm:$0x1]
            %v6521 = vld [vmem:[%s6472] sm:$0xe]
            %v6522 = vld [vmem:[%s6472 + $0xc] sm:$0xe]
            %v6523 = vld [vmem:[%s6472 + $0x18] sm:$0xe]
            %v6524 = vld [vmem:[%s6472 + $0x24] sm:$0xe]
            %v6525 = vld [vmem:[%s6472 + $0x30] sm:$0xe]
            %v6526 = vld [vmem:[%s6472 + $0x3c] sm:$0xe]
            %v6527 = vld [vmem:[%s6472 + $0x48] sm:$0xe]
            %v6528 = vld [vmem:[%s6472 + $0x54] sm:$0xe]
            %v6529 = vld [vmem:[%s6472 + $0x60] sm:$0xe]
            %v6530 = vld [vmem:[%s6472 + $0x6c] sm:$0xe]
            %v6531 = vld [vmem:[%s6472 + $0x78] sm:$0xe]
            %v6532 = vld [vmem:[%s6472 + $0x84] sm:$0xe]
            %v6533 = vld [vmem:[%s6472 + $0x90] sm:$0xe]
            %v6534 = vld [vmem:[%s6472 + $0x9c] sm:$0xe]
            %v6535 = vld [vmem:[%s6472 + $0xa8] sm:$0xe]
            %v6536 = vld [vmem:[%s6472 + $0xb4] sm:$0xe]
            %v6569 = vunpack.c.l.b16 %v6343
            %v6570 = vunpack.c.l.b16 %v6344
            %v6571 = vunpack.c.l.b16 %v6345
            %v6572 = vunpack.c.l.b16 %v6346
            %v6573 = vunpack.c.l.b16 %v6347
            %v6574 = vunpack.c.l.b16 %v6348
            %v6575 = vunpack.c.l.b16 %v6349
            %v6576 = vunpack.c.l.b16 %v6350
            %v6577 = vunpack.c.l.b16 %v6351
            %v6578 = vunpack.c.l.b16 %v6352
            %v6579 = vunpack.c.l.b16 %v6353
            %v6580 = vunpack.c.l.b16 %v6354
            %v6581 = vunpack.c.l.b16 %v6355
            %v6582 = vunpack.c.l.b16 %v6356
            %v6583 = vunpack.c.l.b16 %v6357
            %v6584 = vunpack.c.l.b16 %v6358
            %v6585 = vunpack.c.l.b16 %v6359
            %v6586 = vunpack.c.l.b16 %v6360
            %v6587 = vunpack.c.l.b16 %v6361
            %v6588 = vunpack.c.l.b16 %v6362
            %v6589 = vunpack.c.l.b16 %v6363
            %v6590 = vunpack.c.l.b16 %v6364
            %v6591 = vunpack.c.l.b16 %v6365
            %v6592 = vunpack.c.l.b16 %v6366
            %v6593 = vunpack.c.l.b16 %v6367
            %v6594 = vunpack.c.l.b16 %v6368
            %v6595 = vunpack.c.l.b16 %v6369
            %v6596 = vunpack.c.l.b16 %v6370
            %v6597 = vunpack.c.l.b16 %v6371
            %v6598 = vunpack.c.l.b16 %v6372
            %v6599 = vunpack.c.l.b16 %v6373
            %v6600 = vunpack.c.l.b16 %v6374
            %v6601 = vpack.c.b16 %v6570, %v6569
            %v6602 = vpack.c.b16 %v6572, %v6571
            %v6603 = vpack.c.b16 %v6574, %v6573
            %v6604 = vpack.c.b16 %v6576, %v6575
            %v6605 = vpack.c.b16 %v6578, %v6577
            %v6606 = vpack.c.b16 %v6580, %v6579
            %v6607 = vpack.c.b16 %v6582, %v6581
            %v6608 = vpack.c.b16 %v6584, %v6583
            %v6609 = vpack.c.b16 %v6586, %v6585
            %v6610 = vpack.c.b16 %v6588, %v6587
            %v6611 = vpack.c.b16 %v6590, %v6589
            %v6612 = vpack.c.b16 %v6592, %v6591
            %v6613 = vpack.c.b16 %v6594, %v6593
            %v6614 = vpack.c.b16 %v6596, %v6595
            %v6615 = vpack.c.b16 %v6598, %v6597
            %v6616 = vpack.c.b16 %v6600, %v6599
            %v6633 = vunpack.c.l.b16 %v6375
            %v6634 = vunpack.c.l.b16 %v6376
            %v6635 = vunpack.c.l.b16 %v6377
            %v6636 = vunpack.c.l.b16 %v6378
            %v6637 = vunpack.c.l.b16 %v6379
            %v6638 = vunpack.c.l.b16 %v6380
            %v6639 = vunpack.c.l.b16 %v6381
            %v6640 = vunpack.c.l.b16 %v6382
            %v6641 = vunpack.c.l.b16 %v6383
            %v6642 = vunpack.c.l.b16 %v6384
            %v6643 = vunpack.c.l.b16 %v6385
            %v6644 = vunpack.c.l.b16 %v6386
            %v6645 = vunpack.c.l.b16 %v6387
            %v6646 = vunpack.c.l.b16 %v6388
            %v6647 = vunpack.c.l.b16 %v6389
            %v6648 = vunpack.c.l.b16 %v6390
            %v6649 = vpack.c.b16 %v6633, %v6633
            %v6650 = vpack.c.b16 %v6634, %v6634
            %v6651 = vpack.c.b16 %v6635, %v6635
            %v6652 = vpack.c.b16 %v6636, %v6636
            %v6653 = vpack.c.b16 %v6637, %v6637
            %v6654 = vpack.c.b16 %v6638, %v6638
            %v6655 = vpack.c.b16 %v6639, %v6639
            %v6656 = vpack.c.b16 %v6640, %v6640
            %v6657 = vpack.c.b16 %v6641, %v6641
            %v6658 = vpack.c.b16 %v6642, %v6642
            %v6659 = vpack.c.b16 %v6643, %v6643
            %v6660 = vpack.c.b16 %v6644, %v6644
            %v6661 = vpack.c.b16 %v6645, %v6645
            %v6662 = vpack.c.b16 %v6646, %v6646
            %v6663 = vpack.c.b16 %v6647, %v6647
            %v6664 = vpack.c.b16 %v6648, %v6648
            %vm6665 = vsmask.f32 7424
            %v6667 = vshrl.u32 %v6601, 16
            %v6669 = vshll.u32 %v6601, 16
            %v6671 = vrot.slane %v6669, 1
            %v6672 = vor.u32 %v6667, %v6671
            %v6674 = vshll.u32 %v6649, 16
            %v6676 = vrot.slane %v6674, 1
            %v6677 = vsel %vm6665, %v6672, %v6676
            %v6679 = vshrl.u32 %v6602, 16
            %v6681 = vshll.u32 %v6602, 16
            %v6683 = vrot.slane %v6681, 1
            %v6684 = vor.u32 %v6679, %v6683
            %v6686 = vshll.u32 %v6650, 16
            %v6688 = vrot.slane %v6686, 1
            %v6689 = vsel %vm6665, %v6684, %v6688
            %v6691 = vshrl.u32 %v6603, 16
            %v6693 = vshll.u32 %v6603, 16
            %v6695 = vrot.slane %v6693, 1
            %v6696 = vor.u32 %v6691, %v6695
            %v6698 = vshll.u32 %v6651, 16
            %v6700 = vrot.slane %v6698, 1
            %v6701 = vsel %vm6665, %v6696, %v6700
            %v6703 = vshrl.u32 %v6604, 16
            %v6705 = vshll.u32 %v6604, 16
            %v6707 = vrot.slane %v6705, 1
            %v6708 = vor.u32 %v6703, %v6707
            %v6710 = vshll.u32 %v6652, 16
            %v6712 = vrot.slane %v6710, 1
            %v6713 = vsel %vm6665, %v6708, %v6712
            %v6715 = vshrl.u32 %v6605, 16
            %v6717 = vshll.u32 %v6605, 16
            %v6719 = vrot.slane %v6717, 1
            %v6720 = vor.u32 %v6715, %v6719
            %v6722 = vshll.u32 %v6653, 16
            %v6724 = vrot.slane %v6722, 1
            %v6725 = vsel %vm6665, %v6720, %v6724
            %v6727 = vshrl.u32 %v6606, 16
            %v6729 = vshll.u32 %v6606, 16
            %v6731 = vrot.slane %v6729, 1
            %v6732 = vor.u32 %v6727, %v6731
            %v6734 = vshll.u32 %v6654, 16
            %v6736 = vrot.slane %v6734, 1
            %v6737 = vsel %vm6665, %v6732, %v6736
            %v6739 = vshrl.u32 %v6607, 16
            %v6741 = vshll.u32 %v6607, 16
            %v6743 = vrot.slane %v6741, 1
            %v6744 = vor.u32 %v6739, %v6743
            %v6746 = vshll.u32 %v6655, 16
            %v6748 = vrot.slane %v6746, 1
            %v6749 = vsel %vm6665, %v6744, %v6748
            %v6751 = vshrl.u32 %v6608, 16
            %v6753 = vshll.u32 %v6608, 16
            %v6755 = vrot.slane %v6753, 1
            %v6756 = vor.u32 %v6751, %v6755
            %v6758 = vshll.u32 %v6656, 16
            %v6760 = vrot.slane %v6758, 1
            %v6761 = vsel %vm6665, %v6756, %v6760
            %v6763 = vshrl.u32 %v6609, 16
            %v6765 = vshll.u32 %v6609, 16
            %v6767 = vrot.slane %v6765, 1
            %v6768 = vor.u32 %v6763, %v6767
            %v6770 = vshll.u32 %v6657, 16
            %v6772 = vrot.slane %v6770, 1
            %v6773 = vsel %vm6665, %v6768, %v6772
            %v6775 = vshrl.u32 %v6610, 16
            %v6777 = vshll.u32 %v6610, 16
            %v6779 = vrot.slane %v6777, 1
            %v6780 = vor.u32 %v6775, %v6779
            %v6782 = vshll.u32 %v6658, 16
            %v6784 = vrot.slane %v6782, 1
            %v6785 = vsel %vm6665, %v6780, %v6784
            %v6787 = vshrl.u32 %v6611, 16
            %v6789 = vshll.u32 %v6611, 16
            %v6791 = vrot.slane %v6789, 1
            %v6792 = vor.u32 %v6787, %v6791
            %v6794 = vshll.u32 %v6659, 16
            %v6796 = vrot.slane %v6794, 1
            %v6797 = vsel %vm6665, %v6792, %v6796
            %v6799 = vshrl.u32 %v6612, 16
            %v6801 = vshll.u32 %v6612, 16
            %v6803 = vrot.slane %v6801, 1
            %v6804 = vor.u32 %v6799, %v6803
            %v6806 = vshll.u32 %v6660, 16
            %v6808 = vrot.slane %v6806, 1
            %v6809 = vsel %vm6665, %v6804, %v6808
            %v6811 = vshrl.u32 %v6613, 16
            %v6813 = vshll.u32 %v6613, 16
            %v6815 = vrot.slane %v6813, 1
            %v6816 = vor.u32 %v6811, %v6815
            %v6818 = vshll.u32 %v6661, 16
            %v6820 = vrot.slane %v6818, 1
            %v6821 = vsel %vm6665, %v6816, %v6820
            %v6823 = vshrl.u32 %v6614, 16
            %v6825 = vshll.u32 %v6614, 16
            %v6827 = vrot.slane %v6825, 1
            %v6828 = vor.u32 %v6823, %v6827
            %v6830 = vshll.u32 %v6662, 16
            %v6832 = vrot.slane %v6830, 1
            %v6833 = vsel %vm6665, %v6828, %v6832
            %v6835 = vshrl.u32 %v6615, 16
            %v6837 = vshll.u32 %v6615, 16
            %v6839 = vrot.slane %v6837, 1
            %v6840 = vor.u32 %v6835, %v6839
            %v6842 = vshll.u32 %v6663, 16
            %v6844 = vrot.slane %v6842, 1
            %v6845 = vsel %vm6665, %v6840, %v6844
            %v6847 = vshrl.u32 %v6616, 16
            %v6849 = vshll.u32 %v6616, 16
            %v6851 = vrot.slane %v6849, 1
            %v6852 = vor.u32 %v6847, %v6851
            %v6854 = vshll.u32 %v6664, 16
            %v6856 = vrot.slane %v6854, 1
            %v6857 = vsel %vm6665, %v6852, %v6856
            %6858 = vrot.lane.b32.xlu0 %v6677, 64
            %v6859 = vpop.permute.xlu0 %6858
            %6860 = vrot.lane.b32.xlu0 %v6689, 64
            %v6861 = vpop.permute.xlu0 %6860
            %6862 = vrot.lane.b32.xlu0 %v6701, 64
            %v6863 = vpop.permute.xlu0 %6862
            %6864 = vrot.lane.b32.xlu0 %v6713, 64
            %v6865 = vpop.permute.xlu0 %6864
            %6866 = vrot.lane.b32.xlu0 %v6725, 64
            %v6867 = vpop.permute.xlu0 %6866
            %6868 = vrot.lane.b32.xlu0 %v6737, 64
            %v6869 = vpop.permute.xlu0 %6868
            %6870 = vrot.lane.b32.xlu0 %v6749, 64
            %v6871 = vpop.permute.xlu0 %6870
            %6872 = vrot.lane.b32.xlu0 %v6761, 64
            %v6873 = vpop.permute.xlu0 %6872
            %6874 = vrot.lane.b32.xlu0 %v6773, 64
            %v6875 = vpop.permute.xlu0 %6874
            %6876 = vrot.lane.b32.xlu0 %v6785, 64
            %v6877 = vpop.permute.xlu0 %6876
            %6878 = vrot.lane.b32.xlu0 %v6797, 64
            %v6879 = vpop.permute.xlu0 %6878
            %6880 = vrot.lane.b32.xlu0 %v6809, 64
            %v6881 = vpop.permute.xlu0 %6880
            %6882 = vrot.lane.b32.xlu0 %v6821, 64
            %v6883 = vpop.permute.xlu0 %6882
            %6884 = vrot.lane.b32.xlu0 %v6833, 64
            %v6885 = vpop.permute.xlu0 %6884
            %6886 = vrot.lane.b32.xlu0 %v6845, 64
            %v6887 = vpop.permute.xlu0 %6886
            %6888 = vrot.lane.b32.xlu0 %v6857, 64
            %v6889 = vpop.permute.xlu0 %6888
            %v6906 = vunpack.c.l.b16 %v6391
            %v6907 = vunpack.c.l.b16 %v6392
            %v6908 = vunpack.c.l.b16 %v6393
            %v6909 = vunpack.c.l.b16 %v6394
            %v6910 = vunpack.c.l.b16 %v6395
            %v6911 = vunpack.c.l.b16 %v6396
            %v6912 = vunpack.c.l.b16 %v6397
            %v6913 = vunpack.c.l.b16 %v6398
            %v6914 = vunpack.c.l.b16 %v6399
            %v6915 = vunpack.c.l.b16 %v6400
            %v6916 = vunpack.c.l.b16 %v6401
            %v6917 = vunpack.c.l.b16 %v6402
            %v6918 = vunpack.c.l.b16 %v6403
            %v6919 = vunpack.c.l.b16 %v6404
            %v6920 = vunpack.c.l.b16 %v6405
            %v6921 = vunpack.c.l.b16 %v6406
            %v6922 = vpack.c.b16 %v6570, %v6906
            %v6923 = vpack.c.b16 %v6572, %v6907
            %v6924 = vpack.c.b16 %v6574, %v6908
            %v6925 = vpack.c.b16 %v6576, %v6909
            %v6926 = vpack.c.b16 %v6578, %v6910
            %v6927 = vpack.c.b16 %v6580, %v6911
            %v6928 = vpack.c.b16 %v6582, %v6912
            %v6929 = vpack.c.b16 %v6584, %v6913
            %v6930 = vpack.c.b16 %v6586, %v6914
            %v6931 = vpack.c.b16 %v6588, %v6915
            %v6932 = vpack.c.b16 %v6590, %v6916
            %v6933 = vpack.c.b16 %v6592, %v6917
            %v6934 = vpack.c.b16 %v6594, %v6918
            %v6935 = vpack.c.b16 %v6596, %v6919
            %v6936 = vpack.c.b16 %v6598, %v6920
            %v6937 = vpack.c.b16 %v6600, %v6921
            %vm6938 = vcmask 1046528
            %v6939 = vrot.slane %v6922, 1
            %v6940 = vrot.slane %v6649, 1
            %v6941 = vsel %vm6938, %v6939, %v6940
            %v6942 = vrot.slane %v6923, 1
            %v6943 = vrot.slane %v6650, 1
            %v6944 = vsel %vm6938, %v6942, %v6943
            %v6945 = vrot.slane %v6924, 1
            %v6946 = vrot.slane %v6651, 1
            %v6947 = vsel %vm6938, %v6945, %v6946
            %v6948 = vrot.slane %v6925, 1
            %v6949 = vrot.slane %v6652, 1
            %v6950 = vsel %vm6938, %v6948, %v6949
            %v6951 = vrot.slane %v6926, 1
            %v6952 = vrot.slane %v6653, 1
            %v6953 = vsel %vm6938, %v6951, %v6952
            %v6954 = vrot.slane %v6927, 1
            %v6955 = vrot.slane %v6654, 1
            %v6956 = vsel %vm6938, %v6954, %v6955
            %v6957 = vrot.slane %v6928, 1
            %v6958 = vrot.slane %v6655, 1
            %v6959 = vsel %vm6938, %v6957, %v6958
            %v6960 = vrot.slane %v6929, 1
            %v6961 = vrot.slane %v6656, 1
            %v6962 = vsel %vm6938, %v6960, %v6961
            %v6963 = vrot.slane %v6930, 1
            %v6964 = vrot.slane %v6657, 1
            %v6965 = vsel %vm6938, %v6963, %v6964
            %v6966 = vrot.slane %v6931, 1
            %v6967 = vrot.slane %v6658, 1
            %v6968 = vsel %vm6938, %v6966, %v6967
            %v6969 = vrot.slane %v6932, 1
            %v6970 = vrot.slane %v6659, 1
            %v6971 = vsel %vm6938, %v6969, %v6970
            %v6972 = vrot.slane %v6933, 1
            %v6973 = vrot.slane %v6660, 1
            %v6974 = vsel %vm6938, %v6972, %v6973
            %v6975 = vrot.slane %v6934, 1
            %v6976 = vrot.slane %v6661, 1
            %v6977 = vsel %vm6938, %v6975, %v6976
            %v6978 = vrot.slane %v6935, 1
            %v6979 = vrot.slane %v6662, 1
            %v6980 = vsel %vm6938, %v6978, %v6979
            %v6981 = vrot.slane %v6936, 1
            %v6982 = vrot.slane %v6663, 1
            %v6983 = vsel %vm6938, %v6981, %v6982
            %v6984 = vrot.slane %v6937, 1
            %v6985 = vrot.slane %v6664, 1
            %v6986 = vsel %vm6938, %v6984, %v6985
            %v7019 = vunpack.c.l.b16 %v6408
            %v7020 = vunpack.c.l.b16 %v6409
            %v7021 = vunpack.c.l.b16 %v6410
            %v7022 = vunpack.c.l.b16 %v6411
            %v7023 = vunpack.c.l.b16 %v6412
            %v7024 = vunpack.c.l.b16 %v6413
            %v7025 = vunpack.c.l.b16 %v6414
            %v7026 = vunpack.c.l.b16 %v6415
            %v7027 = vunpack.c.l.b16 %v6416
            %v7028 = vunpack.c.l.b16 %v6417
            %v7029 = vunpack.c.l.b16 %v6418
            %v7030 = vunpack.c.l.b16 %v6419
            %v7031 = vunpack.c.l.b16 %v6420
            %v7032 = vunpack.c.l.b16 %v6421
            %v7033 = vunpack.c.l.b16 %v6422
            %v7034 = vunpack.c.l.b16 %v6423
            %v7035 = vunpack.c.l.b16 %v6424
            %v7036 = vunpack.c.l.b16 %v6425
            %v7037 = vunpack.c.l.b16 %v6426
            %v7038 = vunpack.c.l.b16 %v6427
            %v7039 = vunpack.c.l.b16 %v6428
            %v7040 = vunpack.c.l.b16 %v6429
            %v7041 = vunpack.c.l.b16 %v6430
            %v7042 = vunpack.c.l.b16 %v6431
            %v7043 = vunpack.c.l.b16 %v6432
            %v7044 = vunpack.c.l.b16 %v6433
            %v7045 = vunpack.c.l.b16 %v6434
            %v7046 = vunpack.c.l.b16 %v6435
            %v7047 = vunpack.c.l.b16 %v6436
            %v7048 = vunpack.c.l.b16 %v6437
            %v7049 = vunpack.c.l.b16 %v6438
            %v7050 = vunpack.c.l.b16 %v6439
            %v7051 = vpack.c.b16 %v7020, %v7019
            %v7052 = vpack.c.b16 %v7022, %v7021
            %v7053 = vpack.c.b16 %v7024, %v7023
            %v7054 = vpack.c.b16 %v7026, %v7025
            %v7055 = vpack.c.b16 %v7028, %v7027
            %v7056 = vpack.c.b16 %v7030, %v7029
            %v7057 = vpack.c.b16 %v7032, %v7031
            %v7058 = vpack.c.b16 %v7034, %v7033
            %v7059 = vpack.c.b16 %v7036, %v7035
            %v7060 = vpack.c.b16 %v7038, %v7037
            %v7061 = vpack.c.b16 %v7040, %v7039
            %v7062 = vpack.c.b16 %v7042, %v7041
            %v7063 = vpack.c.b16 %v7044, %v7043
            %v7064 = vpack.c.b16 %v7046, %v7045
            %v7065 = vpack.c.b16 %v7048, %v7047
            %v7066 = vpack.c.b16 %v7050, %v7049
            %7067 = vrot.lane.b32.xlu0 %v7051, 64
            %v7068 = vpop.permute.xlu0 %7067
            %7069 = vrot.lane.b32.xlu0 %v7052, 64
            %v7070 = vpop.permute.xlu0 %7069
            %7071 = vrot.lane.b32.xlu0 %v7053, 64
            %v7072 = vpop.permute.xlu0 %7071
            %7073 = vrot.lane.b32.xlu0 %v7054, 64
            %v7074 = vpop.permute.xlu0 %7073
            %7075 = vrot.lane.b32.xlu0 %v7055, 64
            %v7076 = vpop.permute.xlu0 %7075
            %7077 = vrot.lane.b32.xlu0 %v7056, 64
            %v7078 = vpop.permute.xlu0 %7077
            %7079 = vrot.lane.b32.xlu0 %v7057, 64
            %v7080 = vpop.permute.xlu0 %7079
            %7081 = vrot.lane.b32.xlu0 %v7058, 64
            %v7082 = vpop.permute.xlu0 %7081
            %7083 = vrot.lane.b32.xlu0 %v7059, 64
            %v7084 = vpop.permute.xlu0 %7083
            %7085 = vrot.lane.b32.xlu0 %v7060, 64
            %v7086 = vpop.permute.xlu0 %7085
            %7087 = vrot.lane.b32.xlu0 %v7061, 64
            %v7088 = vpop.permute.xlu0 %7087
            %7089 = vrot.lane.b32.xlu0 %v7062, 64
            %v7090 = vpop.permute.xlu0 %7089
            %7091 = vrot.lane.b32.xlu0 %v7063, 64
            %v7092 = vpop.permute.xlu0 %7091
            %7093 = vrot.lane.b32.xlu0 %v7064, 64
            %v7094 = vpop.permute.xlu0 %7093
            %7095 = vrot.lane.b32.xlu0 %v7065, 64
            %v7096 = vpop.permute.xlu0 %7095
            %7097 = vrot.lane.b32.xlu0 %v7066, 64
            %v7098 = vpop.permute.xlu0 %7097
            %v7115 = vunpack.c.l.b16 %v6440
            %v7116 = vunpack.c.l.b16 %v6441
            %v7117 = vunpack.c.l.b16 %v6442
            %v7118 = vunpack.c.l.b16 %v6443
            %v7119 = vunpack.c.l.b16 %v6444
            %v7120 = vunpack.c.l.b16 %v6445
            %v7121 = vunpack.c.l.b16 %v6446
            %v7122 = vunpack.c.l.b16 %v6447
            %v7123 = vunpack.c.l.b16 %v6448
            %v7124 = vunpack.c.l.b16 %v6449
            %v7125 = vunpack.c.l.b16 %v6450
            %v7126 = vunpack.c.l.b16 %v6451
            %v7127 = vunpack.c.l.b16 %v6452
            %v7128 = vunpack.c.l.b16 %v6453
            %v7129 = vunpack.c.l.b16 %v6454
            %v7130 = vunpack.c.l.b16 %v6455
            %v7131 = vpack.c.b16 %v7115, %v7115
            %v7132 = vpack.c.b16 %v7116, %v7116
            %v7133 = vpack.c.b16 %v7117, %v7117
            %v7134 = vpack.c.b16 %v7118, %v7118
            %v7135 = vpack.c.b16 %v7119, %v7119
            %v7136 = vpack.c.b16 %v7120, %v7120
            %v7137 = vpack.c.b16 %v7121, %v7121
            %v7138 = vpack.c.b16 %v7122, %v7122
            %v7139 = vpack.c.b16 %v7123, %v7123
            %v7140 = vpack.c.b16 %v7124, %v7124
            %v7141 = vpack.c.b16 %v7125, %v7125
            %v7142 = vpack.c.b16 %v7126, %v7126
            %v7143 = vpack.c.b16 %v7127, %v7127
            %v7144 = vpack.c.b16 %v7128, %v7128
            %v7145 = vpack.c.b16 %v7129, %v7129
            %v7146 = vpack.c.b16 %v7130, %v7130
            %v7148 = vshrl.u32 %v7051, 16
            %v7150 = vshll.u32 %v7051, 16
            %v7152 = vrot.slane %v7150, 1
            %v7153 = vor.u32 %v7148, %v7152
            %v7155 = vshll.u32 %v7131, 16
            %v7157 = vrot.slane %v7155, 1
            %v7158 = vsel %vm6665, %v7153, %v7157
            %v7160 = vshrl.u32 %v7052, 16
            %v7162 = vshll.u32 %v7052, 16
            %v7164 = vrot.slane %v7162, 1
            %v7165 = vor.u32 %v7160, %v7164
            %v7167 = vshll.u32 %v7132, 16
            %v7169 = vrot.slane %v7167, 1
            %v7170 = vsel %vm6665, %v7165, %v7169
            %v7172 = vshrl.u32 %v7053, 16
            %v7174 = vshll.u32 %v7053, 16
            %v7176 = vrot.slane %v7174, 1
            %v7177 = vor.u32 %v7172, %v7176
            %v7179 = vshll.u32 %v7133, 16
            %v7181 = vrot.slane %v7179, 1
            %v7182 = vsel %vm6665, %v7177, %v7181
            %v7184 = vshrl.u32 %v7054, 16
            %v7186 = vshll.u32 %v7054, 16
            %v7188 = vrot.slane %v7186, 1
            %v7189 = vor.u32 %v7184, %v7188
            %v7191 = vshll.u32 %v7134, 16
            %v7193 = vrot.slane %v7191, 1
            %v7194 = vsel %vm6665, %v7189, %v7193
            %v7196 = vshrl.u32 %v7055, 16
            %v7198 = vshll.u32 %v7055, 16
            %v7200 = vrot.slane %v7198, 1
            %v7201 = vor.u32 %v7196, %v7200
            %v7203 = vshll.u32 %v7135, 16
            %v7205 = vrot.slane %v7203, 1
            %v7206 = vsel %vm6665, %v7201, %v7205
            %v7208 = vshrl.u32 %v7056, 16
            %v7210 = vshll.u32 %v7056, 16
            %v7212 = vrot.slane %v7210, 1
            %v7213 = vor.u32 %v7208, %v7212
            %v7215 = vshll.u32 %v7136, 16
            %v7217 = vrot.slane %v7215, 1
            %v7218 = vsel %vm6665, %v7213, %v7217
            %v7220 = vshrl.u32 %v7057, 16
            %v7222 = vshll.u32 %v7057, 16
            %v7224 = vrot.slane %v7222, 1
            %v7225 = vor.u32 %v7220, %v7224
            %v7227 = vshll.u32 %v7137, 16
            %v7229 = vrot.slane %v7227, 1
            %v7230 = vsel %vm6665, %v7225, %v7229
            %v7232 = vshrl.u32 %v7058, 16
            %v7234 = vshll.u32 %v7058, 16
            %v7236 = vrot.slane %v7234, 1
            %v7237 = vor.u32 %v7232, %v7236
            %v7239 = vshll.u32 %v7138, 16
            %v7241 = vrot.slane %v7239, 1
            %v7242 = vsel %vm6665, %v7237, %v7241
            %v7244 = vshrl.u32 %v7059, 16
            %v7246 = vshll.u32 %v7059, 16
            %v7248 = vrot.slane %v7246, 1
            %v7249 = vor.u32 %v7244, %v7248
            %v7251 = vshll.u32 %v7139, 16
            %v7253 = vrot.slane %v7251, 1
            %v7254 = vsel %vm6665, %v7249, %v7253
            %v7256 = vshrl.u32 %v7060, 16
            %v7258 = vshll.u32 %v7060, 16
            %v7260 = vrot.slane %v7258, 1
            %v7261 = vor.u32 %v7256, %v7260
            %v7263 = vshll.u32 %v7140, 16
            %v7265 = vrot.slane %v7263, 1
            %v7266 = vsel %vm6665, %v7261, %v7265
            %v7268 = vshrl.u32 %v7061, 16
            %v7270 = vshll.u32 %v7061, 16
            %v7272 = vrot.slane %v7270, 1
            %v7273 = vor.u32 %v7268, %v7272
            %v7275 = vshll.u32 %v7141, 16
            %v7277 = vrot.slane %v7275, 1
            %v7278 = vsel %vm6665, %v7273, %v7277
            %v7280 = vshrl.u32 %v7062, 16
            %v7282 = vshll.u32 %v7062, 16
            %v7284 = vrot.slane %v7282, 1
            %v7285 = vor.u32 %v7280, %v7284
            %v7287 = vshll.u32 %v7142, 16
            %v7289 = vrot.slane %v7287, 1
            %v7290 = vsel %vm6665, %v7285, %v7289
            %v7292 = vshrl.u32 %v7063, 16
            %v7294 = vshll.u32 %v7063, 16
            %v7296 = vrot.slane %v7294, 1
            %v7297 = vor.u32 %v7292, %v7296
            %v7299 = vshll.u32 %v7143, 16
            %v7301 = vrot.slane %v7299, 1
            %v7302 = vsel %vm6665, %v7297, %v7301
            %v7304 = vshrl.u32 %v7064, 16
            %v7306 = vshll.u32 %v7064, 16
            %v7308 = vrot.slane %v7306, 1
            %v7309 = vor.u32 %v7304, %v7308
            %v7311 = vshll.u32 %v7144, 16
            %v7313 = vrot.slane %v7311, 1
            %v7314 = vsel %vm6665, %v7309, %v7313
            %v7316 = vshrl.u32 %v7065, 16
            %v7318 = vshll.u32 %v7065, 16
            %v7320 = vrot.slane %v7318, 1
            %v7321 = vor.u32 %v7316, %v7320
            %v7323 = vshll.u32 %v7145, 16
            %v7325 = vrot.slane %v7323, 1
            %v7326 = vsel %vm6665, %v7321, %v7325
            %v7328 = vshrl.u32 %v7066, 16
            %v7330 = vshll.u32 %v7066, 16
            %v7332 = vrot.slane %v7330, 1
            %v7333 = vor.u32 %v7328, %v7332
            %v7335 = vshll.u32 %v7146, 16
            %v7337 = vrot.slane %v7335, 1
            %v7338 = vsel %vm6665, %v7333, %v7337
            %v7355 = vunpack.c.l.b16 %v6456
            %v7356 = vunpack.c.l.b16 %v6457
            %v7357 = vunpack.c.l.b16 %v6458
            %v7358 = vunpack.c.l.b16 %v6459
            %v7359 = vunpack.c.l.b16 %v6460
            %v7360 = vunpack.c.l.b16 %v6461
            %v7361 = vunpack.c.l.b16 %v6462
            %v7362 = vunpack.c.l.b16 %v6463
            %v7363 = vunpack.c.l.b16 %v6464
            %v7364 = vunpack.c.l.b16 %v6465
            %v7365 = vunpack.c.l.b16 %v6466
            %v7366 = vunpack.c.l.b16 %v6467
            %v7367 = vunpack.c.l.b16 %v6468
            %v7368 = vunpack.c.l.b16 %v6469
            %v7369 = vunpack.c.l.b16 %v6470
            %v7370 = vunpack.c.l.b16 %v6471
            %v7371 = vpack.c.b16 %v7020, %v7355
            %v7372 = vpack.c.b16 %v7022, %v7356
            %v7373 = vpack.c.b16 %v7024, %v7357
            %v7374 = vpack.c.b16 %v7026, %v7358
            %v7375 = vpack.c.b16 %v7028, %v7359
            %v7376 = vpack.c.b16 %v7030, %v7360
            %v7377 = vpack.c.b16 %v7032, %v7361
            %v7378 = vpack.c.b16 %v7034, %v7362
            %v7379 = vpack.c.b16 %v7036, %v7363
            %v7380 = vpack.c.b16 %v7038, %v7364
            %v7381 = vpack.c.b16 %v7040, %v7365
            %v7382 = vpack.c.b16 %v7042, %v7366
            %v7383 = vpack.c.b16 %v7044, %v7367
            %v7384 = vpack.c.b16 %v7046, %v7368
            %v7385 = vpack.c.b16 %v7048, %v7369
            %v7386 = vpack.c.b16 %v7050, %v7370
            %v7387 = vrot.slane %v7371, 1
            %v7388 = vrot.slane %v7131, 1
            %v7389 = vsel %vm6938, %v7387, %v7388
            %v7390 = vrot.slane %v7372, 1
            %v7391 = vrot.slane %v7132, 1
            %v7392 = vsel %vm6938, %v7390, %v7391
            %v7393 = vrot.slane %v7373, 1
            %v7394 = vrot.slane %v7133, 1
            %v7395 = vsel %vm6938, %v7393, %v7394
            %v7396 = vrot.slane %v7374, 1
            %v7397 = vrot.slane %v7134, 1
            %v7398 = vsel %vm6938, %v7396, %v7397
            %v7399 = vrot.slane %v7375, 1
            %v7400 = vrot.slane %v7135, 1
            %v7401 = vsel %vm6938, %v7399, %v7400
            %v7402 = vrot.slane %v7376, 1
            %v7403 = vrot.slane %v7136, 1
            %v7404 = vsel %vm6938, %v7402, %v7403
            %v7405 = vrot.slane %v7377, 1
            %v7406 = vrot.slane %v7137, 1
            %v7407 = vsel %vm6938, %v7405, %v7406
            %v7408 = vrot.slane %v7378, 1
            %v7409 = vrot.slane %v7138, 1
            %v7410 = vsel %vm6938, %v7408, %v7409
            %v7411 = vrot.slane %v7379, 1
            %v7412 = vrot.slane %v7139, 1
            %v7413 = vsel %vm6938, %v7411, %v7412
            %v7414 = vrot.slane %v7380, 1
            %v7415 = vrot.slane %v7140, 1
            %v7416 = vsel %vm6938, %v7414, %v7415
            %v7417 = vrot.slane %v7381, 1
            %v7418 = vrot.slane %v7141, 1
            %v7419 = vsel %vm6938, %v7417, %v7418
            %v7420 = vrot.slane %v7382, 1
            %v7421 = vrot.slane %v7142, 1
            %v7422 = vsel %vm6938, %v7420, %v7421
            %v7423 = vrot.slane %v7383, 1
            %v7424 = vrot.slane %v7143, 1
            %v7425 = vsel %vm6938, %v7423, %v7424
            %v7426 = vrot.slane %v7384, 1
            %v7427 = vrot.slane %v7144, 1
            %v7428 = vsel %vm6938, %v7426, %v7427
            %v7429 = vrot.slane %v7385, 1
            %v7430 = vrot.slane %v7145, 1
            %v7431 = vsel %vm6938, %v7429, %v7430
            %v7432 = vrot.slane %v7386, 1
            %v7433 = vrot.slane %v7146, 1
            %v7434 = vsel %vm6938, %v7432, %v7433
            %7435 = vrot.lane.b32.xlu0 %v7389, 64
            %v7436 = vpop.permute.xlu0 %7435
            %7437 = vrot.lane.b32.xlu0 %v7392, 64
            %v7438 = vpop.permute.xlu0 %7437
            %7439 = vrot.lane.b32.xlu0 %v7395, 64
            %v7440 = vpop.permute.xlu0 %7439
            %7441 = vrot.lane.b32.xlu0 %v7398, 64
            %v7442 = vpop.permute.xlu0 %7441
            %7443 = vrot.lane.b32.xlu0 %v7401, 64
            %v7444 = vpop.permute.xlu0 %7443
            %7445 = vrot.lane.b32.xlu0 %v7404, 64
            %v7446 = vpop.permute.xlu0 %7445
            %7447 = vrot.lane.b32.xlu0 %v7407, 64
            %v7448 = vpop.permute.xlu0 %7447
            %7449 = vrot.lane.b32.xlu0 %v7410, 64
            %v7450 = vpop.permute.xlu0 %7449
            %7451 = vrot.lane.b32.xlu0 %v7413, 64
            %v7452 = vpop.permute.xlu0 %7451
            %7453 = vrot.lane.b32.xlu0 %v7416, 64
            %v7454 = vpop.permute.xlu0 %7453
            %7455 = vrot.lane.b32.xlu0 %v7419, 64
            %v7456 = vpop.permute.xlu0 %7455
            %7457 = vrot.lane.b32.xlu0 %v7422, 64
            %v7458 = vpop.permute.xlu0 %7457
            %7459 = vrot.lane.b32.xlu0 %v7425, 64
            %v7460 = vpop.permute.xlu0 %7459
            %7461 = vrot.lane.b32.xlu0 %v7428, 64
            %v7462 = vpop.permute.xlu0 %7461
            %7463 = vrot.lane.b32.xlu0 %v7431, 64
            %v7464 = vpop.permute.xlu0 %7463
            %7465 = vrot.lane.b32.xlu0 %v7434, 64
            %v7466 = vpop.permute.xlu0 %7465
            %v7499 = vunpack.c.l.b16 %v6473
            %v7500 = vunpack.c.l.b16 %v6474
            %v7501 = vunpack.c.l.b16 %v6475
            %v7502 = vunpack.c.l.b16 %v6476
            %v7503 = vunpack.c.l.b16 %v6477
            %v7504 = vunpack.c.l.b16 %v6478
            %v7505 = vunpack.c.l.b16 %v6479
            %v7506 = vunpack.c.l.b16 %v6480
            %v7507 = vunpack.c.l.b16 %v6481
            %v7508 = vunpack.c.l.b16 %v6482
            %v7509 = vunpack.c.l.b16 %v6483
            %v7510 = vunpack.c.l.b16 %v6484
            %v7511 = vunpack.c.l.b16 %v6485
            %v7512 = vunpack.c.l.b16 %v6486
            %v7513 = vunpack.c.l.b16 %v6487
            %v7514 = vunpack.c.l.b16 %v6488
            %v7515 = vunpack.c.l.b16 %v6489
            %v7516 = vunpack.c.l.b16 %v6490
            %v7517 = vunpack.c.l.b16 %v6491
            %v7518 = vunpack.c.l.b16 %v6492
            %v7519 = vunpack.c.l.b16 %v6493
            %v7520 = vunpack.c.l.b16 %v6494
            %v7521 = vunpack.c.l.b16 %v6495
            %v7522 = vunpack.c.l.b16 %v6496
            %v7523 = vunpack.c.l.b16 %v6497
            %v7524 = vunpack.c.l.b16 %v6498
            %v7525 = vunpack.c.l.b16 %v6499
            %v7526 = vunpack.c.l.b16 %v6500
            %v7527 = vunpack.c.l.b16 %v6501
            %v7528 = vunpack.c.l.b16 %v6502
            %v7529 = vunpack.c.l.b16 %v6503
            %v7530 = vunpack.c.l.b16 %v6504
            %v7531 = vpack.c.b16 %v7500, %v7499
            %v7532 = vpack.c.b16 %v7502, %v7501
            %v7533 = vpack.c.b16 %v7504, %v7503
            %v7534 = vpack.c.b16 %v7506, %v7505
            %v7535 = vpack.c.b16 %v7508, %v7507
            %v7536 = vpack.c.b16 %v7510, %v7509
            %v7537 = vpack.c.b16 %v7512, %v7511
            %v7538 = vpack.c.b16 %v7514, %v7513
            %v7539 = vpack.c.b16 %v7516, %v7515
            %v7540 = vpack.c.b16 %v7518, %v7517
            %v7541 = vpack.c.b16 %v7520, %v7519
            %v7542 = vpack.c.b16 %v7522, %v7521
            %v7543 = vpack.c.b16 %v7524, %v7523
            %v7544 = vpack.c.b16 %v7526, %v7525
            %v7545 = vpack.c.b16 %v7528, %v7527
            %v7546 = vpack.c.b16 %v7530, %v7529
            %v7563 = vunpack.c.l.b16 %v6505
            %v7564 = vunpack.c.l.b16 %v6506
            %v7565 = vunpack.c.l.b16 %v6507
            %v7566 = vunpack.c.l.b16 %v6508
            %v7567 = vunpack.c.l.b16 %v6509
            %v7568 = vunpack.c.l.b16 %v6510
            %v7569 = vunpack.c.l.b16 %v6511
            %v7570 = vunpack.c.l.b16 %v6512
            %v7571 = vunpack.c.l.b16 %v6513
            %v7572 = vunpack.c.l.b16 %v6514
            %v7573 = vunpack.c.l.b16 %v6515
            %v7574 = vunpack.c.l.b16 %v6516
            %v7575 = vunpack.c.l.b16 %v6517
            %v7576 = vunpack.c.l.b16 %v6518
            %v7577 = vunpack.c.l.b16 %v6519
            %v7578 = vunpack.c.l.b16 %v6520
            %v7579 = vpack.c.b16 %v7563, %v7563
            %v7580 = vpack.c.b16 %v7564, %v7564
            %v7581 = vpack.c.b16 %v7565, %v7565
            %v7582 = vpack.c.b16 %v7566, %v7566
            %v7583 = vpack.c.b16 %v7567, %v7567
            %v7584 = vpack.c.b16 %v7568, %v7568
            %v7585 = vpack.c.b16 %v7569, %v7569
            %v7586 = vpack.c.b16 %v7570, %v7570
            %v7587 = vpack.c.b16 %v7571, %v7571
            %v7588 = vpack.c.b16 %v7572, %v7572
            %v7589 = vpack.c.b16 %v7573, %v7573
            %v7590 = vpack.c.b16 %v7574, %v7574
            %v7591 = vpack.c.b16 %v7575, %v7575
            %v7592 = vpack.c.b16 %v7576, %v7576
            %v7593 = vpack.c.b16 %v7577, %v7577
            %v7594 = vpack.c.b16 %v7578, %v7578
            %v7596 = vshrl.u32 %v7531, 16
            %v7598 = vshll.u32 %v7531, 16
            %v7600 = vrot.slane %v7598, 1
            %v7601 = vor.u32 %v7596, %v7600
            %v7603 = vshll.u32 %v7579, 16
            %v7605 = vrot.slane %v7603, 1
            %v7606 = vsel %vm6665, %v7601, %v7605
            %v7608 = vshrl.u32 %v7532, 16
            %v7610 = vshll.u32 %v7532, 16
            %v7612 = vrot.slane %v7610, 1
            %v7613 = vor.u32 %v7608, %v7612
            %v7615 = vshll.u32 %v7580, 16
            %v7617 = vrot.slane %v7615, 1
            %v7618 = vsel %vm6665, %v7613, %v7617
            %v7620 = vshrl.u32 %v7533, 16
            %v7622 = vshll.u32 %v7533, 16
            %v7624 = vrot.slane %v7622, 1
            %v7625 = vor.u32 %v7620, %v7624
            %v7627 = vshll.u32 %v7581, 16
            %v7629 = vrot.slane %v7627, 1
            %v7630 = vsel %vm6665, %v7625, %v7629
            %v7632 = vshrl.u32 %v7534, 16
            %v7634 = vshll.u32 %v7534, 16
            %v7636 = vrot.slane %v7634, 1
            %v7637 = vor.u32 %v7632, %v7636
            %v7639 = vshll.u32 %v7582, 16
            %v7641 = vrot.slane %v7639, 1
            %v7642 = vsel %vm6665, %v7637, %v7641
            %v7644 = vshrl.u32 %v7535, 16
            %v7646 = vshll.u32 %v7535, 16
            %v7648 = vrot.slane %v7646, 1
            %v7649 = vor.u32 %v7644, %v7648
            %v7651 = vshll.u32 %v7583, 16
            %v7653 = vrot.slane %v7651, 1
            %v7654 = vsel %vm6665, %v7649, %v7653
            %v7656 = vshrl.u32 %v7536, 16
            %v7658 = vshll.u32 %v7536, 16
            %v7660 = vrot.slane %v7658, 1
            %v7661 = vor.u32 %v7656, %v7660
            %v7663 = vshll.u32 %v7584, 16
            %v7665 = vrot.slane %v7663, 1
            %v7666 = vsel %vm6665, %v7661, %v7665
            %v7668 = vshrl.u32 %v7537, 16
            %v7670 = vshll.u32 %v7537, 16
            %v7672 = vrot.slane %v7670, 1
            %v7673 = vor.u32 %v7668, %v7672
            %v7675 = vshll.u32 %v7585, 16
            %v7677 = vrot.slane %v7675, 1
            %v7678 = vsel %vm6665, %v7673, %v7677
            %v7680 = vshrl.u32 %v7538, 16
            %v7682 = vshll.u32 %v7538, 16
            %v7684 = vrot.slane %v7682, 1
            %v7685 = vor.u32 %v7680, %v7684
            %v7687 = vshll.u32 %v7586, 16
            %v7689 = vrot.slane %v7687, 1
            %v7690 = vsel %vm6665, %v7685, %v7689
            %v7692 = vshrl.u32 %v7539, 16
            %v7694 = vshll.u32 %v7539, 16
            %v7696 = vrot.slane %v7694, 1
            %v7697 = vor.u32 %v7692, %v7696
            %v7699 = vshll.u32 %v7587, 16
            %v7701 = vrot.slane %v7699, 1
            %v7702 = vsel %vm6665, %v7697, %v7701
            %v7704 = vshrl.u32 %v7540, 16
            %v7706 = vshll.u32 %v7540, 16
            %v7708 = vrot.slane %v7706, 1
            %v7709 = vor.u32 %v7704, %v7708
            %v7711 = vshll.u32 %v7588, 16
            %v7713 = vrot.slane %v7711, 1
            %v7714 = vsel %vm6665, %v7709, %v7713
            %v7716 = vshrl.u32 %v7541, 16
            %v7718 = vshll.u32 %v7541, 16
            %v7720 = vrot.slane %v7718, 1
            %v7721 = vor.u32 %v7716, %v7720
            %v7723 = vshll.u32 %v7589, 16
            %v7725 = vrot.slane %v7723, 1
            %v7726 = vsel %vm6665, %v7721, %v7725
            %v7728 = vshrl.u32 %v7542, 16
            %v7730 = vshll.u32 %v7542, 16
            %v7732 = vrot.slane %v7730, 1
            %v7733 = vor.u32 %v7728, %v7732
            %v7735 = vshll.u32 %v7590, 16
            %v7737 = vrot.slane %v7735, 1
            %v7738 = vsel %vm6665, %v7733, %v7737
            %v7740 = vshrl.u32 %v7543, 16
            %v7742 = vshll.u32 %v7543, 16
            %v7744 = vrot.slane %v7742, 1
            %v7745 = vor.u32 %v7740, %v7744
            %v7747 = vshll.u32 %v7591, 16
            %v7749 = vrot.slane %v7747, 1
            %v7750 = vsel %vm6665, %v7745, %v7749
            %v7752 = vshrl.u32 %v7544, 16
            %v7754 = vshll.u32 %v7544, 16
            %v7756 = vrot.slane %v7754, 1
            %v7757 = vor.u32 %v7752, %v7756
            %v7759 = vshll.u32 %v7592, 16
            %v7761 = vrot.slane %v7759, 1
            %v7762 = vsel %vm6665, %v7757, %v7761
            %v7764 = vshrl.u32 %v7545, 16
            %v7766 = vshll.u32 %v7545, 16
            %v7768 = vrot.slane %v7766, 1
            %v7769 = vor.u32 %v7764, %v7768
            %v7771 = vshll.u32 %v7593, 16
            %v7773 = vrot.slane %v7771, 1
            %v7774 = vsel %vm6665, %v7769, %v7773
            %v7776 = vshrl.u32 %v7546, 16
            %v7778 = vshll.u32 %v7546, 16
            %v7780 = vrot.slane %v7778, 1
            %v7781 = vor.u32 %v7776, %v7780
            %v7783 = vshll.u32 %v7594, 16
            %v7785 = vrot.slane %v7783, 1
            %v7786 = vsel %vm6665, %v7781, %v7785
            %7787 = vrot.lane.b32.xlu0 %v7606, 64
            %v7788 = vpop.permute.xlu0 %7787
            %7789 = vrot.lane.b32.xlu0 %v7618, 64
            %v7790 = vpop.permute.xlu0 %7789
            %7791 = vrot.lane.b32.xlu0 %v7630, 64
            %v7792 = vpop.permute.xlu0 %7791
            %7793 = vrot.lane.b32.xlu0 %v7642, 64
            %v7794 = vpop.permute.xlu0 %7793
            %7795 = vrot.lane.b32.xlu0 %v7654, 64
            %v7796 = vpop.permute.xlu0 %7795
            %7797 = vrot.lane.b32.xlu0 %v7666, 64
            %v7798 = vpop.permute.xlu0 %7797
            %7799 = vrot.lane.b32.xlu0 %v7678, 64
            %v7800 = vpop.permute.xlu0 %7799
            %7801 = vrot.lane.b32.xlu0 %v7690, 64
            %v7802 = vpop.permute.xlu0 %7801
            %7803 = vrot.lane.b32.xlu0 %v7702, 64
            %v7804 = vpop.permute.xlu0 %7803
            %7805 = vrot.lane.b32.xlu0 %v7714, 64
            %v7806 = vpop.permute.xlu0 %7805
            %7807 = vrot.lane.b32.xlu0 %v7726, 64
            %v7808 = vpop.permute.xlu0 %7807
            %7809 = vrot.lane.b32.xlu0 %v7738, 64
            %v7810 = vpop.permute.xlu0 %7809
            %7811 = vrot.lane.b32.xlu0 %v7750, 64
            %v7812 = vpop.permute.xlu0 %7811
            %7813 = vrot.lane.b32.xlu0 %v7762, 64
            %v7814 = vpop.permute.xlu0 %7813
            %7815 = vrot.lane.b32.xlu0 %v7774, 64
            %v7816 = vpop.permute.xlu0 %7815
            %7817 = vrot.lane.b32.xlu0 %v7786, 64
            %v7818 = vpop.permute.xlu0 %7817
            %v7835 = vunpack.c.l.b16 %v6521
            %v7836 = vunpack.c.l.b16 %v6522
            %v7837 = vunpack.c.l.b16 %v6523
            %v7838 = vunpack.c.l.b16 %v6524
            %v7839 = vunpack.c.l.b16 %v6525
            %v7840 = vunpack.c.l.b16 %v6526
            %v7841 = vunpack.c.l.b16 %v6527
            %v7842 = vunpack.c.l.b16 %v6528
            %v7843 = vunpack.c.l.b16 %v6529
            %v7844 = vunpack.c.l.b16 %v6530
            %v7845 = vunpack.c.l.b16 %v6531
            %v7846 = vunpack.c.l.b16 %v6532
            %v7847 = vunpack.c.l.b16 %v6533
            %v7848 = vunpack.c.l.b16 %v6534
            %v7849 = vunpack.c.l.b16 %v6535
            %v7850 = vunpack.c.l.b16 %v6536
            %v7851 = vpack.c.b16 %v7500, %v7835
            %v7852 = vpack.c.b16 %v7502, %v7836
            %v7853 = vpack.c.b16 %v7504, %v7837
            %v7854 = vpack.c.b16 %v7506, %v7838
            %v7855 = vpack.c.b16 %v7508, %v7839
            %v7856 = vpack.c.b16 %v7510, %v7840
            %v7857 = vpack.c.b16 %v7512, %v7841
            %v7858 = vpack.c.b16 %v7514, %v7842
            %v7859 = vpack.c.b16 %v7516, %v7843
            %v7860 = vpack.c.b16 %v7518, %v7844
            %v7861 = vpack.c.b16 %v7520, %v7845
            %v7862 = vpack.c.b16 %v7522, %v7846
            %v7863 = vpack.c.b16 %v7524, %v7847
            %v7864 = vpack.c.b16 %v7526, %v7848
            %v7865 = vpack.c.b16 %v7528, %v7849
            %v7866 = vpack.c.b16 %v7530, %v7850
            %v7867 = vrot.slane %v7851, 1
            %v7868 = vrot.slane %v7579, 1
            %v7869 = vsel %vm6938, %v7867, %v7868
            %v7870 = vrot.slane %v7852, 1
            %v7871 = vrot.slane %v7580, 1
            %v7872 = vsel %vm6938, %v7870, %v7871
            %v7873 = vrot.slane %v7853, 1
            %v7874 = vrot.slane %v7581, 1
            %v7875 = vsel %vm6938, %v7873, %v7874
            %v7876 = vrot.slane %v7854, 1
            %v7877 = vrot.slane %v7582, 1
            %v7878 = vsel %vm6938, %v7876, %v7877
            %v7879 = vrot.slane %v7855, 1
            %v7880 = vrot.slane %v7583, 1
            %v7881 = vsel %vm6938, %v7879, %v7880
            %v7882 = vrot.slane %v7856, 1
            %v7883 = vrot.slane %v7584, 1
            %v7884 = vsel %vm6938, %v7882, %v7883
            %v7885 = vrot.slane %v7857, 1
            %v7886 = vrot.slane %v7585, 1
            %v7887 = vsel %vm6938, %v7885, %v7886
            %v7888 = vrot.slane %v7858, 1
            %v7889 = vrot.slane %v7586, 1
            %v7890 = vsel %vm6938, %v7888, %v7889
            %v7891 = vrot.slane %v7859, 1
            %v7892 = vrot.slane %v7587, 1
            %v7893 = vsel %vm6938, %v7891, %v7892
            %v7894 = vrot.slane %v7860, 1
            %v7895 = vrot.slane %v7588, 1
            %v7896 = vsel %vm6938, %v7894, %v7895
            %v7897 = vrot.slane %v7861, 1
            %v7898 = vrot.slane %v7589, 1
            %v7899 = vsel %vm6938, %v7897, %v7898
            %v7900 = vrot.slane %v7862, 1
            %v7901 = vrot.slane %v7590, 1
            %v7902 = vsel %vm6938, %v7900, %v7901
            %v7903 = vrot.slane %v7863, 1
            %v7904 = vrot.slane %v7591, 1
            %v7905 = vsel %vm6938, %v7903, %v7904
            %v7906 = vrot.slane %v7864, 1
            %v7907 = vrot.slane %v7592, 1
            %v7908 = vsel %vm6938, %v7906, %v7907
            %v7909 = vrot.slane %v7865, 1
            %v7910 = vrot.slane %v7593, 1
            %v7911 = vsel %vm6938, %v7909, %v7910
            %v7912 = vrot.slane %v7866, 1
            %v7913 = vrot.slane %v7594, 1
            %v7914 = vsel %vm6938, %v7912, %v7913
            %vm7915 = vcmask 523264
            %v7917 = vsel %vm7915, %v6601, %v6859
            %v7920 = vsel %vm7915, %v6602, %v6861
            %v7923 = vsel %vm7915, %v6603, %v6863
            %v7926 = vsel %vm7915, %v6604, %v6865
            %v7929 = vsel %vm7915, %v6605, %v6867
            %v7932 = vsel %vm7915, %v6606, %v6869
            %v7935 = vsel %vm7915, %v6607, %v6871
            %v7938 = vsel %vm7915, %v6608, %v6873
            %v7941 = vsel %vm7915, %v6609, %v6875
            %v7944 = vsel %vm7915, %v6610, %v6877
            %v7947 = vsel %vm7915, %v6611, %v6879
            %v7950 = vsel %vm7915, %v6612, %v6881
            %v7953 = vsel %vm7915, %v6613, %v6883
            %v7956 = vsel %vm7915, %v6614, %v6885
            %v7959 = vsel %vm7915, %v6615, %v6887
            %v7962 = vsel %vm7915, %v6616, %v6889
            %v7966 = vsel %vm7915, %v6941, %v7068
            %v7970 = vsel %vm7915, %v6944, %v7070
            %v7974 = vsel %vm7915, %v6947, %v7072
            %v7978 = vsel %vm7915, %v6950, %v7074
            %v7982 = vsel %vm7915, %v6953, %v7076
            %v7986 = vsel %vm7915, %v6956, %v7078
            %v7990 = vsel %vm7915, %v6959, %v7080
            %v7994 = vsel %vm7915, %v6962, %v7082
            %v7998 = vsel %vm7915, %v6965, %v7084
            %v8002 = vsel %vm7915, %v6968, %v7086
            %v8006 = vsel %vm7915, %v6971, %v7088
            %v8010 = vsel %vm7915, %v6974, %v7090
            %v8014 = vsel %vm7915, %v6977, %v7092
            %v8018 = vsel %vm7915, %v6980, %v7094
            %v8022 = vsel %vm7915, %v6983, %v7096
            %v8026 = vsel %vm7915, %v6986, %v7098
            %v8030 = vsel %vm7915, %v7158, %v7436
            %v8034 = vsel %vm7915, %v7170, %v7438
            %v8038 = vsel %vm7915, %v7182, %v7440
            %v8042 = vsel %vm7915, %v7194, %v7442
            %v8046 = vsel %vm7915, %v7206, %v7444
            %v8050 = vsel %vm7915, %v7218, %v7446
            %v8054 = vsel %vm7915, %v7230, %v7448
            %v8058 = vsel %vm7915, %v7242, %v7450
            %v8062 = vsel %vm7915, %v7254, %v7452
            %v8066 = vsel %vm7915, %v7266, %v7454
            %v8070 = vsel %vm7915, %v7278, %v7456
            %v8074 = vsel %vm7915, %v7290, %v7458
            %v8078 = vsel %vm7915, %v7302, %v7460
            %v8082 = vsel %vm7915, %v7314, %v7462
            %v8086 = vsel %vm7915, %v7326, %v7464
            %v8090 = vsel %vm7915, %v7338, %v7466
            %v8093 = vsel %vm7915, %v7531, %v7788
            %v8096 = vsel %vm7915, %v7532, %v7790
            %v8099 = vsel %vm7915, %v7533, %v7792
            %v8102 = vsel %vm7915, %v7534, %v7794
            %v8105 = vsel %vm7915, %v7535, %v7796
            %v8108 = vsel %vm7915, %v7536, %v7798
            %v8111 = vsel %vm7915, %v7537, %v7800
            %v8114 = vsel %vm7915, %v7538, %v7802
            %v8117 = vsel %vm7915, %v7539, %v7804
            %v8120 = vsel %vm7915, %v7540, %v7806
            %v8123 = vsel %vm7915, %v7541, %v7808
            %v8126 = vsel %vm7915, %v7542, %v7810
            %v8129 = vsel %vm7915, %v7543, %v7812
            %v8132 = vsel %vm7915, %v7544, %v7814
            %v8135 = vsel %vm7915, %v7545, %v7816
            %v8138 = vsel %vm7915, %v7546, %v7818
            %v8212 = vunpack.c.l.b16 %v3147
            %v8213 = vunpack.c.l.b16 %v3148
            %v8214 = vunpack.c.l.b16 %v3149
            %v8215 = vunpack.c.l.b16 %v3150
            %v8216 = vunpack.c.l.b16 %v3151
            %v8217 = vunpack.c.l.b16 %v3152
            %v8218 = vunpack.c.l.b16 %v3153
            %v8219 = vunpack.c.l.b16 %v3154
            %v8220 = vunpack.c.l.b16 %v3155
            %v8221 = vunpack.c.l.b16 %v3156
            %v8222 = vunpack.c.l.b16 %v3157
            %v8223 = vunpack.c.l.b16 %v3158
            %v8224 = vunpack.c.l.b16 %v3159
            %v8225 = vunpack.c.l.b16 %v3160
            %v8226 = vunpack.c.l.b16 %v3161
            %v8227 = vunpack.c.l.b16 %v3162
            %v8228 = vunpack.c.l.b16 %v3163
            %v8229 = vunpack.c.l.b16 %v3164
            %v8230 = vunpack.c.l.b16 %v3165
            %v8231 = vunpack.c.l.b16 %v3166
            %v8232 = vunpack.c.l.b16 %v3167
            %v8233 = vunpack.c.l.b16 %v3168
            %v8234 = vunpack.c.l.b16 %v3169
            %v8235 = vunpack.c.l.b16 %v3170
            %v8236 = vunpack.c.l.b16 %v3171
            %v8237 = vunpack.c.l.b16 %v3172
            %v8238 = vunpack.c.l.b16 %v3173
            %v8239 = vunpack.c.l.b16 %v3174
            %v8240 = vunpack.c.l.b16 %v3175
            %v8241 = vunpack.c.l.b16 %v3176
            %v8242 = vunpack.c.l.b16 %v3177
            %v8243 = vunpack.c.l.b16 %v3178
            %v8244 = vunpack.c.l.b16 %v3179
            %v8245 = vunpack.c.l.b16 %v3180
            %v8246 = vunpack.c.l.b16 %v3181
            %v8247 = vunpack.c.l.b16 %v3182
            %v8248 = vunpack.c.l.b16 %v3183
            %v8249 = vunpack.c.l.b16 %v3184
            %v8250 = vunpack.c.l.b16 %v3185
            %v8251 = vunpack.c.l.b16 %v3186
            %v8252 = vunpack.c.l.b16 %v3187
            %v8253 = vunpack.c.l.b16 %v3188
            %v8254 = vunpack.c.l.b16 %v3189
            %v8255 = vunpack.c.l.b16 %v3190
            %v8256 = vunpack.c.l.b16 %v3191
            %v8257 = vunpack.c.l.b16 %v3192
            %v8258 = vunpack.c.l.b16 %v3193
            %v8259 = vunpack.c.l.b16 %v3194
            %v8260 = vunpack.c.l.b16 %v3195
            %v8261 = vunpack.c.l.b16 %v3196
            %v8262 = vunpack.c.l.b16 %v3197
            %v8263 = vunpack.c.l.b16 %v3198
            %v8264 = vunpack.c.l.b16 %v3199
            %v8265 = vunpack.c.l.b16 %v3200
            %v8266 = vunpack.c.l.b16 %v3201
            %v8267 = vunpack.c.l.b16 %v3202
            %v8268 = vunpack.c.l.b16 %v3203
            %v8269 = vunpack.c.l.b16 %v3204
            %v8270 = vunpack.c.l.b16 %v3205
            %v8271 = vunpack.c.l.b16 %v3206
            %v8272 = vunpack.c.l.b16 %v3207
            %v8273 = vunpack.c.l.b16 %v3208
            %v8274 = vunpack.c.l.b16 %v3209
            %v8275 = vunpack.c.l.b16 %v3210
            %v8276 = vunpack.c.l.b16 %v3211
            %v8277 = vunpack.c.l.b16 %v3212
            %v8278 = vunpack.c.l.b16 %v3213
            %v8279 = vunpack.c.l.b16 %v3214
            %v8280 = vunpack.c.l.b16 %v3215
            %v8281 = vunpack.c.l.b16 %v3216
            %v8282 = vunpack.c.l.b16 %v3217
            %v8283 = vunpack.c.l.b16 %v3218
            %v8284 = vpack.c.b16 %v8213, %v8212
            %v8285 = vpack.c.b16 %v8215, %v8214
            %v8286 = vpack.c.b16 %v8217, %v8216
            %v8287 = vpack.c.b16 %v8219, %v8218
            %v8288 = vpack.c.b16 %v8221, %v8220
            %v8289 = vpack.c.b16 %v8223, %v8222
            %v8290 = vpack.c.b16 %v8225, %v8224
            %v8291 = vpack.c.b16 %v8227, %v8226
            %v8292 = vpack.c.b16 %v8229, %v8228
            %v8293 = vpack.c.b16 %v8231, %v8230
            %v8294 = vpack.c.b16 %v8233, %v8232
            %v8295 = vpack.c.b16 %v8235, %v8234
            %v8296 = vpack.c.b16 %v8237, %v8236
            %v8297 = vpack.c.b16 %v8239, %v8238
            %v8298 = vpack.c.b16 %v8241, %v8240
            %v8299 = vpack.c.b16 %v8243, %v8242
            %v8300 = vpack.c.b16 %v8245, %v8244
            %v8301 = vpack.c.b16 %v8247, %v8246
            %v8302 = vpack.c.b16 %v8249, %v8248
            %v8303 = vpack.c.b16 %v8251, %v8250
            %v8304 = vpack.c.b16 %v8253, %v8252
            %v8305 = vpack.c.b16 %v8255, %v8254
            %v8306 = vpack.c.b16 %v8257, %v8256
            %v8307 = vpack.c.b16 %v8259, %v8258
            %v8308 = vpack.c.b16 %v8261, %v8260
            %v8309 = vpack.c.b16 %v8263, %v8262
            %v8310 = vpack.c.b16 %v8265, %v8264
            %v8311 = vpack.c.b16 %v8267, %v8266
            %v8312 = vpack.c.b16 %v8269, %v8268
            %v8313 = vpack.c.b16 %v8271, %v8270
            %v8314 = vpack.c.b16 %v8273, %v8272
            %v8315 = vpack.c.b16 %v8275, %v8274
            %v8316 = vpack.c.b16 %v8277, %v8276
            %v8317 = vpack.c.b16 %v8279, %v8278
            %v8318 = vpack.c.b16 %v8281, %v8280
            %v8319 = vpack.c.b16 %v8283, %v8282
            %v8357 = vsel %vm7915, %v7869, 0
            %v8360 = vsel %vm7915, %v7872, 0
            %v8363 = vsel %vm7915, %v7875, 0
            %v8366 = vsel %vm7915, %v7878, 0
            %v8369 = vsel %vm7915, %v7881, 0
            %v8372 = vsel %vm7915, %v7884, 0
            %v8375 = vsel %vm7915, %v7887, 0
            %v8378 = vsel %vm7915, %v7890, 0
            %v8381 = vsel %vm7915, %v7893, 0
            %v8384 = vsel %vm7915, %v7896, 0
            %v8387 = vsel %vm7915, %v7899, 0
            %v8390 = vsel %vm7915, %v7902, 0
            %v8393 = vsel %vm7915, %v7905, 0
            %v8396 = vsel %vm7915, %v7908, 0
            %v8399 = vsel %vm7915, %v7911, 0
            %v8402 = vsel %vm7915, %v7914, 0
            %8404 = vmatprep.subr.bf16.mxu0 0
            %8405 = vmatpush1.bf16.msra.mxu0 %v8291
            %8406 = vmatprep.subr.bf16.mxu0 0
            %8407 = vmatpush1.bf16.msra.mxu0 %v8290
            %8408 = vmatprep.subr.bf16.mxu0 0
            %8409 = vmatpush1.bf16.msra.mxu0 %v8289
            %8410 = vmatprep.subr.bf16.mxu0 0
            %8411 = vmatpush1.bf16.msra.mxu0 %v8288
            %8412 = vmatprep.subr.bf16.mxu0 0
            %8413 = vmatpush1.bf16.msra.mxu0 %v8287
            %8414 = vmatprep.subr.bf16.mxu0 0
            %8415 = vmatpush1.bf16.msra.mxu0 %v8286
            %8416 = vmatprep.subr.bf16.mxu0 0
            %8417 = vmatpush1.bf16.msra.mxu0 %v8285
            %8418 = vmatprep.subr.bf16.mxu0 0
            %8419 = vmatpush1.bf16.msra.mxu0 %v8284
            %8420 = vmatprep.subr.bf16.mxu0 0
            %8421 = vmatpush2.bf16.msra.mxu0 %v8299
            %8422 = vmatprep.subr.bf16.mxu0 0
            %8423 = vmatpush2.bf16.msra.mxu0 %v8298
            %8424 = vmatprep.subr.bf16.mxu0 0
            %8425 = vmatpush2.bf16.msra.mxu0 %v8297
            %8426 = vmatprep.subr.bf16.mxu0 0
            %8427 = vmatpush2.bf16.msra.mxu0 %v8296
            %8428 = vmatprep.subr.bf16.mxu0 0
            %8429 = vmatpush2.bf16.msra.mxu0 %v8295
            %8430 = vmatprep.subr.bf16.mxu0 0
            %8431 = vmatpush2.bf16.msra.mxu0 %v8294
            %8432 = vmatprep.subr.bf16.mxu0 0
            %8433 = vmatpush2.bf16.msra.mxu0 %v8293
            %8434 = vmatprep.subr.bf16.mxu0 0
            %8435 = vmatpush2.bf16.msra.mxu0 %v8292
            %8436 = vmatprep.mubr.bf16.mxu0 %v7966
            %8437 = vmatmul.mubr.bf16.gmra.mxu0 %v7917
            %v8438 = vpop.f32.mrf.mxu0
            %v8439 = vadd.f32 0.0, %v8438
            %v8440 = vpop.f32.mrf.mxu0
            %v8441 = vpop.f32.mrf.mxu0
            %v8442 = vadd.f32 0.0, %v8441
            %v8443 = vpop.f32.mrf.mxu0
            %8444 = vmatprep.mubr.bf16.mxu0 %v7970
            %8445 = vmatmul.mubr.bf16.gmra.mxu0 %v7920
            %v8446 = vpop.f32.mrf.mxu0
            %v8447 = vadd.f32 0.0, %v8446
            %v8448 = vpop.f32.mrf.mxu0
            %v8449 = vpop.f32.mrf.mxu0
            %v8450 = vadd.f32 0.0, %v8449
            %v8451 = vpop.f32.mrf.mxu0
            %8452 = vmatprep.mubr.bf16.mxu0 %v7974
            %8453 = vmatmul.mubr.bf16.gmra.mxu0 %v7923
            %v8454 = vpop.f32.mrf.mxu0
            %v8455 = vadd.f32 0.0, %v8454
            %v8456 = vpop.f32.mrf.mxu0
            %v8457 = vpop.f32.mrf.mxu0
            %v8458 = vadd.f32 0.0, %v8457
            %v8459 = vpop.f32.mrf.mxu0
            %8460 = vmatprep.mubr.bf16.mxu0 %v7978
            %8461 = vmatmul.mubr.bf16.gmra.mxu0 %v7926
            %v8462 = vpop.f32.mrf.mxu0
            %v8463 = vadd.f32 0.0, %v8462
            %v8464 = vpop.f32.mrf.mxu0
            %v8465 = vpop.f32.mrf.mxu0
            %v8466 = vadd.f32 0.0, %v8465
            %v8467 = vpop.f32.mrf.mxu0
            %8468 = vmatprep.mubr.bf16.mxu0 %v7982
            %8469 = vmatmul.mubr.bf16.gmra.mxu0 %v7929
            %v8470 = vpop.f32.mrf.mxu0
            %v8471 = vadd.f32 0.0, %v8470
            %v8472 = vpop.f32.mrf.mxu0
            %v8473 = vpop.f32.mrf.mxu0
            %v8474 = vadd.f32 0.0, %v8473
            %v8475 = vpop.f32.mrf.mxu0
            %8476 = vmatprep.mubr.bf16.mxu0 %v7986
            %8477 = vmatmul.mubr.bf16.gmra.mxu0 %v7932
            %v8478 = vpop.f32.mrf.mxu0
            %v8479 = vadd.f32 0.0, %v8478
            %v8480 = vpop.f32.mrf.mxu0
            %v8481 = vpop.f32.mrf.mxu0
            %v8482 = vadd.f32 0.0, %v8481
            %v8483 = vpop.f32.mrf.mxu0
            %8484 = vmatprep.mubr.bf16.mxu0 %v7990
            %8485 = vmatmul.mubr.bf16.gmra.mxu0 %v7935
            %v8486 = vpop.f32.mrf.mxu0
            %v8487 = vadd.f32 0.0, %v8486
            %v8488 = vpop.f32.mrf.mxu0
            %v8489 = vpop.f32.mrf.mxu0
            %v8490 = vadd.f32 0.0, %v8489
            %v8491 = vpop.f32.mrf.mxu0
            %8492 = vmatprep.mubr.bf16.mxu0 %v7994
            %8493 = vmatmul.mubr.bf16.gmra.mxu0 %v7938
            %v8494 = vpop.f32.mrf.mxu0
            %v8495 = vadd.f32 0.0, %v8494
            %v8496 = vpop.f32.mrf.mxu0
            %v8497 = vpop.f32.mrf.mxu0
            %v8498 = vadd.f32 0.0, %v8497
            %v8499 = vpop.f32.mrf.mxu0
            %8500 = vmatprep.mubr.bf16.mxu0 %v7998
            %8501 = vmatmul.mubr.bf16.gmra.mxu0 %v7941
            %v8502 = vpop.f32.mrf.mxu0
            %v8503 = vadd.f32 0.0, %v8502
            %v8504 = vpop.f32.mrf.mxu0
            %v8505 = vpop.f32.mrf.mxu0
            %v8506 = vadd.f32 0.0, %v8505
            %v8507 = vpop.f32.mrf.mxu0
            %8508 = vmatprep.mubr.bf16.mxu0 %v8002
            %8509 = vmatmul.mubr.bf16.gmra.mxu0 %v7944
            %v8510 = vpop.f32.mrf.mxu0
            %v8511 = vadd.f32 0.0, %v8510
            %v8512 = vpop.f32.mrf.mxu0
            %v8513 = vpop.f32.mrf.mxu0
            %v8514 = vadd.f32 0.0, %v8513
            %v8515 = vpop.f32.mrf.mxu0
            %8516 = vmatprep.mubr.bf16.mxu0 %v8006
            %8517 = vmatmul.mubr.bf16.gmra.mxu0 %v7947
            %v8518 = vpop.f32.mrf.mxu0
            %v8519 = vadd.f32 0.0, %v8518
            %v8520 = vpop.f32.mrf.mxu0
            %v8521 = vpop.f32.mrf.mxu0
            %v8522 = vadd.f32 0.0, %v8521
            %v8523 = vpop.f32.mrf.mxu0
            %8524 = vmatprep.mubr.bf16.mxu0 %v8010
            %8525 = vmatmul.mubr.bf16.gmra.mxu0 %v7950
            %v8526 = vpop.f32.mrf.mxu0
            %v8527 = vadd.f32 0.0, %v8526
            %v8528 = vpop.f32.mrf.mxu0
            %v8529 = vpop.f32.mrf.mxu0
            %v8530 = vadd.f32 0.0, %v8529
            %v8531 = vpop.f32.mrf.mxu0
            %8532 = vmatprep.mubr.bf16.mxu0 %v8014
            %8533 = vmatmul.mubr.bf16.gmra.mxu0 %v7953
            %v8534 = vpop.f32.mrf.mxu0
            %v8535 = vadd.f32 0.0, %v8534
            %v8536 = vpop.f32.mrf.mxu0
            %v8537 = vpop.f32.mrf.mxu0
            %v8538 = vadd.f32 0.0, %v8537
            %v8539 = vpop.f32.mrf.mxu0
            %8540 = vmatprep.mubr.bf16.mxu0 %v8018
            %8541 = vmatmul.mubr.bf16.gmra.mxu0 %v7956
            %v8542 = vpop.f32.mrf.mxu0
            %v8543 = vadd.f32 0.0, %v8542
            %v8544 = vpop.f32.mrf.mxu0
            %v8545 = vpop.f32.mrf.mxu0
            %v8546 = vadd.f32 0.0, %v8545
            %v8547 = vpop.f32.mrf.mxu0
            %8548 = vmatprep.mubr.bf16.mxu0 %v8022
            %8549 = vmatmul.mubr.bf16.gmra.mxu0 %v7959
            %v8550 = vpop.f32.mrf.mxu0
            %v8551 = vadd.f32 0.0, %v8550
            %v8552 = vpop.f32.mrf.mxu0
            %v8553 = vpop.f32.mrf.mxu0
            %v8554 = vadd.f32 0.0, %v8553
            %v8555 = vpop.f32.mrf.mxu0
            %8556 = vmatprep.mubr.bf16.mxu0 %v8026
            %8557 = vmatmul.mubr.bf16.gmra.mxu0 %v7962
            %v8558 = vpop.f32.mrf.mxu0
            %v8559 = vadd.f32 0.0, %v8558
            %v8560 = vpop.f32.mrf.mxu0
            %v8561 = vpop.f32.mrf.mxu0
            %v8562 = vadd.f32 0.0, %v8561
            %v8563 = vpop.f32.mrf.mxu0
            %8564 = vdwg.mxu0
            %8565 = vmatprep.subr.bf16.mxu0 0
            %8566 = vmatpush1.bf16.msra.mxu0 %v8307
            %8567 = vmatprep.subr.bf16.mxu0 0
            %8568 = vmatpush1.bf16.msra.mxu0 %v8306
            %8569 = vmatprep.subr.bf16.mxu0 0
            %8570 = vmatpush1.bf16.msra.mxu0 %v8305
            %8571 = vmatprep.subr.bf16.mxu0 0
            %8572 = vmatpush1.bf16.msra.mxu0 %v8304
            %8573 = vmatprep.subr.bf16.mxu0 0
            %8574 = vmatpush1.bf16.msra.mxu0 %v8303
            %8575 = vmatprep.subr.bf16.mxu0 0
            %8576 = vmatpush1.bf16.msra.mxu0 %v8302
            %8577 = vmatprep.subr.bf16.mxu0 0
            %8578 = vmatpush1.bf16.msra.mxu0 %v8301
            %8579 = vmatprep.subr.bf16.mxu0 0
            %8580 = vmatpush1.bf16.msra.mxu0 %v8300
            %8581 = vmatprep.subr.bf16.mxu0 0
            %8582 = vmatpush2.bf16.msra.mxu0 %v8315
            %8583 = vmatprep.subr.bf16.mxu0 0
            %8584 = vmatpush2.bf16.msra.mxu0 %v8314
            %8585 = vmatprep.subr.bf16.mxu0 0
            %8586 = vmatpush2.bf16.msra.mxu0 %v8313
            %8587 = vmatprep.subr.bf16.mxu0 0
            %8588 = vmatpush2.bf16.msra.mxu0 %v8312
            %8589 = vmatprep.subr.bf16.mxu0 0
            %8590 = vmatpush2.bf16.msra.mxu0 %v8311
            %8591 = vmatprep.subr.bf16.mxu0 0
            %8592 = vmatpush2.bf16.msra.mxu0 %v8310
            %8593 = vmatprep.subr.bf16.mxu0 0
            %8594 = vmatpush2.bf16.msra.mxu0 %v8309
            %8595 = vmatprep.subr.bf16.mxu0 0
            %8596 = vmatpush2.bf16.msra.mxu0 %v8308
            %8597 = vmatprep.mubr.bf16.mxu0 %v8093
            %8598 = vmatmul.mubr.bf16.gmra.mxu0 %v8030
            %v8599 = vpop.f32.mrf.mxu0
            %v8600 = vadd.f32 %v8439, %v8599
            %v8601 = vpop.f32.mrf.mxu0
            %v8602 = vpop.f32.mrf.mxu0
            %v8603 = vadd.f32 %v8442, %v8602
            %v8604 = vpop.f32.mrf.mxu0
            %8605 = vmatprep.mubr.bf16.mxu0 %v8096
            %8606 = vmatmul.mubr.bf16.gmra.mxu0 %v8034
            %v8607 = vpop.f32.mrf.mxu0
            %v8608 = vadd.f32 %v8447, %v8607
            %v8609 = vpop.f32.mrf.mxu0
            %v8610 = vpop.f32.mrf.mxu0
            %v8611 = vadd.f32 %v8450, %v8610
            %v8612 = vpop.f32.mrf.mxu0
            %8613 = vmatprep.mubr.bf16.mxu0 %v8099
            %8614 = vmatmul.mubr.bf16.gmra.mxu0 %v8038
            %v8615 = vpop.f32.mrf.mxu0
            %v8616 = vadd.f32 %v8455, %v8615
            %v8617 = vpop.f32.mrf.mxu0
            %v8618 = vpop.f32.mrf.mxu0
            %v8619 = vadd.f32 %v8458, %v8618
            %v8620 = vpop.f32.mrf.mxu0
            %8621 = vmatprep.mubr.bf16.mxu0 %v8102
            %8622 = vmatmul.mubr.bf16.gmra.mxu0 %v8042
            %v8623 = vpop.f32.mrf.mxu0
            %v8624 = vadd.f32 %v8463, %v8623
            %v8625 = vpop.f32.mrf.mxu0
            %v8626 = vpop.f32.mrf.mxu0
            %v8627 = vadd.f32 %v8466, %v8626
            %v8628 = vpop.f32.mrf.mxu0
            %8629 = vmatprep.mubr.bf16.mxu0 %v8105
            %8630 = vmatmul.mubr.bf16.gmra.mxu0 %v8046
            %v8631 = vpop.f32.mrf.mxu0
            %v8632 = vadd.f32 %v8471, %v8631
            %v8633 = vpop.f32.mrf.mxu0
            %v8634 = vpop.f32.mrf.mxu0
            %v8635 = vadd.f32 %v8474, %v8634
            %v8636 = vpop.f32.mrf.mxu0
            %8637 = vmatprep.mubr.bf16.mxu0 %v8108
            %8638 = vmatmul.mubr.bf16.gmra.mxu0 %v8050
            %v8639 = vpop.f32.mrf.mxu0
            %v8640 = vadd.f32 %v8479, %v8639
            %v8641 = vpop.f32.mrf.mxu0
            %v8642 = vpop.f32.mrf.mxu0
            %v8643 = vadd.f32 %v8482, %v8642
            %v8644 = vpop.f32.mrf.mxu0
            %8645 = vmatprep.mubr.bf16.mxu0 %v8111
            %8646 = vmatmul.mubr.bf16.gmra.mxu0 %v8054
            %v8647 = vpop.f32.mrf.mxu0
            %v8648 = vadd.f32 %v8487, %v8647
            %v8649 = vpop.f32.mrf.mxu0
            %v8650 = vpop.f32.mrf.mxu0
            %v8651 = vadd.f32 %v8490, %v8650
            %v8652 = vpop.f32.mrf.mxu0
            %8653 = vmatprep.mubr.bf16.mxu0 %v8114
            %8654 = vmatmul.mubr.bf16.gmra.mxu0 %v8058
            %v8655 = vpop.f32.mrf.mxu0
            %v8656 = vadd.f32 %v8495, %v8655
            %v8657 = vpop.f32.mrf.mxu0
            %v8658 = vpop.f32.mrf.mxu0
            %v8659 = vadd.f32 %v8498, %v8658
            %v8660 = vpop.f32.mrf.mxu0
            %8661 = vmatprep.mubr.bf16.mxu0 %v8117
            %8662 = vmatmul.mubr.bf16.gmra.mxu0 %v8062
            %v8663 = vpop.f32.mrf.mxu0
            %v8664 = vadd.f32 %v8503, %v8663
            %v8665 = vpop.f32.mrf.mxu0
            %v8666 = vpop.f32.mrf.mxu0
            %v8667 = vadd.f32 %v8506, %v8666
            %v8668 = vpop.f32.mrf.mxu0
            %8669 = vmatprep.mubr.bf16.mxu0 %v8120
            %8670 = vmatmul.mubr.bf16.gmra.mxu0 %v8066
            %v8671 = vpop.f32.mrf.mxu0
            %v8672 = vadd.f32 %v8511, %v8671
            %v8673 = vpop.f32.mrf.mxu0
            %v8674 = vpop.f32.mrf.mxu0
            %v8675 = vadd.f32 %v8514, %v8674
            %v8676 = vpop.f32.mrf.mxu0
            %8677 = vmatprep.mubr.bf16.mxu0 %v8123
            %8678 = vmatmul.mubr.bf16.gmra.mxu0 %v8070
            %v8679 = vpop.f32.mrf.mxu0
            %v8680 = vadd.f32 %v8519, %v8679
            %v8681 = vpop.f32.mrf.mxu0
            %v8682 = vpop.f32.mrf.mxu0
            %v8683 = vadd.f32 %v8522, %v8682
            %v8684 = vpop.f32.mrf.mxu0
            %8685 = vmatprep.mubr.bf16.mxu0 %v8126
            %8686 = vmatmul.mubr.bf16.gmra.mxu0 %v8074
            %v8687 = vpop.f32.mrf.mxu0
            %v8688 = vadd.f32 %v8527, %v8687
            %v8689 = vpop.f32.mrf.mxu0
            %v8690 = vpop.f32.mrf.mxu0
            %v8691 = vadd.f32 %v8530, %v8690
            %v8692 = vpop.f32.mrf.mxu0
            %8693 = vmatprep.mubr.bf16.mxu0 %v8129
            %8694 = vmatmul.mubr.bf16.gmra.mxu0 %v8078
            %v8695 = vpop.f32.mrf.mxu0
            %v8696 = vadd.f32 %v8535, %v8695
            %v8697 = vpop.f32.mrf.mxu0
            %v8698 = vpop.f32.mrf.mxu0
            %v8699 = vadd.f32 %v8538, %v8698
            %v8700 = vpop.f32.mrf.mxu0
            %8701 = vmatprep.mubr.bf16.mxu0 %v8132
            %8702 = vmatmul.mubr.bf16.gmra.mxu0 %v8082
            %v8703 = vpop.f32.mrf.mxu0
            %v8704 = vadd.f32 %v8543, %v8703
            %v8705 = vpop.f32.mrf.mxu0
            %v8706 = vpop.f32.mrf.mxu0
            %v8707 = vadd.f32 %v8546, %v8706
            %v8708 = vpop.f32.mrf.mxu0
            %8709 = vmatprep.mubr.bf16.mxu0 %v8135
            %8710 = vmatmul.mubr.bf16.gmra.mxu0 %v8086
            %v8711 = vpop.f32.mrf.mxu0
            %v8712 = vadd.f32 %v8551, %v8711
            %v8713 = vpop.f32.mrf.mxu0
            %v8714 = vpop.f32.mrf.mxu0
            %v8715 = vadd.f32 %v8554, %v8714
            %v8716 = vpop.f32.mrf.mxu0
            %8717 = vmatprep.mubr.bf16.mxu0 %v8138
            %8718 = vmatmul.mubr.bf16.gmra.mxu0 %v8090
            %v8719 = vpop.f32.mrf.mxu0
            %v8720 = vadd.f32 %v8559, %v8719
            %v8721 = vpop.f32.mrf.mxu0
            %v8722 = vpop.f32.mrf.mxu0
            %v8723 = vadd.f32 %v8562, %v8722
            %v8724 = vpop.f32.mrf.mxu0
            %8725 = vdwg.mxu0
            %8726 = vmatprep.subr.bf16.mxu0 0
            %8727 = vmatpush1.bf16.msra.mxu0 0
            %8728 = vmatprep.subr.bf16.mxu0 0
            %8729 = vmatpush1.bf16.msra.mxu0 0
            %8730 = vmatprep.subr.bf16.mxu0 0
            %8731 = vmatpush1.bf16.msra.mxu0 0
            %8732 = vmatprep.subr.bf16.mxu0 0
            %8733 = vmatpush1.bf16.msra.mxu0 0
            %8734 = vmatprep.subr.bf16.mxu0 0
            %8735 = vmatpush1.bf16.msra.mxu0 %v8319
            %8736 = vmatprep.subr.bf16.mxu0 0
            %8737 = vmatpush1.bf16.msra.mxu0 %v8318
            %8738 = vmatprep.subr.bf16.mxu0 0
            %8739 = vmatpush1.bf16.msra.mxu0 %v8317
            %8740 = vmatprep.subr.bf16.mxu0 0
            %8741 = vmatpush1.bf16.msra.mxu0 %v8316
            %8742 = vmatprep.subr.bf16.mxu0 0
            %8743 = vmatpush2.bf16.msra.mxu0 0
            %8744 = vmatprep.subr.bf16.mxu0 0
            %8745 = vmatpush2.bf16.msra.mxu0 0
            %8746 = vmatprep.subr.bf16.mxu0 0
            %8747 = vmatpush2.bf16.msra.mxu0 0
            %8748 = vmatprep.subr.bf16.mxu0 0
            %8749 = vmatpush2.bf16.msra.mxu0 0
            %8750 = vmatprep.subr.bf16.mxu0 0
            %8751 = vmatpush2.bf16.msra.mxu0 0
            %8752 = vmatprep.subr.bf16.mxu0 0
            %8753 = vmatpush2.bf16.msra.mxu0 0
            %8754 = vmatprep.subr.bf16.mxu0 0
            %8755 = vmatpush2.bf16.msra.mxu0 0
            %8756 = vmatprep.subr.bf16.mxu0 0
            %8757 = vmatpush2.bf16.msra.mxu0 0
            %8758 = vmatprep.mubr.bf16.mxu0 0
            %8759 = vmatmul.mubr.bf16.gmra.mxu0 %v8357
            %v8760 = vpop.f32.mrf.mxu0
            %v8761 = vadd.f32 %v8600, %v8760
            %v8762 = vpop.f32.mrf.mxu0
            %v8763 = vpop.f32.mrf.mxu0
            %v8764 = vadd.f32 %v8603, %v8763
            %v8765 = vpop.f32.mrf.mxu0
            %8766 = vmatprep.mubr.bf16.mxu0 0
            %8767 = vmatmul.mubr.bf16.gmra.mxu0 %v8360
            %v8768 = vpop.f32.mrf.mxu0
            %v8769 = vadd.f32 %v8608, %v8768
            %v8770 = vpop.f32.mrf.mxu0
            %v8771 = vpop.f32.mrf.mxu0
            %v8772 = vadd.f32 %v8611, %v8771
            %v8773 = vpop.f32.mrf.mxu0
            %8774 = vmatprep.mubr.bf16.mxu0 0
            %8775 = vmatmul.mubr.bf16.gmra.mxu0 %v8363
            %v8776 = vpop.f32.mrf.mxu0
            %v8777 = vadd.f32 %v8616, %v8776
            %v8778 = vpop.f32.mrf.mxu0
            %v8779 = vpop.f32.mrf.mxu0
            %v8780 = vadd.f32 %v8619, %v8779
            %v8781 = vpop.f32.mrf.mxu0
            %8782 = vmatprep.mubr.bf16.mxu0 0
            %8783 = vmatmul.mubr.bf16.gmra.mxu0 %v8366
            %v8784 = vpop.f32.mrf.mxu0
            %v8785 = vadd.f32 %v8624, %v8784
            %v8786 = vpop.f32.mrf.mxu0
            %v8787 = vpop.f32.mrf.mxu0
            %v8788 = vadd.f32 %v8627, %v8787
            %v8789 = vpop.f32.mrf.mxu0
            %8790 = vmatprep.mubr.bf16.mxu0 0
            %8791 = vmatmul.mubr.bf16.gmra.mxu0 %v8369
            %v8792 = vpop.f32.mrf.mxu0
            %v8793 = vadd.f32 %v8632, %v8792
            %v8794 = vpop.f32.mrf.mxu0
            %v8795 = vpop.f32.mrf.mxu0
            %v8796 = vadd.f32 %v8635, %v8795
            %v8797 = vpop.f32.mrf.mxu0
            %8798 = vmatprep.mubr.bf16.mxu0 0
            %8799 = vmatmul.mubr.bf16.gmra.mxu0 %v8372
            %v8800 = vpop.f32.mrf.mxu0
            %v8801 = vadd.f32 %v8640, %v8800
            %v8802 = vpop.f32.mrf.mxu0
            %v8803 = vpop.f32.mrf.mxu0
            %v8804 = vadd.f32 %v8643, %v8803
            %v8805 = vpop.f32.mrf.mxu0
            %8806 = vmatprep.mubr.bf16.mxu0 0
            %8807 = vmatmul.mubr.bf16.gmra.mxu0 %v8375
            %v8808 = vpop.f32.mrf.mxu0
            %v8809 = vadd.f32 %v8648, %v8808
            %v8810 = vpop.f32.mrf.mxu0
            %v8811 = vpop.f32.mrf.mxu0
            %v8812 = vadd.f32 %v8651, %v8811
            %v8813 = vpop.f32.mrf.mxu0
            %8814 = vmatprep.mubr.bf16.mxu0 0
            %8815 = vmatmul.mubr.bf16.gmra.mxu0 %v8378
            %v8816 = vpop.f32.mrf.mxu0
            %v8817 = vadd.f32 %v8656, %v8816
            %v8818 = vpop.f32.mrf.mxu0
            %v8819 = vpop.f32.mrf.mxu0
            %v8820 = vadd.f32 %v8659, %v8819
            %v8821 = vpop.f32.mrf.mxu0
            %8822 = vmatprep.mubr.bf16.mxu0 0
            %8823 = vmatmul.mubr.bf16.gmra.mxu0 %v8381
            %v8824 = vpop.f32.mrf.mxu0
            %v8825 = vadd.f32 %v8664, %v8824
            %v8826 = vpop.f32.mrf.mxu0
            %v8827 = vpop.f32.mrf.mxu0
            %v8828 = vadd.f32 %v8667, %v8827
            %v8829 = vpop.f32.mrf.mxu0
            %8830 = vmatprep.mubr.bf16.mxu0 0
            %8831 = vmatmul.mubr.bf16.gmra.mxu0 %v8384
            %v8832 = vpop.f32.mrf.mxu0
            %v8833 = vadd.f32 %v8672, %v8832
            %v8834 = vpop.f32.mrf.mxu0
            %v8835 = vpop.f32.mrf.mxu0
            %v8836 = vadd.f32 %v8675, %v8835
            %v8837 = vpop.f32.mrf.mxu0
            %8838 = vmatprep.mubr.bf16.mxu0 0
            %8839 = vmatmul.mubr.bf16.gmra.mxu0 %v8387
            %v8840 = vpop.f32.mrf.mxu0
            %v8841 = vadd.f32 %v8680, %v8840
            %v8842 = vpop.f32.mrf.mxu0
            %v8843 = vpop.f32.mrf.mxu0
            %v8844 = vadd.f32 %v8683, %v8843
            %v8845 = vpop.f32.mrf.mxu0
            %8846 = vmatprep.mubr.bf16.mxu0 0
            %8847 = vmatmul.mubr.bf16.gmra.mxu0 %v8390
            %v8848 = vpop.f32.mrf.mxu0
            %v8849 = vadd.f32 %v8688, %v8848
            %v8850 = vpop.f32.mrf.mxu0
            %v8851 = vpop.f32.mrf.mxu0
            %v8852 = vadd.f32 %v8691, %v8851
            %v8853 = vpop.f32.mrf.mxu0
            %8854 = vmatprep.mubr.bf16.mxu0 0
            %8855 = vmatmul.mubr.bf16.gmra.mxu0 %v8393
            %v8856 = vpop.f32.mrf.mxu0
            %v8857 = vadd.f32 %v8696, %v8856
            %v8858 = vpop.f32.mrf.mxu0
            %v8859 = vpop.f32.mrf.mxu0
            %v8860 = vadd.f32 %v8699, %v8859
            %v8861 = vpop.f32.mrf.mxu0
            %8862 = vmatprep.mubr.bf16.mxu0 0
            %8863 = vmatmul.mubr.bf16.gmra.mxu0 %v8396
            %v8864 = vpop.f32.mrf.mxu0
            %v8865 = vadd.f32 %v8704, %v8864
            %v8866 = vpop.f32.mrf.mxu0
            %v8867 = vpop.f32.mrf.mxu0
            %v8868 = vadd.f32 %v8707, %v8867
            %v8869 = vpop.f32.mrf.mxu0
            %8870 = vmatprep.mubr.bf16.mxu0 0
            %8871 = vmatmul.mubr.bf16.gmra.mxu0 %v8399
            %v8872 = vpop.f32.mrf.mxu0
            %v8873 = vadd.f32 %v8712, %v8872
            %v8874 = vpop.f32.mrf.mxu0
            %v8875 = vpop.f32.mrf.mxu0
            %v8876 = vadd.f32 %v8715, %v8875
            %v8877 = vpop.f32.mrf.mxu0
            %8878 = vmatprep.mubr.bf16.mxu0 0
            %8879 = vmatmul.mubr.bf16.gmra.mxu0 %v8402
            %v8880 = vpop.f32.mrf.mxu0
            %v8881 = vadd.f32 %v8720, %v8880
            %v8882 = vpop.f32.mrf.mxu0
            %v8883 = vpop.f32.mrf.mxu0
            %v8884 = vadd.f32 %v8723, %v8883
            %v8885 = vpop.f32.mrf.mxu0
            %8886 = vdwg.mxu0
            %v8887 = vmax.f32 %v8761, 0.0
            %v8888 = vmax.f32 %v8764, 0.0
            %v8889 = vmax.f32 %v8769, 0.0
            %v8890 = vmax.f32 %v8772, 0.0
            %v8891 = vmax.f32 %v8777, 0.0
            %v8892 = vmax.f32 %v8780, 0.0
            %v8893 = vmax.f32 %v8785, 0.0
            %v8894 = vmax.f32 %v8788, 0.0
            %v8895 = vmax.f32 %v8793, 0.0
            %v8896 = vmax.f32 %v8796, 0.0
            %v8897 = vmax.f32 %v8801, 0.0
            %v8898 = vmax.f32 %v8804, 0.0
            %v8899 = vmax.f32 %v8809, 0.0
            %v8900 = vmax.f32 %v8812, 0.0
            %v8901 = vmax.f32 %v8817, 0.0
            %v8902 = vmax.f32 %v8820, 0.0
            %v8903 = vmax.f32 %v8825, 0.0
            %v8904 = vmax.f32 %v8828, 0.0
            %v8905 = vmax.f32 %v8833, 0.0
            %v8906 = vmax.f32 %v8836, 0.0
            %v8907 = vmax.f32 %v8841, 0.0
            %v8908 = vmax.f32 %v8844, 0.0
            %v8909 = vmax.f32 %v8849, 0.0
            %v8910 = vmax.f32 %v8852, 0.0
            %v8911 = vmax.f32 %v8857, 0.0
            %v8912 = vmax.f32 %v8860, 0.0
            %v8913 = vmax.f32 %v8865, 0.0
            %v8914 = vmax.f32 %v8868, 0.0
            %v8915 = vmax.f32 %v8873, 0.0
            %v8916 = vmax.f32 %v8876, 0.0
            %v8917 = vmax.f32 %v8881, 0.0
            %v8918 = vmax.f32 %v8884, 0.0
            %v8919 = vpack.c.bf16 %v8888, %v8887
            %v8920 = vpack.c.bf16 %v8890, %v8889
            %v8921 = vpack.c.bf16 %v8892, %v8891
            %v8922 = vpack.c.bf16 %v8894, %v8893
            %v8923 = vpack.c.bf16 %v8896, %v8895
            %v8924 = vpack.c.bf16 %v8898, %v8897
            %v8925 = vpack.c.bf16 %v8900, %v8899
            %v8926 = vpack.c.bf16 %v8902, %v8901
            %v8927 = vpack.c.bf16 %v8904, %v8903
            %v8928 = vpack.c.bf16 %v8906, %v8905
            %v8929 = vpack.c.bf16 %v8908, %v8907
            %v8930 = vpack.c.bf16 %v8910, %v8909
            %v8931 = vpack.c.bf16 %v8912, %v8911
            %v8932 = vpack.c.bf16 %v8914, %v8913
            %v8933 = vpack.c.bf16 %v8916, %v8915
            %v8934 = vpack.c.bf16 %v8918, %v8917
            %v8951 = vunpack.c.l.b16 %v8919
            %v8952 = vunpack.c.h.b16 %v8919
            %v8953 = vunpack.c.l.b16 %v8920
            %v8954 = vunpack.c.h.b16 %v8920
            %v8955 = vunpack.c.l.b16 %v8921
            %v8956 = vunpack.c.h.b16 %v8921
            %v8957 = vunpack.c.l.b16 %v8922
            %v8958 = vunpack.c.h.b16 %v8922
            %v8959 = vunpack.c.l.b16 %v8923
            %v8960 = vunpack.c.h.b16 %v8923
            %v8961 = vunpack.c.l.b16 %v8924
            %v8962 = vunpack.c.h.b16 %v8924
            %v8963 = vunpack.c.l.b16 %v8925
            %v8964 = vunpack.c.h.b16 %v8925
            %v8965 = vunpack.c.l.b16 %v8926
            %v8966 = vunpack.c.h.b16 %v8926
            %v8967 = vunpack.c.l.b16 %v8927
            %v8968 = vunpack.c.h.b16 %v8927
            %v8969 = vunpack.c.l.b16 %v8928
            %v8970 = vunpack.c.h.b16 %v8928
            %v8971 = vunpack.c.l.b16 %v8929
            %v8972 = vunpack.c.h.b16 %v8929
            %v8973 = vunpack.c.l.b16 %v8930
            %v8974 = vunpack.c.h.b16 %v8930
            %v8975 = vunpack.c.l.b16 %v8931
            %v8976 = vunpack.c.h.b16 %v8931
            %v8977 = vunpack.c.l.b16 %v8932
            %v8978 = vunpack.c.h.b16 %v8932
            %v8979 = vunpack.c.l.b16 %v8933
            %v8980 = vunpack.c.h.b16 %v8933
            %v8981 = vunpack.c.l.b16 %v8934
            %v8982 = vunpack.c.h.b16 %v8934
            %v8983 = vpack.c.b16 %v8951, %v8951
            %v8984 = vpack.c.b16 %v8952, %v8952
            %v8985 = vpack.c.b16 %v8953, %v8953
            %v8986 = vpack.c.b16 %v8954, %v8954
            %v8987 = vpack.c.b16 %v8955, %v8955
            %v8988 = vpack.c.b16 %v8956, %v8956
            %v8989 = vpack.c.b16 %v8957, %v8957
            %v8990 = vpack.c.b16 %v8958, %v8958
            %v8991 = vpack.c.b16 %v8959, %v8959
            %v8992 = vpack.c.b16 %v8960, %v8960
            %v8993 = vpack.c.b16 %v8961, %v8961
            %v8994 = vpack.c.b16 %v8962, %v8962
            %v8995 = vpack.c.b16 %v8963, %v8963
            %v8996 = vpack.c.b16 %v8964, %v8964
            %v8997 = vpack.c.b16 %v8965, %v8965
            %v8998 = vpack.c.b16 %v8966, %v8966
            %v8999 = vpack.c.b16 %v8967, %v8967
            %v9000 = vpack.c.b16 %v8968, %v8968
            %v9001 = vpack.c.b16 %v8969, %v8969
            %v9002 = vpack.c.b16 %v8970, %v8970
            %v9003 = vpack.c.b16 %v8971, %v8971
            %v9004 = vpack.c.b16 %v8972, %v8972
            %v9005 = vpack.c.b16 %v8973, %v8973
            %v9006 = vpack.c.b16 %v8974, %v8974
            %v9007 = vpack.c.b16 %v8975, %v8975
            %v9008 = vpack.c.b16 %v8976, %v8976
            %v9009 = vpack.c.b16 %v8977, %v8977
            %v9010 = vpack.c.b16 %v8978, %v8978
            %v9011 = vpack.c.b16 %v8979, %v8979
            %v9012 = vpack.c.b16 %v8980, %v8980
            %v9013 = vpack.c.b16 %v8981, %v8981
            %v9014 = vpack.c.b16 %v8982, %v8982
            %vm9015 = vsmask.f32 256
            %vm9016 = vsmask.f32 4368
            %vm9017 = vmor %vm9015, %vm9016
            %v9019 = vshrl.u32 %v8983, 16
            %v9021 = vrot.slane %v9019, 7
            %v9022 = vshll.u32 %v8983, 16
            %v9024 = vor.u32 %v9021, %v9022
            %v9025 = vrot.slane %v9021, 4
            %v9027 = vshrl.u32 %v8984, 16
            %v9029 = vrot.slane %v9027, 7
            %v9030 = vshll.u32 %v8984, 16
            %v9032 = vor.u32 %v9029, %v9030
            %v9033 = vsel %vm9017, %v9025, %v9032
            %v9034 = vrot.slane %v9029, 4
            %v9036 = vshrl.u32 %v8985, 16
            %v9038 = vrot.slane %v9036, 7
            %v9039 = vshll.u32 %v8985, 16
            %v9041 = vor.u32 %v9038, %v9039
            %v9042 = vrot.slane %v9038, 4
            %v9044 = vshrl.u32 %v8986, 16
            %v9046 = vrot.slane %v9044, 7
            %v9047 = vshll.u32 %v8986, 16
            %v9049 = vor.u32 %v9046, %v9047
            %v9050 = vsel %vm9017, %v9042, %v9049
            %v9051 = vrot.slane %v9046, 4
            %v9053 = vshrl.u32 %v8987, 16
            %v9055 = vrot.slane %v9053, 7
            %v9056 = vshll.u32 %v8987, 16
            %v9058 = vor.u32 %v9055, %v9056
            %v9059 = vrot.slane %v9055, 4
            %v9061 = vshrl.u32 %v8988, 16
            %v9063 = vrot.slane %v9061, 7
            %v9064 = vshll.u32 %v8988, 16
            %v9066 = vor.u32 %v9063, %v9064
            %v9067 = vsel %vm9017, %v9059, %v9066
            %v9068 = vrot.slane %v9063, 4
            %v9070 = vshrl.u32 %v8989, 16
            %v9072 = vrot.slane %v9070, 7
            %v9073 = vshll.u32 %v8989, 16
            %v9075 = vor.u32 %v9072, %v9073
            %v9076 = vrot.slane %v9072, 4
            %v9078 = vshrl.u32 %v8990, 16
            %v9080 = vrot.slane %v9078, 7
            %v9081 = vshll.u32 %v8990, 16
            %v9083 = vor.u32 %v9080, %v9081
            %v9084 = vsel %vm9017, %v9076, %v9083
            %v9085 = vrot.slane %v9080, 4
            %v9087 = vshrl.u32 %v8991, 16
            %v9089 = vrot.slane %v9087, 7
            %v9090 = vshll.u32 %v8991, 16
            %v9092 = vor.u32 %v9089, %v9090
            %v9093 = vrot.slane %v9089, 4
            %v9095 = vshrl.u32 %v8992, 16
            %v9097 = vrot.slane %v9095, 7
            %v9098 = vshll.u32 %v8992, 16
            %v9100 = vor.u32 %v9097, %v9098
            %v9101 = vsel %vm9017, %v9093, %v9100
            %v9102 = vrot.slane %v9097, 4
            %v9104 = vshrl.u32 %v8993, 16
            %v9106 = vrot.slane %v9104, 7
            %v9107 = vshll.u32 %v8993, 16
            %v9109 = vor.u32 %v9106, %v9107
            %v9110 = vrot.slane %v9106, 4
            %v9112 = vshrl.u32 %v8994, 16
            %v9114 = vrot.slane %v9112, 7
            %v9115 = vshll.u32 %v8994, 16
            %v9117 = vor.u32 %v9114, %v9115
            %v9118 = vsel %vm9017, %v9110, %v9117
            %v9119 = vrot.slane %v9114, 4
            %v9121 = vshrl.u32 %v8995, 16
            %v9123 = vrot.slane %v9121, 7
            %v9124 = vshll.u32 %v8995, 16
            %v9126 = vor.u32 %v9123, %v9124
            %v9127 = vrot.slane %v9123, 4
            %v9129 = vshrl.u32 %v8996, 16
            %v9131 = vrot.slane %v9129, 7
            %v9132 = vshll.u32 %v8996, 16
            %v9134 = vor.u32 %v9131, %v9132
            %v9135 = vsel %vm9017, %v9127, %v9134
            %v9136 = vrot.slane %v9131, 4
            %v9138 = vshrl.u32 %v8997, 16
            %v9140 = vrot.slane %v9138, 7
            %v9141 = vshll.u32 %v8997, 16
            %v9143 = vor.u32 %v9140, %v9141
            %v9144 = vrot.slane %v9140, 4
            %v9146 = vshrl.u32 %v8998, 16
            %v9148 = vrot.slane %v9146, 7
            %v9149 = vshll.u32 %v8998, 16
            %v9151 = vor.u32 %v9148, %v9149
            %v9152 = vsel %vm9017, %v9144, %v9151
            %v9153 = vrot.slane %v9148, 4
            %v9155 = vshrl.u32 %v8999, 16
            %v9157 = vrot.slane %v9155, 7
            %v9158 = vshll.u32 %v8999, 16
            %v9160 = vor.u32 %v9157, %v9158
            %v9161 = vrot.slane %v9157, 4
            %v9163 = vshrl.u32 %v9000, 16
            %v9165 = vrot.slane %v9163, 7
            %v9166 = vshll.u32 %v9000, 16
            %v9168 = vor.u32 %v9165, %v9166
            %v9169 = vsel %vm9017, %v9161, %v9168
            %v9170 = vrot.slane %v9165, 4
            %v9172 = vshrl.u32 %v9001, 16
            %v9174 = vrot.slane %v9172, 7
            %v9175 = vshll.u32 %v9001, 16
            %v9177 = vor.u32 %v9174, %v9175
            %v9178 = vrot.slane %v9174, 4
            %v9180 = vshrl.u32 %v9002, 16
            %v9182 = vrot.slane %v9180, 7
            %v9183 = vshll.u32 %v9002, 16
            %v9185 = vor.u32 %v9182, %v9183
            %v9186 = vsel %vm9017, %v9178, %v9185
            %v9187 = vrot.slane %v9182, 4
            %v9189 = vshrl.u32 %v9003, 16
            %v9191 = vrot.slane %v9189, 7
            %v9192 = vshll.u32 %v9003, 16
            %v9194 = vor.u32 %v9191, %v9192
            %v9195 = vrot.slane %v9191, 4
            %v9197 = vshrl.u32 %v9004, 16
            %v9199 = vrot.slane %v9197, 7
            %v9200 = vshll.u32 %v9004, 16
            %v9202 = vor.u32 %v9199, %v9200
            %v9203 = vsel %vm9017, %v9195, %v9202
            %v9204 = vrot.slane %v9199, 4
            %v9206 = vshrl.u32 %v9005, 16
            %v9208 = vrot.slane %v9206, 7
            %v9209 = vshll.u32 %v9005, 16
            %v9211 = vor.u32 %v9208, %v9209
            %v9212 = vrot.slane %v9208, 4
            %v9214 = vshrl.u32 %v9006, 16
            %v9216 = vrot.slane %v9214, 7
            %v9217 = vshll.u32 %v9006, 16
            %v9219 = vor.u32 %v9216, %v9217
            %v9220 = vsel %vm9017, %v9212, %v9219
            %v9221 = vrot.slane %v9216, 4
            %v9223 = vshrl.u32 %v9007, 16
            %v9225 = vrot.slane %v9223, 7
            %v9226 = vshll.u32 %v9007, 16
            %v9228 = vor.u32 %v9225, %v9226
            %v9229 = vrot.slane %v9225, 4
            %v9231 = vshrl.u32 %v9008, 16
            %v9233 = vrot.slane %v9231, 7
            %v9234 = vshll.u32 %v9008, 16
            %v9236 = vor.u32 %v9233, %v9234
            %v9237 = vsel %vm9017, %v9229, %v9236
            %v9238 = vrot.slane %v9233, 4
            %v9240 = vshrl.u32 %v9009, 16
            %v9242 = vrot.slane %v9240, 7
            %v9243 = vshll.u32 %v9009, 16
            %v9245 = vor.u32 %v9242, %v9243
            %v9246 = vrot.slane %v9242, 4
            %v9248 = vshrl.u32 %v9010, 16
            %v9250 = vrot.slane %v9248, 7
            %v9251 = vshll.u32 %v9010, 16
            %v9253 = vor.u32 %v9250, %v9251
            %v9254 = vsel %vm9017, %v9246, %v9253
            %v9255 = vrot.slane %v9250, 4
            %v9257 = vshrl.u32 %v9011, 16
            %v9259 = vrot.slane %v9257, 7
            %v9260 = vshll.u32 %v9011, 16
            %v9262 = vor.u32 %v9259, %v9260
            %v9263 = vrot.slane %v9259, 4
            %v9265 = vshrl.u32 %v9012, 16
            %v9267 = vrot.slane %v9265, 7
            %v9268 = vshll.u32 %v9012, 16
            %v9270 = vor.u32 %v9267, %v9268
            %v9271 = vsel %vm9017, %v9263, %v9270
            %v9272 = vrot.slane %v9267, 4
            %v9274 = vshrl.u32 %v9013, 16
            %v9276 = vrot.slane %v9274, 7
            %v9277 = vshll.u32 %v9013, 16
            %v9279 = vor.u32 %v9276, %v9277
            %v9280 = vrot.slane %v9276, 4
            %v9282 = vshrl.u32 %v9014, 16
            %v9284 = vrot.slane %v9282, 7
            %v9285 = vshll.u32 %v9014, 16
            %v9287 = vor.u32 %v9284, %v9285
            %v9288 = vsel %vm9017, %v9280, %v9287
            %v9289 = vrot.slane %v9284, 4
            %s9338 = scalar_lea.vmem [#allocation2], 12
            %vm9339 = vcmask 519168
            %vm9340 = vsmask.f32 7938
            %vm9341 = vmand %vm9339, %vm9340
            %v9342 = vld [vmem:[%s9338] sm:$0xf]
            %v9343 = vsel %vm9341, %v9024, %v9342
            %9344 = vst [vmem:[%s9338] sm:$0xf] %v9343
            %vm9345 = vcmask 519168
            %9346 = vst.msk [vmem:[%s9338 + $0x4] sm:$0xf] %vm9345, %v9033
            %vm9347 = vcmask 516096
            %vm9348 = vmand %vm9347, %vm9015
            %v9349 = vld [vmem:[%s9338 + $0x8] sm:$0x1]
            %v9350 = vsel %vm9348, %v9034, %v9349
            %9351 = vst [vmem:[%s9338 + $0x8] sm:$0x1] %v9350
            %v9352 = vld [vmem:[%s9338 + $0xc] sm:$0xf]
            %v9353 = vsel %vm9341, %v9041, %v9352
            %9354 = vst [vmem:[%s9338 + $0xc] sm:$0xf] %v9353
            %9355 = vst.msk [vmem:[%s9338 + $0x10] sm:$0xf] %vm9345, %v9050
            %v9356 = vld [vmem:[%s9338 + $0x14] sm:$0x1]
            %v9357 = vsel %vm9348, %v9051, %v9356
            %9358 = vst [vmem:[%s9338 + $0x14] sm:$0x1] %v9357
            %v9359 = vld [vmem:[%s9338 + $0x18] sm:$0xf]
            %v9360 = vsel %vm9341, %v9058, %v9359
            %9361 = vst [vmem:[%s9338 + $0x18] sm:$0xf] %v9360
            %9362 = vst.msk [vmem:[%s9338 + $0x1c] sm:$0xf] %vm9345, %v9067
            %v9363 = vld [vmem:[%s9338 + $0x20] sm:$0x1]
            %v9364 = vsel %vm9348, %v9068, %v9363
            %9365 = vst [vmem:[%s9338 + $0x20] sm:$0x1] %v9364
            %v9366 = vld [vmem:[%s9338 + $0x24] sm:$0xf]
            %v9367 = vsel %vm9341, %v9075, %v9366
            %9368 = vst [vmem:[%s9338 + $0x24] sm:$0xf] %v9367
            %9369 = vst.msk [vmem:[%s9338 + $0x28] sm:$0xf] %vm9345, %v9084
            %v9370 = vld [vmem:[%s9338 + $0x2c] sm:$0x1]
            %v9371 = vsel %vm9348, %v9085, %v9370
            %9372 = vst [vmem:[%s9338 + $0x2c] sm:$0x1] %v9371
            %v9373 = vld [vmem:[%s9338 + $0x30] sm:$0xf]
            %v9374 = vsel %vm9341, %v9092, %v9373
            %9375 = vst [vmem:[%s9338 + $0x30] sm:$0xf] %v9374
            %9376 = vst.msk [vmem:[%s9338 + $0x34] sm:$0xf] %vm9345, %v9101
            %v9377 = vld [vmem:[%s9338 + $0x38] sm:$0x1]
            %v9378 = vsel %vm9348, %v9102, %v9377
            %9379 = vst [vmem:[%s9338 + $0x38] sm:$0x1] %v9378
            %v9380 = vld [vmem:[%s9338 + $0x3c] sm:$0xf]
            %v9381 = vsel %vm9341, %v9109, %v9380
            %9382 = vst [vmem:[%s9338 + $0x3c] sm:$0xf] %v9381
            %9383 = vst.msk [vmem:[%s9338 + $0x40] sm:$0xf] %vm9345, %v9118
            %v9384 = vld [vmem:[%s9338 + $0x44] sm:$0x1]
            %v9385 = vsel %vm9348, %v9119, %v9384
            %9386 = vst [vmem:[%s9338 + $0x44] sm:$0x1] %v9385
            %v9387 = vld [vmem:[%s9338 + $0x48] sm:$0xf]
            %v9388 = vsel %vm9341, %v9126, %v9387
            %9389 = vst [vmem:[%s9338 + $0x48] sm:$0xf] %v9388
            %9390 = vst.msk [vmem:[%s9338 + $0x4c] sm:$0xf] %vm9345, %v9135
            %v9391 = vld [vmem:[%s9338 + $0x50] sm:$0x1]
            %v9392 = vsel %vm9348, %v9136, %v9391
            %9393 = vst [vmem:[%s9338 + $0x50] sm:$0x1] %v9392
            %v9394 = vld [vmem:[%s9338 + $0x54] sm:$0xf]
            %v9395 = vsel %vm9341, %v9143, %v9394
            %9396 = vst [vmem:[%s9338 + $0x54] sm:$0xf] %v9395
            %9397 = vst.msk [vmem:[%s9338 + $0x58] sm:$0xf] %vm9345, %v9152
            %v9398 = vld [vmem:[%s9338 + $0x5c] sm:$0x1]
            %v9399 = vsel %vm9348, %v9153, %v9398
            %9400 = vst [vmem:[%s9338 + $0x5c] sm:$0x1] %v9399
            %v9401 = vld [vmem:[%s9338 + $0x60] sm:$0xf]
            %v9402 = vsel %vm9341, %v9160, %v9401
            %9403 = vst [vmem:[%s9338 + $0x60] sm:$0xf] %v9402
            %9404 = vst.msk [vmem:[%s9338 + $0x64] sm:$0xf] %vm9345, %v9169
            %v9405 = vld [vmem:[%s9338 + $0x68] sm:$0x1]
            %v9406 = vsel %vm9348, %v9170, %v9405
            %9407 = vst [vmem:[%s9338 + $0x68] sm:$0x1] %v9406
            %v9408 = vld [vmem:[%s9338 + $0x6c] sm:$0xf]
            %v9409 = vsel %vm9341, %v9177, %v9408
            %9410 = vst [vmem:[%s9338 + $0x6c] sm:$0xf] %v9409
            %9411 = vst.msk [vmem:[%s9338 + $0x70] sm:$0xf] %vm9345, %v9186
            %v9412 = vld [vmem:[%s9338 + $0x74] sm:$0x1]
            %v9413 = vsel %vm9348, %v9187, %v9412
            %9414 = vst [vmem:[%s9338 + $0x74] sm:$0x1] %v9413
            %v9415 = vld [vmem:[%s9338 + $0x78] sm:$0xf]
            %v9416 = vsel %vm9341, %v9194, %v9415
            %9417 = vst [vmem:[%s9338 + $0x78] sm:$0xf] %v9416
            %9418 = vst.msk [vmem:[%s9338 + $0x7c] sm:$0xf] %vm9345, %v9203
            %v9419 = vld [vmem:[%s9338 + $0x80] sm:$0x1]
            %v9420 = vsel %vm9348, %v9204, %v9419
            %9421 = vst [vmem:[%s9338 + $0x80] sm:$0x1] %v9420
            %v9422 = vld [vmem:[%s9338 + $0x84] sm:$0xf]
            %v9423 = vsel %vm9341, %v9211, %v9422
            %9424 = vst [vmem:[%s9338 + $0x84] sm:$0xf] %v9423
            %9425 = vst.msk [vmem:[%s9338 + $0x88] sm:$0xf] %vm9345, %v9220
            %v9426 = vld [vmem:[%s9338 + $0x8c] sm:$0x1]
            %v9427 = vsel %vm9348, %v9221, %v9426
            %9428 = vst [vmem:[%s9338 + $0x8c] sm:$0x1] %v9427
            %v9429 = vld [vmem:[%s9338 + $0x90] sm:$0xf]
            %v9430 = vsel %vm9341, %v9228, %v9429
            %9431 = vst [vmem:[%s9338 + $0x90] sm:$0xf] %v9430
            %9432 = vst.msk [vmem:[%s9338 + $0x94] sm:$0xf] %vm9345, %v9237
            %v9433 = vld [vmem:[%s9338 + $0x98] sm:$0x1]
            %v9434 = vsel %vm9348, %v9238, %v9433
            %9435 = vst [vmem:[%s9338 + $0x98] sm:$0x1] %v9434
            %v9436 = vld [vmem:[%s9338 + $0x9c] sm:$0xf]
            %v9437 = vsel %vm9341, %v9245, %v9436
            %9438 = vst [vmem:[%s9338 + $0x9c] sm:$0xf] %v9437
            %9439 = vst.msk [vmem:[%s9338 + $0xa0] sm:$0xf] %vm9345, %v9254
            %v9440 = vld [vmem:[%s9338 + $0xa4] sm:$0x1]
            %v9441 = vsel %vm9348, %v9255, %v9440
            %9442 = vst [vmem:[%s9338 + $0xa4] sm:$0x1] %v9441
            %v9443 = vld [vmem:[%s9338 + $0xa8] sm:$0xf]
            %v9444 = vsel %vm9341, %v9262, %v9443
            %9445 = vst [vmem:[%s9338 + $0xa8] sm:$0xf] %v9444
            %9446 = vst.msk [vmem:[%s9338 + $0xac] sm:$0xf] %vm9345, %v9271
            %v9447 = vld [vmem:[%s9338 + $0xb0] sm:$0x1]
            %v9448 = vsel %vm9348, %v9272, %v9447
            %9449 = vst [vmem:[%s9338 + $0xb0] sm:$0x1] %v9448
            %v9450 = vld [vmem:[%s9338 + $0xb4] sm:$0xf]
            %v9451 = vsel %vm9341, %v9279, %v9450
            %9452 = vst [vmem:[%s9338 + $0xb4] sm:$0xf] %v9451
            %9453 = vst.msk [vmem:[%s9338 + $0xb8] sm:$0xf] %vm9345, %v9288
            %v9454 = vld [vmem:[%s9338 + $0xbc] sm:$0x1]
            %v9455 = vsel %vm9348, %v9289, %v9454
            %9456 = vst [vmem:[%s9338 + $0xbc] sm:$0x1] %v9455
          $region56: #{vdsr_forward.1} parent=47 // pred_fallthru
            _
        $region48: #{vdsr_forward.1} parent=39 // pred_fallthru
          _
        %p9457 = scmp.eq.s32.totalorder %s24, 19
        // Predicated region
        $region57: #{vdsr_forward.1} parent=39 // pred_check
          %p9458 = pneg %p9457
        $region58: #{vdsr_forward.1} parent=39 // pred_check_branch
          %9460 = sbr.rel (%p9458) target = $region60
        $region59: #{vdsr_forward.1} parent=39 // pred_region
          %v9461 = vld [vmem:[%s4] sm:$0xf]
          %v9462 = vld [vmem:[%s4 + $0x4] sm:$0xf]
          %v9463 = vld [vmem:[%s4 + $0x8] sm:$0xf]
          %v9464 = vld [vmem:[%s4 + $0xc] sm:$0xf]
          %v9465 = vld [vmem:[%s4 + $0x10] sm:$0xf]
          %v9466 = vld [vmem:[%s4 + $0x14] sm:$0xf]
          %v9467 = vld [vmem:[%s4 + $0x18] sm:$0xf]
          %v9468 = vld [vmem:[%s4 + $0x1c] sm:$0xf]
          %v9469 = vld [vmem:[%s4 + $0x20] sm:$0xf]
          %v9470 = vld [vmem:[%s4 + $0x24] sm:$0xf]
          %v9471 = vld [vmem:[%s4 + $0x28] sm:$0xf]
          %v9472 = vld [vmem:[%s4 + $0x2c] sm:$0xf]
          %v9473 = vld [vmem:[%s4 + $0x30] sm:$0xf]
          %v9474 = vld [vmem:[%s4 + $0x34] sm:$0xf]
          %v9475 = vld [vmem:[%s4 + $0x38] sm:$0xf]
          %v9476 = vld [vmem:[%s4 + $0x3c] sm:$0xf]
          %v9477 = vld [vmem:[%s4 + $0x40] sm:$0xf]
          %v9478 = vld [vmem:[%s4 + $0x44] sm:$0xf]
          %v9479 = vld [vmem:[%s4 + $0x48] sm:$0xf]
          %v9480 = vld [vmem:[%s4 + $0x4c] sm:$0xf]
          %v9481 = vld [vmem:[%s4 + $0x50] sm:$0xf]
          %v9482 = vld [vmem:[%s4 + $0x54] sm:$0xf]
          %v9483 = vld [vmem:[%s4 + $0x58] sm:$0xf]
          %v9484 = vld [vmem:[%s4 + $0x5c] sm:$0xf]
          %v9485 = vld [vmem:[%s4 + $0x60] sm:$0xf]
          %v9486 = vld [vmem:[%s4 + $0x64] sm:$0xf]
          %v9487 = vld [vmem:[%s4 + $0x68] sm:$0xf]
          %v9488 = vld [vmem:[%s4 + $0x6c] sm:$0xf]
          %v9489 = vld [vmem:[%s4 + $0x70] sm:$0xf]
          %v9490 = vld [vmem:[%s4 + $0x74] sm:$0xf]
          %v9491 = vld [vmem:[%s4 + $0x78] sm:$0xf]
          %v9492 = vld [vmem:[%s4 + $0x7c] sm:$0xf]
          %v9493 = vld [vmem:[%s4 + $0x80] sm:$0xf]
          %v9494 = vld [vmem:[%s4 + $0x84] sm:$0xf]
          %v9495 = vld [vmem:[%s4 + $0x88] sm:$0xf]
          %v9496 = vld [vmem:[%s4 + $0x8c] sm:$0xf]
          %v9497 = vld [vmem:[%s4 + $0x90] sm:$0xf]
          %v9498 = vld [vmem:[%s4 + $0x94] sm:$0xf]
          %v9499 = vld [vmem:[%s4 + $0x98] sm:$0xf]
          %v9500 = vld [vmem:[%s4 + $0x9c] sm:$0xf]
          %v9501 = vld [vmem:[%s4 + $0xa0] sm:$0xf]
          %v9502 = vld [vmem:[%s4 + $0xa4] sm:$0xf]
          %v9503 = vld [vmem:[%s4 + $0xa8] sm:$0xf]
          %v9504 = vld [vmem:[%s4 + $0xac] sm:$0xf]
          %v9505 = vld [vmem:[%s4 + $0xb0] sm:$0xf]
          %v9506 = vld [vmem:[%s4 + $0xb4] sm:$0xf]
          %v9507 = vld [vmem:[%s4 + $0xb8] sm:$0xf]
          %v9508 = vld [vmem:[%s4 + $0xbc] sm:$0xf]
          %v9509 = vld [vmem:[%s4 + $0xc0] sm:$0xf]
          %v9510 = vld [vmem:[%s4 + $0xc4] sm:$0xf]
          %v9511 = vld [vmem:[%s4 + $0xc8] sm:$0xf]
          %v9512 = vld [vmem:[%s4 + $0xcc] sm:$0xf]
          %v9513 = vld [vmem:[%s4 + $0xd0] sm:$0xf]
          %v9514 = vld [vmem:[%s4 + $0xd4] sm:$0xf]
          %v9515 = vld [vmem:[%s4 + $0xd8] sm:$0xf]
          %v9516 = vld [vmem:[%s4 + $0xdc] sm:$0xf]
          %v9517 = vld [vmem:[%s4 + $0xe0] sm:$0xf]
          %v9518 = vld [vmem:[%s4 + $0xe4] sm:$0xf]
          %v9519 = vld [vmem:[%s4 + $0xe8] sm:$0xf]
          %v9520 = vld [vmem:[%s4 + $0xec] sm:$0xf]
          %v9521 = vld [vmem:[%s4 + $0xf0] sm:$0xf]
          %v9522 = vld [vmem:[%s4 + $0xf4] sm:$0xf]
          %v9523 = vld [vmem:[%s4 + $0xf8] sm:$0xf]
          %v9524 = vld [vmem:[%s4 + $0xfc] sm:$0xf]
          %v9525 = vld [vmem:[%s4 + $0x100] sm:$0xf]
          %v9526 = vld [vmem:[%s4 + $0x104] sm:$0xf]
          %v9527 = vld [vmem:[%s4 + $0x108] sm:$0xf]
          %v9528 = vld [vmem:[%s4 + $0x10c] sm:$0xf]
          %v9529 = vld [vmem:[%s4 + $0x110] sm:$0xf]
          %v9530 = vld [vmem:[%s4 + $0x114] sm:$0xf]
          %v9531 = vld [vmem:[%s4 + $0x118] sm:$0xf]
          %v9532 = vld [vmem:[%s4 + $0x11c] sm:$0xf]
          %v9533 = vld [vmem:[#allocation2] sm:$0xf]
          %v9534 = vld [vmem:[#allocation2 + $0x4] sm:$0xf]
          %v9535 = vld [vmem:[#allocation2 + $0xc] sm:$0xf]
          %v9536 = vld [vmem:[#allocation2 + $0x10] sm:$0xf]
          %v9537 = vld [vmem:[#allocation2 + $0x18] sm:$0xf]
          %v9538 = vld [vmem:[#allocation2 + $0x1c] sm:$0xf]
          %v9539 = vld [vmem:[#allocation2 + $0x24] sm:$0xf]
          %v9540 = vld [vmem:[#allocation2 + $0x28] sm:$0xf]
          %v9541 = vld [vmem:[#allocation2 + $0x30] sm:$0xf]
          %v9542 = vld [vmem:[#allocation2 + $0x34] sm:$0xf]
          %v9543 = vld [vmem:[#allocation2 + $0x3c] sm:$0xf]
          %v9544 = vld [vmem:[#allocation2 + $0x40] sm:$0xf]
          %v9545 = vld [vmem:[#allocation2 + $0x48] sm:$0xf]
          %v9546 = vld [vmem:[#allocation2 + $0x4c] sm:$0xf]
          %v9547 = vld [vmem:[#allocation2 + $0x54] sm:$0xf]
          %v9548 = vld [vmem:[#allocation2 + $0x58] sm:$0xf]
          %v9549 = vld [vmem:[#allocation2 + $0x60] sm:$0xf]
          %v9550 = vld [vmem:[#allocation2 + $0x64] sm:$0xf]
          %v9551 = vld [vmem:[#allocation2 + $0x6c] sm:$0xf]
          %v9552 = vld [vmem:[#allocation2 + $0x70] sm:$0xf]
          %v9553 = vld [vmem:[#allocation2 + $0x78] sm:$0xf]
          %v9554 = vld [vmem:[#allocation2 + $0x7c] sm:$0xf]
          %v9555 = vld [vmem:[#allocation2 + $0x84] sm:$0xf]
          %v9556 = vld [vmem:[#allocation2 + $0x88] sm:$0xf]
          %v9557 = vld [vmem:[#allocation2 + $0x90] sm:$0xf]
          %v9558 = vld [vmem:[#allocation2 + $0x94] sm:$0xf]
          %v9559 = vld [vmem:[#allocation2 + $0x9c] sm:$0xf]
          %v9560 = vld [vmem:[#allocation2 + $0xa0] sm:$0xf]
          %v9561 = vld [vmem:[#allocation2 + $0xa8] sm:$0xf]
          %v9562 = vld [vmem:[#allocation2 + $0xac] sm:$0xf]
          %v9563 = vld [vmem:[#allocation2 + $0xb4] sm:$0xf]
          %v9564 = vld [vmem:[#allocation2 + $0xb8] sm:$0xf]
          %v9565 = vld [vmem:[#allocation2 + $0x8] sm:$0x1]
          %v9566 = vld [vmem:[#allocation2 + $0x14] sm:$0x1]
          %v9567 = vld [vmem:[#allocation2 + $0x20] sm:$0x1]
          %v9568 = vld [vmem:[#allocation2 + $0x2c] sm:$0x1]
          %v9569 = vld [vmem:[#allocation2 + $0x38] sm:$0x1]
          %v9570 = vld [vmem:[#allocation2 + $0x44] sm:$0x1]
          %v9571 = vld [vmem:[#allocation2 + $0x50] sm:$0x1]
          %v9572 = vld [vmem:[#allocation2 + $0x5c] sm:$0x1]
          %v9573 = vld [vmem:[#allocation2 + $0x68] sm:$0x1]
          %v9574 = vld [vmem:[#allocation2 + $0x74] sm:$0x1]
          %v9575 = vld [vmem:[#allocation2 + $0x80] sm:$0x1]
          %v9576 = vld [vmem:[#allocation2 + $0x8c] sm:$0x1]
          %v9577 = vld [vmem:[#allocation2 + $0x98] sm:$0x1]
          %v9578 = vld [vmem:[#allocation2 + $0xa4] sm:$0x1]
          %v9579 = vld [vmem:[#allocation2 + $0xb0] sm:$0x1]
          %v9580 = vld [vmem:[#allocation2 + $0xbc] sm:$0x1]
          %v9581 = vld [vmem:[#allocation2] sm:$0xe]
          %v9582 = vld [vmem:[#allocation2 + $0xc] sm:$0xe]
          %v9583 = vld [vmem:[#allocation2 + $0x18] sm:$0xe]
          %v9584 = vld [vmem:[#allocation2 + $0x24] sm:$0xe]
          %v9585 = vld [vmem:[#allocation2 + $0x30] sm:$0xe]
          %v9586 = vld [vmem:[#allocation2 + $0x3c] sm:$0xe]
          %v9587 = vld [vmem:[#allocation2 + $0x48] sm:$0xe]
          %v9588 = vld [vmem:[#allocation2 + $0x54] sm:$0xe]
          %v9589 = vld [vmem:[#allocation2 + $0x60] sm:$0xe]
          %v9590 = vld [vmem:[#allocation2 + $0x6c] sm:$0xe]
          %v9591 = vld [vmem:[#allocation2 + $0x78] sm:$0xe]
          %v9592 = vld [vmem:[#allocation2 + $0x84] sm:$0xe]
          %v9593 = vld [vmem:[#allocation2 + $0x90] sm:$0xe]
          %v9594 = vld [vmem:[#allocation2 + $0x9c] sm:$0xe]
          %v9595 = vld [vmem:[#allocation2 + $0xa8] sm:$0xe]
          %v9596 = vld [vmem:[#allocation2 + $0xb4] sm:$0xe]
          %s9597 = scalar_lea.vmem [#allocation2], 12
          %v9598 = vld [vmem:[%s9597] sm:$0xf]
          %v9599 = vld [vmem:[%s9597 + $0x4] sm:$0xf]
          %v9600 = vld [vmem:[%s9597 + $0xc] sm:$0xf]
          %v9601 = vld [vmem:[%s9597 + $0x10] sm:$0xf]
          %v9602 = vld [vmem:[%s9597 + $0x18] sm:$0xf]
          %v9603 = vld [vmem:[%s9597 + $0x1c] sm:$0xf]
          %v9604 = vld [vmem:[%s9597 + $0x24] sm:$0xf]
          %v9605 = vld [vmem:[%s9597 + $0x28] sm:$0xf]
          %v9606 = vld [vmem:[%s9597 + $0x30] sm:$0xf]
          %v9607 = vld [vmem:[%s9597 + $0x34] sm:$0xf]
          %v9608 = vld [vmem:[%s9597 + $0x3c] sm:$0xf]
          %v9609 = vld [vmem:[%s9597 + $0x40] sm:$0xf]
          %v9610 = vld [vmem:[%s9597 + $0x48] sm:$0xf]
          %v9611 = vld [vmem:[%s9597 + $0x4c] sm:$0xf]
          %v9612 = vld [vmem:[%s9597 + $0x54] sm:$0xf]
          %v9613 = vld [vmem:[%s9597 + $0x58] sm:$0xf]
          %v9614 = vld [vmem:[%s9597 + $0x60] sm:$0xf]
          %v9615 = vld [vmem:[%s9597 + $0x64] sm:$0xf]
          %v9616 = vld [vmem:[%s9597 + $0x6c] sm:$0xf]
          %v9617 = vld [vmem:[%s9597 + $0x70] sm:$0xf]
          %v9618 = vld [vmem:[%s9597 + $0x78] sm:$0xf]
          %v9619 = vld [vmem:[%s9597 + $0x7c] sm:$0xf]
          %v9620 = vld [vmem:[%s9597 + $0x84] sm:$0xf]
          %v9621 = vld [vmem:[%s9597 + $0x88] sm:$0xf]
          %v9622 = vld [vmem:[%s9597 + $0x90] sm:$0xf]
          %v9623 = vld [vmem:[%s9597 + $0x94] sm:$0xf]
          %v9624 = vld [vmem:[%s9597 + $0x9c] sm:$0xf]
          %v9625 = vld [vmem:[%s9597 + $0xa0] sm:$0xf]
          %v9626 = vld [vmem:[%s9597 + $0xa8] sm:$0xf]
          %v9627 = vld [vmem:[%s9597 + $0xac] sm:$0xf]
          %v9628 = vld [vmem:[%s9597 + $0xb4] sm:$0xf]
          %v9629 = vld [vmem:[%s9597 + $0xb8] sm:$0xf]
          %v9630 = vld [vmem:[%s9597 + $0x8] sm:$0x1]
          %v9631 = vld [vmem:[%s9597 + $0x14] sm:$0x1]
          %v9632 = vld [vmem:[%s9597 + $0x20] sm:$0x1]
          %v9633 = vld [vmem:[%s9597 + $0x2c] sm:$0x1]
          %v9634 = vld [vmem:[%s9597 + $0x38] sm:$0x1]
          %v9635 = vld [vmem:[%s9597 + $0x44] sm:$0x1]
          %v9636 = vld [vmem:[%s9597 + $0x50] sm:$0x1]
          %v9637 = vld [vmem:[%s9597 + $0x5c] sm:$0x1]
          %v9638 = vld [vmem:[%s9597 + $0x68] sm:$0x1]
          %v9639 = vld [vmem:[%s9597 + $0x74] sm:$0x1]
          %v9640 = vld [vmem:[%s9597 + $0x80] sm:$0x1]
          %v9641 = vld [vmem:[%s9597 + $0x8c] sm:$0x1]
          %v9642 = vld [vmem:[%s9597 + $0x98] sm:$0x1]
          %v9643 = vld [vmem:[%s9597 + $0xa4] sm:$0x1]
          %v9644 = vld [vmem:[%s9597 + $0xb0] sm:$0x1]
          %v9645 = vld [vmem:[%s9597 + $0xbc] sm:$0x1]
          %v9646 = vld [vmem:[%s9597] sm:$0xe]
          %v9647 = vld [vmem:[%s9597 + $0xc] sm:$0xe]
          %v9648 = vld [vmem:[%s9597 + $0x18] sm:$0xe]
          %v9649 = vld [vmem:[%s9597 + $0x24] sm:$0xe]
          %v9650 = vld [vmem:[%s9597 + $0x30] sm:$0xe]
          %v9651 = vld [vmem:[%s9597 + $0x3c] sm:$0xe]
          %v9652 = vld [vmem:[%s9597 + $0x48] sm:$0xe]
          %v9653 = vld [vmem:[%s9597 + $0x54] sm:$0xe]
          %v9654 = vld [vmem:[%s9597 + $0x60] sm:$0xe]
          %v9655 = vld [vmem:[%s9597 + $0x6c] sm:$0xe]
          %v9656 = vld [vmem:[%s9597 + $0x78] sm:$0xe]
          %v9657 = vld [vmem:[%s9597 + $0x84] sm:$0xe]
          %v9658 = vld [vmem:[%s9597 + $0x90] sm:$0xe]
          %v9659 = vld [vmem:[%s9597 + $0x9c] sm:$0xe]
          %v9660 = vld [vmem:[%s9597 + $0xa8] sm:$0xe]
          %v9661 = vld [vmem:[%s9597 + $0xb4] sm:$0xe]
          %s9662 = scalar_lea.vmem [#allocation2], 24
          %v9663 = vld [vmem:[%s9662] sm:$0xf]
          %v9664 = vld [vmem:[%s9662 + $0x4] sm:$0xf]
          %v9665 = vld [vmem:[%s9662 + $0xc] sm:$0xf]
          %v9666 = vld [vmem:[%s9662 + $0x10] sm:$0xf]
          %v9667 = vld [vmem:[%s9662 + $0x18] sm:$0xf]
          %v9668 = vld [vmem:[%s9662 + $0x1c] sm:$0xf]
          %v9669 = vld [vmem:[%s9662 + $0x24] sm:$0xf]
          %v9670 = vld [vmem:[%s9662 + $0x28] sm:$0xf]
          %v9671 = vld [vmem:[%s9662 + $0x30] sm:$0xf]
          %v9672 = vld [vmem:[%s9662 + $0x34] sm:$0xf]
          %v9673 = vld [vmem:[%s9662 + $0x3c] sm:$0xf]
          %v9674 = vld [vmem:[%s9662 + $0x40] sm:$0xf]
          %v9675 = vld [vmem:[%s9662 + $0x48] sm:$0xf]
          %v9676 = vld [vmem:[%s9662 + $0x4c] sm:$0xf]
          %v9677 = vld [vmem:[%s9662 + $0x54] sm:$0xf]
          %v9678 = vld [vmem:[%s9662 + $0x58] sm:$0xf]
          %v9679 = vld [vmem:[%s9662 + $0x60] sm:$0xf]
          %v9680 = vld [vmem:[%s9662 + $0x64] sm:$0xf]
          %v9681 = vld [vmem:[%s9662 + $0x6c] sm:$0xf]
          %v9682 = vld [vmem:[%s9662 + $0x70] sm:$0xf]
          %v9683 = vld [vmem:[%s9662 + $0x78] sm:$0xf]
          %v9684 = vld [vmem:[%s9662 + $0x7c] sm:$0xf]
          %v9685 = vld [vmem:[%s9662 + $0x84] sm:$0xf]
          %v9686 = vld [vmem:[%s9662 + $0x88] sm:$0xf]
          %v9687 = vld [vmem:[%s9662 + $0x90] sm:$0xf]
          %v9688 = vld [vmem:[%s9662 + $0x94] sm:$0xf]
          %v9689 = vld [vmem:[%s9662 + $0x9c] sm:$0xf]
          %v9690 = vld [vmem:[%s9662 + $0xa0] sm:$0xf]
          %v9691 = vld [vmem:[%s9662 + $0xa8] sm:$0xf]
          %v9692 = vld [vmem:[%s9662 + $0xac] sm:$0xf]
          %v9693 = vld [vmem:[%s9662 + $0xb4] sm:$0xf]
          %v9694 = vld [vmem:[%s9662 + $0xb8] sm:$0xf]
          %v9695 = vld [vmem:[%s9662 + $0x8] sm:$0x1]
          %v9696 = vld [vmem:[%s9662 + $0x14] sm:$0x1]
          %v9697 = vld [vmem:[%s9662 + $0x20] sm:$0x1]
          %v9698 = vld [vmem:[%s9662 + $0x2c] sm:$0x1]
          %v9699 = vld [vmem:[%s9662 + $0x38] sm:$0x1]
          %v9700 = vld [vmem:[%s9662 + $0x44] sm:$0x1]
          %v9701 = vld [vmem:[%s9662 + $0x50] sm:$0x1]
          %v9702 = vld [vmem:[%s9662 + $0x5c] sm:$0x1]
          %v9703 = vld [vmem:[%s9662 + $0x68] sm:$0x1]
          %v9704 = vld [vmem:[%s9662 + $0x74] sm:$0x1]
          %v9705 = vld [vmem:[%s9662 + $0x80] sm:$0x1]
          %v9706 = vld [vmem:[%s9662 + $0x8c] sm:$0x1]
          %v9707 = vld [vmem:[%s9662 + $0x98] sm:$0x1]
          %v9708 = vld [vmem:[%s9662 + $0xa4] sm:$0x1]
          %v9709 = vld [vmem:[%s9662 + $0xb0] sm:$0x1]
          %v9710 = vld [vmem:[%s9662 + $0xbc] sm:$0x1]
          %v9711 = vld [vmem:[%s9662] sm:$0xe]
          %v9712 = vld [vmem:[%s9662 + $0xc] sm:$0xe]
          %v9713 = vld [vmem:[%s9662 + $0x18] sm:$0xe]
          %v9714 = vld [vmem:[%s9662 + $0x24] sm:$0xe]
          %v9715 = vld [vmem:[%s9662 + $0x30] sm:$0xe]
          %v9716 = vld [vmem:[%s9662 + $0x3c] sm:$0xe]
          %v9717 = vld [vmem:[%s9662 + $0x48] sm:$0xe]
          %v9718 = vld [vmem:[%s9662 + $0x54] sm:$0xe]
          %v9719 = vld [vmem:[%s9662 + $0x60] sm:$0xe]
          %v9720 = vld [vmem:[%s9662 + $0x6c] sm:$0xe]
          %v9721 = vld [vmem:[%s9662 + $0x78] sm:$0xe]
          %v9722 = vld [vmem:[%s9662 + $0x84] sm:$0xe]
          %v9723 = vld [vmem:[%s9662 + $0x90] sm:$0xe]
          %v9724 = vld [vmem:[%s9662 + $0x9c] sm:$0xe]
          %v9725 = vld [vmem:[%s9662 + $0xa8] sm:$0xe]
          %v9726 = vld [vmem:[%s9662 + $0xb4] sm:$0xe]
          %v9759 = vunpack.c.l.b16 %v9533
          %v9760 = vunpack.c.l.b16 %v9534
          %v9761 = vunpack.c.l.b16 %v9535
          %v9762 = vunpack.c.l.b16 %v9536
          %v9763 = vunpack.c.l.b16 %v9537
          %v9764 = vunpack.c.l.b16 %v9538
          %v9765 = vunpack.c.l.b16 %v9539
          %v9766 = vunpack.c.l.b16 %v9540
          %v9767 = vunpack.c.l.b16 %v9541
          %v9768 = vunpack.c.l.b16 %v9542
          %v9769 = vunpack.c.l.b16 %v9543
          %v9770 = vunpack.c.l.b16 %v9544
          %v9771 = vunpack.c.l.b16 %v9545
          %v9772 = vunpack.c.l.b16 %v9546
          %v9773 = vunpack.c.l.b16 %v9547
          %v9774 = vunpack.c.l.b16 %v9548
          %v9775 = vunpack.c.l.b16 %v9549
          %v9776 = vunpack.c.l.b16 %v9550
          %v9777 = vunpack.c.l.b16 %v9551
          %v9778 = vunpack.c.l.b16 %v9552
          %v9779 = vunpack.c.l.b16 %v9553
          %v9780 = vunpack.c.l.b16 %v9554
          %v9781 = vunpack.c.l.b16 %v9555
          %v9782 = vunpack.c.l.b16 %v9556
          %v9783 = vunpack.c.l.b16 %v9557
          %v9784 = vunpack.c.l.b16 %v9558
          %v9785 = vunpack.c.l.b16 %v9559
          %v9786 = vunpack.c.l.b16 %v9560
          %v9787 = vunpack.c.l.b16 %v9561
          %v9788 = vunpack.c.l.b16 %v9562
          %v9789 = vunpack.c.l.b16 %v9563
          %v9790 = vunpack.c.l.b16 %v9564
          %v9791 = vpack.c.b16 %v9760, %v9759
          %v9792 = vpack.c.b16 %v9762, %v9761
          %v9793 = vpack.c.b16 %v9764, %v9763
          %v9794 = vpack.c.b16 %v9766, %v9765
          %v9795 = vpack.c.b16 %v9768, %v9767
          %v9796 = vpack.c.b16 %v9770, %v9769
          %v9797 = vpack.c.b16 %v9772, %v9771
          %v9798 = vpack.c.b16 %v9774, %v9773
          %v9799 = vpack.c.b16 %v9776, %v9775
          %v9800 = vpack.c.b16 %v9778, %v9777
          %v9801 = vpack.c.b16 %v9780, %v9779
          %v9802 = vpack.c.b16 %v9782, %v9781
          %v9803 = vpack.c.b16 %v9784, %v9783
          %v9804 = vpack.c.b16 %v9786, %v9785
          %v9805 = vpack.c.b16 %v9788, %v9787
          %v9806 = vpack.c.b16 %v9790, %v9789
          %v9823 = vunpack.c.l.b16 %v9565
          %v9824 = vunpack.c.l.b16 %v9566
          %v9825 = vunpack.c.l.b16 %v9567
          %v9826 = vunpack.c.l.b16 %v9568
          %v9827 = vunpack.c.l.b16 %v9569
          %v9828 = vunpack.c.l.b16 %v9570
          %v9829 = vunpack.c.l.b16 %v9571
          %v9830 = vunpack.c.l.b16 %v9572
          %v9831 = vunpack.c.l.b16 %v9573
          %v9832 = vunpack.c.l.b16 %v9574
          %v9833 = vunpack.c.l.b16 %v9575
          %v9834 = vunpack.c.l.b16 %v9576
          %v9835 = vunpack.c.l.b16 %v9577
          %v9836 = vunpack.c.l.b16 %v9578
          %v9837 = vunpack.c.l.b16 %v9579
          %v9838 = vunpack.c.l.b16 %v9580
          %v9839 = vpack.c.b16 %v9823, %v9823
          %v9840 = vpack.c.b16 %v9824, %v9824
          %v9841 = vpack.c.b16 %v9825, %v9825
          %v9842 = vpack.c.b16 %v9826, %v9826
          %v9843 = vpack.c.b16 %v9827, %v9827
          %v9844 = vpack.c.b16 %v9828, %v9828
          %v9845 = vpack.c.b16 %v9829, %v9829
          %v9846 = vpack.c.b16 %v9830, %v9830
          %v9847 = vpack.c.b16 %v9831, %v9831
          %v9848 = vpack.c.b16 %v9832, %v9832
          %v9849 = vpack.c.b16 %v9833, %v9833
          %v9850 = vpack.c.b16 %v9834, %v9834
          %v9851 = vpack.c.b16 %v9835, %v9835
          %v9852 = vpack.c.b16 %v9836, %v9836
          %v9853 = vpack.c.b16 %v9837, %v9837
          %v9854 = vpack.c.b16 %v9838, %v9838
          %vm9855 = vsmask.f32 7424
          %v9857 = vshrl.u32 %v9791, 16
          %v9859 = vshll.u32 %v9791, 16
          %v9861 = vrot.slane %v9859, 1
          %v9862 = vor.u32 %v9857, %v9861
          %v9864 = vshll.u32 %v9839, 16
          %v9866 = vrot.slane %v9864, 1
          %v9867 = vsel %vm9855, %v9862, %v9866
          %v9869 = vshrl.u32 %v9792, 16
          %v9871 = vshll.u32 %v9792, 16
          %v9873 = vrot.slane %v9871, 1
          %v9874 = vor.u32 %v9869, %v9873
          %v9876 = vshll.u32 %v9840, 16
          %v9878 = vrot.slane %v9876, 1
          %v9879 = vsel %vm9855, %v9874, %v9878
          %v9881 = vshrl.u32 %v9793, 16
          %v9883 = vshll.u32 %v9793, 16
          %v9885 = vrot.slane %v9883, 1
          %v9886 = vor.u32 %v9881, %v9885
          %v9888 = vshll.u32 %v9841, 16
          %v9890 = vrot.slane %v9888, 1
          %v9891 = vsel %vm9855, %v9886, %v9890
          %v9893 = vshrl.u32 %v9794, 16
          %v9895 = vshll.u32 %v9794, 16
          %v9897 = vrot.slane %v9895, 1
          %v9898 = vor.u32 %v9893, %v9897
          %v9900 = vshll.u32 %v9842, 16
          %v9902 = vrot.slane %v9900, 1
          %v9903 = vsel %vm9855, %v9898, %v9902
          %v9905 = vshrl.u32 %v9795, 16
          %v9907 = vshll.u32 %v9795, 16
          %v9909 = vrot.slane %v9907, 1
          %v9910 = vor.u32 %v9905, %v9909
          %v9912 = vshll.u32 %v9843, 16
          %v9914 = vrot.slane %v9912, 1
          %v9915 = vsel %vm9855, %v9910, %v9914
          %v9917 = vshrl.u32 %v9796, 16
          %v9919 = vshll.u32 %v9796, 16
          %v9921 = vrot.slane %v9919, 1
          %v9922 = vor.u32 %v9917, %v9921
          %v9924 = vshll.u32 %v9844, 16
          %v9926 = vrot.slane %v9924, 1
          %v9927 = vsel %vm9855, %v9922, %v9926
          %v9929 = vshrl.u32 %v9797, 16
          %v9931 = vshll.u32 %v9797, 16
          %v9933 = vrot.slane %v9931, 1
          %v9934 = vor.u32 %v9929, %v9933
          %v9936 = vshll.u32 %v9845, 16
          %v9938 = vrot.slane %v9936, 1
          %v9939 = vsel %vm9855, %v9934, %v9938
          %v9941 = vshrl.u32 %v9798, 16
          %v9943 = vshll.u32 %v9798, 16
          %v9945 = vrot.slane %v9943, 1
          %v9946 = vor.u32 %v9941, %v9945
          %v9948 = vshll.u32 %v9846, 16
          %v9950 = vrot.slane %v9948, 1
          %v9951 = vsel %vm9855, %v9946, %v9950
          %v9953 = vshrl.u32 %v9799, 16
          %v9955 = vshll.u32 %v9799, 16
          %v9957 = vrot.slane %v9955, 1
          %v9958 = vor.u32 %v9953, %v9957
          %v9960 = vshll.u32 %v9847, 16
          %v9962 = vrot.slane %v9960, 1
          %v9963 = vsel %vm9855, %v9958, %v9962
          %v9965 = vshrl.u32 %v9800, 16
          %v9967 = vshll.u32 %v9800, 16
          %v9969 = vrot.slane %v9967, 1
          %v9970 = vor.u32 %v9965, %v9969
          %v9972 = vshll.u32 %v9848, 16
          %v9974 = vrot.slane %v9972, 1
          %v9975 = vsel %vm9855, %v9970, %v9974
          %v9977 = vshrl.u32 %v9801, 16
          %v9979 = vshll.u32 %v9801, 16
          %v9981 = vrot.slane %v9979, 1
          %v9982 = vor.u32 %v9977, %v9981
          %v9984 = vshll.u32 %v9849, 16
          %v9986 = vrot.slane %v9984, 1
          %v9987 = vsel %vm9855, %v9982, %v9986
          %v9989 = vshrl.u32 %v9802, 16
          %v9991 = vshll.u32 %v9802, 16
          %v9993 = vrot.slane %v9991, 1
          %v9994 = vor.u32 %v9989, %v9993
          %v9996 = vshll.u32 %v9850, 16
          %v9998 = vrot.slane %v9996, 1
          %v9999 = vsel %vm9855, %v9994, %v9998
          %v10001 = vshrl.u32 %v9803, 16
          %v10003 = vshll.u32 %v9803, 16
          %v10005 = vrot.slane %v10003, 1
          %v10006 = vor.u32 %v10001, %v10005
          %v10008 = vshll.u32 %v9851, 16
          %v10010 = vrot.slane %v10008, 1
          %v10011 = vsel %vm9855, %v10006, %v10010
          %v10013 = vshrl.u32 %v9804, 16
          %v10015 = vshll.u32 %v9804, 16
          %v10017 = vrot.slane %v10015, 1
          %v10018 = vor.u32 %v10013, %v10017
          %v10020 = vshll.u32 %v9852, 16
          %v10022 = vrot.slane %v10020, 1
          %v10023 = vsel %vm9855, %v10018, %v10022
          %v10025 = vshrl.u32 %v9805, 16
          %v10027 = vshll.u32 %v9805, 16
          %v10029 = vrot.slane %v10027, 1
          %v10030 = vor.u32 %v10025, %v10029
          %v10032 = vshll.u32 %v9853, 16
          %v10034 = vrot.slane %v10032, 1
          %v10035 = vsel %vm9855, %v10030, %v10034
          %v10037 = vshrl.u32 %v9806, 16
          %v10039 = vshll.u32 %v9806, 16
          %v10041 = vrot.slane %v10039, 1
          %v10042 = vor.u32 %v10037, %v10041
          %v10044 = vshll.u32 %v9854, 16
          %v10046 = vrot.slane %v10044, 1
          %v10047 = vsel %vm9855, %v10042, %v10046
          %10048 = vrot.lane.b32.xlu0 %v9867, 64
          %v10049 = vpop.permute.xlu0 %10048
          %10050 = vrot.lane.b32.xlu0 %v9879, 64
          %v10051 = vpop.permute.xlu0 %10050
          %10052 = vrot.lane.b32.xlu0 %v9891, 64
          %v10053 = vpop.permute.xlu0 %10052
          %10054 = vrot.lane.b32.xlu0 %v9903, 64
          %v10055 = vpop.permute.xlu0 %10054
          %10056 = vrot.lane.b32.xlu0 %v9915, 64
          %v10057 = vpop.permute.xlu0 %10056
          %10058 = vrot.lane.b32.xlu0 %v9927, 64
          %v10059 = vpop.permute.xlu0 %10058
          %10060 = vrot.lane.b32.xlu0 %v9939, 64
          %v10061 = vpop.permute.xlu0 %10060
          %10062 = vrot.lane.b32.xlu0 %v9951, 64
          %v10063 = vpop.permute.xlu0 %10062
          %10064 = vrot.lane.b32.xlu0 %v9963, 64
          %v10065 = vpop.permute.xlu0 %10064
          %10066 = vrot.lane.b32.xlu0 %v9975, 64
          %v10067 = vpop.permute.xlu0 %10066
          %10068 = vrot.lane.b32.xlu0 %v9987, 64
          %v10069 = vpop.permute.xlu0 %10068
          %10070 = vrot.lane.b32.xlu0 %v9999, 64
          %v10071 = vpop.permute.xlu0 %10070
          %10072 = vrot.lane.b32.xlu0 %v10011, 64
          %v10073 = vpop.permute.xlu0 %10072
          %10074 = vrot.lane.b32.xlu0 %v10023, 64
          %v10075 = vpop.permute.xlu0 %10074
          %10076 = vrot.lane.b32.xlu0 %v10035, 64
          %v10077 = vpop.permute.xlu0 %10076
          %10078 = vrot.lane.b32.xlu0 %v10047, 64
          %v10079 = vpop.permute.xlu0 %10078
          %v10096 = vunpack.c.l.b16 %v9581
          %v10097 = vunpack.c.l.b16 %v9582
          %v10098 = vunpack.c.l.b16 %v9583
          %v10099 = vunpack.c.l.b16 %v9584
          %v10100 = vunpack.c.l.b16 %v9585
          %v10101 = vunpack.c.l.b16 %v9586
          %v10102 = vunpack.c.l.b16 %v9587
          %v10103 = vunpack.c.l.b16 %v9588
          %v10104 = vunpack.c.l.b16 %v9589
          %v10105 = vunpack.c.l.b16 %v9590
          %v10106 = vunpack.c.l.b16 %v9591
          %v10107 = vunpack.c.l.b16 %v9592
          %v10108 = vunpack.c.l.b16 %v9593
          %v10109 = vunpack.c.l.b16 %v9594
          %v10110 = vunpack.c.l.b16 %v9595
          %v10111 = vunpack.c.l.b16 %v9596
          %v10112 = vpack.c.b16 %v9760, %v10096
          %v10113 = vpack.c.b16 %v9762, %v10097
          %v10114 = vpack.c.b16 %v9764, %v10098
          %v10115 = vpack.c.b16 %v9766, %v10099
          %v10116 = vpack.c.b16 %v9768, %v10100
          %v10117 = vpack.c.b16 %v9770, %v10101
          %v10118 = vpack.c.b16 %v9772, %v10102
          %v10119 = vpack.c.b16 %v9774, %v10103
          %v10120 = vpack.c.b16 %v9776, %v10104
          %v10121 = vpack.c.b16 %v9778, %v10105
          %v10122 = vpack.c.b16 %v9780, %v10106
          %v10123 = vpack.c.b16 %v9782, %v10107
          %v10124 = vpack.c.b16 %v9784, %v10108
          %v10125 = vpack.c.b16 %v9786, %v10109
          %v10126 = vpack.c.b16 %v9788, %v10110
          %v10127 = vpack.c.b16 %v9790, %v10111
          %vm10128 = vcmask 1046528
          %v10129 = vrot.slane %v10112, 1
          %v10130 = vrot.slane %v9839, 1
          %v10131 = vsel %vm10128, %v10129, %v10130
          %v10132 = vrot.slane %v10113, 1
          %v10133 = vrot.slane %v9840, 1
          %v10134 = vsel %vm10128, %v10132, %v10133
          %v10135 = vrot.slane %v10114, 1
          %v10136 = vrot.slane %v9841, 1
          %v10137 = vsel %vm10128, %v10135, %v10136
          %v10138 = vrot.slane %v10115, 1
          %v10139 = vrot.slane %v9842, 1
          %v10140 = vsel %vm10128, %v10138, %v10139
          %v10141 = vrot.slane %v10116, 1
          %v10142 = vrot.slane %v9843, 1
          %v10143 = vsel %vm10128, %v10141, %v10142
          %v10144 = vrot.slane %v10117, 1
          %v10145 = vrot.slane %v9844, 1
          %v10146 = vsel %vm10128, %v10144, %v10145
          %v10147 = vrot.slane %v10118, 1
          %v10148 = vrot.slane %v9845, 1
          %v10149 = vsel %vm10128, %v10147, %v10148
          %v10150 = vrot.slane %v10119, 1
          %v10151 = vrot.slane %v9846, 1
          %v10152 = vsel %vm10128, %v10150, %v10151
          %v10153 = vrot.slane %v10120, 1
          %v10154 = vrot.slane %v9847, 1
          %v10155 = vsel %vm10128, %v10153, %v10154
          %v10156 = vrot.slane %v10121, 1
          %v10157 = vrot.slane %v9848, 1
          %v10158 = vsel %vm10128, %v10156, %v10157
          %v10159 = vrot.slane %v10122, 1
          %v10160 = vrot.slane %v9849, 1
          %v10161 = vsel %vm10128, %v10159, %v10160
          %v10162 = vrot.slane %v10123, 1
          %v10163 = vrot.slane %v9850, 1
          %v10164 = vsel %vm10128, %v10162, %v10163
          %v10165 = vrot.slane %v10124, 1
          %v10166 = vrot.slane %v9851, 1
          %v10167 = vsel %vm10128, %v10165, %v10166
          %v10168 = vrot.slane %v10125, 1
          %v10169 = vrot.slane %v9852, 1
          %v10170 = vsel %vm10128, %v10168, %v10169
          %v10171 = vrot.slane %v10126, 1
          %v10172 = vrot.slane %v9853, 1
          %v10173 = vsel %vm10128, %v10171, %v10172
          %v10174 = vrot.slane %v10127, 1
          %v10175 = vrot.slane %v9854, 1
          %v10176 = vsel %vm10128, %v10174, %v10175
          %v10209 = vunpack.c.l.b16 %v9598
          %v10210 = vunpack.c.l.b16 %v9599
          %v10211 = vunpack.c.l.b16 %v9600
          %v10212 = vunpack.c.l.b16 %v9601
          %v10213 = vunpack.c.l.b16 %v9602
          %v10214 = vunpack.c.l.b16 %v9603
          %v10215 = vunpack.c.l.b16 %v9604
          %v10216 = vunpack.c.l.b16 %v9605
          %v10217 = vunpack.c.l.b16 %v9606
          %v10218 = vunpack.c.l.b16 %v9607
          %v10219 = vunpack.c.l.b16 %v9608
          %v10220 = vunpack.c.l.b16 %v9609
          %v10221 = vunpack.c.l.b16 %v9610
          %v10222 = vunpack.c.l.b16 %v9611
          %v10223 = vunpack.c.l.b16 %v9612
          %v10224 = vunpack.c.l.b16 %v9613
          %v10225 = vunpack.c.l.b16 %v9614
          %v10226 = vunpack.c.l.b16 %v9615
          %v10227 = vunpack.c.l.b16 %v9616
          %v10228 = vunpack.c.l.b16 %v9617
          %v10229 = vunpack.c.l.b16 %v9618
          %v10230 = vunpack.c.l.b16 %v9619
          %v10231 = vunpack.c.l.b16 %v9620
          %v10232 = vunpack.c.l.b16 %v9621
          %v10233 = vunpack.c.l.b16 %v9622
          %v10234 = vunpack.c.l.b16 %v9623
          %v10235 = vunpack.c.l.b16 %v9624
          %v10236 = vunpack.c.l.b16 %v9625
          %v10237 = vunpack.c.l.b16 %v9626
          %v10238 = vunpack.c.l.b16 %v9627
          %v10239 = vunpack.c.l.b16 %v9628
          %v10240 = vunpack.c.l.b16 %v9629
          %v10241 = vpack.c.b16 %v10210, %v10209
          %v10242 = vpack.c.b16 %v10212, %v10211
          %v10243 = vpack.c.b16 %v10214, %v10213
          %v10244 = vpack.c.b16 %v10216, %v10215
          %v10245 = vpack.c.b16 %v10218, %v10217
          %v10246 = vpack.c.b16 %v10220, %v10219
          %v10247 = vpack.c.b16 %v10222, %v10221
          %v10248 = vpack.c.b16 %v10224, %v10223
          %v10249 = vpack.c.b16 %v10226, %v10225
          %v10250 = vpack.c.b16 %v10228, %v10227
          %v10251 = vpack.c.b16 %v10230, %v10229
          %v10252 = vpack.c.b16 %v10232, %v10231
          %v10253 = vpack.c.b16 %v10234, %v10233
          %v10254 = vpack.c.b16 %v10236, %v10235
          %v10255 = vpack.c.b16 %v10238, %v10237
          %v10256 = vpack.c.b16 %v10240, %v10239
          %10257 = vrot.lane.b32.xlu0 %v10241, 64
          %v10258 = vpop.permute.xlu0 %10257
          %10259 = vrot.lane.b32.xlu0 %v10242, 64
          %v10260 = vpop.permute.xlu0 %10259
          %10261 = vrot.lane.b32.xlu0 %v10243, 64
          %v10262 = vpop.permute.xlu0 %10261
          %10263 = vrot.lane.b32.xlu0 %v10244, 64
          %v10264 = vpop.permute.xlu0 %10263
          %10265 = vrot.lane.b32.xlu0 %v10245, 64
          %v10266 = vpop.permute.xlu0 %10265
          %10267 = vrot.lane.b32.xlu0 %v10246, 64
          %v10268 = vpop.permute.xlu0 %10267
          %10269 = vrot.lane.b32.xlu0 %v10247, 64
          %v10270 = vpop.permute.xlu0 %10269
          %10271 = vrot.lane.b32.xlu0 %v10248, 64
          %v10272 = vpop.permute.xlu0 %10271
          %10273 = vrot.lane.b32.xlu0 %v10249, 64
          %v10274 = vpop.permute.xlu0 %10273
          %10275 = vrot.lane.b32.xlu0 %v10250, 64
          %v10276 = vpop.permute.xlu0 %10275
          %10277 = vrot.lane.b32.xlu0 %v10251, 64
          %v10278 = vpop.permute.xlu0 %10277
          %10279 = vrot.lane.b32.xlu0 %v10252, 64
          %v10280 = vpop.permute.xlu0 %10279
          %10281 = vrot.lane.b32.xlu0 %v10253, 64
          %v10282 = vpop.permute.xlu0 %10281
          %10283 = vrot.lane.b32.xlu0 %v10254, 64
          %v10284 = vpop.permute.xlu0 %10283
          %10285 = vrot.lane.b32.xlu0 %v10255, 64
          %v10286 = vpop.permute.xlu0 %10285
          %10287 = vrot.lane.b32.xlu0 %v10256, 64
          %v10288 = vpop.permute.xlu0 %10287
          %v10305 = vunpack.c.l.b16 %v9630
          %v10306 = vunpack.c.l.b16 %v9631
          %v10307 = vunpack.c.l.b16 %v9632
          %v10308 = vunpack.c.l.b16 %v9633
          %v10309 = vunpack.c.l.b16 %v9634
          %v10310 = vunpack.c.l.b16 %v9635
          %v10311 = vunpack.c.l.b16 %v9636
          %v10312 = vunpack.c.l.b16 %v9637
          %v10313 = vunpack.c.l.b16 %v9638
          %v10314 = vunpack.c.l.b16 %v9639
          %v10315 = vunpack.c.l.b16 %v9640
          %v10316 = vunpack.c.l.b16 %v9641
          %v10317 = vunpack.c.l.b16 %v9642
          %v10318 = vunpack.c.l.b16 %v9643
          %v10319 = vunpack.c.l.b16 %v9644
          %v10320 = vunpack.c.l.b16 %v9645
          %v10321 = vpack.c.b16 %v10305, %v10305
          %v10322 = vpack.c.b16 %v10306, %v10306
          %v10323 = vpack.c.b16 %v10307, %v10307
          %v10324 = vpack.c.b16 %v10308, %v10308
          %v10325 = vpack.c.b16 %v10309, %v10309
          %v10326 = vpack.c.b16 %v10310, %v10310
          %v10327 = vpack.c.b16 %v10311, %v10311
          %v10328 = vpack.c.b16 %v10312, %v10312
          %v10329 = vpack.c.b16 %v10313, %v10313
          %v10330 = vpack.c.b16 %v10314, %v10314
          %v10331 = vpack.c.b16 %v10315, %v10315
          %v10332 = vpack.c.b16 %v10316, %v10316
          %v10333 = vpack.c.b16 %v10317, %v10317
          %v10334 = vpack.c.b16 %v10318, %v10318
          %v10335 = vpack.c.b16 %v10319, %v10319
          %v10336 = vpack.c.b16 %v10320, %v10320
          %v10338 = vshrl.u32 %v10241, 16
          %v10340 = vshll.u32 %v10241, 16
          %v10342 = vrot.slane %v10340, 1
          %v10343 = vor.u32 %v10338, %v10342
          %v10345 = vshll.u32 %v10321, 16
          %v10347 = vrot.slane %v10345, 1
          %v10348 = vsel %vm9855, %v10343, %v10347
          %v10350 = vshrl.u32 %v10242, 16
          %v10352 = vshll.u32 %v10242, 16
          %v10354 = vrot.slane %v10352, 1
          %v10355 = vor.u32 %v10350, %v10354
          %v10357 = vshll.u32 %v10322, 16
          %v10359 = vrot.slane %v10357, 1
          %v10360 = vsel %vm9855, %v10355, %v10359
          %v10362 = vshrl.u32 %v10243, 16
          %v10364 = vshll.u32 %v10243, 16
          %v10366 = vrot.slane %v10364, 1
          %v10367 = vor.u32 %v10362, %v10366
          %v10369 = vshll.u32 %v10323, 16
          %v10371 = vrot.slane %v10369, 1
          %v10372 = vsel %vm9855, %v10367, %v10371
          %v10374 = vshrl.u32 %v10244, 16
          %v10376 = vshll.u32 %v10244, 16
          %v10378 = vrot.slane %v10376, 1
          %v10379 = vor.u32 %v10374, %v10378
          %v10381 = vshll.u32 %v10324, 16
          %v10383 = vrot.slane %v10381, 1
          %v10384 = vsel %vm9855, %v10379, %v10383
          %v10386 = vshrl.u32 %v10245, 16
          %v10388 = vshll.u32 %v10245, 16
          %v10390 = vrot.slane %v10388, 1
          %v10391 = vor.u32 %v10386, %v10390
          %v10393 = vshll.u32 %v10325, 16
          %v10395 = vrot.slane %v10393, 1
          %v10396 = vsel %vm9855, %v10391, %v10395
          %v10398 = vshrl.u32 %v10246, 16
          %v10400 = vshll.u32 %v10246, 16
          %v10402 = vrot.slane %v10400, 1
          %v10403 = vor.u32 %v10398, %v10402
          %v10405 = vshll.u32 %v10326, 16
          %v10407 = vrot.slane %v10405, 1
          %v10408 = vsel %vm9855, %v10403, %v10407
          %v10410 = vshrl.u32 %v10247, 16
          %v10412 = vshll.u32 %v10247, 16
          %v10414 = vrot.slane %v10412, 1
          %v10415 = vor.u32 %v10410, %v10414
          %v10417 = vshll.u32 %v10327, 16
          %v10419 = vrot.slane %v10417, 1
          %v10420 = vsel %vm9855, %v10415, %v10419
          %v10422 = vshrl.u32 %v10248, 16
          %v10424 = vshll.u32 %v10248, 16
          %v10426 = vrot.slane %v10424, 1
          %v10427 = vor.u32 %v10422, %v10426
          %v10429 = vshll.u32 %v10328, 16
          %v10431 = vrot.slane %v10429, 1
          %v10432 = vsel %vm9855, %v10427, %v10431
          %v10434 = vshrl.u32 %v10249, 16
          %v10436 = vshll.u32 %v10249, 16
          %v10438 = vrot.slane %v10436, 1
          %v10439 = vor.u32 %v10434, %v10438
          %v10441 = vshll.u32 %v10329, 16
          %v10443 = vrot.slane %v10441, 1
          %v10444 = vsel %vm9855, %v10439, %v10443
          %v10446 = vshrl.u32 %v10250, 16
          %v10448 = vshll.u32 %v10250, 16
          %v10450 = vrot.slane %v10448, 1
          %v10451 = vor.u32 %v10446, %v10450
          %v10453 = vshll.u32 %v10330, 16
          %v10455 = vrot.slane %v10453, 1
          %v10456 = vsel %vm9855, %v10451, %v10455
          %v10458 = vshrl.u32 %v10251, 16
          %v10460 = vshll.u32 %v10251, 16
          %v10462 = vrot.slane %v10460, 1
          %v10463 = vor.u32 %v10458, %v10462
          %v10465 = vshll.u32 %v10331, 16
          %v10467 = vrot.slane %v10465, 1
          %v10468 = vsel %vm9855, %v10463, %v10467
          %v10470 = vshrl.u32 %v10252, 16
          %v10472 = vshll.u32 %v10252, 16
          %v10474 = vrot.slane %v10472, 1
          %v10475 = vor.u32 %v10470, %v10474
          %v10477 = vshll.u32 %v10332, 16
          %v10479 = vrot.slane %v10477, 1
          %v10480 = vsel %vm9855, %v10475, %v10479
          %v10482 = vshrl.u32 %v10253, 16
          %v10484 = vshll.u32 %v10253, 16
          %v10486 = vrot.slane %v10484, 1
          %v10487 = vor.u32 %v10482, %v10486
          %v10489 = vshll.u32 %v10333, 16
          %v10491 = vrot.slane %v10489, 1
          %v10492 = vsel %vm9855, %v10487, %v10491
          %v10494 = vshrl.u32 %v10254, 16
          %v10496 = vshll.u32 %v10254, 16
          %v10498 = vrot.slane %v10496, 1
          %v10499 = vor.u32 %v10494, %v10498
          %v10501 = vshll.u32 %v10334, 16
          %v10503 = vrot.slane %v10501, 1
          %v10504 = vsel %vm9855, %v10499, %v10503
          %v10506 = vshrl.u32 %v10255, 16
          %v10508 = vshll.u32 %v10255, 16
          %v10510 = vrot.slane %v10508, 1
          %v10511 = vor.u32 %v10506, %v10510
          %v10513 = vshll.u32 %v10335, 16
          %v10515 = vrot.slane %v10513, 1
          %v10516 = vsel %vm9855, %v10511, %v10515
          %v10518 = vshrl.u32 %v10256, 16
          %v10520 = vshll.u32 %v10256, 16
          %v10522 = vrot.slane %v10520, 1
          %v10523 = vor.u32 %v10518, %v10522
          %v10525 = vshll.u32 %v10336, 16
          %v10527 = vrot.slane %v10525, 1
          %v10528 = vsel %vm9855, %v10523, %v10527
          %v10545 = vunpack.c.l.b16 %v9646
          %v10546 = vunpack.c.l.b16 %v9647
          %v10547 = vunpack.c.l.b16 %v9648
          %v10548 = vunpack.c.l.b16 %v9649
          %v10549 = vunpack.c.l.b16 %v9650
          %v10550 = vunpack.c.l.b16 %v9651
          %v10551 = vunpack.c.l.b16 %v9652
          %v10552 = vunpack.c.l.b16 %v9653
          %v10553 = vunpack.c.l.b16 %v9654
          %v10554 = vunpack.c.l.b16 %v9655
          %v10555 = vunpack.c.l.b16 %v9656
          %v10556 = vunpack.c.l.b16 %v9657
          %v10557 = vunpack.c.l.b16 %v9658
          %v10558 = vunpack.c.l.b16 %v9659
          %v10559 = vunpack.c.l.b16 %v9660
          %v10560 = vunpack.c.l.b16 %v9661
          %v10561 = vpack.c.b16 %v10210, %v10545
          %v10562 = vpack.c.b16 %v10212, %v10546
          %v10563 = vpack.c.b16 %v10214, %v10547
          %v10564 = vpack.c.b16 %v10216, %v10548
          %v10565 = vpack.c.b16 %v10218, %v10549
          %v10566 = vpack.c.b16 %v10220, %v10550
          %v10567 = vpack.c.b16 %v10222, %v10551
          %v10568 = vpack.c.b16 %v10224, %v10552
          %v10569 = vpack.c.b16 %v10226, %v10553
          %v10570 = vpack.c.b16 %v10228, %v10554
          %v10571 = vpack.c.b16 %v10230, %v10555
          %v10572 = vpack.c.b16 %v10232, %v10556
          %v10573 = vpack.c.b16 %v10234, %v10557
          %v10574 = vpack.c.b16 %v10236, %v10558
          %v10575 = vpack.c.b16 %v10238, %v10559
          %v10576 = vpack.c.b16 %v10240, %v10560
          %v10577 = vrot.slane %v10561, 1
          %v10578 = vrot.slane %v10321, 1
          %v10579 = vsel %vm10128, %v10577, %v10578
          %v10580 = vrot.slane %v10562, 1
          %v10581 = vrot.slane %v10322, 1
          %v10582 = vsel %vm10128, %v10580, %v10581
          %v10583 = vrot.slane %v10563, 1
          %v10584 = vrot.slane %v10323, 1
          %v10585 = vsel %vm10128, %v10583, %v10584
          %v10586 = vrot.slane %v10564, 1
          %v10587 = vrot.slane %v10324, 1
          %v10588 = vsel %vm10128, %v10586, %v10587
          %v10589 = vrot.slane %v10565, 1
          %v10590 = vrot.slane %v10325, 1
          %v10591 = vsel %vm10128, %v10589, %v10590
          %v10592 = vrot.slane %v10566, 1
          %v10593 = vrot.slane %v10326, 1
          %v10594 = vsel %vm10128, %v10592, %v10593
          %v10595 = vrot.slane %v10567, 1
          %v10596 = vrot.slane %v10327, 1
          %v10597 = vsel %vm10128, %v10595, %v10596
          %v10598 = vrot.slane %v10568, 1
          %v10599 = vrot.slane %v10328, 1
          %v10600 = vsel %vm10128, %v10598, %v10599
          %v10601 = vrot.slane %v10569, 1
          %v10602 = vrot.slane %v10329, 1
          %v10603 = vsel %vm10128, %v10601, %v10602
          %v10604 = vrot.slane %v10570, 1
          %v10605 = vrot.slane %v10330, 1
          %v10606 = vsel %vm10128, %v10604, %v10605
          %v10607 = vrot.slane %v10571, 1
          %v10608 = vrot.slane %v10331, 1
          %v10609 = vsel %vm10128, %v10607, %v10608
          %v10610 = vrot.slane %v10572, 1
          %v10611 = vrot.slane %v10332, 1
          %v10612 = vsel %vm10128, %v10610, %v10611
          %v10613 = vrot.slane %v10573, 1
          %v10614 = vrot.slane %v10333, 1
          %v10615 = vsel %vm10128, %v10613, %v10614
          %v10616 = vrot.slane %v10574, 1
          %v10617 = vrot.slane %v10334, 1
          %v10618 = vsel %vm10128, %v10616, %v10617
          %v10619 = vrot.slane %v10575, 1
          %v10620 = vrot.slane %v10335, 1
          %v10621 = vsel %vm10128, %v10619, %v10620
          %v10622 = vrot.slane %v10576, 1
          %v10623 = vrot.slane %v10336, 1
          %v10624 = vsel %vm10128, %v10622, %v10623
          %10625 = vrot.lane.b32.xlu0 %v10579, 64
          %v10626 = vpop.permute.xlu0 %10625
          %10627 = vrot.lane.b32.xlu0 %v10582, 64
          %v10628 = vpop.permute.xlu0 %10627
          %10629 = vrot.lane.b32.xlu0 %v10585, 64
          %v10630 = vpop.permute.xlu0 %10629
          %10631 = vrot.lane.b32.xlu0 %v10588, 64
          %v10632 = vpop.permute.xlu0 %10631
          %10633 = vrot.lane.b32.xlu0 %v10591, 64
          %v10634 = vpop.permute.xlu0 %10633
          %10635 = vrot.lane.b32.xlu0 %v10594, 64
          %v10636 = vpop.permute.xlu0 %10635
          %10637 = vrot.lane.b32.xlu0 %v10597, 64
          %v10638 = vpop.permute.xlu0 %10637
          %10639 = vrot.lane.b32.xlu0 %v10600, 64
          %v10640 = vpop.permute.xlu0 %10639
          %10641 = vrot.lane.b32.xlu0 %v10603, 64
          %v10642 = vpop.permute.xlu0 %10641
          %10643 = vrot.lane.b32.xlu0 %v10606, 64
          %v10644 = vpop.permute.xlu0 %10643
          %10645 = vrot.lane.b32.xlu0 %v10609, 64
          %v10646 = vpop.permute.xlu0 %10645
          %10647 = vrot.lane.b32.xlu0 %v10612, 64
          %v10648 = vpop.permute.xlu0 %10647
          %10649 = vrot.lane.b32.xlu0 %v10615, 64
          %v10650 = vpop.permute.xlu0 %10649
          %10651 = vrot.lane.b32.xlu0 %v10618, 64
          %v10652 = vpop.permute.xlu0 %10651
          %10653 = vrot.lane.b32.xlu0 %v10621, 64
          %v10654 = vpop.permute.xlu0 %10653
          %10655 = vrot.lane.b32.xlu0 %v10624, 64
          %v10656 = vpop.permute.xlu0 %10655
          %v10689 = vunpack.c.l.b16 %v9663
          %v10690 = vunpack.c.l.b16 %v9664
          %v10691 = vunpack.c.l.b16 %v9665
          %v10692 = vunpack.c.l.b16 %v9666
          %v10693 = vunpack.c.l.b16 %v9667
          %v10694 = vunpack.c.l.b16 %v9668
          %v10695 = vunpack.c.l.b16 %v9669
          %v10696 = vunpack.c.l.b16 %v9670
          %v10697 = vunpack.c.l.b16 %v9671
          %v10698 = vunpack.c.l.b16 %v9672
          %v10699 = vunpack.c.l.b16 %v9673
          %v10700 = vunpack.c.l.b16 %v9674
          %v10701 = vunpack.c.l.b16 %v9675
          %v10702 = vunpack.c.l.b16 %v9676
          %v10703 = vunpack.c.l.b16 %v9677
          %v10704 = vunpack.c.l.b16 %v9678
          %v10705 = vunpack.c.l.b16 %v9679
          %v10706 = vunpack.c.l.b16 %v9680
          %v10707 = vunpack.c.l.b16 %v9681
          %v10708 = vunpack.c.l.b16 %v9682
          %v10709 = vunpack.c.l.b16 %v9683
          %v10710 = vunpack.c.l.b16 %v9684
          %v10711 = vunpack.c.l.b16 %v9685
          %v10712 = vunpack.c.l.b16 %v9686
          %v10713 = vunpack.c.l.b16 %v9687
          %v10714 = vunpack.c.l.b16 %v9688
          %v10715 = vunpack.c.l.b16 %v9689
          %v10716 = vunpack.c.l.b16 %v9690
          %v10717 = vunpack.c.l.b16 %v9691
          %v10718 = vunpack.c.l.b16 %v9692
          %v10719 = vunpack.c.l.b16 %v9693
          %v10720 = vunpack.c.l.b16 %v9694
          %v10721 = vpack.c.b16 %v10690, %v10689
          %v10722 = vpack.c.b16 %v10692, %v10691
          %v10723 = vpack.c.b16 %v10694, %v10693
          %v10724 = vpack.c.b16 %v10696, %v10695
          %v10725 = vpack.c.b16 %v10698, %v10697
          %v10726 = vpack.c.b16 %v10700, %v10699
          %v10727 = vpack.c.b16 %v10702, %v10701
          %v10728 = vpack.c.b16 %v10704, %v10703
          %v10729 = vpack.c.b16 %v10706, %v10705
          %v10730 = vpack.c.b16 %v10708, %v10707
          %v10731 = vpack.c.b16 %v10710, %v10709
          %v10732 = vpack.c.b16 %v10712, %v10711
          %v10733 = vpack.c.b16 %v10714, %v10713
          %v10734 = vpack.c.b16 %v10716, %v10715
          %v10735 = vpack.c.b16 %v10718, %v10717
          %v10736 = vpack.c.b16 %v10720, %v10719
          %v10753 = vunpack.c.l.b16 %v9695
          %v10754 = vunpack.c.l.b16 %v9696
          %v10755 = vunpack.c.l.b16 %v9697
          %v10756 = vunpack.c.l.b16 %v9698
          %v10757 = vunpack.c.l.b16 %v9699
          %v10758 = vunpack.c.l.b16 %v9700
          %v10759 = vunpack.c.l.b16 %v9701
          %v10760 = vunpack.c.l.b16 %v9702
          %v10761 = vunpack.c.l.b16 %v9703
          %v10762 = vunpack.c.l.b16 %v9704
          %v10763 = vunpack.c.l.b16 %v9705
          %v10764 = vunpack.c.l.b16 %v9706
          %v10765 = vunpack.c.l.b16 %v9707
          %v10766 = vunpack.c.l.b16 %v9708
          %v10767 = vunpack.c.l.b16 %v9709
          %v10768 = vunpack.c.l.b16 %v9710
          %v10769 = vpack.c.b16 %v10753, %v10753
          %v10770 = vpack.c.b16 %v10754, %v10754
          %v10771 = vpack.c.b16 %v10755, %v10755
          %v10772 = vpack.c.b16 %v10756, %v10756
          %v10773 = vpack.c.b16 %v10757, %v10757
          %v10774 = vpack.c.b16 %v10758, %v10758
          %v10775 = vpack.c.b16 %v10759, %v10759
          %v10776 = vpack.c.b16 %v10760, %v10760
          %v10777 = vpack.c.b16 %v10761, %v10761
          %v10778 = vpack.c.b16 %v10762, %v10762
          %v10779 = vpack.c.b16 %v10763, %v10763
          %v10780 = vpack.c.b16 %v10764, %v10764
          %v10781 = vpack.c.b16 %v10765, %v10765
          %v10782 = vpack.c.b16 %v10766, %v10766
          %v10783 = vpack.c.b16 %v10767, %v10767
          %v10784 = vpack.c.b16 %v10768, %v10768
          %v10786 = vshrl.u32 %v10721, 16
          %v10788 = vshll.u32 %v10721, 16
          %v10790 = vrot.slane %v10788, 1
          %v10791 = vor.u32 %v10786, %v10790
          %v10793 = vshll.u32 %v10769, 16
          %v10795 = vrot.slane %v10793, 1
          %v10796 = vsel %vm9855, %v10791, %v10795
          %v10798 = vshrl.u32 %v10722, 16
          %v10800 = vshll.u32 %v10722, 16
          %v10802 = vrot.slane %v10800, 1
          %v10803 = vor.u32 %v10798, %v10802
          %v10805 = vshll.u32 %v10770, 16
          %v10807 = vrot.slane %v10805, 1
          %v10808 = vsel %vm9855, %v10803, %v10807
          %v10810 = vshrl.u32 %v10723, 16
          %v10812 = vshll.u32 %v10723, 16
          %v10814 = vrot.slane %v10812, 1
          %v10815 = vor.u32 %v10810, %v10814
          %v10817 = vshll.u32 %v10771, 16
          %v10819 = vrot.slane %v10817, 1
          %v10820 = vsel %vm9855, %v10815, %v10819
          %v10822 = vshrl.u32 %v10724, 16
          %v10824 = vshll.u32 %v10724, 16
          %v10826 = vrot.slane %v10824, 1
          %v10827 = vor.u32 %v10822, %v10826
          %v10829 = vshll.u32 %v10772, 16
          %v10831 = vrot.slane %v10829, 1
          %v10832 = vsel %vm9855, %v10827, %v10831
          %v10834 = vshrl.u32 %v10725, 16
          %v10836 = vshll.u32 %v10725, 16
          %v10838 = vrot.slane %v10836, 1
          %v10839 = vor.u32 %v10834, %v10838
          %v10841 = vshll.u32 %v10773, 16
          %v10843 = vrot.slane %v10841, 1
          %v10844 = vsel %vm9855, %v10839, %v10843
          %v10846 = vshrl.u32 %v10726, 16
          %v10848 = vshll.u32 %v10726, 16
          %v10850 = vrot.slane %v10848, 1
          %v10851 = vor.u32 %v10846, %v10850
          %v10853 = vshll.u32 %v10774, 16
          %v10855 = vrot.slane %v10853, 1
          %v10856 = vsel %vm9855, %v10851, %v10855
          %v10858 = vshrl.u32 %v10727, 16
          %v10860 = vshll.u32 %v10727, 16
          %v10862 = vrot.slane %v10860, 1
          %v10863 = vor.u32 %v10858, %v10862
          %v10865 = vshll.u32 %v10775, 16
          %v10867 = vrot.slane %v10865, 1
          %v10868 = vsel %vm9855, %v10863, %v10867
          %v10870 = vshrl.u32 %v10728, 16
          %v10872 = vshll.u32 %v10728, 16
          %v10874 = vrot.slane %v10872, 1
          %v10875 = vor.u32 %v10870, %v10874
          %v10877 = vshll.u32 %v10776, 16
          %v10879 = vrot.slane %v10877, 1
          %v10880 = vsel %vm9855, %v10875, %v10879
          %v10882 = vshrl.u32 %v10729, 16
          %v10884 = vshll.u32 %v10729, 16
          %v10886 = vrot.slane %v10884, 1
          %v10887 = vor.u32 %v10882, %v10886
          %v10889 = vshll.u32 %v10777, 16
          %v10891 = vrot.slane %v10889, 1
          %v10892 = vsel %vm9855, %v10887, %v10891
          %v10894 = vshrl.u32 %v10730, 16
          %v10896 = vshll.u32 %v10730, 16
          %v10898 = vrot.slane %v10896, 1
          %v10899 = vor.u32 %v10894, %v10898
          %v10901 = vshll.u32 %v10778, 16
          %v10903 = vrot.slane %v10901, 1
          %v10904 = vsel %vm9855, %v10899, %v10903
          %v10906 = vshrl.u32 %v10731, 16
          %v10908 = vshll.u32 %v10731, 16
          %v10910 = vrot.slane %v10908, 1
          %v10911 = vor.u32 %v10906, %v10910
          %v10913 = vshll.u32 %v10779, 16
          %v10915 = vrot.slane %v10913, 1
          %v10916 = vsel %vm9855, %v10911, %v10915
          %v10918 = vshrl.u32 %v10732, 16
          %v10920 = vshll.u32 %v10732, 16
          %v10922 = vrot.slane %v10920, 1
          %v10923 = vor.u32 %v10918, %v10922
          %v10925 = vshll.u32 %v10780, 16
          %v10927 = vrot.slane %v10925, 1
          %v10928 = vsel %vm9855, %v10923, %v10927
          %v10930 = vshrl.u32 %v10733, 16
          %v10932 = vshll.u32 %v10733, 16
          %v10934 = vrot.slane %v10932, 1
          %v10935 = vor.u32 %v10930, %v10934
          %v10937 = vshll.u32 %v10781, 16
          %v10939 = vrot.slane %v10937, 1
          %v10940 = vsel %vm9855, %v10935, %v10939
          %v10942 = vshrl.u32 %v10734, 16
          %v10944 = vshll.u32 %v10734, 16
          %v10946 = vrot.slane %v10944, 1
          %v10947 = vor.u32 %v10942, %v10946
          %v10949 = vshll.u32 %v10782, 16
          %v10951 = vrot.slane %v10949, 1
          %v10952 = vsel %vm9855, %v10947, %v10951
          %v10954 = vshrl.u32 %v10735, 16
          %v10956 = vshll.u32 %v10735, 16
          %v10958 = vrot.slane %v10956, 1
          %v10959 = vor.u32 %v10954, %v10958
          %v10961 = vshll.u32 %v10783, 16
          %v10963 = vrot.slane %v10961, 1
          %v10964 = vsel %vm9855, %v10959, %v10963
          %v10966 = vshrl.u32 %v10736, 16
          %v10968 = vshll.u32 %v10736, 16
          %v10970 = vrot.slane %v10968, 1
          %v10971 = vor.u32 %v10966, %v10970
          %v10973 = vshll.u32 %v10784, 16
          %v10975 = vrot.slane %v10973, 1
          %v10976 = vsel %vm9855, %v10971, %v10975
          %10977 = vrot.lane.b32.xlu0 %v10796, 64
          %v10978 = vpop.permute.xlu0 %10977
          %10979 = vrot.lane.b32.xlu0 %v10808, 64
          %v10980 = vpop.permute.xlu0 %10979
          %10981 = vrot.lane.b32.xlu0 %v10820, 64
          %v10982 = vpop.permute.xlu0 %10981
          %10983 = vrot.lane.b32.xlu0 %v10832, 64
          %v10984 = vpop.permute.xlu0 %10983
          %10985 = vrot.lane.b32.xlu0 %v10844, 64
          %v10986 = vpop.permute.xlu0 %10985
          %10987 = vrot.lane.b32.xlu0 %v10856, 64
          %v10988 = vpop.permute.xlu0 %10987
          %10989 = vrot.lane.b32.xlu0 %v10868, 64
          %v10990 = vpop.permute.xlu0 %10989
          %10991 = vrot.lane.b32.xlu0 %v10880, 64
          %v10992 = vpop.permute.xlu0 %10991
          %10993 = vrot.lane.b32.xlu0 %v10892, 64
          %v10994 = vpop.permute.xlu0 %10993
          %10995 = vrot.lane.b32.xlu0 %v10904, 64
          %v10996 = vpop.permute.xlu0 %10995
          %10997 = vrot.lane.b32.xlu0 %v10916, 64
          %v10998 = vpop.permute.xlu0 %10997
          %10999 = vrot.lane.b32.xlu0 %v10928, 64
          %v11000 = vpop.permute.xlu0 %10999
          %11001 = vrot.lane.b32.xlu0 %v10940, 64
          %v11002 = vpop.permute.xlu0 %11001
          %11003 = vrot.lane.b32.xlu0 %v10952, 64
          %v11004 = vpop.permute.xlu0 %11003
          %11005 = vrot.lane.b32.xlu0 %v10964, 64
          %v11006 = vpop.permute.xlu0 %11005
          %11007 = vrot.lane.b32.xlu0 %v10976, 64
          %v11008 = vpop.permute.xlu0 %11007
          %v11025 = vunpack.c.l.b16 %v9711
          %v11026 = vunpack.c.l.b16 %v9712
          %v11027 = vunpack.c.l.b16 %v9713
          %v11028 = vunpack.c.l.b16 %v9714
          %v11029 = vunpack.c.l.b16 %v9715
          %v11030 = vunpack.c.l.b16 %v9716
          %v11031 = vunpack.c.l.b16 %v9717
          %v11032 = vunpack.c.l.b16 %v9718
          %v11033 = vunpack.c.l.b16 %v9719
          %v11034 = vunpack.c.l.b16 %v9720
          %v11035 = vunpack.c.l.b16 %v9721
          %v11036 = vunpack.c.l.b16 %v9722
          %v11037 = vunpack.c.l.b16 %v9723
          %v11038 = vunpack.c.l.b16 %v9724
          %v11039 = vunpack.c.l.b16 %v9725
          %v11040 = vunpack.c.l.b16 %v9726
          %v11041 = vpack.c.b16 %v10690, %v11025
          %v11042 = vpack.c.b16 %v10692, %v11026
          %v11043 = vpack.c.b16 %v10694, %v11027
          %v11044 = vpack.c.b16 %v10696, %v11028
          %v11045 = vpack.c.b16 %v10698, %v11029
          %v11046 = vpack.c.b16 %v10700, %v11030
          %v11047 = vpack.c.b16 %v10702, %v11031
          %v11048 = vpack.c.b16 %v10704, %v11032
          %v11049 = vpack.c.b16 %v10706, %v11033
          %v11050 = vpack.c.b16 %v10708, %v11034
          %v11051 = vpack.c.b16 %v10710, %v11035
          %v11052 = vpack.c.b16 %v10712, %v11036
          %v11053 = vpack.c.b16 %v10714, %v11037
          %v11054 = vpack.c.b16 %v10716, %v11038
          %v11055 = vpack.c.b16 %v10718, %v11039
          %v11056 = vpack.c.b16 %v10720, %v11040
          %v11057 = vrot.slane %v11041, 1
          %v11058 = vrot.slane %v10769, 1
          %v11059 = vsel %vm10128, %v11057, %v11058
          %v11060 = vrot.slane %v11042, 1
          %v11061 = vrot.slane %v10770, 1
          %v11062 = vsel %vm10128, %v11060, %v11061
          %v11063 = vrot.slane %v11043, 1
          %v11064 = vrot.slane %v10771, 1
          %v11065 = vsel %vm10128, %v11063, %v11064
          %v11066 = vrot.slane %v11044, 1
          %v11067 = vrot.slane %v10772, 1
          %v11068 = vsel %vm10128, %v11066, %v11067
          %v11069 = vrot.slane %v11045, 1
          %v11070 = vrot.slane %v10773, 1
          %v11071 = vsel %vm10128, %v11069, %v11070
          %v11072 = vrot.slane %v11046, 1
          %v11073 = vrot.slane %v10774, 1
          %v11074 = vsel %vm10128, %v11072, %v11073
          %v11075 = vrot.slane %v11047, 1
          %v11076 = vrot.slane %v10775, 1
          %v11077 = vsel %vm10128, %v11075, %v11076
          %v11078 = vrot.slane %v11048, 1
          %v11079 = vrot.slane %v10776, 1
          %v11080 = vsel %vm10128, %v11078, %v11079
          %v11081 = vrot.slane %v11049, 1
          %v11082 = vrot.slane %v10777, 1
          %v11083 = vsel %vm10128, %v11081, %v11082
          %v11084 = vrot.slane %v11050, 1
          %v11085 = vrot.slane %v10778, 1
          %v11086 = vsel %vm10128, %v11084, %v11085
          %v11087 = vrot.slane %v11051, 1
          %v11088 = vrot.slane %v10779, 1
          %v11089 = vsel %vm10128, %v11087, %v11088
          %v11090 = vrot.slane %v11052, 1
          %v11091 = vrot.slane %v10780, 1
          %v11092 = vsel %vm10128, %v11090, %v11091
          %v11093 = vrot.slane %v11053, 1
          %v11094 = vrot.slane %v10781, 1
          %v11095 = vsel %vm10128, %v11093, %v11094
          %v11096 = vrot.slane %v11054, 1
          %v11097 = vrot.slane %v10782, 1
          %v11098 = vsel %vm10128, %v11096, %v11097
          %v11099 = vrot.slane %v11055, 1
          %v11100 = vrot.slane %v10783, 1
          %v11101 = vsel %vm10128, %v11099, %v11100
          %v11102 = vrot.slane %v11056, 1
          %v11103 = vrot.slane %v10784, 1
          %v11104 = vsel %vm10128, %v11102, %v11103
          %vm11105 = vcmask 523264
          %v11107 = vsel %vm11105, %v9791, %v10049
          %v11110 = vsel %vm11105, %v9792, %v10051
          %v11113 = vsel %vm11105, %v9793, %v10053
          %v11116 = vsel %vm11105, %v9794, %v10055
          %v11119 = vsel %vm11105, %v9795, %v10057
          %v11122 = vsel %vm11105, %v9796, %v10059
          %v11125 = vsel %vm11105, %v9797, %v10061
          %v11128 = vsel %vm11105, %v9798, %v10063
          %v11131 = vsel %vm11105, %v9799, %v10065
          %v11134 = vsel %vm11105, %v9800, %v10067
          %v11137 = vsel %vm11105, %v9801, %v10069
          %v11140 = vsel %vm11105, %v9802, %v10071
          %v11143 = vsel %vm11105, %v9803, %v10073
          %v11146 = vsel %vm11105, %v9804, %v10075
          %v11149 = vsel %vm11105, %v9805, %v10077
          %v11152 = vsel %vm11105, %v9806, %v10079
          %v11156 = vsel %vm11105, %v10131, %v10258
          %v11160 = vsel %vm11105, %v10134, %v10260
          %v11164 = vsel %vm11105, %v10137, %v10262
          %v11168 = vsel %vm11105, %v10140, %v10264
          %v11172 = vsel %vm11105, %v10143, %v10266
          %v11176 = vsel %vm11105, %v10146, %v10268
          %v11180 = vsel %vm11105, %v10149, %v10270
          %v11184 = vsel %vm11105, %v10152, %v10272
          %v11188 = vsel %vm11105, %v10155, %v10274
          %v11192 = vsel %vm11105, %v10158, %v10276
          %v11196 = vsel %vm11105, %v10161, %v10278
          %v11200 = vsel %vm11105, %v10164, %v10280
          %v11204 = vsel %vm11105, %v10167, %v10282
          %v11208 = vsel %vm11105, %v10170, %v10284
          %v11212 = vsel %vm11105, %v10173, %v10286
          %v11216 = vsel %vm11105, %v10176, %v10288
          %v11220 = vsel %vm11105, %v10348, %v10626
          %v11224 = vsel %vm11105, %v10360, %v10628
          %v11228 = vsel %vm11105, %v10372, %v10630
          %v11232 = vsel %vm11105, %v10384, %v10632
          %v11236 = vsel %vm11105, %v10396, %v10634
          %v11240 = vsel %vm11105, %v10408, %v10636
          %v11244 = vsel %vm11105, %v10420, %v10638
          %v11248 = vsel %vm11105, %v10432, %v10640
          %v11252 = vsel %vm11105, %v10444, %v10642
          %v11256 = vsel %vm11105, %v10456, %v10644
          %v11260 = vsel %vm11105, %v10468, %v10646
          %v11264 = vsel %vm11105, %v10480, %v10648
          %v11268 = vsel %vm11105, %v10492, %v10650
          %v11272 = vsel %vm11105, %v10504, %v10652
          %v11276 = vsel %vm11105, %v10516, %v10654
          %v11280 = vsel %vm11105, %v10528, %v10656
          %v11283 = vsel %vm11105, %v10721, %v10978
          %v11286 = vsel %vm11105, %v10722, %v10980
          %v11289 = vsel %vm11105, %v10723, %v10982
          %v11292 = vsel %vm11105, %v10724, %v10984
          %v11295 = vsel %vm11105, %v10725, %v10986
          %v11298 = vsel %vm11105, %v10726, %v10988
          %v11301 = vsel %vm11105, %v10727, %v10990
          %v11304 = vsel %vm11105, %v10728, %v10992
          %v11307 = vsel %vm11105, %v10729, %v10994
          %v11310 = vsel %vm11105, %v10730, %v10996
          %v11313 = vsel %vm11105, %v10731, %v10998
          %v11316 = vsel %vm11105, %v10732, %v11000
          %v11319 = vsel %vm11105, %v10733, %v11002
          %v11322 = vsel %vm11105, %v10734, %v11004
          %v11325 = vsel %vm11105, %v10735, %v11006
          %v11328 = vsel %vm11105, %v10736, %v11008
          %v11402 = vunpack.c.l.b16 %v9461
          %v11403 = vunpack.c.l.b16 %v9462
          %v11404 = vunpack.c.l.b16 %v9463
          %v11405 = vunpack.c.l.b16 %v9464
          %v11406 = vunpack.c.l.b16 %v9465
          %v11407 = vunpack.c.l.b16 %v9466
          %v11408 = vunpack.c.l.b16 %v9467
          %v11409 = vunpack.c.l.b16 %v9468
          %v11410 = vunpack.c.l.b16 %v9469
          %v11411 = vunpack.c.l.b16 %v9470
          %v11412 = vunpack.c.l.b16 %v9471
          %v11413 = vunpack.c.l.b16 %v9472
          %v11414 = vunpack.c.l.b16 %v9473
          %v11415 = vunpack.c.l.b16 %v9474
          %v11416 = vunpack.c.l.b16 %v9475
          %v11417 = vunpack.c.l.b16 %v9476
          %v11418 = vunpack.c.l.b16 %v9477
          %v11419 = vunpack.c.l.b16 %v9478
          %v11420 = vunpack.c.l.b16 %v9479
          %v11421 = vunpack.c.l.b16 %v9480
          %v11422 = vunpack.c.l.b16 %v9481
          %v11423 = vunpack.c.l.b16 %v9482
          %v11424 = vunpack.c.l.b16 %v9483
          %v11425 = vunpack.c.l.b16 %v9484
          %v11426 = vunpack.c.l.b16 %v9485
          %v11427 = vunpack.c.l.b16 %v9486
          %v11428 = vunpack.c.l.b16 %v9487
          %v11429 = vunpack.c.l.b16 %v9488
          %v11430 = vunpack.c.l.b16 %v9489
          %v11431 = vunpack.c.l.b16 %v9490
          %v11432 = vunpack.c.l.b16 %v9491
          %v11433 = vunpack.c.l.b16 %v9492
          %v11434 = vunpack.c.l.b16 %v9493
          %v11435 = vunpack.c.l.b16 %v9494
          %v11436 = vunpack.c.l.b16 %v9495
          %v11437 = vunpack.c.l.b16 %v9496
          %v11438 = vunpack.c.l.b16 %v9497
          %v11439 = vunpack.c.l.b16 %v9498
          %v11440 = vunpack.c.l.b16 %v9499
          %v11441 = vunpack.c.l.b16 %v9500
          %v11442 = vunpack.c.l.b16 %v9501
          %v11443 = vunpack.c.l.b16 %v9502
          %v11444 = vunpack.c.l.b16 %v9503
          %v11445 = vunpack.c.l.b16 %v9504
          %v11446 = vunpack.c.l.b16 %v9505
          %v11447 = vunpack.c.l.b16 %v9506
          %v11448 = vunpack.c.l.b16 %v9507
          %v11449 = vunpack.c.l.b16 %v9508
          %v11450 = vunpack.c.l.b16 %v9509
          %v11451 = vunpack.c.l.b16 %v9510
          %v11452 = vunpack.c.l.b16 %v9511
          %v11453 = vunpack.c.l.b16 %v9512
          %v11454 = vunpack.c.l.b16 %v9513
          %v11455 = vunpack.c.l.b16 %v9514
          %v11456 = vunpack.c.l.b16 %v9515
          %v11457 = vunpack.c.l.b16 %v9516
          %v11458 = vunpack.c.l.b16 %v9517
          %v11459 = vunpack.c.l.b16 %v9518
          %v11460 = vunpack.c.l.b16 %v9519
          %v11461 = vunpack.c.l.b16 %v9520
          %v11462 = vunpack.c.l.b16 %v9521
          %v11463 = vunpack.c.l.b16 %v9522
          %v11464 = vunpack.c.l.b16 %v9523
          %v11465 = vunpack.c.l.b16 %v9524
          %v11466 = vunpack.c.l.b16 %v9525
          %v11467 = vunpack.c.l.b16 %v9526
          %v11468 = vunpack.c.l.b16 %v9527
          %v11469 = vunpack.c.l.b16 %v9528
          %v11470 = vunpack.c.l.b16 %v9529
          %v11471 = vunpack.c.l.b16 %v9530
          %v11472 = vunpack.c.l.b16 %v9531
          %v11473 = vunpack.c.l.b16 %v9532
          %v11474 = vpack.c.b16 %v11403, %v11402
          %v11475 = vpack.c.b16 %v11405, %v11404
          %v11476 = vpack.c.b16 %v11407, %v11406
          %v11477 = vpack.c.b16 %v11409, %v11408
          %v11478 = vpack.c.b16 %v11411, %v11410
          %v11479 = vpack.c.b16 %v11413, %v11412
          %v11480 = vpack.c.b16 %v11415, %v11414
          %v11481 = vpack.c.b16 %v11417, %v11416
          %v11482 = vpack.c.b16 %v11419, %v11418
          %v11483 = vpack.c.b16 %v11421, %v11420
          %v11484 = vpack.c.b16 %v11423, %v11422
          %v11485 = vpack.c.b16 %v11425, %v11424
          %v11486 = vpack.c.b16 %v11427, %v11426
          %v11487 = vpack.c.b16 %v11429, %v11428
          %v11488 = vpack.c.b16 %v11431, %v11430
          %v11489 = vpack.c.b16 %v11433, %v11432
          %v11490 = vpack.c.b16 %v11435, %v11434
          %v11491 = vpack.c.b16 %v11437, %v11436
          %v11492 = vpack.c.b16 %v11439, %v11438
          %v11493 = vpack.c.b16 %v11441, %v11440
          %v11494 = vpack.c.b16 %v11443, %v11442
          %v11495 = vpack.c.b16 %v11445, %v11444
          %v11496 = vpack.c.b16 %v11447, %v11446
          %v11497 = vpack.c.b16 %v11449, %v11448
          %v11498 = vpack.c.b16 %v11451, %v11450
          %v11499 = vpack.c.b16 %v11453, %v11452
          %v11500 = vpack.c.b16 %v11455, %v11454
          %v11501 = vpack.c.b16 %v11457, %v11456
          %v11502 = vpack.c.b16 %v11459, %v11458
          %v11503 = vpack.c.b16 %v11461, %v11460
          %v11504 = vpack.c.b16 %v11463, %v11462
          %v11505 = vpack.c.b16 %v11465, %v11464
          %v11506 = vpack.c.b16 %v11467, %v11466
          %v11507 = vpack.c.b16 %v11469, %v11468
          %v11508 = vpack.c.b16 %v11471, %v11470
          %v11509 = vpack.c.b16 %v11473, %v11472
          %v11547 = vsel %vm11105, %v11059, 0
          %v11550 = vsel %vm11105, %v11062, 0
          %v11553 = vsel %vm11105, %v11065, 0
          %v11556 = vsel %vm11105, %v11068, 0
          %v11559 = vsel %vm11105, %v11071, 0
          %v11562 = vsel %vm11105, %v11074, 0
          %v11565 = vsel %vm11105, %v11077, 0
          %v11568 = vsel %vm11105, %v11080, 0
          %v11571 = vsel %vm11105, %v11083, 0
          %v11574 = vsel %vm11105, %v11086, 0
          %v11577 = vsel %vm11105, %v11089, 0
          %v11580 = vsel %vm11105, %v11092, 0
          %v11583 = vsel %vm11105, %v11095, 0
          %v11586 = vsel %vm11105, %v11098, 0
          %v11589 = vsel %vm11105, %v11101, 0
          %v11592 = vsel %vm11105, %v11104, 0
          %11594 = vmatprep.subr.bf16.mxu0 0
          %11595 = vmatpush1.bf16.msra.mxu0 %v11481
          %11596 = vmatprep.subr.bf16.mxu0 0
          %11597 = vmatpush1.bf16.msra.mxu0 %v11480
          %11598 = vmatprep.subr.bf16.mxu0 0
          %11599 = vmatpush1.bf16.msra.mxu0 %v11479
          %11600 = vmatprep.subr.bf16.mxu0 0
          %11601 = vmatpush1.bf16.msra.mxu0 %v11478
          %11602 = vmatprep.subr.bf16.mxu0 0
          %11603 = vmatpush1.bf16.msra.mxu0 %v11477
          %11604 = vmatprep.subr.bf16.mxu0 0
          %11605 = vmatpush1.bf16.msra.mxu0 %v11476
          %11606 = vmatprep.subr.bf16.mxu0 0
          %11607 = vmatpush1.bf16.msra.mxu0 %v11475
          %11608 = vmatprep.subr.bf16.mxu0 0
          %11609 = vmatpush1.bf16.msra.mxu0 %v11474
          %11610 = vmatprep.subr.bf16.mxu0 0
          %11611 = vmatpush2.bf16.msra.mxu0 %v11489
          %11612 = vmatprep.subr.bf16.mxu0 0
          %11613 = vmatpush2.bf16.msra.mxu0 %v11488
          %11614 = vmatprep.subr.bf16.mxu0 0
          %11615 = vmatpush2.bf16.msra.mxu0 %v11487
          %11616 = vmatprep.subr.bf16.mxu0 0
          %11617 = vmatpush2.bf16.msra.mxu0 %v11486
          %11618 = vmatprep.subr.bf16.mxu0 0
          %11619 = vmatpush2.bf16.msra.mxu0 %v11485
          %11620 = vmatprep.subr.bf16.mxu0 0
          %11621 = vmatpush2.bf16.msra.mxu0 %v11484
          %11622 = vmatprep.subr.bf16.mxu0 0
          %11623 = vmatpush2.bf16.msra.mxu0 %v11483
          %11624 = vmatprep.subr.bf16.mxu0 0
          %11625 = vmatpush2.bf16.msra.mxu0 %v11482
          %11626 = vmatprep.mubr.bf16.mxu0 %v11156
          %11627 = vmatmul.mubr.bf16.gmra.mxu0 %v11107
          %v11628 = vpop.f32.mrf.mxu0
          %v11629 = vadd.f32 0.0, %v11628
          %v11630 = vpop.f32.mrf.mxu0
          %v11631 = vpop.f32.mrf.mxu0
          %v11632 = vadd.f32 0.0, %v11631
          %v11633 = vpop.f32.mrf.mxu0
          %11634 = vmatprep.mubr.bf16.mxu0 %v11160
          %11635 = vmatmul.mubr.bf16.gmra.mxu0 %v11110
          %v11636 = vpop.f32.mrf.mxu0
          %v11637 = vadd.f32 0.0, %v11636
          %v11638 = vpop.f32.mrf.mxu0
          %v11639 = vpop.f32.mrf.mxu0
          %v11640 = vadd.f32 0.0, %v11639
          %v11641 = vpop.f32.mrf.mxu0
          %11642 = vmatprep.mubr.bf16.mxu0 %v11164
          %11643 = vmatmul.mubr.bf16.gmra.mxu0 %v11113
          %v11644 = vpop.f32.mrf.mxu0
          %v11645 = vadd.f32 0.0, %v11644
          %v11646 = vpop.f32.mrf.mxu0
          %v11647 = vpop.f32.mrf.mxu0
          %v11648 = vadd.f32 0.0, %v11647
          %v11649 = vpop.f32.mrf.mxu0
          %11650 = vmatprep.mubr.bf16.mxu0 %v11168
          %11651 = vmatmul.mubr.bf16.gmra.mxu0 %v11116
          %v11652 = vpop.f32.mrf.mxu0
          %v11653 = vadd.f32 0.0, %v11652
          %v11654 = vpop.f32.mrf.mxu0
          %v11655 = vpop.f32.mrf.mxu0
          %v11656 = vadd.f32 0.0, %v11655
          %v11657 = vpop.f32.mrf.mxu0
          %11658 = vmatprep.mubr.bf16.mxu0 %v11172
          %11659 = vmatmul.mubr.bf16.gmra.mxu0 %v11119
          %v11660 = vpop.f32.mrf.mxu0
          %v11661 = vadd.f32 0.0, %v11660
          %v11662 = vpop.f32.mrf.mxu0
          %v11663 = vpop.f32.mrf.mxu0
          %v11664 = vadd.f32 0.0, %v11663
          %v11665 = vpop.f32.mrf.mxu0
          %11666 = vmatprep.mubr.bf16.mxu0 %v11176
          %11667 = vmatmul.mubr.bf16.gmra.mxu0 %v11122
          %v11668 = vpop.f32.mrf.mxu0
          %v11669 = vadd.f32 0.0, %v11668
          %v11670 = vpop.f32.mrf.mxu0
          %v11671 = vpop.f32.mrf.mxu0
          %v11672 = vadd.f32 0.0, %v11671
          %v11673 = vpop.f32.mrf.mxu0
          %11674 = vmatprep.mubr.bf16.mxu0 %v11180
          %11675 = vmatmul.mubr.bf16.gmra.mxu0 %v11125
          %v11676 = vpop.f32.mrf.mxu0
          %v11677 = vadd.f32 0.0, %v11676
          %v11678 = vpop.f32.mrf.mxu0
          %v11679 = vpop.f32.mrf.mxu0
          %v11680 = vadd.f32 0.0, %v11679
          %v11681 = vpop.f32.mrf.mxu0
          %11682 = vmatprep.mubr.bf16.mxu0 %v11184
          %11683 = vmatmul.mubr.bf16.gmra.mxu0 %v11128
          %v11684 = vpop.f32.mrf.mxu0
          %v11685 = vadd.f32 0.0, %v11684
          %v11686 = vpop.f32.mrf.mxu0
          %v11687 = vpop.f32.mrf.mxu0
          %v11688 = vadd.f32 0.0, %v11687
          %v11689 = vpop.f32.mrf.mxu0
          %11690 = vmatprep.mubr.bf16.mxu0 %v11188
          %11691 = vmatmul.mubr.bf16.gmra.mxu0 %v11131
          %v11692 = vpop.f32.mrf.mxu0
          %v11693 = vadd.f32 0.0, %v11692
          %v11694 = vpop.f32.mrf.mxu0
          %v11695 = vpop.f32.mrf.mxu0
          %v11696 = vadd.f32 0.0, %v11695
          %v11697 = vpop.f32.mrf.mxu0
          %11698 = vmatprep.mubr.bf16.mxu0 %v11192
          %11699 = vmatmul.mubr.bf16.gmra.mxu0 %v11134
          %v11700 = vpop.f32.mrf.mxu0
          %v11701 = vadd.f32 0.0, %v11700
          %v11702 = vpop.f32.mrf.mxu0
          %v11703 = vpop.f32.mrf.mxu0
          %v11704 = vadd.f32 0.0, %v11703
          %v11705 = vpop.f32.mrf.mxu0
          %11706 = vmatprep.mubr.bf16.mxu0 %v11196
          %11707 = vmatmul.mubr.bf16.gmra.mxu0 %v11137
          %v11708 = vpop.f32.mrf.mxu0
          %v11709 = vadd.f32 0.0, %v11708
          %v11710 = vpop.f32.mrf.mxu0
          %v11711 = vpop.f32.mrf.mxu0
          %v11712 = vadd.f32 0.0, %v11711
          %v11713 = vpop.f32.mrf.mxu0
          %11714 = vmatprep.mubr.bf16.mxu0 %v11200
          %11715 = vmatmul.mubr.bf16.gmra.mxu0 %v11140
          %v11716 = vpop.f32.mrf.mxu0
          %v11717 = vadd.f32 0.0, %v11716
          %v11718 = vpop.f32.mrf.mxu0
          %v11719 = vpop.f32.mrf.mxu0
          %v11720 = vadd.f32 0.0, %v11719
          %v11721 = vpop.f32.mrf.mxu0
          %11722 = vmatprep.mubr.bf16.mxu0 %v11204
          %11723 = vmatmul.mubr.bf16.gmra.mxu0 %v11143
          %v11724 = vpop.f32.mrf.mxu0
          %v11725 = vadd.f32 0.0, %v11724
          %v11726 = vpop.f32.mrf.mxu0
          %v11727 = vpop.f32.mrf.mxu0
          %v11728 = vadd.f32 0.0, %v11727
          %v11729 = vpop.f32.mrf.mxu0
          %11730 = vmatprep.mubr.bf16.mxu0 %v11208
          %11731 = vmatmul.mubr.bf16.gmra.mxu0 %v11146
          %v11732 = vpop.f32.mrf.mxu0
          %v11733 = vadd.f32 0.0, %v11732
          %v11734 = vpop.f32.mrf.mxu0
          %v11735 = vpop.f32.mrf.mxu0
          %v11736 = vadd.f32 0.0, %v11735
          %v11737 = vpop.f32.mrf.mxu0
          %11738 = vmatprep.mubr.bf16.mxu0 %v11212
          %11739 = vmatmul.mubr.bf16.gmra.mxu0 %v11149
          %v11740 = vpop.f32.mrf.mxu0
          %v11741 = vadd.f32 0.0, %v11740
          %v11742 = vpop.f32.mrf.mxu0
          %v11743 = vpop.f32.mrf.mxu0
          %v11744 = vadd.f32 0.0, %v11743
          %v11745 = vpop.f32.mrf.mxu0
          %11746 = vmatprep.mubr.bf16.mxu0 %v11216
          %11747 = vmatmul.mubr.bf16.gmra.mxu0 %v11152
          %v11748 = vpop.f32.mrf.mxu0
          %v11749 = vadd.f32 0.0, %v11748
          %v11750 = vpop.f32.mrf.mxu0
          %v11751 = vpop.f32.mrf.mxu0
          %v11752 = vadd.f32 0.0, %v11751
          %v11753 = vpop.f32.mrf.mxu0
          %11754 = vdwg.mxu0
          %11755 = vmatprep.subr.bf16.mxu0 0
          %11756 = vmatpush1.bf16.msra.mxu0 %v11497
          %11757 = vmatprep.subr.bf16.mxu0 0
          %11758 = vmatpush1.bf16.msra.mxu0 %v11496
          %11759 = vmatprep.subr.bf16.mxu0 0
          %11760 = vmatpush1.bf16.msra.mxu0 %v11495
          %11761 = vmatprep.subr.bf16.mxu0 0
          %11762 = vmatpush1.bf16.msra.mxu0 %v11494
          %11763 = vmatprep.subr.bf16.mxu0 0
          %11764 = vmatpush1.bf16.msra.mxu0 %v11493
          %11765 = vmatprep.subr.bf16.mxu0 0
          %11766 = vmatpush1.bf16.msra.mxu0 %v11492
          %11767 = vmatprep.subr.bf16.mxu0 0
          %11768 = vmatpush1.bf16.msra.mxu0 %v11491
          %11769 = vmatprep.subr.bf16.mxu0 0
          %11770 = vmatpush1.bf16.msra.mxu0 %v11490
          %11771 = vmatprep.subr.bf16.mxu0 0
          %11772 = vmatpush2.bf16.msra.mxu0 %v11505
          %11773 = vmatprep.subr.bf16.mxu0 0
          %11774 = vmatpush2.bf16.msra.mxu0 %v11504
          %11775 = vmatprep.subr.bf16.mxu0 0
          %11776 = vmatpush2.bf16.msra.mxu0 %v11503
          %11777 = vmatprep.subr.bf16.mxu0 0
          %11778 = vmatpush2.bf16.msra.mxu0 %v11502
          %11779 = vmatprep.subr.bf16.mxu0 0
          %11780 = vmatpush2.bf16.msra.mxu0 %v11501
          %11781 = vmatprep.subr.bf16.mxu0 0
          %11782 = vmatpush2.bf16.msra.mxu0 %v11500
          %11783 = vmatprep.subr.bf16.mxu0 0
          %11784 = vmatpush2.bf16.msra.mxu0 %v11499
          %11785 = vmatprep.subr.bf16.mxu0 0
          %11786 = vmatpush2.bf16.msra.mxu0 %v11498
          %11787 = vmatprep.mubr.bf16.mxu0 %v11283
          %11788 = vmatmul.mubr.bf16.gmra.mxu0 %v11220
          %v11789 = vpop.f32.mrf.mxu0
          %v11790 = vadd.f32 %v11629, %v11789
          %v11791 = vpop.f32.mrf.mxu0
          %v11792 = vpop.f32.mrf.mxu0
          %v11793 = vadd.f32 %v11632, %v11792
          %v11794 = vpop.f32.mrf.mxu0
          %11795 = vmatprep.mubr.bf16.mxu0 %v11286
          %11796 = vmatmul.mubr.bf16.gmra.mxu0 %v11224
          %v11797 = vpop.f32.mrf.mxu0
          %v11798 = vadd.f32 %v11637, %v11797
          %v11799 = vpop.f32.mrf.mxu0
          %v11800 = vpop.f32.mrf.mxu0
          %v11801 = vadd.f32 %v11640, %v11800
          %v11802 = vpop.f32.mrf.mxu0
          %11803 = vmatprep.mubr.bf16.mxu0 %v11289
          %11804 = vmatmul.mubr.bf16.gmra.mxu0 %v11228
          %v11805 = vpop.f32.mrf.mxu0
          %v11806 = vadd.f32 %v11645, %v11805
          %v11807 = vpop.f32.mrf.mxu0
          %v11808 = vpop.f32.mrf.mxu0
          %v11809 = vadd.f32 %v11648, %v11808
          %v11810 = vpop.f32.mrf.mxu0
          %11811 = vmatprep.mubr.bf16.mxu0 %v11292
          %11812 = vmatmul.mubr.bf16.gmra.mxu0 %v11232
          %v11813 = vpop.f32.mrf.mxu0
          %v11814 = vadd.f32 %v11653, %v11813
          %v11815 = vpop.f32.mrf.mxu0
          %v11816 = vpop.f32.mrf.mxu0
          %v11817 = vadd.f32 %v11656, %v11816
          %v11818 = vpop.f32.mrf.mxu0
          %11819 = vmatprep.mubr.bf16.mxu0 %v11295
          %11820 = vmatmul.mubr.bf16.gmra.mxu0 %v11236
          %v11821 = vpop.f32.mrf.mxu0
          %v11822 = vadd.f32 %v11661, %v11821
          %v11823 = vpop.f32.mrf.mxu0
          %v11824 = vpop.f32.mrf.mxu0
          %v11825 = vadd.f32 %v11664, %v11824
          %v11826 = vpop.f32.mrf.mxu0
          %11827 = vmatprep.mubr.bf16.mxu0 %v11298
          %11828 = vmatmul.mubr.bf16.gmra.mxu0 %v11240
          %v11829 = vpop.f32.mrf.mxu0
          %v11830 = vadd.f32 %v11669, %v11829
          %v11831 = vpop.f32.mrf.mxu0
          %v11832 = vpop.f32.mrf.mxu0
          %v11833 = vadd.f32 %v11672, %v11832
          %v11834 = vpop.f32.mrf.mxu0
          %11835 = vmatprep.mubr.bf16.mxu0 %v11301
          %11836 = vmatmul.mubr.bf16.gmra.mxu0 %v11244
          %v11837 = vpop.f32.mrf.mxu0
          %v11838 = vadd.f32 %v11677, %v11837
          %v11839 = vpop.f32.mrf.mxu0
          %v11840 = vpop.f32.mrf.mxu0
          %v11841 = vadd.f32 %v11680, %v11840
          %v11842 = vpop.f32.mrf.mxu0
          %11843 = vmatprep.mubr.bf16.mxu0 %v11304
          %11844 = vmatmul.mubr.bf16.gmra.mxu0 %v11248
          %v11845 = vpop.f32.mrf.mxu0
          %v11846 = vadd.f32 %v11685, %v11845
          %v11847 = vpop.f32.mrf.mxu0
          %v11848 = vpop.f32.mrf.mxu0
          %v11849 = vadd.f32 %v11688, %v11848
          %v11850 = vpop.f32.mrf.mxu0
          %11851 = vmatprep.mubr.bf16.mxu0 %v11307
          %11852 = vmatmul.mubr.bf16.gmra.mxu0 %v11252
          %v11853 = vpop.f32.mrf.mxu0
          %v11854 = vadd.f32 %v11693, %v11853
          %v11855 = vpop.f32.mrf.mxu0
          %v11856 = vpop.f32.mrf.mxu0
          %v11857 = vadd.f32 %v11696, %v11856
          %v11858 = vpop.f32.mrf.mxu0
          %11859 = vmatprep.mubr.bf16.mxu0 %v11310
          %11860 = vmatmul.mubr.bf16.gmra.mxu0 %v11256
          %v11861 = vpop.f32.mrf.mxu0
          %v11862 = vadd.f32 %v11701, %v11861
          %v11863 = vpop.f32.mrf.mxu0
          %v11864 = vpop.f32.mrf.mxu0
          %v11865 = vadd.f32 %v11704, %v11864
          %v11866 = vpop.f32.mrf.mxu0
          %11867 = vmatprep.mubr.bf16.mxu0 %v11313
          %11868 = vmatmul.mubr.bf16.gmra.mxu0 %v11260
          %v11869 = vpop.f32.mrf.mxu0
          %v11870 = vadd.f32 %v11709, %v11869
          %v11871 = vpop.f32.mrf.mxu0
          %v11872 = vpop.f32.mrf.mxu0
          %v11873 = vadd.f32 %v11712, %v11872
          %v11874 = vpop.f32.mrf.mxu0
          %11875 = vmatprep.mubr.bf16.mxu0 %v11316
          %11876 = vmatmul.mubr.bf16.gmra.mxu0 %v11264
          %v11877 = vpop.f32.mrf.mxu0
          %v11878 = vadd.f32 %v11717, %v11877
          %v11879 = vpop.f32.mrf.mxu0
          %v11880 = vpop.f32.mrf.mxu0
          %v11881 = vadd.f32 %v11720, %v11880
          %v11882 = vpop.f32.mrf.mxu0
          %11883 = vmatprep.mubr.bf16.mxu0 %v11319
          %11884 = vmatmul.mubr.bf16.gmra.mxu0 %v11268
          %v11885 = vpop.f32.mrf.mxu0
          %v11886 = vadd.f32 %v11725, %v11885
          %v11887 = vpop.f32.mrf.mxu0
          %v11888 = vpop.f32.mrf.mxu0
          %v11889 = vadd.f32 %v11728, %v11888
          %v11890 = vpop.f32.mrf.mxu0
          %11891 = vmatprep.mubr.bf16.mxu0 %v11322
          %11892 = vmatmul.mubr.bf16.gmra.mxu0 %v11272
          %v11893 = vpop.f32.mrf.mxu0
          %v11894 = vadd.f32 %v11733, %v11893
          %v11895 = vpop.f32.mrf.mxu0
          %v11896 = vpop.f32.mrf.mxu0
          %v11897 = vadd.f32 %v11736, %v11896
          %v11898 = vpop.f32.mrf.mxu0
          %11899 = vmatprep.mubr.bf16.mxu0 %v11325
          %11900 = vmatmul.mubr.bf16.gmra.mxu0 %v11276
          %v11901 = vpop.f32.mrf.mxu0
          %v11902 = vadd.f32 %v11741, %v11901
          %v11903 = vpop.f32.mrf.mxu0
          %v11904 = vpop.f32.mrf.mxu0
          %v11905 = vadd.f32 %v11744, %v11904
          %v11906 = vpop.f32.mrf.mxu0
          %11907 = vmatprep.mubr.bf16.mxu0 %v11328
          %11908 = vmatmul.mubr.bf16.gmra.mxu0 %v11280
          %v11909 = vpop.f32.mrf.mxu0
          %v11910 = vadd.f32 %v11749, %v11909
          %v11911 = vpop.f32.mrf.mxu0
          %v11912 = vpop.f32.mrf.mxu0
          %v11913 = vadd.f32 %v11752, %v11912
          %v11914 = vpop.f32.mrf.mxu0
          %11915 = vdwg.mxu0
          %11916 = vmatprep.subr.bf16.mxu0 0
          %11917 = vmatpush1.bf16.msra.mxu0 0
          %11918 = vmatprep.subr.bf16.mxu0 0
          %11919 = vmatpush1.bf16.msra.mxu0 0
          %11920 = vmatprep.subr.bf16.mxu0 0
          %11921 = vmatpush1.bf16.msra.mxu0 0
          %11922 = vmatprep.subr.bf16.mxu0 0
          %11923 = vmatpush1.bf16.msra.mxu0 0
          %11924 = vmatprep.subr.bf16.mxu0 0
          %11925 = vmatpush1.bf16.msra.mxu0 %v11509
          %11926 = vmatprep.subr.bf16.mxu0 0
          %11927 = vmatpush1.bf16.msra.mxu0 %v11508
          %11928 = vmatprep.subr.bf16.mxu0 0
          %11929 = vmatpush1.bf16.msra.mxu0 %v11507
          %11930 = vmatprep.subr.bf16.mxu0 0
          %11931 = vmatpush1.bf16.msra.mxu0 %v11506
          %11932 = vmatprep.subr.bf16.mxu0 0
          %11933 = vmatpush2.bf16.msra.mxu0 0
          %11934 = vmatprep.subr.bf16.mxu0 0
          %11935 = vmatpush2.bf16.msra.mxu0 0
          %11936 = vmatprep.subr.bf16.mxu0 0
          %11937 = vmatpush2.bf16.msra.mxu0 0
          %11938 = vmatprep.subr.bf16.mxu0 0
          %11939 = vmatpush2.bf16.msra.mxu0 0
          %11940 = vmatprep.subr.bf16.mxu0 0
          %11941 = vmatpush2.bf16.msra.mxu0 0
          %11942 = vmatprep.subr.bf16.mxu0 0
          %11943 = vmatpush2.bf16.msra.mxu0 0
          %11944 = vmatprep.subr.bf16.mxu0 0
          %11945 = vmatpush2.bf16.msra.mxu0 0
          %11946 = vmatprep.subr.bf16.mxu0 0
          %11947 = vmatpush2.bf16.msra.mxu0 0
          %11948 = vmatprep.mubr.bf16.mxu0 0
          %11949 = vmatmul.mubr.bf16.gmra.mxu0 %v11547
          %v11950 = vpop.f32.mrf.mxu0
          %v11951 = vadd.f32 %v11790, %v11950
          %v11952 = vpop.f32.mrf.mxu0
          %v11953 = vpop.f32.mrf.mxu0
          %v11954 = vadd.f32 %v11793, %v11953
          %v11955 = vpop.f32.mrf.mxu0
          %11956 = vmatprep.mubr.bf16.mxu0 0
          %11957 = vmatmul.mubr.bf16.gmra.mxu0 %v11550
          %v11958 = vpop.f32.mrf.mxu0
          %v11959 = vadd.f32 %v11798, %v11958
          %v11960 = vpop.f32.mrf.mxu0
          %v11961 = vpop.f32.mrf.mxu0
          %v11962 = vadd.f32 %v11801, %v11961
          %v11963 = vpop.f32.mrf.mxu0
          %11964 = vmatprep.mubr.bf16.mxu0 0
          %11965 = vmatmul.mubr.bf16.gmra.mxu0 %v11553
          %v11966 = vpop.f32.mrf.mxu0
          %v11967 = vadd.f32 %v11806, %v11966
          %v11968 = vpop.f32.mrf.mxu0
          %v11969 = vpop.f32.mrf.mxu0
          %v11970 = vadd.f32 %v11809, %v11969
          %v11971 = vpop.f32.mrf.mxu0
          %11972 = vmatprep.mubr.bf16.mxu0 0
          %11973 = vmatmul.mubr.bf16.gmra.mxu0 %v11556
          %v11974 = vpop.f32.mrf.mxu0
          %v11975 = vadd.f32 %v11814, %v11974
          %v11976 = vpop.f32.mrf.mxu0
          %v11977 = vpop.f32.mrf.mxu0
          %v11978 = vadd.f32 %v11817, %v11977
          %v11979 = vpop.f32.mrf.mxu0
          %11980 = vmatprep.mubr.bf16.mxu0 0
          %11981 = vmatmul.mubr.bf16.gmra.mxu0 %v11559
          %v11982 = vpop.f32.mrf.mxu0
          %v11983 = vadd.f32 %v11822, %v11982
          %v11984 = vpop.f32.mrf.mxu0
          %v11985 = vpop.f32.mrf.mxu0
          %v11986 = vadd.f32 %v11825, %v11985
          %v11987 = vpop.f32.mrf.mxu0
          %11988 = vmatprep.mubr.bf16.mxu0 0
          %11989 = vmatmul.mubr.bf16.gmra.mxu0 %v11562
          %v11990 = vpop.f32.mrf.mxu0
          %v11991 = vadd.f32 %v11830, %v11990
          %v11992 = vpop.f32.mrf.mxu0
          %v11993 = vpop.f32.mrf.mxu0
          %v11994 = vadd.f32 %v11833, %v11993
          %v11995 = vpop.f32.mrf.mxu0
          %11996 = vmatprep.mubr.bf16.mxu0 0
          %11997 = vmatmul.mubr.bf16.gmra.mxu0 %v11565
          %v11998 = vpop.f32.mrf.mxu0
          %v11999 = vadd.f32 %v11838, %v11998
          %v12000 = vpop.f32.mrf.mxu0
          %v12001 = vpop.f32.mrf.mxu0
          %v12002 = vadd.f32 %v11841, %v12001
          %v12003 = vpop.f32.mrf.mxu0
          %12004 = vmatprep.mubr.bf16.mxu0 0
          %12005 = vmatmul.mubr.bf16.gmra.mxu0 %v11568
          %v12006 = vpop.f32.mrf.mxu0
          %v12007 = vadd.f32 %v11846, %v12006
          %v12008 = vpop.f32.mrf.mxu0
          %v12009 = vpop.f32.mrf.mxu0
          %v12010 = vadd.f32 %v11849, %v12009
          %v12011 = vpop.f32.mrf.mxu0
          %12012 = vmatprep.mubr.bf16.mxu0 0
          %12013 = vmatmul.mubr.bf16.gmra.mxu0 %v11571
          %v12014 = vpop.f32.mrf.mxu0
          %v12015 = vadd.f32 %v11854, %v12014
          %v12016 = vpop.f32.mrf.mxu0
          %v12017 = vpop.f32.mrf.mxu0
          %v12018 = vadd.f32 %v11857, %v12017
          %v12019 = vpop.f32.mrf.mxu0
          %12020 = vmatprep.mubr.bf16.mxu0 0
          %12021 = vmatmul.mubr.bf16.gmra.mxu0 %v11574
          %v12022 = vpop.f32.mrf.mxu0
          %v12023 = vadd.f32 %v11862, %v12022
          %v12024 = vpop.f32.mrf.mxu0
          %v12025 = vpop.f32.mrf.mxu0
          %v12026 = vadd.f32 %v11865, %v12025
          %v12027 = vpop.f32.mrf.mxu0
          %12028 = vmatprep.mubr.bf16.mxu0 0
          %12029 = vmatmul.mubr.bf16.gmra.mxu0 %v11577
          %v12030 = vpop.f32.mrf.mxu0
          %v12031 = vadd.f32 %v11870, %v12030
          %v12032 = vpop.f32.mrf.mxu0
          %v12033 = vpop.f32.mrf.mxu0
          %v12034 = vadd.f32 %v11873, %v12033
          %v12035 = vpop.f32.mrf.mxu0
          %12036 = vmatprep.mubr.bf16.mxu0 0
          %12037 = vmatmul.mubr.bf16.gmra.mxu0 %v11580
          %v12038 = vpop.f32.mrf.mxu0
          %v12039 = vadd.f32 %v11878, %v12038
          %v12040 = vpop.f32.mrf.mxu0
          %v12041 = vpop.f32.mrf.mxu0
          %v12042 = vadd.f32 %v11881, %v12041
          %v12043 = vpop.f32.mrf.mxu0
          %12044 = vmatprep.mubr.bf16.mxu0 0
          %12045 = vmatmul.mubr.bf16.gmra.mxu0 %v11583
          %v12046 = vpop.f32.mrf.mxu0
          %v12047 = vadd.f32 %v11886, %v12046
          %v12048 = vpop.f32.mrf.mxu0
          %v12049 = vpop.f32.mrf.mxu0
          %v12050 = vadd.f32 %v11889, %v12049
          %v12051 = vpop.f32.mrf.mxu0
          %12052 = vmatprep.mubr.bf16.mxu0 0
          %12053 = vmatmul.mubr.bf16.gmra.mxu0 %v11586
          %v12054 = vpop.f32.mrf.mxu0
          %v12055 = vadd.f32 %v11894, %v12054
          %v12056 = vpop.f32.mrf.mxu0
          %v12057 = vpop.f32.mrf.mxu0
          %v12058 = vadd.f32 %v11897, %v12057
          %v12059 = vpop.f32.mrf.mxu0
          %12060 = vmatprep.mubr.bf16.mxu0 0
          %12061 = vmatmul.mubr.bf16.gmra.mxu0 %v11589
          %v12062 = vpop.f32.mrf.mxu0
          %v12063 = vadd.f32 %v11902, %v12062
          %v12064 = vpop.f32.mrf.mxu0
          %v12065 = vpop.f32.mrf.mxu0
          %v12066 = vadd.f32 %v11905, %v12065
          %v12067 = vpop.f32.mrf.mxu0
          %12068 = vmatprep.mubr.bf16.mxu0 0
          %12069 = vmatmul.mubr.bf16.gmra.mxu0 %v11592
          %v12070 = vpop.f32.mrf.mxu0
          %v12071 = vadd.f32 %v11910, %v12070
          %v12072 = vpop.f32.mrf.mxu0
          %v12073 = vpop.f32.mrf.mxu0
          %v12074 = vadd.f32 %v11913, %v12073
          %v12075 = vpop.f32.mrf.mxu0
          %12076 = vdwg.mxu0
          %12077 = vadd.xlane.f32.xlu0 %v11951
          %v12078 = vpop.xlane.xlu0 %12077
          %12079 = vadd.xlane.f32.xlu0 %v11954
          %v12080 = vpop.xlane.xlu0 %12079
          %12081 = vadd.xlane.f32.xlu0 %v11959
          %v12082 = vpop.xlane.xlu0 %12081
          %12083 = vadd.xlane.f32.xlu0 %v11962
          %v12084 = vpop.xlane.xlu0 %12083
          %12085 = vadd.xlane.f32.xlu0 %v11967
          %v12086 = vpop.xlane.xlu0 %12085
          %12087 = vadd.xlane.f32.xlu0 %v11970
          %v12088 = vpop.xlane.xlu0 %12087
          %12089 = vadd.xlane.f32.xlu0 %v11975
          %v12090 = vpop.xlane.xlu0 %12089
          %12091 = vadd.xlane.f32.xlu0 %v11978
          %v12092 = vpop.xlane.xlu0 %12091
          %12093 = vadd.xlane.f32.xlu0 %v11983
          %v12094 = vpop.xlane.xlu0 %12093
          %12095 = vadd.xlane.f32.xlu0 %v11986
          %v12096 = vpop.xlane.xlu0 %12095
          %12097 = vadd.xlane.f32.xlu0 %v11991
          %v12098 = vpop.xlane.xlu0 %12097
          %12099 = vadd.xlane.f32.xlu0 %v11994
          %v12100 = vpop.xlane.xlu0 %12099
          %12101 = vadd.xlane.f32.xlu0 %v11999
          %v12102 = vpop.xlane.xlu0 %12101
          %12103 = vadd.xlane.f32.xlu0 %v12002
          %v12104 = vpop.xlane.xlu0 %12103
          %12105 = vadd.xlane.f32.xlu0 %v12007
          %v12106 = vpop.xlane.xlu0 %12105
          %12107 = vadd.xlane.f32.xlu0 %v12010
          %v12108 = vpop.xlane.xlu0 %12107
          %12109 = vadd.xlane.f32.xlu0 %v12015
          %v12110 = vpop.xlane.xlu0 %12109
          %12111 = vadd.xlane.f32.xlu0 %v12018
          %v12112 = vpop.xlane.xlu0 %12111
          %12113 = vadd.xlane.f32.xlu0 %v12023
          %v12114 = vpop.xlane.xlu0 %12113
          %12115 = vadd.xlane.f32.xlu0 %v12026
          %v12116 = vpop.xlane.xlu0 %12115
          %12117 = vadd.xlane.f32.xlu0 %v12031
          %v12118 = vpop.xlane.xlu0 %12117
          %12119 = vadd.xlane.f32.xlu0 %v12034
          %v12120 = vpop.xlane.xlu0 %12119
          %12121 = vadd.xlane.f32.xlu0 %v12039
          %v12122 = vpop.xlane.xlu0 %12121
          %12123 = vadd.xlane.f32.xlu0 %v12042
          %v12124 = vpop.xlane.xlu0 %12123
          %12125 = vadd.xlane.f32.xlu0 %v12047
          %v12126 = vpop.xlane.xlu0 %12125
          %12127 = vadd.xlane.f32.xlu0 %v12050
          %v12128 = vpop.xlane.xlu0 %12127
          %12129 = vadd.xlane.f32.xlu0 %v12055
          %v12130 = vpop.xlane.xlu0 %12129
          %12131 = vadd.xlane.f32.xlu0 %v12058
          %v12132 = vpop.xlane.xlu0 %12131
          %12133 = vadd.xlane.f32.xlu0 %v12063
          %v12134 = vpop.xlane.xlu0 %12133
          %12135 = vadd.xlane.f32.xlu0 %v12066
          %v12136 = vpop.xlane.xlu0 %12135
          %12137 = vadd.xlane.f32.xlu0 %v12071
          %v12138 = vpop.xlane.xlu0 %12137
          %12139 = vadd.xlane.f32.xlu0 %v12074
          %v12140 = vpop.xlane.xlu0 %12139
          %v12141 = vld [vmem:[%s254] sm:$0xff]
          %v12142 = vld [vmem:[%s254 + $0x8] sm:$0xff]
          %v12145 = vlaneseq
          %v12146 = vshrl.u32 %v12145, 7
          %v12147 = vsub.s32 0, %v12146
          %v12148 = vrot.slane %v12141, %v12147
          %12150 = vbcast.lane.b32.xlu0 %v12148, 256
          %v12151 = vpop.permute.xlu0 %12150
          %s12153 = sor.u32 256, 8
          %12154 = vbcast.lane.b32.xlu0 %v12148, %s12153
          %v12155 = vpop.permute.xlu0 %12154
          %v12156 = vlaneseq
          %v12157 = vshrl.u32 %v12156, 7
          %v12158 = vsub.s32 1, %v12157
          %v12159 = vrot.slane %v12141, %v12158
          %12161 = vbcast.lane.b32.xlu0 %v12159, 256
          %v12162 = vpop.permute.xlu0 %12161
          %s12164 = sor.u32 256, 8
          %12165 = vbcast.lane.b32.xlu0 %v12159, %s12164
          %v12166 = vpop.permute.xlu0 %12165
          %v12167 = vlaneseq
          %v12168 = vshrl.u32 %v12167, 7
          %v12169 = vsub.s32 2, %v12168
          %v12170 = vrot.slane %v12141, %v12169
          %12172 = vbcast.lane.b32.xlu0 %v12170, 256
          %v12173 = vpop.permute.xlu0 %12172
          %s12175 = sor.u32 256, 8
          %12176 = vbcast.lane.b32.xlu0 %v12170, %s12175
          %v12177 = vpop.permute.xlu0 %12176
          %v12178 = vlaneseq
          %v12179 = vshrl.u32 %v12178, 7
          %v12180 = vsub.s32 3, %v12179
          %v12181 = vrot.slane %v12141, %v12180
          %12183 = vbcast.lane.b32.xlu0 %v12181, 256
          %v12184 = vpop.permute.xlu0 %12183
          %s12186 = sor.u32 256, 8
          %12187 = vbcast.lane.b32.xlu0 %v12181, %s12186
          %v12188 = vpop.permute.xlu0 %12187
          %v12189 = vlaneseq
          %v12190 = vshrl.u32 %v12189, 7
          %v12191 = vsub.s32 4, %v12190
          %v12192 = vrot.slane %v12141, %v12191
          %12194 = vbcast.lane.b32.xlu0 %v12192, 256
          %v12195 = vpop.permute.xlu0 %12194
          %s12197 = sor.u32 256, 8
          %12198 = vbcast.lane.b32.xlu0 %v12192, %s12197
          %v12199 = vpop.permute.xlu0 %12198
          %v12200 = vlaneseq
          %v12201 = vshrl.u32 %v12200, 7
          %v12202 = vsub.s32 5, %v12201
          %v12203 = vrot.slane %v12141, %v12202
          %12205 = vbcast.lane.b32.xlu0 %v12203, 256
          %v12206 = vpop.permute.xlu0 %12205
          %s12208 = sor.u32 256, 8
          %12209 = vbcast.lane.b32.xlu0 %v12203, %s12208
          %v12210 = vpop.permute.xlu0 %12209
          %v12211 = vlaneseq
          %v12212 = vshrl.u32 %v12211, 7
          %v12213 = vsub.s32 6, %v12212
          %v12214 = vrot.slane %v12141, %v12213
          %12216 = vbcast.lane.b32.xlu0 %v12214, 256
          %v12217 = vpop.permute.xlu0 %12216
          %s12219 = sor.u32 256, 8
          %12220 = vbcast.lane.b32.xlu0 %v12214, %s12219
          %v12221 = vpop.permute.xlu0 %12220
          %v12222 = vlaneseq
          %v12223 = vshrl.u32 %v12222, 7
          %v12224 = vsub.s32 7, %v12223
          %v12225 = vrot.slane %v12141, %v12224
          %12227 = vbcast.lane.b32.xlu0 %v12225, 256
          %v12228 = vpop.permute.xlu0 %12227
          %s12230 = sor.u32 256, 8
          %12231 = vbcast.lane.b32.xlu0 %v12225, %s12230
          %v12232 = vpop.permute.xlu0 %12231
          %v12233 = vlaneseq
          %v12234 = vshrl.u32 %v12233, 7
          %v12235 = vsub.s32 0, %v12234
          %v12236 = vrot.slane %v12142, %v12235
          %12238 = vbcast.lane.b32.xlu0 %v12236, 256
          %v12239 = vpop.permute.xlu0 %12238
          %s12241 = sor.u32 256, 8
          %12242 = vbcast.lane.b32.xlu0 %v12236, %s12241
          %v12243 = vpop.permute.xlu0 %12242
          %v12244 = vlaneseq
          %v12245 = vshrl.u32 %v12244, 7
          %v12246 = vsub.s32 1, %v12245
          %v12247 = vrot.slane %v12142, %v12246
          %12249 = vbcast.lane.b32.xlu0 %v12247, 256
          %v12250 = vpop.permute.xlu0 %12249
          %s12252 = sor.u32 256, 8
          %12253 = vbcast.lane.b32.xlu0 %v12247, %s12252
          %v12254 = vpop.permute.xlu0 %12253
          %v12255 = vlaneseq
          %v12256 = vshrl.u32 %v12255, 7
          %v12257 = vsub.s32 2, %v12256
          %v12258 = vrot.slane %v12142, %v12257
          %12260 = vbcast.lane.b32.xlu0 %v12258, 256
          %v12261 = vpop.permute.xlu0 %12260
          %s12263 = sor.u32 256, 8
          %12264 = vbcast.lane.b32.xlu0 %v12258, %s12263
          %v12265 = vpop.permute.xlu0 %12264
          %v12266 = vlaneseq
          %v12267 = vshrl.u32 %v12266, 7
          %v12268 = vsub.s32 3, %v12267
          %v12269 = vrot.slane %v12142, %v12268
          %12271 = vbcast.lane.b32.xlu0 %v12269, 256
          %v12272 = vpop.permute.xlu0 %12271
          %s12274 = sor.u32 256, 8
          %12275 = vbcast.lane.b32.xlu0 %v12269, %s12274
          %v12276 = vpop.permute.xlu0 %12275
          %v12277 = vlaneseq
          %v12278 = vshrl.u32 %v12277, 7
          %v12279 = vsub.s32 4, %v12278
          %v12280 = vrot.slane %v12142, %v12279
          %12282 = vbcast.lane.b32.xlu0 %v12280, 256
          %v12283 = vpop.permute.xlu0 %12282
          %s12285 = sor.u32 256, 8
          %12286 = vbcast.lane.b32.xlu0 %v12280, %s12285
          %v12287 = vpop.permute.xlu0 %12286
          %v12288 = vlaneseq
          %v12289 = vshrl.u32 %v12288, 7
          %v12290 = vsub.s32 5, %v12289
          %v12291 = vrot.slane %v12142, %v12290
          %12293 = vbcast.lane.b32.xlu0 %v12291, 256
          %v12294 = vpop.permute.xlu0 %12293
          %s12296 = sor.u32 256, 8
          %12297 = vbcast.lane.b32.xlu0 %v12291, %s12296
          %v12298 = vpop.permute.xlu0 %12297
          %v12299 = vlaneseq
          %v12300 = vshrl.u32 %v12299, 7
          %v12301 = vsub.s32 6, %v12300
          %v12302 = vrot.slane %v12142, %v12301
          %12304 = vbcast.lane.b32.xlu0 %v12302, 256
          %v12305 = vpop.permute.xlu0 %12304
          %s12307 = sor.u32 256, 8
          %12308 = vbcast.lane.b32.xlu0 %v12302, %s12307
          %v12309 = vpop.permute.xlu0 %12308
          %v12310 = vlaneseq
          %v12311 = vshrl.u32 %v12310, 7
          %v12312 = vsub.s32 7, %v12311
          %v12313 = vrot.slane %v12142, %v12312
          %12315 = vbcast.lane.b32.xlu0 %v12313, 256
          %v12316 = vpop.permute.xlu0 %12315
          %s12318 = sor.u32 256, 8
          %12319 = vbcast.lane.b32.xlu0 %v12313, %s12318
          %v12320 = vpop.permute.xlu0 %12319
          %v12353 = vadd.f32 %v12078, %v12151
          %v12354 = vadd.f32 %v12080, %v12155
          %v12355 = vadd.f32 %v12082, %v12162
          %v12356 = vadd.f32 %v12084, %v12166
          %v12357 = vadd.f32 %v12086, %v12173
          %v12358 = vadd.f32 %v12088, %v12177
          %v12359 = vadd.f32 %v12090, %v12184
          %v12360 = vadd.f32 %v12092, %v12188
          %v12361 = vadd.f32 %v12094, %v12195
          %v12362 = vadd.f32 %v12096, %v12199
          %v12363 = vadd.f32 %v12098, %v12206
          %v12364 = vadd.f32 %v12100, %v12210
          %v12365 = vadd.f32 %v12102, %v12217
          %v12366 = vadd.f32 %v12104, %v12221
          %v12367 = vadd.f32 %v12106, %v12228
          %v12368 = vadd.f32 %v12108, %v12232
          %v12369 = vadd.f32 %v12110, %v12239
          %v12370 = vadd.f32 %v12112, %v12243
          %v12371 = vadd.f32 %v12114, %v12250
          %v12372 = vadd.f32 %v12116, %v12254
          %v12373 = vadd.f32 %v12118, %v12261
          %v12374 = vadd.f32 %v12120, %v12265
          %v12375 = vadd.f32 %v12122, %v12272
          %v12376 = vadd.f32 %v12124, %v12276
          %v12377 = vadd.f32 %v12126, %v12283
          %v12378 = vadd.f32 %v12128, %v12287
          %v12379 = vadd.f32 %v12130, %v12294
          %v12380 = vadd.f32 %v12132, %v12298
          %v12381 = vadd.f32 %v12134, %v12305
          %v12382 = vadd.f32 %v12136, %v12309
          %v12383 = vadd.f32 %v12138, %v12316
          %v12384 = vadd.f32 %v12140, %v12320
          %12417 = vset.pattern.permute.xlu0 0
          %12418 = vperm.xlu0 %12417, %v12353
          %v12419 = vpop.permute.xlu0 %12418
          %12420 = vset.pattern.permute.xlu0 0
          %12421 = vperm.xlu0 %12420, %v12354
          %v12422 = vpop.permute.xlu0 %12421
          %12423 = vset.pattern.permute.xlu0 0
          %12424 = vperm.xlu0 %12423, %v12355
          %v12425 = vpop.permute.xlu0 %12424
          %12426 = vset.pattern.permute.xlu0 0
          %12427 = vperm.xlu0 %12426, %v12356
          %v12428 = vpop.permute.xlu0 %12427
          %12429 = vset.pattern.permute.xlu0 0
          %12430 = vperm.xlu0 %12429, %v12357
          %v12431 = vpop.permute.xlu0 %12430
          %12432 = vset.pattern.permute.xlu0 0
          %12433 = vperm.xlu0 %12432, %v12358
          %v12434 = vpop.permute.xlu0 %12433
          %12435 = vset.pattern.permute.xlu0 0
          %12436 = vperm.xlu0 %12435, %v12359
          %v12437 = vpop.permute.xlu0 %12436
          %12438 = vset.pattern.permute.xlu0 0
          %12439 = vperm.xlu0 %12438, %v12360
          %v12440 = vpop.permute.xlu0 %12439
          %12441 = vset.pattern.permute.xlu0 0
          %12442 = vperm.xlu0 %12441, %v12361
          %v12443 = vpop.permute.xlu0 %12442
          %12444 = vset.pattern.permute.xlu0 0
          %12445 = vperm.xlu0 %12444, %v12362
          %v12446 = vpop.permute.xlu0 %12445
          %12447 = vset.pattern.permute.xlu0 0
          %12448 = vperm.xlu0 %12447, %v12363
          %v12449 = vpop.permute.xlu0 %12448
          %12450 = vset.pattern.permute.xlu0 0
          %12451 = vperm.xlu0 %12450, %v12364
          %v12452 = vpop.permute.xlu0 %12451
          %12453 = vset.pattern.permute.xlu0 0
          %12454 = vperm.xlu0 %12453, %v12365
          %v12455 = vpop.permute.xlu0 %12454
          %12456 = vset.pattern.permute.xlu0 0
          %12457 = vperm.xlu0 %12456, %v12366
          %v12458 = vpop.permute.xlu0 %12457
          %12459 = vset.pattern.permute.xlu0 0
          %12460 = vperm.xlu0 %12459, %v12367
          %v12461 = vpop.permute.xlu0 %12460
          %12462 = vset.pattern.permute.xlu0 0
          %12463 = vperm.xlu0 %12462, %v12368
          %v12464 = vpop.permute.xlu0 %12463
          %12465 = vset.pattern.permute.xlu0 0
          %12466 = vperm.xlu0 %12465, %v12369
          %v12467 = vpop.permute.xlu0 %12466
          %12468 = vset.pattern.permute.xlu0 0
          %12469 = vperm.xlu0 %12468, %v12370
          %v12470 = vpop.permute.xlu0 %12469
          %12471 = vset.pattern.permute.xlu0 0
          %12472 = vperm.xlu0 %12471, %v12371
          %v12473 = vpop.permute.xlu0 %12472
          %12474 = vset.pattern.permute.xlu0 0
          %12475 = vperm.xlu0 %12474, %v12372
          %v12476 = vpop.permute.xlu0 %12475
          %12477 = vset.pattern.permute.xlu0 0
          %12478 = vperm.xlu0 %12477, %v12373
          %v12479 = vpop.permute.xlu0 %12478
          %12480 = vset.pattern.permute.xlu0 0
          %12481 = vperm.xlu0 %12480, %v12374
          %v12482 = vpop.permute.xlu0 %12481
          %12483 = vset.pattern.permute.xlu0 0
          %12484 = vperm.xlu0 %12483, %v12375
          %v12485 = vpop.permute.xlu0 %12484
          %12486 = vset.pattern.permute.xlu0 0
          %12487 = vperm.xlu0 %12486, %v12376
          %v12488 = vpop.permute.xlu0 %12487
          %12489 = vset.pattern.permute.xlu0 0
          %12490 = vperm.xlu0 %12489, %v12377
          %v12491 = vpop.permute.xlu0 %12490
          %12492 = vset.pattern.permute.xlu0 0
          %12493 = vperm.xlu0 %12492, %v12378
          %v12494 = vpop.permute.xlu0 %12493
          %12495 = vset.pattern.permute.xlu0 0
          %12496 = vperm.xlu0 %12495, %v12379
          %v12497 = vpop.permute.xlu0 %12496
          %12498 = vset.pattern.permute.xlu0 0
          %12499 = vperm.xlu0 %12498, %v12380
          %v12500 = vpop.permute.xlu0 %12499
          %12501 = vset.pattern.permute.xlu0 0
          %12502 = vperm.xlu0 %12501, %v12381
          %v12503 = vpop.permute.xlu0 %12502
          %12504 = vset.pattern.permute.xlu0 0
          %12505 = vperm.xlu0 %12504, %v12382
          %v12506 = vpop.permute.xlu0 %12505
          %12507 = vset.pattern.permute.xlu0 0
          %12508 = vperm.xlu0 %12507, %v12383
          %v12509 = vpop.permute.xlu0 %12508
          %12510 = vset.pattern.permute.xlu0 0
          %12511 = vperm.xlu0 %12510, %v12384
          %v12512 = vpop.permute.xlu0 %12511
          %v12513 = vlaneseq
          %v12514 = vand.u32 %v12513, 127
          %v12515 = vlaneseq
          %v12516 = vshrl.u32 %v12515, 7
          %v12517 = vsub.s32 %v12514, %v12516
          %v12518 = vrot.slane %v12419, %v12517
          %v12519 = vadd.s32 %v12514, 4294967288
          %v12520 = vlaneseq
          %v12521 = vshrl.u32 %v12520, 7
          %v12522 = vsub.s32 %v12519, %v12521
          %v12523 = vrot.slane %v12422, %v12522
          %vm12524 = vcmask 130112
          %v12525 = vsel %vm12524, %v12523, %v12518
          %v12526 = vlaneseq
          %v12527 = vshrl.u32 %v12526, 7
          %v12528 = vsub.s32 %v12514, %v12527
          %v12529 = vrot.slane %v12425, %v12528
          %v12530 = vlaneseq
          %v12531 = vshrl.u32 %v12530, 7
          %v12532 = vsub.s32 %v12519, %v12531
          %v12533 = vrot.slane %v12428, %v12532
          %v12534 = vsel %vm12524, %v12533, %v12529
          %v12535 = vlaneseq
          %v12536 = vshrl.u32 %v12535, 7
          %v12537 = vsub.s32 %v12514, %v12536
          %v12538 = vrot.slane %v12431, %v12537
          %v12539 = vlaneseq
          %v12540 = vshrl.u32 %v12539, 7
          %v12541 = vsub.s32 %v12519, %v12540
          %v12542 = vrot.slane %v12434, %v12541
          %v12543 = vsel %vm12524, %v12542, %v12538
          %v12544 = vlaneseq
          %v12545 = vshrl.u32 %v12544, 7
          %v12546 = vsub.s32 %v12514, %v12545
          %v12547 = vrot.slane %v12437, %v12546
          %v12548 = vlaneseq
          %v12549 = vshrl.u32 %v12548, 7
          %v12550 = vsub.s32 %v12519, %v12549
          %v12551 = vrot.slane %v12440, %v12550
          %v12552 = vsel %vm12524, %v12551, %v12547
          %v12553 = vlaneseq
          %v12554 = vshrl.u32 %v12553, 7
          %v12555 = vsub.s32 %v12514, %v12554
          %v12556 = vrot.slane %v12443, %v12555
          %v12557 = vlaneseq
          %v12558 = vshrl.u32 %v12557, 7
          %v12559 = vsub.s32 %v12519, %v12558
          %v12560 = vrot.slane %v12446, %v12559
          %v12561 = vsel %vm12524, %v12560, %v12556
          %v12562 = vlaneseq
          %v12563 = vshrl.u32 %v12562, 7
          %v12564 = vsub.s32 %v12514, %v12563
          %v12565 = vrot.slane %v12449, %v12564
          %v12566 = vlaneseq
          %v12567 = vshrl.u32 %v12566, 7
          %v12568 = vsub.s32 %v12519, %v12567
          %v12569 = vrot.slane %v12452, %v12568
          %v12570 = vsel %vm12524, %v12569, %v12565
          %v12571 = vlaneseq
          %v12572 = vshrl.u32 %v12571, 7
          %v12573 = vsub.s32 %v12514, %v12572
          %v12574 = vrot.slane %v12455, %v12573
          %v12575 = vlaneseq
          %v12576 = vshrl.u32 %v12575, 7
          %v12577 = vsub.s32 %v12519, %v12576
          %v12578 = vrot.slane %v12458, %v12577
          %v12579 = vsel %vm12524, %v12578, %v12574
          %v12580 = vlaneseq
          %v12581 = vshrl.u32 %v12580, 7
          %v12582 = vsub.s32 %v12514, %v12581
          %v12583 = vrot.slane %v12461, %v12582
          %v12584 = vlaneseq
          %v12585 = vshrl.u32 %v12584, 7
          %v12586 = vsub.s32 %v12519, %v12585
          %v12587 = vrot.slane %v12464, %v12586
          %v12588 = vsel %vm12524, %v12587, %v12583
          %v12589 = vlaneseq
          %v12590 = vshrl.u32 %v12589, 7
          %v12591 = vsub.s32 %v12514, %v12590
          %v12592 = vrot.slane %v12467, %v12591
          %v12593 = vlaneseq
          %v12594 = vshrl.u32 %v12593, 7
          %v12595 = vsub.s32 %v12519, %v12594
          %v12596 = vrot.slane %v12470, %v12595
          %v12597 = vsel %vm12524, %v12596, %v12592
          %v12598 = vlaneseq
          %v12599 = vshrl.u32 %v12598, 7
          %v12600 = vsub.s32 %v12514, %v12599
          %v12601 = vrot.slane %v12473, %v12600
          %v12602 = vlaneseq
          %v12603 = vshrl.u32 %v12602, 7
          %v12604 = vsub.s32 %v12519, %v12603
          %v12605 = vrot.slane %v12476, %v12604
          %v12606 = vsel %vm12524, %v12605, %v12601
          %v12607 = vlaneseq
          %v12608 = vshrl.u32 %v12607, 7
          %v12609 = vsub.s32 %v12514, %v12608
          %v12610 = vrot.slane %v12479, %v12609
          %v12611 = vlaneseq
          %v12612 = vshrl.u32 %v12611, 7
          %v12613 = vsub.s32 %v12519, %v12612
          %v12614 = vrot.slane %v12482, %v12613
          %v12615 = vsel %vm12524, %v12614, %v12610
          %v12616 = vlaneseq
          %v12617 = vshrl.u32 %v12616, 7
          %v12618 = vsub.s32 %v12514, %v12617
          %v12619 = vrot.slane %v12485, %v12618
          %v12620 = vlaneseq
          %v12621 = vshrl.u32 %v12620, 7
          %v12622 = vsub.s32 %v12519, %v12621
          %v12623 = vrot.slane %v12488, %v12622
          %v12624 = vsel %vm12524, %v12623, %v12619
          %v12625 = vlaneseq
          %v12626 = vshrl.u32 %v12625, 7
          %v12627 = vsub.s32 %v12514, %v12626
          %v12628 = vrot.slane %v12491, %v12627
          %v12629 = vlaneseq
          %v12630 = vshrl.u32 %v12629, 7
          %v12631 = vsub.s32 %v12519, %v12630
          %v12632 = vrot.slane %v12494, %v12631
          %v12633 = vsel %vm12524, %v12632, %v12628
          %v12634 = vlaneseq
          %v12635 = vshrl.u32 %v12634, 7
          %v12636 = vsub.s32 %v12514, %v12635
          %v12637 = vrot.slane %v12497, %v12636
          %v12638 = vlaneseq
          %v12639 = vshrl.u32 %v12638, 7
          %v12640 = vsub.s32 %v12519, %v12639
          %v12641 = vrot.slane %v12500, %v12640
          %v12642 = vsel %vm12524, %v12641, %v12637
          %v12643 = vlaneseq
          %v12644 = vshrl.u32 %v12643, 7
          %v12645 = vsub.s32 %v12514, %v12644
          %v12646 = vrot.slane %v12503, %v12645
          %v12647 = vlaneseq
          %v12648 = vshrl.u32 %v12647, 7
          %v12649 = vsub.s32 %v12519, %v12648
          %v12650 = vrot.slane %v12506, %v12649
          %v12651 = vsel %vm12524, %v12650, %v12646
          %v12652 = vlaneseq
          %v12653 = vshrl.u32 %v12652, 7
          %v12654 = vsub.s32 %v12514, %v12653
          %v12655 = vrot.slane %v12509, %v12654
          %v12656 = vlaneseq
          %v12657 = vshrl.u32 %v12656, 7
          %v12658 = vsub.s32 %v12519, %v12657
          %v12659 = vrot.slane %v12512, %v12658
          %v12660 = vsel %vm12524, %v12659, %v12655
          %vm12661 = vcmask 1041409
          %v12662 = vsel %vm12661, %v12534, %v12525
          %vm12663 = vcmask 1042434
          %v12664 = vsel %vm12663, %v12543, %v12662
          %vm12665 = vcmask 1043459
          %v12666 = vsel %vm12665, %v12552, %v12664
          %vm12667 = vcmask 1044484
          %v12668 = vsel %vm12667, %v12561, %v12666
          %vm12669 = vcmask 1045509
          %v12670 = vsel %vm12669, %v12570, %v12668
          %vm12671 = vcmask 1046534
          %v12672 = vsel %vm12671, %v12579, %v12670
          %vm12673 = vcmask 1047559
          %v12674 = vsel %vm12673, %v12588, %v12672
          %v12675 = vsel %vm12661, %v12606, %v12597
          %v12676 = vsel %vm12663, %v12615, %v12675
          %v12677 = vsel %vm12665, %v12624, %v12676
          %v12678 = vsel %vm12667, %v12633, %v12677
          %v12679 = vsel %vm12669, %v12642, %v12678
          %v12680 = vsel %vm12671, %v12651, %v12679
          %v12681 = vsel %vm12673, %v12660, %v12680
          %vm12684 = vcmask 130048
          %12685 = vst.msk [vmem:[%s244] sm:$0xff] %vm12684, %v12674
          %12686 = vst.msk [vmem:[%s244 + $0x8] sm:$0xff] %vm12684, %v12681
        $region60: #{vdsr_forward.1} parent=39 // pred_fallthru
          _
        %s12687 = sand.u32 %s154, 1
        %s12688 = scalar_lea.sflag [#allocation4], %s12687
        %s12689 = sand.u32 %s154, 1
        %s12690 = smul.addr %s12689, 16
        %s12691 = scalar_lea.vmem [#allocation3], %s12690
        // Predicated region
        $region61: #{vdsr_forward.1} parent=39 // pred_check
          %p12692 = pneg %p164
        $region62: #{vdsr_forward.1} parent=39 // pred_check_branch
          %12694 = sbr.rel (%p12692) target = $region64
        $region63: #{vdsr_forward.1} parent=39 // pred_region
          %s12696 = ssub.s32 256, 256
          %12697 = vsyncadd %s12688, %s12696
          %s12698 = smul.addr %s23, 2
          %s12699 = smul.addr %s12698, 128
          %s12700 = scalar_lea.hbm %s5, %s12699
          %s12701 = sshll.u32 %s12691, 4
          %s12702 = int_to_ptr.vmem [resolvable:$true] %s12701
          %12707 = dma.vmem_to_hbm [thread:$0]  %s12702, 256, %s12700, %s12688, 128, 128, 8
        $region64: #{vdsr_forward.1} parent=39 // pred_fallthru
          _
      $region40: #{vdsr_forward.1} parent=5 // pred_fallthru
        _
      %p12708 = scmp.le.s32.totalorder 2, %s14
      // Predicated region
      $region65: #{vdsr_forward.1} parent=5 // pred_check
        %p12709 = pneg %p12708
      $region66: #{vdsr_forward.1} parent=5 // pred_check_branch
        %12711 = sbr.rel (%p12709) target = $region68
      $region67: #{vdsr_forward.1} parent=5 // pred_region
        %s12712 = ssub.s32 %s14, 2
        // Predicated region
        $region69: #{vdsr_forward.1} parent=67 // pred_check
          %p12713 = pneg %p170
        $region70: #{vdsr_forward.1} parent=67 // pred_check_branch
          %12715 = sbr.rel (%p12713) target = $region72
        $region71: #{vdsr_forward.1} parent=67 // pred_region
          %s12716 = sand.u32 %s155, 1
          %s12717 = scalar_lea.sflag [#allocation4], %s12716
          %s12718 = sand.u32 %s155, 1
          %s12719 = smul.addr %s12718, 16
          %s12720 = scalar_lea.vmem [#allocation3], %s12719
          %12721 = dma.done %s12717, 256
        $region72: #{vdsr_forward.1} parent=67 // pred_fallthru
          _
      $region68: #{vdsr_forward.1} parent=5 // pred_fallthru
        _
    $region6: #{vdsr_forward.1} parent=1 // loop_footer
      %s18 = sadd.s32 1, %s14
    $region7: #{vdsr_forward.1} parent=1 // loop_footer_branch
      %13 = sbr.rel target = $region3
    $region8: #{vdsr_forward.1} parent=1 // loop_exit
      _
    %12722 = vsyncpa [#allocation4], 1
    %s12723 = scalar_lea.sflag [#allocation4], 1
    %12724 = vsyncpa %s12723, 1

</llo_original>
